<compile_context>
chip_gen: v7x
topology: tpu7x:2x2x1
jax: 0.10.0
libtpu: 0.0.40
codegen_flags: <defaults>
</compile_context>

<pallas_src>
import math

import jax
import jax.numpy as jnp
from jax.experimental import pallas as pl
from jax.experimental.pallas import tpu as pltpu

# ----------------------------- config -------------------------------------
HIDDEN = 128
N_HEADS = 4
HEAD_DIM = HIDDEN // N_HEADS
INTERMEDIATE = 256
N_LAYERS = 3              # part1 = layer 0, part2 = layers 1..N_LAYERS-1
VOCAB = 64
MAX_POS = 64
PAD_IDX = 1
NUM_LABELS = 2
LN_EPS = 1e-5

# decay-linear schedule constants from the module's __init__
RATE1 = 9.0 / 10.0
STEP = 200
STOP_STEP = 600
GLOBAL_STEP = 0           # frozen (inference)


# TODO(synk): DecayLinearFirst/DecayLinearSecond source is not provided; modeled
# as an identity-blended linear  y = c*(x@W + b) + (1-c)*x  with coefficient c
# from a linear decay schedule driven by (rate, step, stop_step).
def decay_coef(global_step, rate, step, stop_step):
    t = min(max(global_step - step, 0), stop_step - step)
    frac = t / float(stop_step - step)
    return 1.0 - (1.0 - rate) * frac


# ----------------------------- fused kernel --------------------------------
def _ln(y, g, b):
    """LayerNorm in f32 over the last axis. y:[S,H] f32, g/b:[1,H] f32."""
    mu = jnp.mean(y, axis=-1, keepdims=True)
    var = jnp.mean((y - mu) ** 2, axis=-1, keepdims=True)
    return (y - mu) * jax.lax.rsqrt(var + LN_EPS) * g + b


def _fused_stack_kernel(
    emb_ref, mask_ref, emb_g_ref, emb_b_ref,
    wq_ref, bq_ref, wk_ref, bk_ref, wv_ref, bv_ref,
    wo_ref, bo_ref, ln1g_ref, ln1b_ref,
    w1_ref, b1_ref, w2_ref, b2_ref, ln2g_ref, ln2b_ref,
    dl12w_ref, dl12b_ref, dl34w_ref, dl34b_ref,
    o_ref,
):
    """One batch per grid step: embedding LN -> N_LAYERS x (attention + FFN)
    with the composed decay-linear affines fused after layer 0 and the last
    layer.  All weights are resident; the activation lives in vregs/VMEM."""
    bf16 = jnp.bfloat16
    f32 = jnp.float32

    x = _ln(emb_ref[0].astype(f32), emb_g_ref[...], emb_b_ref[...]).astype(bf16)  # [S,H]
    add_mask = mask_ref[0]                                                        # [1,S] f32

    for l in range(N_LAYERS):                      # static unroll over layers
        # ---------------- self-attention (per-head, split weights) ----------
        attn = bo_ref[l].astype(f32)               # [1,H] -> broadcasts to [S,H]
        for h in range(N_HEADS):                   # static unroll over heads
            # projections straight to [S, hd]: no lane-offset activation slices
            qh = jnp.dot(x, wq_ref[l, h], preferred_element_type=f32) + bq_ref[l, h]
            kh = jnp.dot(x, wk_ref[l, h], preferred_element_type=f32) + bk_ref[l, h]
            vh = jnp.dot(x, wv_ref[l, h], preferred_element_type=f32) + bv_ref[l, h]
            # scores (1/sqrt(hd) already folded into Wq/bq at init)
            s = jax.lax.dot_general(qh.astype(bf16), kh.astype(bf16),
                                    (((1,), (1,)), ((), ())),
                                    preferred_element_type=f32)          # [S,S]
            s = s + add_mask
            s = s - jnp.max(s, axis=-1, keepdims=True)
            p = jnp.exp(s)
            p = p * pl.reciprocal(jnp.sum(p, axis=-1, keepdims=True), approx=True)
            ctx = jnp.dot(p.astype(bf16), vh.astype(bf16),
                          preferred_element_type=f32)                    # [S,hd]
            # fold the output projection per head -> no lane concatenate
            attn = attn + jnp.dot(ctx.astype(bf16), wo_ref[l, h],
                                  preferred_element_type=f32)            # [S,H]

        y = attn + x.astype(f32)                                         # residual
        x = _ln(y, ln1g_ref[l], ln1b_ref[l]).astype(bf16)

        # ---------------- feed-forward --------------------------------------
        h1 = jnp.dot(x, w1_ref[l], preferred_element_type=f32) + b1_ref[l]
        # TODO(synk): HF RoBERTa uses exact erf-GELU; tanh approximation kept
        # for guaranteed Mosaic lowering of the transcendental.
        h1 = jax.nn.gelu(h1, approximate=True)
        y = jnp.dot(h1.astype(bf16), w2_ref[l], preferred_element_type=f32) + b2_ref[l]
        y = y + x.astype(f32)                                            # residual
        x = _ln(y, ln2g_ref[l], ln2b_ref[l]).astype(bf16)

        # -------- decay-linear affines fused into the stack epilogues -------
        if l == 0:                                   # decaylinear1 ∘ decaylinear2
            x = (jnp.dot(x, dl12w_ref[...], preferred_element_type=f32)
                 + dl12b_ref[...]).astype(bf16)
        if l == N_LAYERS - 1:                        # decaylinear3 ∘ decaylinear4
            x = (jnp.dot(x, dl34w_ref[...], preferred_element_type=f32)
                 + dl34b_ref[...]).astype(bf16)

    o_ref[0] = x


def encoder_stack(emb, add_mask, p):
    """emb: [B,S,H] f32, add_mask: [B,1,S] f32 -> [B,S,H] bf16.
    Single pallas_call; grid=(B,) 'parallel' so v7x's two TCs each take one
    batch; weights (leading-L stacks) are resident for the whole call."""
    B, S, H = emb.shape
    L = N_LAYERS

    def full(shape):                       # fully-resident block, constant index
        return pl.BlockSpec(shape, lambda b, _n=len(shape): (0,) * _n)

    return pl.pallas_call(
        _fused_stack_kernel,
        grid=(B,),
        out_shape=jax.ShapeDtypeStruct((B, S, H), jnp.bfloat16),
        in_specs=[
            pl.BlockSpec((1, S, H), lambda b: (b, 0, 0)),        # embeddings of batch b
            pl.BlockSpec((1, 1, S), lambda b: (b, 0, 0)),        # additive mask
            full((1, H)), full((1, H)),                          # embedding LN
            full((L, N_HEADS, H, HEAD_DIM)), full((L, N_HEADS, 1, HEAD_DIM)),  # Wq,bq (scaled)
            full((L, N_HEADS, H, HEAD_DIM)), full((L, N_HEADS, 1, HEAD_DIM)),  # Wk,bk
            full((L, N_HEADS, H, HEAD_DIM)), full((L, N_HEADS, 1, HEAD_DIM)),  # Wv,bv
            full((L, N_HEADS, HEAD_DIM, H)), full((L, 1, H)),                  # Wo,bo
            full((L, 1, H)), full((L, 1, H)),                                  # LN1
            full((L, H, INTERMEDIATE)), full((L, 1, INTERMEDIATE)),            # W1,b1
            full((L, INTERMEDIATE, H)), full((L, 1, H)),                       # W2,b2
            full((L, 1, H)), full((L, 1, H)),                                  # LN2
            full((H, H)), full((1, H)),                                        # dl12
            full((H, H)), full((1, H)),                                        # dl34
        ],
        out_specs=pl.BlockSpec((1, S, H), lambda b: (b, 0, 0)),
        compiler_params=pltpu.CompilerParams(
            dimension_semantics=("parallel",)),      # default VMEM limit is ample
    )(emb, add_mask, p["emb_ln_g"], p["emb_ln_b"],
      p["wq"], p["bq"], p["wk"], p["bk"], p["wv"], p["bv"],
      p["wo"], p["bo"], p["ln1_g"], p["ln1_b"],
      p["w1"], p["b1"], p["w2"], p["b2"], p["ln2_g"], p["ln2_b"],
      p["dl12_w"], p["dl12_b"], p["dl34_w"], p["dl34_b"])


# ----------------------------- parameters ----------------------------------
def init_params(key):
    keys = iter(jax.random.split(key, 160))

    def rnd(shape, scale=0.02):
        return jax.random.normal(next(keys), shape, jnp.float32) * scale

    def dense(kin, kout):
        return rnd((kin, kout)), jnp.zeros((kout,), jnp.float32)

    p = {
        "word_emb": rnd((VOCAB, HIDDEN)),
        "pos_emb": rnd((MAX_POS, HIDDEN)),
        "type_emb": rnd((1, HIDDEN)),
        "emb_ln_g": jnp.ones((1, HIDDEN), jnp.float32),
        "emb_ln_b": jnp.zeros((1, HIDDEN), jnp.float32),
    }

    att_scale = 1.0 / math.sqrt(HEAD_DIM)

    def split_cols(w, b):
        # [H,H]/[H] column-split per head -> [nh,H,hd] / [nh,1,hd]
        wh = w.reshape(HIDDEN, N_HEADS, HEAD_DIM).transpose(1, 0, 2)
        bh = b.reshape(N_HEADS, 1, HEAD_DIM)
        return wh, bh

    wq_l, bq_l, wk_l, bk_l, wv_l, bv_l = [], [], [], [], [], []
    wo_l, bo_l, w1_l, b1_l, w2_l, b2_l = [], [], [], [], [], []
    for _ in range(N_LAYERS):
        wq, bq = dense(HIDDEN, HIDDEN)
        wk, bk = dense(HIDDEN, HIDDEN)
        wv, bv = dense(HIDDEN, HIDDEN)
        wo, bo = dense(HIDDEN, HIDDEN)
        w1, b1 = dense(HIDDEN, INTERMEDIATE)
        w2, b2 = dense(INTERMEDIATE, HIDDEN)

        # fold 1/sqrt(head_dim) into the Q projection (free at init)
        wqh, bqh = split_cols(wq * att_scale, bq * att_scale)
        wkh, bkh = split_cols(wk, bk)
        wvh, bvh = split_cols(wv, bv)
        woh = wo.reshape(N_HEADS, HEAD_DIM, HIDDEN)   # row-split per head

        wq_l.append(wqh); bq_l.append(bqh)
        wk_l.append(wkh); bk_l.append(bkh)
        wv_l.append(wvh); bv_l.append(bvh)
        wo_l.append(woh); bo_l.append(bo.reshape(1, HIDDEN))
        w1_l.append(w1); b1_l.append(b1.reshape(1, INTERMEDIATE))
        w2_l.append(w2); b2_l.append(b2.reshape(1, HIDDEN))

    p["wq"] = jnp.stack(wq_l).astype(jnp.bfloat16)   # [L,nh,H,hd]
    p["bq"] = jnp.stack(bq_l)                         # [L,nh,1,hd] f32
    p["wk"] = jnp.stack(wk_l).astype(jnp.bfloat16)
    p["bk"] = jnp.stack(bk_l)
    p["wv"] = jnp.stack(wv_l).astype(jnp.bfloat16)
    p["bv"] = jnp.stack(bv_l)
    p["wo"] = jnp.stack(wo_l).astype(jnp.bfloat16)   # [L,nh,hd,H]
    p["bo"] = jnp.stack(bo_l)                         # [L,1,H]
    p["ln1_g"] = jnp.ones((N_LAYERS, 1, HIDDEN), jnp.float32)
    p["ln1_b"] = jnp.zeros((N_LAYERS, 1, HIDDEN), jnp.float32)
    p["w1"] = jnp.stack(w1_l).astype(jnp.bfloat16)   # [L,H,I]
    p["b1"] = jnp.stack(b1_l)                         # [L,1,I]
    p["w2"] = jnp.stack(w2_l).astype(jnp.bfloat16)   # [L,I,H]
    p["b2"] = jnp.stack(b2_l)                         # [L,1,H]
    p["ln2_g"] = jnp.ones((N_LAYERS, 1, HIDDEN), jnp.float32)
    p["ln2_b"] = jnp.zeros((N_LAYERS, 1, HIDDEN), jnp.float32)

    # decaylinear1..4 (dim == 1 path): y = c*(x@W + b) + (1-c)*x.  Weights and
    # coef are static at inference, so each back-to-back pair is composed into
    # one affine transform: W_eff = A1 @ A2, b_eff = (c*b1) @ A2 + c*b2 with
    # A_i = c*W_i + (1-c)*I.
    coef = decay_coef(GLOBAL_STEP, RATE1, STEP, STOP_STEP)

    def composed_pair():
        w1d, b1d = dense(HIDDEN, HIDDEN)
        w2d, b2d = dense(HIDDEN, HIDDEN)
        eye = jnp.eye(HIDDEN, dtype=jnp.float32)
        a1 = coef * w1d + (1.0 - coef) * eye
        a2 = coef * w2d + (1.0 - coef) * eye
        w_eff = a1 @ a2
        b_eff = (coef * b1d) @ a2 + coef * b2d
        return w_eff.astype(jnp.bfloat16), b_eff.reshape(1, HIDDEN)

    p["dl12_w"], p["dl12_b"] = composed_pair()     # decaylinear1 ∘ decaylinear2
    p["dl34_w"], p["dl34_b"] = composed_pair()     # decaylinear3 ∘ decaylinear4

    # classification head (kept in plain XLA: B rows / 2 labels << (8,128) tile)
    p["cls_dense_w"], p["cls_dense_b"] = dense(HIDDEN, HIDDEN)
    p["cls_out_w"], p["cls_out_b"] = dense(HIDDEN, NUM_LABELS)
    return p


# ----------------------------- model forward -------------------------------
def forward(params, input_ids, mask):
    B, S = input_ids.shape
    # mask -> [B,1,S]; additive mask = (1 - mask) * -1e9 (matches PyTorch spec)
    add_mask = ((1.0 - mask.astype(jnp.float32)) * -1e9)[:, None, :]

    # RoBERTa embeddings (gathers handled by XLA; everything downstream up to
    # the classification head is ONE fused Pallas kernel)
    pos_mask = (input_ids != PAD_IDX).astype(jnp.int32)
    position_ids = jnp.cumsum(pos_mask, axis=1) * pos_mask + PAD_IDX
    emb = (params["word_emb"][input_ids]
           + params["pos_emb"][position_ids]
           + params["type_emb"][0])                                 # [B,S,H] f32

    hidden = encoder_stack(emb, add_mask, params)                   # [B,S,H] bf16

    # part3: RobertaClassificationHead on the <s> token.  Plain XLA — B=2 rows
    # and 2 labels are far below the (8,128) vreg tile (per perf review).
    cls = hidden[:, 0, :].astype(jnp.float32)
    h = jnp.tanh(cls @ params["cls_dense_w"] + params["cls_dense_b"])
    logits = h @ params["cls_out_w"] + params["cls_out_b"]
    return logits


# ----------------------------- main ----------------------------------------
if __name__ == "__main__":
    key = jax.random.PRNGKey(0)
    kp, ki = jax.random.split(key)
    params = init_params(kp)

    B, S = 2, 16
    input_ids = jax.random.randint(ki, (B, S), 2, VOCAB, dtype=jnp.int32)
    mask = jnp.ones((B, S), jnp.float32)
    # give the second sequence some padding
    input_ids = input_ids.at[1, 12:].set(PAD_IDX)
    mask = mask.at[1, 12:].set(0.0)

    logits = jax.jit(forward)(params, input_ids, mask)
    logits = jax.block_until_ready(logits)
    assert logits.shape == (B, NUM_LABELS)
    assert bool(jnp.all(jnp.isfinite(logits)))
    print("KERNEL_OK")
</pallas_src>

<mosaic_0001>
module attributes {stable_mosaic.version = 11 : i64} {
  func.func @_fused_stack_kernel(%arg0: i32, %arg1: memref<1x16x128xf32, #tpu.memory_space<vmem>>, %arg2: memref<1x1x16xf32, #tpu.memory_space<vmem>>, %arg3: memref<1x128xf32, #tpu.memory_space<vmem>>, %arg4: memref<1x128xf32, #tpu.memory_space<vmem>>, %arg5: memref<3x4x128x32xbf16, #tpu.memory_space<vmem>>, %arg6: memref<3x4x1x32xf32, #tpu.memory_space<vmem>>, %arg7: memref<3x4x128x32xbf16, #tpu.memory_space<vmem>>, %arg8: memref<3x4x1x32xf32, #tpu.memory_space<vmem>>, %arg9: memref<3x4x128x32xbf16, #tpu.memory_space<vmem>>, %arg10: memref<3x4x1x32xf32, #tpu.memory_space<vmem>>, %arg11: memref<3x4x32x128xbf16, #tpu.memory_space<vmem>>, %arg12: memref<3x1x128xf32, #tpu.memory_space<vmem>>, %arg13: memref<3x1x128xf32, #tpu.memory_space<vmem>>, %arg14: memref<3x1x128xf32, #tpu.memory_space<vmem>>, %arg15: memref<3x128x256xbf16, #tpu.memory_space<vmem>>, %arg16: memref<3x1x256xf32, #tpu.memory_space<vmem>>, %arg17: memref<3x256x128xbf16, #tpu.memory_space<vmem>>, %arg18: memref<3x1x128xf32, #tpu.memory_space<vmem>>, %arg19: memref<3x1x128xf32, #tpu.memory_space<vmem>>, %arg20: memref<3x1x128xf32, #tpu.memory_space<vmem>>, %arg21: memref<128x128xbf16, #tpu.memory_space<vmem>>, %arg22: memref<1x128xf32, #tpu.memory_space<vmem>>, %arg23: memref<128x128xbf16, #tpu.memory_space<vmem>>, %arg24: memref<1x128xf32, #tpu.memory_space<vmem>>, %arg25: memref<1x16x128xbf16, #tpu.memory_space<vmem>>) attributes {dimension_semantics = [#tpu.dimension_semantics<parallel>], iteration_bounds = array<i64: 2>, scalar_prefetch = 0 : i64, scratch_operands = 0 : i64, tpu.core_type = #tpu.core_type<tc>, window_params = [{transform_indices = @transform_0, window_bounds = array<i64: 1, 16, 128>}, {transform_indices = @transform_1, window_bounds = array<i64: 1, 1, 16>}, {pipeline_mode = #tpu.pipeline_mode<synchronous>, transform_indices = @transform_2, window_bounds = array<i64: 1, 128>}, {pipeline_mode = #tpu.pipeline_mode<synchronous>, transform_indices = @transform_3, window_bounds = array<i64: 1, 128>}, {pipeline_mode = #tpu.pipeline_mode<synchronous>, transform_indices = @transform_4, window_bounds = array<i64: 3, 4, 128, 32>}, {pipeline_mode = #tpu.pipeline_mode<synchronous>, transform_indices = @transform_5, window_bounds = array<i64: 3, 4, 1, 32>}, {pipeline_mode = #tpu.pipeline_mode<synchronous>, transform_indices = @transform_6, window_bounds = array<i64: 3, 4, 128, 32>}, {pipeline_mode = #tpu.pipeline_mode<synchronous>, transform_indices = @transform_7, window_bounds = array<i64: 3, 4, 1, 32>}, {pipeline_mode = #tpu.pipeline_mode<synchronous>, transform_indices = @transform_8, window_bounds = array<i64: 3, 4, 128, 32>}, {pipeline_mode = #tpu.pipeline_mode<synchronous>, transform_indices = @transform_9, window_bounds = array<i64: 3, 4, 1, 32>}, {pipeline_mode = #tpu.pipeline_mode<synchronous>, transform_indices = @transform_10, window_bounds = array<i64: 3, 4, 32, 128>}, {pipeline_mode = #tpu.pipeline_mode<synchronous>, transform_indices = @transform_11, window_bounds = array<i64: 3, 1, 128>}, {pipeline_mode = #tpu.pipeline_mode<synchronous>, transform_indices = @transform_12, window_bounds = array<i64: 3, 1, 128>}, {pipeline_mode = #tpu.pipeline_mode<synchronous>, transform_indices = @transform_13, window_bounds = array<i64: 3, 1, 128>}, {pipeline_mode = #tpu.pipeline_mode<synchronous>, transform_indices = @transform_14, window_bounds = array<i64: 3, 128, 256>}, {pipeline_mode = #tpu.pipeline_mode<synchronous>, transform_indices = @transform_15, window_bounds = array<i64: 3, 1, 256>}, {pipeline_mode = #tpu.pipeline_mode<synchronous>, transform_indices = @transform_16, window_bounds = array<i64: 3, 256, 128>}, {pipeline_mode = #tpu.pipeline_mode<synchronous>, transform_indices = @transform_17, window_bounds = array<i64: 3, 1, 128>}, {pipeline_mode = #tpu.pipeline_mode<synchronous>, transform_indices = @transform_18, window_bounds = array<i64: 3, 1, 128>}, {pipeline_mode = #tpu.pipeline_mode<synchronous>, transform_indices = @transform_19, window_bounds = array<i64: 3, 1, 128>}, {pipeline_mode = #tpu.pipeline_mode<synchronous>, transform_indices = @transform_20, window_bounds = array<i64: 128, 128>}, {pipeline_mode = #tpu.pipeline_mode<synchronous>, transform_indices = @transform_21, window_bounds = array<i64: 1, 128>}, {pipeline_mode = #tpu.pipeline_mode<synchronous>, transform_indices = @transform_22, window_bounds = array<i64: 128, 128>}, {pipeline_mode = #tpu.pipeline_mode<synchronous>, transform_indices = @transform_23, window_bounds = array<i64: 1, 128>}, {transform_indices = @transform_24, window_bounds = array<i64: 1, 16, 128>}]} {
    %c0 = arith.constant 0 : index
    %c0_0 = arith.constant 0 : index
    %c0_1 = arith.constant 0 : index
    %0 = vector.load %arg1[%c0, %c0_0, %c0_1] : memref<1x16x128xf32, #tpu.memory_space<vmem>>, vector<1x16x128xf32>
    %1 = vector.shape_cast %0 : vector<1x16x128xf32> to vector<16x128xf32>
    %c0_2 = arith.constant 0 : index
    %c0_3 = arith.constant 0 : index
    %2 = vector.load %arg3[%c0_2, %c0_3] : memref<1x128xf32, #tpu.memory_space<vmem>>, vector<1x128xf32>
    %c0_4 = arith.constant 0 : index
    %c0_5 = arith.constant 0 : index
    %3 = vector.load %arg4[%c0_4, %c0_5] : memref<1x128xf32, #tpu.memory_space<vmem>>, vector<1x128xf32>
    %cst = arith.constant dense<0.000000e+00> : vector<16xf32>
    %4 = vector.multi_reduction <add>, %1, %cst [1] : vector<16x128xf32> to vector<16xf32>
    %5 = vector.shape_cast %4 : vector<16xf32> to vector<16x1xf32>
    %cst_6 = arith.constant 1.280000e+02 : f32
    %6 = vector.broadcast %cst_6 : f32 to vector<16x1xf32>
    %7 = arith.divf %5, %6 : vector<16x1xf32>
    %8 = vector.broadcast %7 : vector<16x1xf32> to vector<16x128xf32>
    %9 = arith.subf %1, %8 : vector<16x128xf32>
    %10 = arith.mulf %9, %9 : vector<16x128xf32>
    %cst_7 = arith.constant dense<0.000000e+00> : vector<16xf32>
    %11 = vector.multi_reduction <add>, %10, %cst_7 [1] : vector<16x128xf32> to vector<16xf32>
    %12 = vector.shape_cast %11 : vector<16xf32> to vector<16x1xf32>
    %cst_8 = arith.constant 1.280000e+02 : f32
    %13 = vector.broadcast %cst_8 : f32 to vector<16x1xf32>
    %14 = arith.divf %12, %13 : vector<16x1xf32>
    %15 = vector.broadcast %7 : vector<16x1xf32> to vector<16x128xf32>
    %16 = arith.subf %1, %15 : vector<16x128xf32>
    %cst_9 = arith.constant 9.99999974E-6 : f32
    %17 = vector.broadcast %cst_9 : f32 to vector<16x1xf32>
    %18 = arith.addf %14, %17 : vector<16x1xf32>
    %19 = math.rsqrt %18 : vector<16x1xf32>
    %20 = vector.broadcast %19 : vector<16x1xf32> to vector<16x128xf32>
    %21 = arith.mulf %16, %20 : vector<16x128xf32>
    %22 = vector.broadcast %2 : vector<1x128xf32> to vector<16x128xf32>
    %23 = arith.mulf %21, %22 : vector<16x128xf32>
    %24 = vector.broadcast %3 : vector<1x128xf32> to vector<16x128xf32>
    %25 = arith.addf %23, %24 : vector<16x128xf32>
    %26 = arith.truncf %25 : vector<16x128xf32> to vector<16x128xbf16>
    %c0_10 = arith.constant 0 : index
    %c0_11 = arith.constant 0 : index
    %c0_12 = arith.constant 0 : index
    %27 = vector.load %arg2[%c0_10, %c0_11, %c0_12] : memref<1x1x16xf32, #tpu.memory_space<vmem>>, vector<1x1x16xf32>
    %28 = vector.shape_cast %27 : vector<1x1x16xf32> to vector<1x16xf32>
    %c0_13 = arith.constant 0 : index
    %c0_14 = arith.constant 0 : index
    %c0_15 = arith.constant 0 : index
    %29 = vector.load %arg12[%c0_13, %c0_14, %c0_15] : memref<3x1x128xf32, #tpu.memory_space<vmem>>, vector<1x1x128xf32>
    %30 = vector.shape_cast %29 : vector<1x1x128xf32> to vector<1x128xf32>
    %c0_16 = arith.constant 0 : index
    %c0_17 = arith.constant 0 : index
    %c0_18 = arith.constant 0 : index
    %c0_19 = arith.constant 0 : index
    %31 = vector.load %arg5[%c0_16, %c0_17, %c0_18, %c0_19] : memref<3x4x128x32xbf16, #tpu.memory_space<vmem>>, vector<1x1x128x32xbf16>
    %32 = vector.shape_cast %31 : vector<1x1x128x32xbf16> to vector<128x32xbf16>
    %cst_20 = arith.constant dense<0.000000e+00> : vector<16x32xf32>
    %33 = tpu.matmul %26, %32, %cst_20 {dimension_numbers = #tpu.dot_dimension_numbers<[1], [0], [0], [1], [0, 0, 1, 1], [], []>} : vector<16x128xbf16>, vector<128x32xbf16>, vector<16x32xf32> -> vector<16x32xf32>
    %c0_21 = arith.constant 0 : index
    %c0_22 = arith.constant 0 : index
    %c0_23 = arith.constant 0 : index
    %c0_24 = arith.constant 0 : index
    %34 = vector.load %arg6[%c0_21, %c0_22, %c0_23, %c0_24] : memref<3x4x1x32xf32, #tpu.memory_space<vmem>>, vector<1x1x1x32xf32>
    %35 = vector.shape_cast %34 : vector<1x1x1x32xf32> to vector<1x32xf32>
    %36 = vector.broadcast %35 : vector<1x32xf32> to vector<16x32xf32>
    %37 = arith.addf %33, %36 : vector<16x32xf32>
    %c0_25 = arith.constant 0 : index
    %c0_26 = arith.constant 0 : index
    %c0_27 = arith.constant 0 : index
    %c0_28 = arith.constant 0 : index
    %38 = vector.load %arg7[%c0_25, %c0_26, %c0_27, %c0_28] : memref<3x4x128x32xbf16, #tpu.memory_space<vmem>>, vector<1x1x128x32xbf16>
    %39 = vector.shape_cast %38 : vector<1x1x128x32xbf16> to vector<128x32xbf16>
    %cst_29 = arith.constant dense<0.000000e+00> : vector<16x32xf32>
    %40 = tpu.matmul %26, %39, %cst_29 {dimension_numbers = #tpu.dot_dimension_numbers<[1], [0], [0], [1], [0, 0, 1, 1], [], []>} : vector<16x128xbf16>, vector<128x32xbf16>, vector<16x32xf32> -> vector<16x32xf32>
    %c0_30 = arith.constant 0 : index
    %c0_31 = arith.constant 0 : index
    %c0_32 = arith.constant 0 : index
    %c0_33 = arith.constant 0 : index
    %41 = vector.load %arg8[%c0_30, %c0_31, %c0_32, %c0_33] : memref<3x4x1x32xf32, #tpu.memory_space<vmem>>, vector<1x1x1x32xf32>
    %42 = vector.shape_cast %41 : vector<1x1x1x32xf32> to vector<1x32xf32>
    %43 = vector.broadcast %42 : vector<1x32xf32> to vector<16x32xf32>
    %44 = arith.addf %40, %43 : vector<16x32xf32>
    %c0_34 = arith.constant 0 : index
    %c0_35 = arith.constant 0 : index
    %c0_36 = arith.constant 0 : index
    %c0_37 = arith.constant 0 : index
    %45 = vector.load %arg9[%c0_34, %c0_35, %c0_36, %c0_37] : memref<3x4x128x32xbf16, #tpu.memory_space<vmem>>, vector<1x1x128x32xbf16>
    %46 = vector.shape_cast %45 : vector<1x1x128x32xbf16> to vector<128x32xbf16>
    %cst_38 = arith.constant dense<0.000000e+00> : vector<16x32xf32>
    %47 = tpu.matmul %26, %46, %cst_38 {dimension_numbers = #tpu.dot_dimension_numbers<[1], [0], [0], [1], [0, 0, 1, 1], [], []>} : vector<16x128xbf16>, vector<128x32xbf16>, vector<16x32xf32> -> vector<16x32xf32>
    %c0_39 = arith.constant 0 : index
    %c0_40 = arith.constant 0 : index
    %c0_41 = arith.constant 0 : index
    %c0_42 = arith.constant 0 : index
    %48 = vector.load %arg10[%c0_39, %c0_40, %c0_41, %c0_42] : memref<3x4x1x32xf32, #tpu.memory_space<vmem>>, vector<1x1x1x32xf32>
    %49 = vector.shape_cast %48 : vector<1x1x1x32xf32> to vector<1x32xf32>
    %50 = vector.broadcast %49 : vector<1x32xf32> to vector<16x32xf32>
    %51 = arith.addf %47, %50 : vector<16x32xf32>
    %52 = arith.truncf %37 : vector<16x32xf32> to vector<16x32xbf16>
    %53 = arith.truncf %44 : vector<16x32xf32> to vector<16x32xbf16>
    %cst_43 = arith.constant dense<0.000000e+00> : vector<16x16xf32>
    %54 = tpu.matmul %52, %53, %cst_43 {dimension_numbers = #tpu.dot_dimension_numbers<[1], [1], [0], [0], [0, 0, 1, 0], [], []>} : vector<16x32xbf16>, vector<16x32xbf16>, vector<16x16xf32> -> vector<16x16xf32>
    %55 = vector.broadcast %28 : vector<1x16xf32> to vector<16x16xf32>
    %56 = arith.addf %54, %55 : vector<16x16xf32>
    %cst_44 = arith.constant dense<0xFF800000> : vector<16xf32>
    %57 = vector.multi_reduction <maximumf>, %56, %cst_44 [1] : vector<16x16xf32> to vector<16xf32>
    %58 = vector.shape_cast %57 : vector<16xf32> to vector<16x1xf32>
    %59 = vector.broadcast %58 : vector<16x1xf32> to vector<16x16xf32>
    %60 = arith.subf %56, %59 : vector<16x16xf32>
    %61 = math.exp %60 : vector<16x16xf32>
    %cst_45 = arith.constant dense<0.000000e+00> : vector<16xf32>
    %62 = vector.multi_reduction <add>, %61, %cst_45 [1] : vector<16x16xf32> to vector<16xf32>
    %63 = vector.shape_cast %62 : vector<16xf32> to vector<16x1xf32>
    %64 = tpu.reciprocal %63 {approx = true} : vector<16x1xf32> -> vector<16x1xf32>
    %65 = vector.broadcast %64 : vector<16x1xf32> to vector<16x16xf32>
    %66 = arith.mulf %61, %65 : vector<16x16xf32>
    %67 = arith.truncf %66 : vector<16x16xf32> to vector<16x16xbf16>
    %68 = arith.truncf %51 : vector<16x32xf32> to vector<16x32xbf16>
    %cst_46 = arith.constant dense<0.000000e+00> : vector<16x32xf32>
    %69 = tpu.matmul %67, %68, %cst_46 {dimension_numbers = #tpu.dot_dimension_numbers<[1], [0], [0], [1], [0, 0, 1, 1], [], []>} : vector<16x16xbf16>, vector<16x32xbf16>, vector<16x32xf32> -> vector<16x32xf32>
    %70 = arith.truncf %69 : vector<16x32xf32> to vector<16x32xbf16>
    %c0_47 = arith.constant 0 : index
    %c0_48 = arith.constant 0 : index
    %c0_49 = arith.constant 0 : index
    %c0_50 = arith.constant 0 : index
    %71 = vector.load %arg11[%c0_47, %c0_48, %c0_49, %c0_50] : memref<3x4x32x128xbf16, #tpu.memory_space<vmem>>, vector<1x1x32x128xbf16>
    %72 = vector.shape_cast %71 : vector<1x1x32x128xbf16> to vector<32x128xbf16>
    %cst_51 = arith.constant dense<0.000000e+00> : vector<16x128xf32>
    %73 = tpu.matmul %70, %72, %cst_51 {dimension_numbers = #tpu.dot_dimension_numbers<[1], [0], [0], [1], [0, 0, 1, 1], [], []>} : vector<16x32xbf16>, vector<32x128xbf16>, vector<16x128xf32> -> vector<16x128xf32>
    %74 = vector.broadcast %30 : vector<1x128xf32> to vector<16x128xf32>
    %75 = arith.addf %74, %73 : vector<16x128xf32>
    %c0_52 = arith.constant 0 : index
    %c1 = arith.constant 1 : index
    %c0_53 = arith.constant 0 : index
    %c0_54 = arith.constant 0 : index
    %76 = vector.load %arg5[%c0_52, %c1, %c0_53, %c0_54] : memref<3x4x128x32xbf16, #tpu.memory_space<vmem>>, vector<1x1x128x32xbf16>
    %77 = vector.shape_cast %76 : vector<1x1x128x32xbf16> to vector<128x32xbf16>
    %cst_55 = arith.constant dense<0.000000e+00> : vector<16x32xf32>
    %78 = tpu.matmul %26, %77, %cst_55 {dimension_numbers = #tpu.dot_dimension_numbers<[1], [0], [0], [1], [0, 0, 1, 1], [], []>} : vector<16x128xbf16>, vector<128x32xbf16>, vector<16x32xf32> -> vector<16x32xf32>
    %c0_56 = arith.constant 0 : index
    %c1_57 = arith.constant 1 : index
    %c0_58 = arith.constant 0 : index
    %c0_59 = arith.constant 0 : index
    %79 = vector.load %arg6[%c0_56, %c1_57, %c0_58, %c0_59] : memref<3x4x1x32xf32, #tpu.memory_space<vmem>>, vector<1x1x1x32xf32>
    %80 = vector.shape_cast %79 : vector<1x1x1x32xf32> to vector<1x32xf32>
    %81 = vector.broadcast %80 : vector<1x32xf32> to vector<16x32xf32>
    %82 = arith.addf %78, %81 : vector<16x32xf32>
    %c0_60 = arith.constant 0 : index
    %c1_61 = arith.constant 1 : index
    %c0_62 = arith.constant 0 : index
    %c0_63 = arith.constant 0 : index
    %83 = vector.load %arg7[%c0_60, %c1_61, %c0_62, %c0_63] : memref<3x4x128x32xbf16, #tpu.memory_space<vmem>>, vector<1x1x128x32xbf16>
    %84 = vector.shape_cast %83 : vector<1x1x128x32xbf16> to vector<128x32xbf16>
    %cst_64 = arith.constant dense<0.000000e+00> : vector<16x32xf32>
    %85 = tpu.matmul %26, %84, %cst_64 {dimension_numbers = #tpu.dot_dimension_numbers<[1], [0], [0], [1], [0, 0, 1, 1], [], []>} : vector<16x128xbf16>, vector<128x32xbf16>, vector<16x32xf32> -> vector<16x32xf32>
    %c0_65 = arith.constant 0 : index
    %c1_66 = arith.constant 1 : index
    %c0_67 = arith.constant 0 : index
    %c0_68 = arith.constant 0 : index
    %86 = vector.load %arg8[%c0_65, %c1_66, %c0_67, %c0_68] : memref<3x4x1x32xf32, #tpu.memory_space<vmem>>, vector<1x1x1x32xf32>
    %87 = vector.shape_cast %86 : vector<1x1x1x32xf32> to vector<1x32xf32>
    %88 = vector.broadcast %87 : vector<1x32xf32> to vector<16x32xf32>
    %89 = arith.addf %85, %88 : vector<16x32xf32>
    %c0_69 = arith.constant 0 : index
    %c1_70 = arith.constant 1 : index
    %c0_71 = arith.constant 0 : index
    %c0_72 = arith.constant 0 : index
    %90 = vector.load %arg9[%c0_69, %c1_70, %c0_71, %c0_72] : memref<3x4x128x32xbf16, #tpu.memory_space<vmem>>, vector<1x1x128x32xbf16>
    %91 = vector.shape_cast %90 : vector<1x1x128x32xbf16> to vector<128x32xbf16>
    %cst_73 = arith.constant dense<0.000000e+00> : vector<16x32xf32>
    %92 = tpu.matmul %26, %91, %cst_73 {dimension_numbers = #tpu.dot_dimension_numbers<[1], [0], [0], [1], [0, 0, 1, 1], [], []>} : vector<16x128xbf16>, vector<128x32xbf16>, vector<16x32xf32> -> vector<16x32xf32>
    %c0_74 = arith.constant 0 : index
    %c1_75 = arith.constant 1 : index
    %c0_76 = arith.constant 0 : index
    %c0_77 = arith.constant 0 : index
    %93 = vector.load %arg10[%c0_74, %c1_75, %c0_76, %c0_77] : memref<3x4x1x32xf32, #tpu.memory_space<vmem>>, vector<1x1x1x32xf32>
    %94 = vector.shape_cast %93 : vector<1x1x1x32xf32> to vector<1x32xf32>
    %95 = vector.broadcast %94 : vector<1x32xf32> to vector<16x32xf32>
    %96 = arith.addf %92, %95 : vector<16x32xf32>
    %97 = arith.truncf %82 : vector<16x32xf32> to vector<16x32xbf16>
    %98 = arith.truncf %89 : vector<16x32xf32> to vector<16x32xbf16>
    %cst_78 = arith.constant dense<0.000000e+00> : vector<16x16xf32>
    %99 = tpu.matmul %97, %98, %cst_78 {dimension_numbers = #tpu.dot_dimension_numbers<[1], [1], [0], [0], [0, 0, 1, 0], [], []>} : vector<16x32xbf16>, vector<16x32xbf16>, vector<16x16xf32> -> vector<16x16xf32>
    %100 = vector.broadcast %28 : vector<1x16xf32> to vector<16x16xf32>
    %101 = arith.addf %99, %100 : vector<16x16xf32>
    %cst_79 = arith.constant dense<0xFF800000> : vector<16xf32>
    %102 = vector.multi_reduction <maximumf>, %101, %cst_79 [1] : vector<16x16xf32> to vector<16xf32>
    %103 = vector.shape_cast %102 : vector<16xf32> to vector<16x1xf32>
    %104 = vector.broadcast %103 : vector<16x1xf32> to vector<16x16xf32>
    %105 = arith.subf %101, %104 : vector<16x16xf32>
    %106 = math.exp %105 : vector<16x16xf32>
    %cst_80 = arith.constant dense<0.000000e+00> : vector<16xf32>
    %107 = vector.multi_reduction <add>, %106, %cst_80 [1] : vector<16x16xf32> to vector<16xf32>
    %108 = vector.shape_cast %107 : vector<16xf32> to vector<16x1xf32>
    %109 = tpu.reciprocal %108 {approx = true} : vector<16x1xf32> -> vector<16x1xf32>
    %110 = vector.broadcast %109 : vector<16x1xf32> to vector<16x16xf32>
    %111 = arith.mulf %106, %110 : vector<16x16xf32>
    %112 = arith.truncf %111 : vector<16x16xf32> to vector<16x16xbf16>
    %113 = arith.truncf %96 : vector<16x32xf32> to vector<16x32xbf16>
    %cst_81 = arith.constant dense<0.000000e+00> : vector<16x32xf32>
    %114 = tpu.matmul %112, %113, %cst_81 {dimension_numbers = #tpu.dot_dimension_numbers<[1], [0], [0], [1], [0, 0, 1, 1], [], []>} : vector<16x16xbf16>, vector<16x32xbf16>, vector<16x32xf32> -> vector<16x32xf32>
    %115 = arith.truncf %114 : vector<16x32xf32> to vector<16x32xbf16>
    %c0_82 = arith.constant 0 : index
    %c1_83 = arith.constant 1 : index
    %c0_84 = arith.constant 0 : index
    %c0_85 = arith.constant 0 : index
    %116 = vector.load %arg11[%c0_82, %c1_83, %c0_84, %c0_85] : memref<3x4x32x128xbf16, #tpu.memory_space<vmem>>, vector<1x1x32x128xbf16>
    %117 = vector.shape_cast %116 : vector<1x1x32x128xbf16> to vector<32x128xbf16>
    %cst_86 = arith.constant dense<0.000000e+00> : vector<16x128xf32>
    %118 = tpu.matmul %115, %117, %cst_86 {dimension_numbers = #tpu.dot_dimension_numbers<[1], [0], [0], [1], [0, 0, 1, 1], [], []>} : vector<16x32xbf16>, vector<32x128xbf16>, vector<16x128xf32> -> vector<16x128xf32>
    %119 = arith.addf %75, %118 : vector<16x128xf32>
    %c0_87 = arith.constant 0 : index
    %c2 = arith.constant 2 : index
    %c0_88 = arith.constant 0 : index
    %c0_89 = arith.constant 0 : index
    %120 = vector.load %arg5[%c0_87, %c2, %c0_88, %c0_89] : memref<3x4x128x32xbf16, #tpu.memory_space<vmem>>, vector<1x1x128x32xbf16>
    %121 = vector.shape_cast %120 : vector<1x1x128x32xbf16> to vector<128x32xbf16>
    %cst_90 = arith.constant dense<0.000000e+00> : vector<16x32xf32>
    %122 = tpu.matmul %26, %121, %cst_90 {dimension_numbers = #tpu.dot_dimension_numbers<[1], [0], [0], [1], [0, 0, 1, 1], [], []>} : vector<16x128xbf16>, vector<128x32xbf16>, vector<16x32xf32> -> vector<16x32xf32>
    %c0_91 = arith.constant 0 : index
    %c2_92 = arith.constant 2 : index
    %c0_93 = arith.constant 0 : index
    %c0_94 = arith.constant 0 : index
    %123 = vector.load %arg6[%c0_91, %c2_92, %c0_93, %c0_94] : memref<3x4x1x32xf32, #tpu.memory_space<vmem>>, vector<1x1x1x32xf32>
    %124 = vector.shape_cast %123 : vector<1x1x1x32xf32> to vector<1x32xf32>
    %125 = vector.broadcast %124 : vector<1x32xf32> to vector<16x32xf32>
    %126 = arith.addf %122, %125 : vector<16x32xf32>
    %c0_95 = arith.constant 0 : index
    %c2_96 = arith.constant 2 : index
    %c0_97 = arith.constant 0 : index
    %c0_98 = arith.constant 0 : index
    %127 = vector.load %arg7[%c0_95, %c2_96, %c0_97, %c0_98] : memref<3x4x128x32xbf16, #tpu.memory_space<vmem>>, vector<1x1x128x32xbf16>
    %128 = vector.shape_cast %127 : vector<1x1x128x32xbf16> to vector<128x32xbf16>
    %cst_99 = arith.constant dense<0.000000e+00> : vector<16x32xf32>
    %129 = tpu.matmul %26, %128, %cst_99 {dimension_numbers = #tpu.dot_dimension_numbers<[1], [0], [0], [1], [0, 0, 1, 1], [], []>} : vector<16x128xbf16>, vector<128x32xbf16>, vector<16x32xf32> -> vector<16x32xf32>
    %c0_100 = arith.constant 0 : index
    %c2_101 = arith.constant 2 : index
    %c0_102 = arith.constant 0 : index
    %c0_103 = arith.constant 0 : index
    %130 = vector.load %arg8[%c0_100, %c2_101, %c0_102, %c0_103] : memref<3x4x1x32xf32, #tpu.memory_space<vmem>>, vector<1x1x1x32xf32>
    %131 = vector.shape_cast %130 : vector<1x1x1x32xf32> to vector<1x32xf32>
    %132 = vector.broadcast %131 : vector<1x32xf32> to vector<16x32xf32>
    %133 = arith.addf %129, %132 : vector<16x32xf32>
    %c0_104 = arith.constant 0 : index
    %c2_105 = arith.constant 2 : index
    %c0_106 = arith.constant 0 : index
    %c0_107 = arith.constant 0 : index
    %134 = vector.load %arg9[%c0_104, %c2_105, %c0_106, %c0_107] : memref<3x4x128x32xbf16, #tpu.memory_space<vmem>>, vector<1x1x128x32xbf16>
    %135 = vector.shape_cast %134 : vector<1x1x128x32xbf16> to vector<128x32xbf16>
    %cst_108 = arith.constant dense<0.000000e+00> : vector<16x32xf32>
    %136 = tpu.matmul %26, %135, %cst_108 {dimension_numbers = #tpu.dot_dimension_numbers<[1], [0], [0], [1], [0, 0, 1, 1], [], []>} : vector<16x128xbf16>, vector<128x32xbf16>, vector<16x32xf32> -> vector<16x32xf32>
    %c0_109 = arith.constant 0 : index
    %c2_110 = arith.constant 2 : index
    %c0_111 = arith.constant 0 : index
    %c0_112 = arith.constant 0 : index
    %137 = vector.load %arg10[%c0_109, %c2_110, %c0_111, %c0_112] : memref<3x4x1x32xf32, #tpu.memory_space<vmem>>, vector<1x1x1x32xf32>
    %138 = vector.shape_cast %137 : vector<1x1x1x32xf32> to vector<1x32xf32>
    %139 = vector.broadcast %138 : vector<1x32xf32> to vector<16x32xf32>
    %140 = arith.addf %136, %139 : vector<16x32xf32>
    %141 = arith.truncf %126 : vector<16x32xf32> to vector<16x32xbf16>
    %142 = arith.truncf %133 : vector<16x32xf32> to vector<16x32xbf16>
    %cst_113 = arith.constant dense<0.000000e+00> : vector<16x16xf32>
    %143 = tpu.matmul %141, %142, %cst_113 {dimension_numbers = #tpu.dot_dimension_numbers<[1], [1], [0], [0], [0, 0, 1, 0], [], []>} : vector<16x32xbf16>, vector<16x32xbf16>, vector<16x16xf32> -> vector<16x16xf32>
    %144 = vector.broadcast %28 : vector<1x16xf32> to vector<16x16xf32>
    %145 = arith.addf %143, %144 : vector<16x16xf32>
    %cst_114 = arith.constant dense<0xFF800000> : vector<16xf32>
    %146 = vector.multi_reduction <maximumf>, %145, %cst_114 [1] : vector<16x16xf32> to vector<16xf32>
    %147 = vector.shape_cast %146 : vector<16xf32> to vector<16x1xf32>
    %148 = vector.broadcast %147 : vector<16x1xf32> to vector<16x16xf32>
    %149 = arith.subf %145, %148 : vector<16x16xf32>
    %150 = math.exp %149 : vector<16x16xf32>
    %cst_115 = arith.constant dense<0.000000e+00> : vector<16xf32>
    %151 = vector.multi_reduction <add>, %150, %cst_115 [1] : vector<16x16xf32> to vector<16xf32>
    %152 = vector.shape_cast %151 : vector<16xf32> to vector<16x1xf32>
    %153 = tpu.reciprocal %152 {approx = true} : vector<16x1xf32> -> vector<16x1xf32>
    %154 = vector.broadcast %153 : vector<16x1xf32> to vector<16x16xf32>
    %155 = arith.mulf %150, %154 : vector<16x16xf32>
    %156 = arith.truncf %155 : vector<16x16xf32> to vector<16x16xbf16>
    %157 = arith.truncf %140 : vector<16x32xf32> to vector<16x32xbf16>
    %cst_116 = arith.constant dense<0.000000e+00> : vector<16x32xf32>
    %158 = tpu.matmul %156, %157, %cst_116 {dimension_numbers = #tpu.dot_dimension_numbers<[1], [0], [0], [1], [0, 0, 1, 1], [], []>} : vector<16x16xbf16>, vector<16x32xbf16>, vector<16x32xf32> -> vector<16x32xf32>
    %159 = arith.truncf %158 : vector<16x32xf32> to vector<16x32xbf16>
    %c0_117 = arith.constant 0 : index
    %c2_118 = arith.constant 2 : index
    %c0_119 = arith.constant 0 : index
    %c0_120 = arith.constant 0 : index
    %160 = vector.load %arg11[%c0_117, %c2_118, %c0_119, %c0_120] : memref<3x4x32x128xbf16, #tpu.memory_space<vmem>>, vector<1x1x32x128xbf16>
    %161 = vector.shape_cast %160 : vector<1x1x32x128xbf16> to vector<32x128xbf16>
    %cst_121 = arith.constant dense<0.000000e+00> : vector<16x128xf32>
    %162 = tpu.matmul %159, %161, %cst_121 {dimension_numbers = #tpu.dot_dimension_numbers<[1], [0], [0], [1], [0, 0, 1, 1], [], []>} : vector<16x32xbf16>, vector<32x128xbf16>, vector<16x128xf32> -> vector<16x128xf32>
    %163 = arith.addf %119, %162 : vector<16x128xf32>
    %c0_122 = arith.constant 0 : index
    %c3 = arith.constant 3 : index
    %c0_123 = arith.constant 0 : index
    %c0_124 = arith.constant 0 : index
    %164 = vector.load %arg5[%c0_122, %c3, %c0_123, %c0_124] : memref<3x4x128x32xbf16, #tpu.memory_space<vmem>>, vector<1x1x128x32xbf16>
    %165 = vector.shape_cast %164 : vector<1x1x128x32xbf16> to vector<128x32xbf16>
    %cst_125 = arith.constant dense<0.000000e+00> : vector<16x32xf32>
    %166 = tpu.matmul %26, %165, %cst_125 {dimension_numbers = #tpu.dot_dimension_numbers<[1], [0], [0], [1], [0, 0, 1, 1], [], []>} : vector<16x128xbf16>, vector<128x32xbf16>, vector<16x32xf32> -> vector<16x32xf32>
    %c0_126 = arith.constant 0 : index
    %c3_127 = arith.constant 3 : index
    %c0_128 = arith.constant 0 : index
    %c0_129 = arith.constant 0 : index
    %167 = vector.load %arg6[%c0_126, %c3_127, %c0_128, %c0_129] : memref<3x4x1x32xf32, #tpu.memory_space<vmem>>, vector<1x1x1x32xf32>
    %168 = vector.shape_cast %167 : vector<1x1x1x32xf32> to vector<1x32xf32>
    %169 = vector.broadcast %168 : vector<1x32xf32> to vector<16x32xf32>
    %170 = arith.addf %166, %169 : vector<16x32xf32>
    %c0_130 = arith.constant 0 : index
    %c3_131 = arith.constant 3 : index
    %c0_132 = arith.constant 0 : index
    %c0_133 = arith.constant 0 : index
    %171 = vector.load %arg7[%c0_130, %c3_131, %c0_132, %c0_133] : memref<3x4x128x32xbf16, #tpu.memory_space<vmem>>, vector<1x1x128x32xbf16>
    %172 = vector.shape_cast %171 : vector<1x1x128x32xbf16> to vector<128x32xbf16>
    %cst_134 = arith.constant dense<0.000000e+00> : vector<16x32xf32>
    %173 = tpu.matmul %26, %172, %cst_134 {dimension_numbers = #tpu.dot_dimension_numbers<[1], [0], [0], [1], [0, 0, 1, 1], [], []>} : vector<16x128xbf16>, vector<128x32xbf16>, vector<16x32xf32> -> vector<16x32xf32>
    %c0_135 = arith.constant 0 : index
    %c3_136 = arith.constant 3 : index
    %c0_137 = arith.constant 0 : index
    %c0_138 = arith.constant 0 : index
    %174 = vector.load %arg8[%c0_135, %c3_136, %c0_137, %c0_138] : memref<3x4x1x32xf32, #tpu.memory_space<vmem>>, vector<1x1x1x32xf32>
    %175 = vector.shape_cast %174 : vector<1x1x1x32xf32> to vector<1x32xf32>
    %176 = vector.broadcast %175 : vector<1x32xf32> to vector<16x32xf32>
    %177 = arith.addf %173, %176 : vector<16x32xf32>
    %c0_139 = arith.constant 0 : index
    %c3_140 = arith.constant 3 : index
    %c0_141 = arith.constant 0 : index
    %c0_142 = arith.constant 0 : index
    %178 = vector.load %arg9[%c0_139, %c3_140, %c0_141, %c0_142] : memref<3x4x128x32xbf16, #tpu.memory_space<vmem>>, vector<1x1x128x32xbf16>
    %179 = vector.shape_cast %178 : vector<1x1x128x32xbf16> to vector<128x32xbf16>
    %cst_143 = arith.constant dense<0.000000e+00> : vector<16x32xf32>
    %180 = tpu.matmul %26, %179, %cst_143 {dimension_numbers = #tpu.dot_dimension_numbers<[1], [0], [0], [1], [0, 0, 1, 1], [], []>} : vector<16x128xbf16>, vector<128x32xbf16>, vector<16x32xf32> -> vector<16x32xf32>
    %c0_144 = arith.constant 0 : index
    %c3_145 = arith.constant 3 : index
    %c0_146 = arith.constant 0 : index
    %c0_147 = arith.constant 0 : index
    %181 = vector.load %arg10[%c0_144, %c3_145, %c0_146, %c0_147] : memref<3x4x1x32xf32, #tpu.memory_space<vmem>>, vector<1x1x1x32xf32>
    %182 = vector.shape_cast %181 : vector<1x1x1x32xf32> to vector<1x32xf32>
    %183 = vector.broadcast %182 : vector<1x32xf32> to vector<16x32xf32>
    %184 = arith.addf %180, %183 : vector<16x32xf32>
    %185 = arith.truncf %170 : vector<16x32xf32> to vector<16x32xbf16>
    %186 = arith.truncf %177 : vector<16x32xf32> to vector<16x32xbf16>
    %cst_148 = arith.constant dense<0.000000e+00> : vector<16x16xf32>
    %187 = tpu.matmul %185, %186, %cst_148 {dimension_numbers = #tpu.dot_dimension_numbers<[1], [1], [0], [0], [0, 0, 1, 0], [], []>} : vector<16x32xbf16>, vector<16x32xbf16>, vector<16x16xf32> -> vector<16x16xf32>
    %188 = vector.broadcast %28 : vector<1x16xf32> to vector<16x16xf32>
    %189 = arith.addf %187, %188 : vector<16x16xf32>
    %cst_149 = arith.constant dense<0xFF800000> : vector<16xf32>
    %190 = vector.multi_reduction <maximumf>, %189, %cst_149 [1] : vector<16x16xf32> to vector<16xf32>
    %191 = vector.shape_cast %190 : vector<16xf32> to vector<16x1xf32>
    %192 = vector.broadcast %191 : vector<16x1xf32> to vector<16x16xf32>
    %193 = arith.subf %189, %192 : vector<16x16xf32>
    %194 = math.exp %193 : vector<16x16xf32>
    %cst_150 = arith.constant dense<0.000000e+00> : vector<16xf32>
    %195 = vector.multi_reduction <add>, %194, %cst_150 [1] : vector<16x16xf32> to vector<16xf32>
    %196 = vector.shape_cast %195 : vector<16xf32> to vector<16x1xf32>
    %197 = tpu.reciprocal %196 {approx = true} : vector<16x1xf32> -> vector<16x1xf32>
    %198 = vector.broadcast %197 : vector<16x1xf32> to vector<16x16xf32>
    %199 = arith.mulf %194, %198 : vector<16x16xf32>
    %200 = arith.truncf %199 : vector<16x16xf32> to vector<16x16xbf16>
    %201 = arith.truncf %184 : vector<16x32xf32> to vector<16x32xbf16>
    %cst_151 = arith.constant dense<0.000000e+00> : vector<16x32xf32>
    %202 = tpu.matmul %200, %201, %cst_151 {dimension_numbers = #tpu.dot_dimension_numbers<[1], [0], [0], [1], [0, 0, 1, 1], [], []>} : vector<16x16xbf16>, vector<16x32xbf16>, vector<16x32xf32> -> vector<16x32xf32>
    %203 = arith.truncf %202 : vector<16x32xf32> to vector<16x32xbf16>
    %c0_152 = arith.constant 0 : index
    %c3_153 = arith.constant 3 : index
    %c0_154 = arith.constant 0 : index
    %c0_155 = arith.constant 0 : index
    %204 = vector.load %arg11[%c0_152, %c3_153, %c0_154, %c0_155] : memref<3x4x32x128xbf16, #tpu.memory_space<vmem>>, vector<1x1x32x128xbf16>
    %205 = vector.shape_cast %204 : vector<1x1x32x128xbf16> to vector<32x128xbf16>
    %cst_156 = arith.constant dense<0.000000e+00> : vector<16x128xf32>
    %206 = tpu.matmul %203, %205, %cst_156 {dimension_numbers = #tpu.dot_dimension_numbers<[1], [0], [0], [1], [0, 0, 1, 1], [], []>} : vector<16x32xbf16>, vector<32x128xbf16>, vector<16x128xf32> -> vector<16x128xf32>
    %207 = arith.addf %163, %206 : vector<16x128xf32>
    %208 = arith.extf %26 : vector<16x128xbf16> to vector<16x128xf32>
    %209 = arith.addf %207, %208 : vector<16x128xf32>
    %c0_157 = arith.constant 0 : index
    %c0_158 = arith.constant 0 : index
    %c0_159 = arith.constant 0 : index
    %210 = vector.load %arg13[%c0_157, %c0_158, %c0_159] : memref<3x1x128xf32, #tpu.memory_space<vmem>>, vector<1x1x128xf32>
    %211 = vector.shape_cast %210 : vector<1x1x128xf32> to vector<1x128xf32>
    %c0_160 = arith.constant 0 : index
    %c0_161 = arith.constant 0 : index
    %c0_162 = arith.constant 0 : index
    %212 = vector.load %arg14[%c0_160, %c0_161, %c0_162] : memref<3x1x128xf32, #tpu.memory_space<vmem>>, vector<1x1x128xf32>
    %213 = vector.shape_cast %212 : vector<1x1x128xf32> to vector<1x128xf32>
    %cst_163 = arith.constant dense<0.000000e+00> : vector<16xf32>
    %214 = vector.multi_reduction <add>, %209, %cst_163 [1] : vector<16x128xf32> to vector<16xf32>
    %215 = vector.shape_cast %214 : vector<16xf32> to vector<16x1xf32>
    %cst_164 = arith.constant 1.280000e+02 : f32
    %216 = vector.broadcast %cst_164 : f32 to vector<16x1xf32>
    %217 = arith.divf %215, %216 : vector<16x1xf32>
    %218 = vector.broadcast %217 : vector<16x1xf32> to vector<16x128xf32>
    %219 = arith.subf %209, %218 : vector<16x128xf32>
    %220 = arith.mulf %219, %219 : vector<16x128xf32>
    %cst_165 = arith.constant dense<0.000000e+00> : vector<16xf32>
    %221 = vector.multi_reduction <add>, %220, %cst_165 [1] : vector<16x128xf32> to vector<16xf32>
    %222 = vector.shape_cast %221 : vector<16xf32> to vector<16x1xf32>
    %cst_166 = arith.constant 1.280000e+02 : f32
    %223 = vector.broadcast %cst_166 : f32 to vector<16x1xf32>
    %224 = arith.divf %222, %223 : vector<16x1xf32>
    %225 = vector.broadcast %217 : vector<16x1xf32> to vector<16x128xf32>
    %226 = arith.subf %209, %225 : vector<16x128xf32>
    %cst_167 = arith.constant 9.99999974E-6 : f32
    %227 = vector.broadcast %cst_167 : f32 to vector<16x1xf32>
    %228 = arith.addf %224, %227 : vector<16x1xf32>
    %229 = math.rsqrt %228 : vector<16x1xf32>
    %230 = vector.broadcast %229 : vector<16x1xf32> to vector<16x128xf32>
    %231 = arith.mulf %226, %230 : vector<16x128xf32>
    %232 = vector.broadcast %211 : vector<1x128xf32> to vector<16x128xf32>
    %233 = arith.mulf %231, %232 : vector<16x128xf32>
    %234 = vector.broadcast %213 : vector<1x128xf32> to vector<16x128xf32>
    %235 = arith.addf %233, %234 : vector<16x128xf32>
    %236 = arith.truncf %235 : vector<16x128xf32> to vector<16x128xbf16>
    %c0_168 = arith.constant 0 : index
    %c0_169 = arith.constant 0 : index
    %c0_170 = arith.constant 0 : index
    %237 = vector.load %arg15[%c0_168, %c0_169, %c0_170] : memref<3x128x256xbf16, #tpu.memory_space<vmem>>, vector<1x128x256xbf16>
    %238 = vector.shape_cast %237 : vector<1x128x256xbf16> to vector<128x256xbf16>
    %cst_171 = arith.constant dense<0.000000e+00> : vector<16x256xf32>
    %239 = tpu.matmul %236, %238, %cst_171 {dimension_numbers = #tpu.dot_dimension_numbers<[1], [0], [0], [1], [0, 0, 1, 1], [], []>} : vector<16x128xbf16>, vector<128x256xbf16>, vector<16x256xf32> -> vector<16x256xf32>
    %c0_172 = arith.constant 0 : index
    %c0_173 = arith.constant 0 : index
    %c0_174 = arith.constant 0 : index
    %240 = vector.load %arg16[%c0_172, %c0_173, %c0_174] : memref<3x1x256xf32, #tpu.memory_space<vmem>>, vector<1x1x256xf32>
    %241 = vector.shape_cast %240 : vector<1x1x256xf32> to vector<1x256xf32>
    %242 = vector.broadcast %241 : vector<1x256xf32> to vector<16x256xf32>
    %243 = arith.addf %239, %242 : vector<16x256xf32>
    %244 = arith.mulf %243, %243 : vector<16x256xf32>
    %245 = arith.mulf %243, %244 : vector<16x256xf32>
    %cst_175 = arith.constant 4.471500e-02 : f32
    %246 = vector.broadcast %cst_175 : f32 to vector<16x256xf32>
    %247 = arith.mulf %246, %245 : vector<16x256xf32>
    %248 = arith.addf %243, %247 : vector<16x256xf32>
    %cst_176 = arith.constant 0.797884583 : f32
    %249 = vector.broadcast %cst_176 : f32 to vector<16x256xf32>
    %250 = arith.mulf %249, %248 : vector<16x256xf32>
    %251 = math.tanh %250 : vector<16x256xf32>
    %cst_177 = arith.constant 1.000000e+00 : f32
    %252 = vector.broadcast %cst_177 : f32 to vector<16x256xf32>
    %253 = arith.addf %252, %251 : vector<16x256xf32>
    %cst_178 = arith.constant 5.000000e-01 : f32
    %254 = vector.broadcast %cst_178 : f32 to vector<16x256xf32>
    %255 = arith.mulf %254, %253 : vector<16x256xf32>
    %256 = arith.mulf %243, %255 : vector<16x256xf32>
    %257 = arith.truncf %256 : vector<16x256xf32> to vector<16x256xbf16>
    %c0_179 = arith.constant 0 : index
    %c0_180 = arith.constant 0 : index
    %c0_181 = arith.constant 0 : index
    %258 = vector.load %arg17[%c0_179, %c0_180, %c0_181] : memref<3x256x128xbf16, #tpu.memory_space<vmem>>, vector<1x256x128xbf16>
    %259 = vector.shape_cast %258 : vector<1x256x128xbf16> to vector<256x128xbf16>
    %cst_182 = arith.constant dense<0.000000e+00> : vector<16x128xf32>
    %260 = tpu.matmul %257, %259, %cst_182 {dimension_numbers = #tpu.dot_dimension_numbers<[1], [0], [0], [1], [0, 0, 1, 1], [], []>} : vector<16x256xbf16>, vector<256x128xbf16>, vector<16x128xf32> -> vector<16x128xf32>
    %c0_183 = arith.constant 0 : index
    %c0_184 = arith.constant 0 : index
    %c0_185 = arith.constant 0 : index
    %261 = vector.load %arg18[%c0_183, %c0_184, %c0_185] : memref<3x1x128xf32, #tpu.memory_space<vmem>>, vector<1x1x128xf32>
    %262 = vector.shape_cast %261 : vector<1x1x128xf32> to vector<1x128xf32>
    %263 = vector.broadcast %262 : vector<1x128xf32> to vector<16x128xf32>
    %264 = arith.addf %260, %263 : vector<16x128xf32>
    %265 = arith.extf %236 : vector<16x128xbf16> to vector<16x128xf32>
    %266 = arith.addf %264, %265 : vector<16x128xf32>
    %c0_186 = arith.constant 0 : index
    %c0_187 = arith.constant 0 : index
    %c0_188 = arith.constant 0 : index
    %267 = vector.load %arg19[%c0_186, %c0_187, %c0_188] : memref<3x1x128xf32, #tpu.memory_space<vmem>>, vector<1x1x128xf32>
    %268 = vector.shape_cast %267 : vector<1x1x128xf32> to vector<1x128xf32>
    %c0_189 = arith.constant 0 : index
    %c0_190 = arith.constant 0 : index
    %c0_191 = arith.constant 0 : index
    %269 = vector.load %arg20[%c0_189, %c0_190, %c0_191] : memref<3x1x128xf32, #tpu.memory_space<vmem>>, vector<1x1x128xf32>
    %270 = vector.shape_cast %269 : vector<1x1x128xf32> to vector<1x128xf32>
    %cst_192 = arith.constant dense<0.000000e+00> : vector<16xf32>
    %271 = vector.multi_reduction <add>, %266, %cst_192 [1] : vector<16x128xf32> to vector<16xf32>
    %272 = vector.shape_cast %271 : vector<16xf32> to vector<16x1xf32>
    %cst_193 = arith.constant 1.280000e+02 : f32
    %273 = vector.broadcast %cst_193 : f32 to vector<16x1xf32>
    %274 = arith.divf %272, %273 : vector<16x1xf32>
    %275 = vector.broadcast %274 : vector<16x1xf32> to vector<16x128xf32>
    %276 = arith.subf %266, %275 : vector<16x128xf32>
    %277 = arith.mulf %276, %276 : vector<16x128xf32>
    %cst_194 = arith.constant dense<0.000000e+00> : vector<16xf32>
    %278 = vector.multi_reduction <add>, %277, %cst_194 [1] : vector<16x128xf32> to vector<16xf32>
    %279 = vector.shape_cast %278 : vector<16xf32> to vector<16x1xf32>
    %cst_195 = arith.constant 1.280000e+02 : f32
    %280 = vector.broadcast %cst_195 : f32 to vector<16x1xf32>
    %281 = arith.divf %279, %280 : vector<16x1xf32>
    %282 = vector.broadcast %274 : vector<16x1xf32> to vector<16x128xf32>
    %283 = arith.subf %266, %282 : vector<16x128xf32>
    %cst_196 = arith.constant 9.99999974E-6 : f32
    %284 = vector.broadcast %cst_196 : f32 to vector<16x1xf32>
    %285 = arith.addf %281, %284 : vector<16x1xf32>
    %286 = math.rsqrt %285 : vector<16x1xf32>
    %287 = vector.broadcast %286 : vector<16x1xf32> to vector<16x128xf32>
    %288 = arith.mulf %283, %287 : vector<16x128xf32>
    %289 = vector.broadcast %268 : vector<1x128xf32> to vector<16x128xf32>
    %290 = arith.mulf %288, %289 : vector<16x128xf32>
    %291 = vector.broadcast %270 : vector<1x128xf32> to vector<16x128xf32>
    %292 = arith.addf %290, %291 : vector<16x128xf32>
    %293 = arith.truncf %292 : vector<16x128xf32> to vector<16x128xbf16>
    %c0_197 = arith.constant 0 : index
    %c0_198 = arith.constant 0 : index
    %294 = vector.load %arg21[%c0_197, %c0_198] : memref<128x128xbf16, #tpu.memory_space<vmem>>, vector<128x128xbf16>
    %cst_199 = arith.constant dense<0.000000e+00> : vector<16x128xf32>
    %295 = tpu.matmul %293, %294, %cst_199 {dimension_numbers = #tpu.dot_dimension_numbers<[1], [0], [0], [1], [0, 0, 1, 1], [], []>} : vector<16x128xbf16>, vector<128x128xbf16>, vector<16x128xf32> -> vector<16x128xf32>
    %c0_200 = arith.constant 0 : index
    %c0_201 = arith.constant 0 : index
    %296 = vector.load %arg22[%c0_200, %c0_201] : memref<1x128xf32, #tpu.memory_space<vmem>>, vector<1x128xf32>
    %297 = vector.broadcast %296 : vector<1x128xf32> to vector<16x128xf32>
    %298 = arith.addf %295, %297 : vector<16x128xf32>
    %299 = arith.truncf %298 : vector<16x128xf32> to vector<16x128xbf16>
    %c1_202 = arith.constant 1 : index
    %c0_203 = arith.constant 0 : index
    %c0_204 = arith.constant 0 : index
    %300 = vector.load %arg12[%c1_202, %c0_203, %c0_204] : memref<3x1x128xf32, #tpu.memory_space<vmem>>, vector<1x1x128xf32>
    %301 = vector.shape_cast %300 : vector<1x1x128xf32> to vector<1x128xf32>
    %c1_205 = arith.constant 1 : index
    %c0_206 = arith.constant 0 : index
    %c0_207 = arith.constant 0 : index
    %c0_208 = arith.constant 0 : index
    %302 = vector.load %arg5[%c1_205, %c0_206, %c0_207, %c0_208] : memref<3x4x128x32xbf16, #tpu.memory_space<vmem>>, vector<1x1x128x32xbf16>
    %303 = vector.shape_cast %302 : vector<1x1x128x32xbf16> to vector<128x32xbf16>
    %cst_209 = arith.constant dense<0.000000e+00> : vector<16x32xf32>
    %304 = tpu.matmul %299, %303, %cst_209 {dimension_numbers = #tpu.dot_dimension_numbers<[1], [0], [0], [1], [0, 0, 1, 1], [], []>} : vector<16x128xbf16>, vector<128x32xbf16>, vector<16x32xf32> -> vector<16x32xf32>
    %c1_210 = arith.constant 1 : index
    %c0_211 = arith.constant 0 : index
    %c0_212 = arith.constant 0 : index
    %c0_213 = arith.constant 0 : index
    %305 = vector.load %arg6[%c1_210, %c0_211, %c0_212, %c0_213] : memref<3x4x1x32xf32, #tpu.memory_space<vmem>>, vector<1x1x1x32xf32>
    %306 = vector.shape_cast %305 : vector<1x1x1x32xf32> to vector<1x32xf32>
    %307 = vector.broadcast %306 : vector<1x32xf32> to vector<16x32xf32>
    %308 = arith.addf %304, %307 : vector<16x32xf32>
    %c1_214 = arith.constant 1 : index
    %c0_215 = arith.constant 0 : index
    %c0_216 = arith.constant 0 : index
    %c0_217 = arith.constant 0 : index
    %309 = vector.load %arg7[%c1_214, %c0_215, %c0_216, %c0_217] : memref<3x4x128x32xbf16, #tpu.memory_space<vmem>>, vector<1x1x128x32xbf16>
    %310 = vector.shape_cast %309 : vector<1x1x128x32xbf16> to vector<128x32xbf16>
    %cst_218 = arith.constant dense<0.000000e+00> : vector<16x32xf32>
    %311 = tpu.matmul %299, %310, %cst_218 {dimension_numbers = #tpu.dot_dimension_numbers<[1], [0], [0], [1], [0, 0, 1, 1], [], []>} : vector<16x128xbf16>, vector<128x32xbf16>, vector<16x32xf32> -> vector<16x32xf32>
    %c1_219 = arith.constant 1 : index
    %c0_220 = arith.constant 0 : index
    %c0_221 = arith.constant 0 : index
    %c0_222 = arith.constant 0 : index
    %312 = vector.load %arg8[%c1_219, %c0_220, %c0_221, %c0_222] : memref<3x4x1x32xf32, #tpu.memory_space<vmem>>, vector<1x1x1x32xf32>
    %313 = vector.shape_cast %312 : vector<1x1x1x32xf32> to vector<1x32xf32>
    %314 = vector.broadcast %313 : vector<1x32xf32> to vector<16x32xf32>
    %315 = arith.addf %311, %314 : vector<16x32xf32>
    %c1_223 = arith.constant 1 : index
    %c0_224 = arith.constant 0 : index
    %c0_225 = arith.constant 0 : index
    %c0_226 = arith.constant 0 : index
    %316 = vector.load %arg9[%c1_223, %c0_224, %c0_225, %c0_226] : memref<3x4x128x32xbf16, #tpu.memory_space<vmem>>, vector<1x1x128x32xbf16>
    %317 = vector.shape_cast %316 : vector<1x1x128x32xbf16> to vector<128x32xbf16>
    %cst_227 = arith.constant dense<0.000000e+00> : vector<16x32xf32>
    %318 = tpu.matmul %299, %317, %cst_227 {dimension_numbers = #tpu.dot_dimension_numbers<[1], [0], [0], [1], [0, 0, 1, 1], [], []>} : vector<16x128xbf16>, vector<128x32xbf16>, vector<16x32xf32> -> vector<16x32xf32>
    %c1_228 = arith.constant 1 : index
    %c0_229 = arith.constant 0 : index
    %c0_230 = arith.constant 0 : index
    %c0_231 = arith.constant 0 : index
    %319 = vector.load %arg10[%c1_228, %c0_229, %c0_230, %c0_231] : memref<3x4x1x32xf32, #tpu.memory_space<vmem>>, vector<1x1x1x32xf32>
    %320 = vector.shape_cast %319 : vector<1x1x1x32xf32> to vector<1x32xf32>
    %321 = vector.broadcast %320 : vector<1x32xf32> to vector<16x32xf32>
    %322 = arith.addf %318, %321 : vector<16x32xf32>
    %323 = arith.truncf %308 : vector<16x32xf32> to vector<16x32xbf16>
    %324 = arith.truncf %315 : vector<16x32xf32> to vector<16x32xbf16>
    %cst_232 = arith.constant dense<0.000000e+00> : vector<16x16xf32>
    %325 = tpu.matmul %323, %324, %cst_232 {dimension_numbers = #tpu.dot_dimension_numbers<[1], [1], [0], [0], [0, 0, 1, 0], [], []>} : vector<16x32xbf16>, vector<16x32xbf16>, vector<16x16xf32> -> vector<16x16xf32>
    %326 = vector.broadcast %28 : vector<1x16xf32> to vector<16x16xf32>
    %327 = arith.addf %325, %326 : vector<16x16xf32>
    %cst_233 = arith.constant dense<0xFF800000> : vector<16xf32>
    %328 = vector.multi_reduction <maximumf>, %327, %cst_233 [1] : vector<16x16xf32> to vector<16xf32>
    %329 = vector.shape_cast %328 : vector<16xf32> to vector<16x1xf32>
    %330 = vector.broadcast %329 : vector<16x1xf32> to vector<16x16xf32>
    %331 = arith.subf %327, %330 : vector<16x16xf32>
    %332 = math.exp %331 : vector<16x16xf32>
    %cst_234 = arith.constant dense<0.000000e+00> : vector<16xf32>
    %333 = vector.multi_reduction <add>, %332, %cst_234 [1] : vector<16x16xf32> to vector<16xf32>
    %334 = vector.shape_cast %333 : vector<16xf32> to vector<16x1xf32>
    %335 = tpu.reciprocal %334 {approx = true} : vector<16x1xf32> -> vector<16x1xf32>
    %336 = vector.broadcast %335 : vector<16x1xf32> to vector<16x16xf32>
    %337 = arith.mulf %332, %336 : vector<16x16xf32>
    %338 = arith.truncf %337 : vector<16x16xf32> to vector<16x16xbf16>
    %339 = arith.truncf %322 : vector<16x32xf32> to vector<16x32xbf16>
    %cst_235 = arith.constant dense<0.000000e+00> : vector<16x32xf32>
    %340 = tpu.matmul %338, %339, %cst_235 {dimension_numbers = #tpu.dot_dimension_numbers<[1], [0], [0], [1], [0, 0, 1, 1], [], []>} : vector<16x16xbf16>, vector<16x32xbf16>, vector<16x32xf32> -> vector<16x32xf32>
    %341 = arith.truncf %340 : vector<16x32xf32> to vector<16x32xbf16>
    %c1_236 = arith.constant 1 : index
    %c0_237 = arith.constant 0 : index
    %c0_238 = arith.constant 0 : index
    %c0_239 = arith.constant 0 : index
    %342 = vector.load %arg11[%c1_236, %c0_237, %c0_238, %c0_239] : memref<3x4x32x128xbf16, #tpu.memory_space<vmem>>, vector<1x1x32x128xbf16>
    %343 = vector.shape_cast %342 : vector<1x1x32x128xbf16> to vector<32x128xbf16>
    %cst_240 = arith.constant dense<0.000000e+00> : vector<16x128xf32>
    %344 = tpu.matmul %341, %343, %cst_240 {dimension_numbers = #tpu.dot_dimension_numbers<[1], [0], [0], [1], [0, 0, 1, 1], [], []>} : vector<16x32xbf16>, vector<32x128xbf16>, vector<16x128xf32> -> vector<16x128xf32>
    %345 = vector.broadcast %301 : vector<1x128xf32> to vector<16x128xf32>
    %346 = arith.addf %345, %344 : vector<16x128xf32>
    %c1_241 = arith.constant 1 : index
    %c1_242 = arith.constant 1 : index
    %c0_243 = arith.constant 0 : index
    %c0_244 = arith.constant 0 : index
    %347 = vector.load %arg5[%c1_241, %c1_242, %c0_243, %c0_244] : memref<3x4x128x32xbf16, #tpu.memory_space<vmem>>, vector<1x1x128x32xbf16>
    %348 = vector.shape_cast %347 : vector<1x1x128x32xbf16> to vector<128x32xbf16>
    %cst_245 = arith.constant dense<0.000000e+00> : vector<16x32xf32>
    %349 = tpu.matmul %299, %348, %cst_245 {dimension_numbers = #tpu.dot_dimension_numbers<[1], [0], [0], [1], [0, 0, 1, 1], [], []>} : vector<16x128xbf16>, vector<128x32xbf16>, vector<16x32xf32> -> vector<16x32xf32>
    %c1_246 = arith.constant 1 : index
    %c1_247 = arith.constant 1 : index
    %c0_248 = arith.constant 0 : index
    %c0_249 = arith.constant 0 : index
    %350 = vector.load %arg6[%c1_246, %c1_247, %c0_248, %c0_249] : memref<3x4x1x32xf32, #tpu.memory_space<vmem>>, vector<1x1x1x32xf32>
    %351 = vector.shape_cast %350 : vector<1x1x1x32xf32> to vector<1x32xf32>
    %352 = vector.broadcast %351 : vector<1x32xf32> to vector<16x32xf32>
    %353 = arith.addf %349, %352 : vector<16x32xf32>
    %c1_250 = arith.constant 1 : index
    %c1_251 = arith.constant 1 : index
    %c0_252 = arith.constant 0 : index
    %c0_253 = arith.constant 0 : index
    %354 = vector.load %arg7[%c1_250, %c1_251, %c0_252, %c0_253] : memref<3x4x128x32xbf16, #tpu.memory_space<vmem>>, vector<1x1x128x32xbf16>
    %355 = vector.shape_cast %354 : vector<1x1x128x32xbf16> to vector<128x32xbf16>
    %cst_254 = arith.constant dense<0.000000e+00> : vector<16x32xf32>
    %356 = tpu.matmul %299, %355, %cst_254 {dimension_numbers = #tpu.dot_dimension_numbers<[1], [0], [0], [1], [0, 0, 1, 1], [], []>} : vector<16x128xbf16>, vector<128x32xbf16>, vector<16x32xf32> -> vector<16x32xf32>
    %c1_255 = arith.constant 1 : index
    %c1_256 = arith.constant 1 : index
    %c0_257 = arith.constant 0 : index
    %c0_258 = arith.constant 0 : index
    %357 = vector.load %arg8[%c1_255, %c1_256, %c0_257, %c0_258] : memref<3x4x1x32xf32, #tpu.memory_space<vmem>>, vector<1x1x1x32xf32>
    %358 = vector.shape_cast %357 : vector<1x1x1x32xf32> to vector<1x32xf32>
    %359 = vector.broadcast %358 : vector<1x32xf32> to vector<16x32xf32>
    %360 = arith.addf %356, %359 : vector<16x32xf32>
    %c1_259 = arith.constant 1 : index
    %c1_260 = arith.constant 1 : index
    %c0_261 = arith.constant 0 : index
    %c0_262 = arith.constant 0 : index
    %361 = vector.load %arg9[%c1_259, %c1_260, %c0_261, %c0_262] : memref<3x4x128x32xbf16, #tpu.memory_space<vmem>>, vector<1x1x128x32xbf16>
    %362 = vector.shape_cast %361 : vector<1x1x128x32xbf16> to vector<128x32xbf16>
    %cst_263 = arith.constant dense<0.000000e+00> : vector<16x32xf32>
    %363 = tpu.matmul %299, %362, %cst_263 {dimension_numbers = #tpu.dot_dimension_numbers<[1], [0], [0], [1], [0, 0, 1, 1], [], []>} : vector<16x128xbf16>, vector<128x32xbf16>, vector<16x32xf32> -> vector<16x32xf32>
    %c1_264 = arith.constant 1 : index
    %c1_265 = arith.constant 1 : index
    %c0_266 = arith.constant 0 : index
    %c0_267 = arith.constant 0 : index
    %364 = vector.load %arg10[%c1_264, %c1_265, %c0_266, %c0_267] : memref<3x4x1x32xf32, #tpu.memory_space<vmem>>, vector<1x1x1x32xf32>
    %365 = vector.shape_cast %364 : vector<1x1x1x32xf32> to vector<1x32xf32>
    %366 = vector.broadcast %365 : vector<1x32xf32> to vector<16x32xf32>
    %367 = arith.addf %363, %366 : vector<16x32xf32>
    %368 = arith.truncf %353 : vector<16x32xf32> to vector<16x32xbf16>
    %369 = arith.truncf %360 : vector<16x32xf32> to vector<16x32xbf16>
    %cst_268 = arith.constant dense<0.000000e+00> : vector<16x16xf32>
    %370 = tpu.matmul %368, %369, %cst_268 {dimension_numbers = #tpu.dot_dimension_numbers<[1], [1], [0], [0], [0, 0, 1, 0], [], []>} : vector<16x32xbf16>, vector<16x32xbf16>, vector<16x16xf32> -> vector<16x16xf32>
    %371 = vector.broadcast %28 : vector<1x16xf32> to vector<16x16xf32>
    %372 = arith.addf %370, %371 : vector<16x16xf32>
    %cst_269 = arith.constant dense<0xFF800000> : vector<16xf32>
    %373 = vector.multi_reduction <maximumf>, %372, %cst_269 [1] : vector<16x16xf32> to vector<16xf32>
    %374 = vector.shape_cast %373 : vector<16xf32> to vector<16x1xf32>
    %375 = vector.broadcast %374 : vector<16x1xf32> to vector<16x16xf32>
    %376 = arith.subf %372, %375 : vector<16x16xf32>
    %377 = math.exp %376 : vector<16x16xf32>
    %cst_270 = arith.constant dense<0.000000e+00> : vector<16xf32>
    %378 = vector.multi_reduction <add>, %377, %cst_270 [1] : vector<16x16xf32> to vector<16xf32>
    %379 = vector.shape_cast %378 : vector<16xf32> to vector<16x1xf32>
    %380 = tpu.reciprocal %379 {approx = true} : vector<16x1xf32> -> vector<16x1xf32>
    %381 = vector.broadcast %380 : vector<16x1xf32> to vector<16x16xf32>
    %382 = arith.mulf %377, %381 : vector<16x16xf32>
    %383 = arith.truncf %382 : vector<16x16xf32> to vector<16x16xbf16>
    %384 = arith.truncf %367 : vector<16x32xf32> to vector<16x32xbf16>
    %cst_271 = arith.constant dense<0.000000e+00> : vector<16x32xf32>
    %385 = tpu.matmul %383, %384, %cst_271 {dimension_numbers = #tpu.dot_dimension_numbers<[1], [0], [0], [1], [0, 0, 1, 1], [], []>} : vector<16x16xbf16>, vector<16x32xbf16>, vector<16x32xf32> -> vector<16x32xf32>
    %386 = arith.truncf %385 : vector<16x32xf32> to vector<16x32xbf16>
    %c1_272 = arith.constant 1 : index
    %c1_273 = arith.constant 1 : index
    %c0_274 = arith.constant 0 : index
    %c0_275 = arith.constant 0 : index
    %387 = vector.load %arg11[%c1_272, %c1_273, %c0_274, %c0_275] : memref<3x4x32x128xbf16, #tpu.memory_space<vmem>>, vector<1x1x32x128xbf16>
    %388 = vector.shape_cast %387 : vector<1x1x32x128xbf16> to vector<32x128xbf16>
    %cst_276 = arith.constant dense<0.000000e+00> : vector<16x128xf32>
    %389 = tpu.matmul %386, %388, %cst_276 {dimension_numbers = #tpu.dot_dimension_numbers<[1], [0], [0], [1], [0, 0, 1, 1], [], []>} : vector<16x32xbf16>, vector<32x128xbf16>, vector<16x128xf32> -> vector<16x128xf32>
    %390 = arith.addf %346, %389 : vector<16x128xf32>
    %c1_277 = arith.constant 1 : index
    %c2_278 = arith.constant 2 : index
    %c0_279 = arith.constant 0 : index
    %c0_280 = arith.constant 0 : index
    %391 = vector.load %arg5[%c1_277, %c2_278, %c0_279, %c0_280] : memref<3x4x128x32xbf16, #tpu.memory_space<vmem>>, vector<1x1x128x32xbf16>
    %392 = vector.shape_cast %391 : vector<1x1x128x32xbf16> to vector<128x32xbf16>
    %cst_281 = arith.constant dense<0.000000e+00> : vector<16x32xf32>
    %393 = tpu.matmul %299, %392, %cst_281 {dimension_numbers = #tpu.dot_dimension_numbers<[1], [0], [0], [1], [0, 0, 1, 1], [], []>} : vector<16x128xbf16>, vector<128x32xbf16>, vector<16x32xf32> -> vector<16x32xf32>
    %c1_282 = arith.constant 1 : index
    %c2_283 = arith.constant 2 : index
    %c0_284 = arith.constant 0 : index
    %c0_285 = arith.constant 0 : index
    %394 = vector.load %arg6[%c1_282, %c2_283, %c0_284, %c0_285] : memref<3x4x1x32xf32, #tpu.memory_space<vmem>>, vector<1x1x1x32xf32>
    %395 = vector.shape_cast %394 : vector<1x1x1x32xf32> to vector<1x32xf32>
    %396 = vector.broadcast %395 : vector<1x32xf32> to vector<16x32xf32>
    %397 = arith.addf %393, %396 : vector<16x32xf32>
    %c1_286 = arith.constant 1 : index
    %c2_287 = arith.constant 2 : index
    %c0_288 = arith.constant 0 : index
    %c0_289 = arith.constant 0 : index
    %398 = vector.load %arg7[%c1_286, %c2_287, %c0_288, %c0_289] : memref<3x4x128x32xbf16, #tpu.memory_space<vmem>>, vector<1x1x128x32xbf16>
    %399 = vector.shape_cast %398 : vector<1x1x128x32xbf16> to vector<128x32xbf16>
    %cst_290 = arith.constant dense<0.000000e+00> : vector<16x32xf32>
    %400 = tpu.matmul %299, %399, %cst_290 {dimension_numbers = #tpu.dot_dimension_numbers<[1], [0], [0], [1], [0, 0, 1, 1], [], []>} : vector<16x128xbf16>, vector<128x32xbf16>, vector<16x32xf32> -> vector<16x32xf32>
    %c1_291 = arith.constant 1 : index
    %c2_292 = arith.constant 2 : index
    %c0_293 = arith.constant 0 : index
    %c0_294 = arith.constant 0 : index
    %401 = vector.load %arg8[%c1_291, %c2_292, %c0_293, %c0_294] : memref<3x4x1x32xf32, #tpu.memory_space<vmem>>, vector<1x1x1x32xf32>
    %402 = vector.shape_cast %401 : vector<1x1x1x32xf32> to vector<1x32xf32>
    %403 = vector.broadcast %402 : vector<1x32xf32> to vector<16x32xf32>
    %404 = arith.addf %400, %403 : vector<16x32xf32>
    %c1_295 = arith.constant 1 : index
    %c2_296 = arith.constant 2 : index
    %c0_297 = arith.constant 0 : index
    %c0_298 = arith.constant 0 : index
    %405 = vector.load %arg9[%c1_295, %c2_296, %c0_297, %c0_298] : memref<3x4x128x32xbf16, #tpu.memory_space<vmem>>, vector<1x1x128x32xbf16>
    %406 = vector.shape_cast %405 : vector<1x1x128x32xbf16> to vector<128x32xbf16>
    %cst_299 = arith.constant dense<0.000000e+00> : vector<16x32xf32>
    %407 = tpu.matmul %299, %406, %cst_299 {dimension_numbers = #tpu.dot_dimension_numbers<[1], [0], [0], [1], [0, 0, 1, 1], [], []>} : vector<16x128xbf16>, vector<128x32xbf16>, vector<16x32xf32> -> vector<16x32xf32>
    %c1_300 = arith.constant 1 : index
    %c2_301 = arith.constant 2 : index
    %c0_302 = arith.constant 0 : index
    %c0_303 = arith.constant 0 : index
    %408 = vector.load %arg10[%c1_300, %c2_301, %c0_302, %c0_303] : memref<3x4x1x32xf32, #tpu.memory_space<vmem>>, vector<1x1x1x32xf32>
    %409 = vector.shape_cast %408 : vector<1x1x1x32xf32> to vector<1x32xf32>
    %410 = vector.broadcast %409 : vector<1x32xf32> to vector<16x32xf32>
    %411 = arith.addf %407, %410 : vector<16x32xf32>
    %412 = arith.truncf %397 : vector<16x32xf32> to vector<16x32xbf16>
    %413 = arith.truncf %404 : vector<16x32xf32> to vector<16x32xbf16>
    %cst_304 = arith.constant dense<0.000000e+00> : vector<16x16xf32>
    %414 = tpu.matmul %412, %413, %cst_304 {dimension_numbers = #tpu.dot_dimension_numbers<[1], [1], [0], [0], [0, 0, 1, 0], [], []>} : vector<16x32xbf16>, vector<16x32xbf16>, vector<16x16xf32> -> vector<16x16xf32>
    %415 = vector.broadcast %28 : vector<1x16xf32> to vector<16x16xf32>
    %416 = arith.addf %414, %415 : vector<16x16xf32>
    %cst_305 = arith.constant dense<0xFF800000> : vector<16xf32>
    %417 = vector.multi_reduction <maximumf>, %416, %cst_305 [1] : vector<16x16xf32> to vector<16xf32>
    %418 = vector.shape_cast %417 : vector<16xf32> to vector<16x1xf32>
    %419 = vector.broadcast %418 : vector<16x1xf32> to vector<16x16xf32>
    %420 = arith.subf %416, %419 : vector<16x16xf32>
    %421 = math.exp %420 : vector<16x16xf32>
    %cst_306 = arith.constant dense<0.000000e+00> : vector<16xf32>
    %422 = vector.multi_reduction <add>, %421, %cst_306 [1] : vector<16x16xf32> to vector<16xf32>
    %423 = vector.shape_cast %422 : vector<16xf32> to vector<16x1xf32>
    %424 = tpu.reciprocal %423 {approx = true} : vector<16x1xf32> -> vector<16x1xf32>
    %425 = vector.broadcast %424 : vector<16x1xf32> to vector<16x16xf32>
    %426 = arith.mulf %421, %425 : vector<16x16xf32>
    %427 = arith.truncf %426 : vector<16x16xf32> to vector<16x16xbf16>
    %428 = arith.truncf %411 : vector<16x32xf32> to vector<16x32xbf16>
    %cst_307 = arith.constant dense<0.000000e+00> : vector<16x32xf32>
    %429 = tpu.matmul %427, %428, %cst_307 {dimension_numbers = #tpu.dot_dimension_numbers<[1], [0], [0], [1], [0, 0, 1, 1], [], []>} : vector<16x16xbf16>, vector<16x32xbf16>, vector<16x32xf32> -> vector<16x32xf32>
    %430 = arith.truncf %429 : vector<16x32xf32> to vector<16x32xbf16>
    %c1_308 = arith.constant 1 : index
    %c2_309 = arith.constant 2 : index
    %c0_310 = arith.constant 0 : index
    %c0_311 = arith.constant 0 : index
    %431 = vector.load %arg11[%c1_308, %c2_309, %c0_310, %c0_311] : memref<3x4x32x128xbf16, #tpu.memory_space<vmem>>, vector<1x1x32x128xbf16>
    %432 = vector.shape_cast %431 : vector<1x1x32x128xbf16> to vector<32x128xbf16>
    %cst_312 = arith.constant dense<0.000000e+00> : vector<16x128xf32>
    %433 = tpu.matmul %430, %432, %cst_312 {dimension_numbers = #tpu.dot_dimension_numbers<[1], [0], [0], [1], [0, 0, 1, 1], [], []>} : vector<16x32xbf16>, vector<32x128xbf16>, vector<16x128xf32> -> vector<16x128xf32>
    %434 = arith.addf %390, %433 : vector<16x128xf32>
    %c1_313 = arith.constant 1 : index
    %c3_314 = arith.constant 3 : index
    %c0_315 = arith.constant 0 : index
    %c0_316 = arith.constant 0 : index
    %435 = vector.load %arg5[%c1_313, %c3_314, %c0_315, %c0_316] : memref<3x4x128x32xbf16, #tpu.memory_space<vmem>>, vector<1x1x128x32xbf16>
    %436 = vector.shape_cast %435 : vector<1x1x128x32xbf16> to vector<128x32xbf16>
    %cst_317 = arith.constant dense<0.000000e+00> : vector<16x32xf32>
    %437 = tpu.matmul %299, %436, %cst_317 {dimension_numbers = #tpu.dot_dimension_numbers<[1], [0], [0], [1], [0, 0, 1, 1], [], []>} : vector<16x128xbf16>, vector<128x32xbf16>, vector<16x32xf32> -> vector<16x32xf32>
    %c1_318 = arith.constant 1 : index
    %c3_319 = arith.constant 3 : index
    %c0_320 = arith.constant 0 : index
    %c0_321 = arith.constant 0 : index
    %438 = vector.load %arg6[%c1_318, %c3_319, %c0_320, %c0_321] : memref<3x4x1x32xf32, #tpu.memory_space<vmem>>, vector<1x1x1x32xf32>
    %439 = vector.shape_cast %438 : vector<1x1x1x32xf32> to vector<1x32xf32>
    %440 = vector.broadcast %439 : vector<1x32xf32> to vector<16x32xf32>
    %441 = arith.addf %437, %440 : vector<16x32xf32>
    %c1_322 = arith.constant 1 : index
    %c3_323 = arith.constant 3 : index
    %c0_324 = arith.constant 0 : index
    %c0_325 = arith.constant 0 : index
    %442 = vector.load %arg7[%c1_322, %c3_323, %c0_324, %c0_325] : memref<3x4x128x32xbf16, #tpu.memory_space<vmem>>, vector<1x1x128x32xbf16>
    %443 = vector.shape_cast %442 : vector<1x1x128x32xbf16> to vector<128x32xbf16>
    %cst_326 = arith.constant dense<0.000000e+00> : vector<16x32xf32>
    %444 = tpu.matmul %299, %443, %cst_326 {dimension_numbers = #tpu.dot_dimension_numbers<[1], [0], [0], [1], [0, 0, 1, 1], [], []>} : vector<16x128xbf16>, vector<128x32xbf16>, vector<16x32xf32> -> vector<16x32xf32>
    %c1_327 = arith.constant 1 : index
    %c3_328 = arith.constant 3 : index
    %c0_329 = arith.constant 0 : index
    %c0_330 = arith.constant 0 : index
    %445 = vector.load %arg8[%c1_327, %c3_328, %c0_329, %c0_330] : memref<3x4x1x32xf32, #tpu.memory_space<vmem>>, vector<1x1x1x32xf32>
    %446 = vector.shape_cast %445 : vector<1x1x1x32xf32> to vector<1x32xf32>
    %447 = vector.broadcast %446 : vector<1x32xf32> to vector<16x32xf32>
    %448 = arith.addf %444, %447 : vector<16x32xf32>
    %c1_331 = arith.constant 1 : index
    %c3_332 = arith.constant 3 : index
    %c0_333 = arith.constant 0 : index
    %c0_334 = arith.constant 0 : index
    %449 = vector.load %arg9[%c1_331, %c3_332, %c0_333, %c0_334] : memref<3x4x128x32xbf16, #tpu.memory_space<vmem>>, vector<1x1x128x32xbf16>
    %450 = vector.shape_cast %449 : vector<1x1x128x32xbf16> to vector<128x32xbf16>
    %cst_335 = arith.constant dense<0.000000e+00> : vector<16x32xf32>
    %451 = tpu.matmul %299, %450, %cst_335 {dimension_numbers = #tpu.dot_dimension_numbers<[1], [0], [0], [1], [0, 0, 1, 1], [], []>} : vector<16x128xbf16>, vector<128x32xbf16>, vector<16x32xf32> -> vector<16x32xf32>
    %c1_336 = arith.constant 1 : index
    %c3_337 = arith.constant 3 : index
    %c0_338 = arith.constant 0 : index
    %c0_339 = arith.constant 0 : index
    %452 = vector.load %arg10[%c1_336, %c3_337, %c0_338, %c0_339] : memref<3x4x1x32xf32, #tpu.memory_space<vmem>>, vector<1x1x1x32xf32>
    %453 = vector.shape_cast %452 : vector<1x1x1x32xf32> to vector<1x32xf32>
    %454 = vector.broadcast %453 : vector<1x32xf32> to vector<16x32xf32>
    %455 = arith.addf %451, %454 : vector<16x32xf32>
    %456 = arith.truncf %441 : vector<16x32xf32> to vector<16x32xbf16>
    %457 = arith.truncf %448 : vector<16x32xf32> to vector<16x32xbf16>
    %cst_340 = arith.constant dense<0.000000e+00> : vector<16x16xf32>
    %458 = tpu.matmul %456, %457, %cst_340 {dimension_numbers = #tpu.dot_dimension_numbers<[1], [1], [0], [0], [0, 0, 1, 0], [], []>} : vector<16x32xbf16>, vector<16x32xbf16>, vector<16x16xf32> -> vector<16x16xf32>
    %459 = vector.broadcast %28 : vector<1x16xf32> to vector<16x16xf32>
    %460 = arith.addf %458, %459 : vector<16x16xf32>
    %cst_341 = arith.constant dense<0xFF800000> : vector<16xf32>
    %461 = vector.multi_reduction <maximumf>, %460, %cst_341 [1] : vector<16x16xf32> to vector<16xf32>
    %462 = vector.shape_cast %461 : vector<16xf32> to vector<16x1xf32>
    %463 = vector.broadcast %462 : vector<16x1xf32> to vector<16x16xf32>
    %464 = arith.subf %460, %463 : vector<16x16xf32>
    %465 = math.exp %464 : vector<16x16xf32>
    %cst_342 = arith.constant dense<0.000000e+00> : vector<16xf32>
    %466 = vector.multi_reduction <add>, %465, %cst_342 [1] : vector<16x16xf32> to vector<16xf32>
    %467 = vector.shape_cast %466 : vector<16xf32> to vector<16x1xf32>
    %468 = tpu.reciprocal %467 {approx = true} : vector<16x1xf32> -> vector<16x1xf32>
    %469 = vector.broadcast %468 : vector<16x1xf32> to vector<16x16xf32>
    %470 = arith.mulf %465, %469 : vector<16x16xf32>
    %471 = arith.truncf %470 : vector<16x16xf32> to vector<16x16xbf16>
    %472 = arith.truncf %455 : vector<16x32xf32> to vector<16x32xbf16>
    %cst_343 = arith.constant dense<0.000000e+00> : vector<16x32xf32>
    %473 = tpu.matmul %471, %472, %cst_343 {dimension_numbers = #tpu.dot_dimension_numbers<[1], [0], [0], [1], [0, 0, 1, 1], [], []>} : vector<16x16xbf16>, vector<16x32xbf16>, vector<16x32xf32> -> vector<16x32xf32>
    %474 = arith.truncf %473 : vector<16x32xf32> to vector<16x32xbf16>
    %c1_344 = arith.constant 1 : index
    %c3_345 = arith.constant 3 : index
    %c0_346 = arith.constant 0 : index
    %c0_347 = arith.constant 0 : index
    %475 = vector.load %arg11[%c1_344, %c3_345, %c0_346, %c0_347] : memref<3x4x32x128xbf16, #tpu.memory_space<vmem>>, vector<1x1x32x128xbf16>
    %476 = vector.shape_cast %475 : vector<1x1x32x128xbf16> to vector<32x128xbf16>
    %cst_348 = arith.constant dense<0.000000e+00> : vector<16x128xf32>
    %477 = tpu.matmul %474, %476, %cst_348 {dimension_numbers = #tpu.dot_dimension_numbers<[1], [0], [0], [1], [0, 0, 1, 1], [], []>} : vector<16x32xbf16>, vector<32x128xbf16>, vector<16x128xf32> -> vector<16x128xf32>
    %478 = arith.addf %434, %477 : vector<16x128xf32>
    %479 = arith.extf %299 : vector<16x128xbf16> to vector<16x128xf32>
    %480 = arith.addf %478, %479 : vector<16x128xf32>
    %c1_349 = arith.constant 1 : index
    %c0_350 = arith.constant 0 : index
    %c0_351 = arith.constant 0 : index
    %481 = vector.load %arg13[%c1_349, %c0_350, %c0_351] : memref<3x1x128xf32, #tpu.memory_space<vmem>>, vector<1x1x128xf32>
    %482 = vector.shape_cast %481 : vector<1x1x128xf32> to vector<1x128xf32>
    %c1_352 = arith.constant 1 : index
    %c0_353 = arith.constant 0 : index
    %c0_354 = arith.constant 0 : index
    %483 = vector.load %arg14[%c1_352, %c0_353, %c0_354] : memref<3x1x128xf32, #tpu.memory_space<vmem>>, vector<1x1x128xf32>
    %484 = vector.shape_cast %483 : vector<1x1x128xf32> to vector<1x128xf32>
    %cst_355 = arith.constant dense<0.000000e+00> : vector<16xf32>
    %485 = vector.multi_reduction <add>, %480, %cst_355 [1] : vector<16x128xf32> to vector<16xf32>
    %486 = vector.shape_cast %485 : vector<16xf32> to vector<16x1xf32>
    %cst_356 = arith.constant 1.280000e+02 : f32
    %487 = vector.broadcast %cst_356 : f32 to vector<16x1xf32>
    %488 = arith.divf %486, %487 : vector<16x1xf32>
    %489 = vector.broadcast %488 : vector<16x1xf32> to vector<16x128xf32>
    %490 = arith.subf %480, %489 : vector<16x128xf32>
    %491 = arith.mulf %490, %490 : vector<16x128xf32>
    %cst_357 = arith.constant dense<0.000000e+00> : vector<16xf32>
    %492 = vector.multi_reduction <add>, %491, %cst_357 [1] : vector<16x128xf32> to vector<16xf32>
    %493 = vector.shape_cast %492 : vector<16xf32> to vector<16x1xf32>
    %cst_358 = arith.constant 1.280000e+02 : f32
    %494 = vector.broadcast %cst_358 : f32 to vector<16x1xf32>
    %495 = arith.divf %493, %494 : vector<16x1xf32>
    %496 = vector.broadcast %488 : vector<16x1xf32> to vector<16x128xf32>
    %497 = arith.subf %480, %496 : vector<16x128xf32>
    %cst_359 = arith.constant 9.99999974E-6 : f32
    %498 = vector.broadcast %cst_359 : f32 to vector<16x1xf32>
    %499 = arith.addf %495, %498 : vector<16x1xf32>
    %500 = math.rsqrt %499 : vector<16x1xf32>
    %501 = vector.broadcast %500 : vector<16x1xf32> to vector<16x128xf32>
    %502 = arith.mulf %497, %501 : vector<16x128xf32>
    %503 = vector.broadcast %482 : vector<1x128xf32> to vector<16x128xf32>
    %504 = arith.mulf %502, %503 : vector<16x128xf32>
    %505 = vector.broadcast %484 : vector<1x128xf32> to vector<16x128xf32>
    %506 = arith.addf %504, %505 : vector<16x128xf32>
    %507 = arith.truncf %506 : vector<16x128xf32> to vector<16x128xbf16>
    %c1_360 = arith.constant 1 : index
    %c0_361 = arith.constant 0 : index
    %c0_362 = arith.constant 0 : index
    %508 = vector.load %arg15[%c1_360, %c0_361, %c0_362] : memref<3x128x256xbf16, #tpu.memory_space<vmem>>, vector<1x128x256xbf16>
    %509 = vector.shape_cast %508 : vector<1x128x256xbf16> to vector<128x256xbf16>
    %cst_363 = arith.constant dense<0.000000e+00> : vector<16x256xf32>
    %510 = tpu.matmul %507, %509, %cst_363 {dimension_numbers = #tpu.dot_dimension_numbers<[1], [0], [0], [1], [0, 0, 1, 1], [], []>} : vector<16x128xbf16>, vector<128x256xbf16>, vector<16x256xf32> -> vector<16x256xf32>
    %c1_364 = arith.constant 1 : index
    %c0_365 = arith.constant 0 : index
    %c0_366 = arith.constant 0 : index
    %511 = vector.load %arg16[%c1_364, %c0_365, %c0_366] : memref<3x1x256xf32, #tpu.memory_space<vmem>>, vector<1x1x256xf32>
    %512 = vector.shape_cast %511 : vector<1x1x256xf32> to vector<1x256xf32>
    %513 = vector.broadcast %512 : vector<1x256xf32> to vector<16x256xf32>
    %514 = arith.addf %510, %513 : vector<16x256xf32>
    %515 = arith.mulf %514, %514 : vector<16x256xf32>
    %516 = arith.mulf %514, %515 : vector<16x256xf32>
    %cst_367 = arith.constant 4.471500e-02 : f32
    %517 = vector.broadcast %cst_367 : f32 to vector<16x256xf32>
    %518 = arith.mulf %517, %516 : vector<16x256xf32>
    %519 = arith.addf %514, %518 : vector<16x256xf32>
    %cst_368 = arith.constant 0.797884583 : f32
    %520 = vector.broadcast %cst_368 : f32 to vector<16x256xf32>
    %521 = arith.mulf %520, %519 : vector<16x256xf32>
    %522 = math.tanh %521 : vector<16x256xf32>
    %cst_369 = arith.constant 1.000000e+00 : f32
    %523 = vector.broadcast %cst_369 : f32 to vector<16x256xf32>
    %524 = arith.addf %523, %522 : vector<16x256xf32>
    %cst_370 = arith.constant 5.000000e-01 : f32
    %525 = vector.broadcast %cst_370 : f32 to vector<16x256xf32>
    %526 = arith.mulf %525, %524 : vector<16x256xf32>
    %527 = arith.mulf %514, %526 : vector<16x256xf32>
    %528 = arith.truncf %527 : vector<16x256xf32> to vector<16x256xbf16>
    %c1_371 = arith.constant 1 : index
    %c0_372 = arith.constant 0 : index
    %c0_373 = arith.constant 0 : index
    %529 = vector.load %arg17[%c1_371, %c0_372, %c0_373] : memref<3x256x128xbf16, #tpu.memory_space<vmem>>, vector<1x256x128xbf16>
    %530 = vector.shape_cast %529 : vector<1x256x128xbf16> to vector<256x128xbf16>
    %cst_374 = arith.constant dense<0.000000e+00> : vector<16x128xf32>
    %531 = tpu.matmul %528, %530, %cst_374 {dimension_numbers = #tpu.dot_dimension_numbers<[1], [0], [0], [1], [0, 0, 1, 1], [], []>} : vector<16x256xbf16>, vector<256x128xbf16>, vector<16x128xf32> -> vector<16x128xf32>
    %c1_375 = arith.constant 1 : index
    %c0_376 = arith.constant 0 : index
    %c0_377 = arith.constant 0 : index
    %532 = vector.load %arg18[%c1_375, %c0_376, %c0_377] : memref<3x1x128xf32, #tpu.memory_space<vmem>>, vector<1x1x128xf32>
    %533 = vector.shape_cast %532 : vector<1x1x128xf32> to vector<1x128xf32>
    %534 = vector.broadcast %533 : vector<1x128xf32> to vector<16x128xf32>
    %535 = arith.addf %531, %534 : vector<16x128xf32>
    %536 = arith.extf %507 : vector<16x128xbf16> to vector<16x128xf32>
    %537 = arith.addf %535, %536 : vector<16x128xf32>
    %c1_378 = arith.constant 1 : index
    %c0_379 = arith.constant 0 : index
    %c0_380 = arith.constant 0 : index
    %538 = vector.load %arg19[%c1_378, %c0_379, %c0_380] : memref<3x1x128xf32, #tpu.memory_space<vmem>>, vector<1x1x128xf32>
    %539 = vector.shape_cast %538 : vector<1x1x128xf32> to vector<1x128xf32>
    %c1_381 = arith.constant 1 : index
    %c0_382 = arith.constant 0 : index
    %c0_383 = arith.constant 0 : index
    %540 = vector.load %arg20[%c1_381, %c0_382, %c0_383] : memref<3x1x128xf32, #tpu.memory_space<vmem>>, vector<1x1x128xf32>
    %541 = vector.shape_cast %540 : vector<1x1x128xf32> to vector<1x128xf32>
    %cst_384 = arith.constant dense<0.000000e+00> : vector<16xf32>
    %542 = vector.multi_reduction <add>, %537, %cst_384 [1] : vector<16x128xf32> to vector<16xf32>
    %543 = vector.shape_cast %542 : vector<16xf32> to vector<16x1xf32>
    %cst_385 = arith.constant 1.280000e+02 : f32
    %544 = vector.broadcast %cst_385 : f32 to vector<16x1xf32>
    %545 = arith.divf %543, %544 : vector<16x1xf32>
    %546 = vector.broadcast %545 : vector<16x1xf32> to vector<16x128xf32>
    %547 = arith.subf %537, %546 : vector<16x128xf32>
    %548 = arith.mulf %547, %547 : vector<16x128xf32>
    %cst_386 = arith.constant dense<0.000000e+00> : vector<16xf32>
    %549 = vector.multi_reduction <add>, %548, %cst_386 [1] : vector<16x128xf32> to vector<16xf32>
    %550 = vector.shape_cast %549 : vector<16xf32> to vector<16x1xf32>
    %cst_387 = arith.constant 1.280000e+02 : f32
    %551 = vector.broadcast %cst_387 : f32 to vector<16x1xf32>
    %552 = arith.divf %550, %551 : vector<16x1xf32>
    %553 = vector.broadcast %545 : vector<16x1xf32> to vector<16x128xf32>
    %554 = arith.subf %537, %553 : vector<16x128xf32>
    %cst_388 = arith.constant 9.99999974E-6 : f32
    %555 = vector.broadcast %cst_388 : f32 to vector<16x1xf32>
    %556 = arith.addf %552, %555 : vector<16x1xf32>
    %557 = math.rsqrt %556 : vector<16x1xf32>
    %558 = vector.broadcast %557 : vector<16x1xf32> to vector<16x128xf32>
    %559 = arith.mulf %554, %558 : vector<16x128xf32>
    %560 = vector.broadcast %539 : vector<1x128xf32> to vector<16x128xf32>
    %561 = arith.mulf %559, %560 : vector<16x128xf32>
    %562 = vector.broadcast %541 : vector<1x128xf32> to vector<16x128xf32>
    %563 = arith.addf %561, %562 : vector<16x128xf32>
    %564 = arith.truncf %563 : vector<16x128xf32> to vector<16x128xbf16>
    %c2_389 = arith.constant 2 : index
    %c0_390 = arith.constant 0 : index
    %c0_391 = arith.constant 0 : index
    %565 = vector.load %arg12[%c2_389, %c0_390, %c0_391] : memref<3x1x128xf32, #tpu.memory_space<vmem>>, vector<1x1x128xf32>
    %566 = vector.shape_cast %565 : vector<1x1x128xf32> to vector<1x128xf32>
    %c2_392 = arith.constant 2 : index
    %c0_393 = arith.constant 0 : index
    %c0_394 = arith.constant 0 : index
    %c0_395 = arith.constant 0 : index
    %567 = vector.load %arg5[%c2_392, %c0_393, %c0_394, %c0_395] : memref<3x4x128x32xbf16, #tpu.memory_space<vmem>>, vector<1x1x128x32xbf16>
    %568 = vector.shape_cast %567 : vector<1x1x128x32xbf16> to vector<128x32xbf16>
    %cst_396 = arith.constant dense<0.000000e+00> : vector<16x32xf32>
    %569 = tpu.matmul %564, %568, %cst_396 {dimension_numbers = #tpu.dot_dimension_numbers<[1], [0], [0], [1], [0, 0, 1, 1], [], []>} : vector<16x128xbf16>, vector<128x32xbf16>, vector<16x32xf32> -> vector<16x32xf32>
    %c2_397 = arith.constant 2 : index
    %c0_398 = arith.constant 0 : index
    %c0_399 = arith.constant 0 : index
    %c0_400 = arith.constant 0 : index
    %570 = vector.load %arg6[%c2_397, %c0_398, %c0_399, %c0_400] : memref<3x4x1x32xf32, #tpu.memory_space<vmem>>, vector<1x1x1x32xf32>
    %571 = vector.shape_cast %570 : vector<1x1x1x32xf32> to vector<1x32xf32>
    %572 = vector.broadcast %571 : vector<1x32xf32> to vector<16x32xf32>
    %573 = arith.addf %569, %572 : vector<16x32xf32>
    %c2_401 = arith.constant 2 : index
    %c0_402 = arith.constant 0 : index
    %c0_403 = arith.constant 0 : index
    %c0_404 = arith.constant 0 : index
    %574 = vector.load %arg7[%c2_401, %c0_402, %c0_403, %c0_404] : memref<3x4x128x32xbf16, #tpu.memory_space<vmem>>, vector<1x1x128x32xbf16>
    %575 = vector.shape_cast %574 : vector<1x1x128x32xbf16> to vector<128x32xbf16>
    %cst_405 = arith.constant dense<0.000000e+00> : vector<16x32xf32>
    %576 = tpu.matmul %564, %575, %cst_405 {dimension_numbers = #tpu.dot_dimension_numbers<[1], [0], [0], [1], [0, 0, 1, 1], [], []>} : vector<16x128xbf16>, vector<128x32xbf16>, vector<16x32xf32> -> vector<16x32xf32>
    %c2_406 = arith.constant 2 : index
    %c0_407 = arith.constant 0 : index
    %c0_408 = arith.constant 0 : index
    %c0_409 = arith.constant 0 : index
    %577 = vector.load %arg8[%c2_406, %c0_407, %c0_408, %c0_409] : memref<3x4x1x32xf32, #tpu.memory_space<vmem>>, vector<1x1x1x32xf32>
    %578 = vector.shape_cast %577 : vector<1x1x1x32xf32> to vector<1x32xf32>
    %579 = vector.broadcast %578 : vector<1x32xf32> to vector<16x32xf32>
    %580 = arith.addf %576, %579 : vector<16x32xf32>
    %c2_410 = arith.constant 2 : index
    %c0_411 = arith.constant 0 : index
    %c0_412 = arith.constant 0 : index
    %c0_413 = arith.constant 0 : index
    %581 = vector.load %arg9[%c2_410, %c0_411, %c0_412, %c0_413] : memref<3x4x128x32xbf16, #tpu.memory_space<vmem>>, vector<1x1x128x32xbf16>
    %582 = vector.shape_cast %581 : vector<1x1x128x32xbf16> to vector<128x32xbf16>
    %cst_414 = arith.constant dense<0.000000e+00> : vector<16x32xf32>
    %583 = tpu.matmul %564, %582, %cst_414 {dimension_numbers = #tpu.dot_dimension_numbers<[1], [0], [0], [1], [0, 0, 1, 1], [], []>} : vector<16x128xbf16>, vector<128x32xbf16>, vector<16x32xf32> -> vector<16x32xf32>
    %c2_415 = arith.constant 2 : index
    %c0_416 = arith.constant 0 : index
    %c0_417 = arith.constant 0 : index
    %c0_418 = arith.constant 0 : index
    %584 = vector.load %arg10[%c2_415, %c0_416, %c0_417, %c0_418] : memref<3x4x1x32xf32, #tpu.memory_space<vmem>>, vector<1x1x1x32xf32>
    %585 = vector.shape_cast %584 : vector<1x1x1x32xf32> to vector<1x32xf32>
    %586 = vector.broadcast %585 : vector<1x32xf32> to vector<16x32xf32>
    %587 = arith.addf %583, %586 : vector<16x32xf32>
    %588 = arith.truncf %573 : vector<16x32xf32> to vector<16x32xbf16>
    %589 = arith.truncf %580 : vector<16x32xf32> to vector<16x32xbf16>
    %cst_419 = arith.constant dense<0.000000e+00> : vector<16x16xf32>
    %590 = tpu.matmul %588, %589, %cst_419 {dimension_numbers = #tpu.dot_dimension_numbers<[1], [1], [0], [0], [0, 0, 1, 0], [], []>} : vector<16x32xbf16>, vector<16x32xbf16>, vector<16x16xf32> -> vector<16x16xf32>
    %591 = vector.broadcast %28 : vector<1x16xf32> to vector<16x16xf32>
    %592 = arith.addf %590, %591 : vector<16x16xf32>
    %cst_420 = arith.constant dense<0xFF800000> : vector<16xf32>
    %593 = vector.multi_reduction <maximumf>, %592, %cst_420 [1] : vector<16x16xf32> to vector<16xf32>
    %594 = vector.shape_cast %593 : vector<16xf32> to vector<16x1xf32>
    %595 = vector.broadcast %594 : vector<16x1xf32> to vector<16x16xf32>
    %596 = arith.subf %592, %595 : vector<16x16xf32>
    %597 = math.exp %596 : vector<16x16xf32>
    %cst_421 = arith.constant dense<0.000000e+00> : vector<16xf32>
    %598 = vector.multi_reduction <add>, %597, %cst_421 [1] : vector<16x16xf32> to vector<16xf32>
    %599 = vector.shape_cast %598 : vector<16xf32> to vector<16x1xf32>
    %600 = tpu.reciprocal %599 {approx = true} : vector<16x1xf32> -> vector<16x1xf32>
    %601 = vector.broadcast %600 : vector<16x1xf32> to vector<16x16xf32>
    %602 = arith.mulf %597, %601 : vector<16x16xf32>
    %603 = arith.truncf %602 : vector<16x16xf32> to vector<16x16xbf16>
    %604 = arith.truncf %587 : vector<16x32xf32> to vector<16x32xbf16>
    %cst_422 = arith.constant dense<0.000000e+00> : vector<16x32xf32>
    %605 = tpu.matmul %603, %604, %cst_422 {dimension_numbers = #tpu.dot_dimension_numbers<[1], [0], [0], [1], [0, 0, 1, 1], [], []>} : vector<16x16xbf16>, vector<16x32xbf16>, vector<16x32xf32> -> vector<16x32xf32>
    %606 = arith.truncf %605 : vector<16x32xf32> to vector<16x32xbf16>
    %c2_423 = arith.constant 2 : index
    %c0_424 = arith.constant 0 : index
    %c0_425 = arith.constant 0 : index
    %c0_426 = arith.constant 0 : index
    %607 = vector.load %arg11[%c2_423, %c0_424, %c0_425, %c0_426] : memref<3x4x32x128xbf16, #tpu.memory_space<vmem>>, vector<1x1x32x128xbf16>
    %608 = vector.shape_cast %607 : vector<1x1x32x128xbf16> to vector<32x128xbf16>
    %cst_427 = arith.constant dense<0.000000e+00> : vector<16x128xf32>
    %609 = tpu.matmul %606, %608, %cst_427 {dimension_numbers = #tpu.dot_dimension_numbers<[1], [0], [0], [1], [0, 0, 1, 1], [], []>} : vector<16x32xbf16>, vector<32x128xbf16>, vector<16x128xf32> -> vector<16x128xf32>
    %610 = vector.broadcast %566 : vector<1x128xf32> to vector<16x128xf32>
    %611 = arith.addf %610, %609 : vector<16x128xf32>
    %c2_428 = arith.constant 2 : index
    %c1_429 = arith.constant 1 : index
    %c0_430 = arith.constant 0 : index
    %c0_431 = arith.constant 0 : index
    %612 = vector.load %arg5[%c2_428, %c1_429, %c0_430, %c0_431] : memref<3x4x128x32xbf16, #tpu.memory_space<vmem>>, vector<1x1x128x32xbf16>
    %613 = vector.shape_cast %612 : vector<1x1x128x32xbf16> to vector<128x32xbf16>
    %cst_432 = arith.constant dense<0.000000e+00> : vector<16x32xf32>
    %614 = tpu.matmul %564, %613, %cst_432 {dimension_numbers = #tpu.dot_dimension_numbers<[1], [0], [0], [1], [0, 0, 1, 1], [], []>} : vector<16x128xbf16>, vector<128x32xbf16>, vector<16x32xf32> -> vector<16x32xf32>
    %c2_433 = arith.constant 2 : index
    %c1_434 = arith.constant 1 : index
    %c0_435 = arith.constant 0 : index
    %c0_436 = arith.constant 0 : index
    %615 = vector.load %arg6[%c2_433, %c1_434, %c0_435, %c0_436] : memref<3x4x1x32xf32, #tpu.memory_space<vmem>>, vector<1x1x1x32xf32>
    %616 = vector.shape_cast %615 : vector<1x1x1x32xf32> to vector<1x32xf32>
    %617 = vector.broadcast %616 : vector<1x32xf32> to vector<16x32xf32>
    %618 = arith.addf %614, %617 : vector<16x32xf32>
    %c2_437 = arith.constant 2 : index
    %c1_438 = arith.constant 1 : index
    %c0_439 = arith.constant 0 : index
    %c0_440 = arith.constant 0 : index
    %619 = vector.load %arg7[%c2_437, %c1_438, %c0_439, %c0_440] : memref<3x4x128x32xbf16, #tpu.memory_space<vmem>>, vector<1x1x128x32xbf16>
    %620 = vector.shape_cast %619 : vector<1x1x128x32xbf16> to vector<128x32xbf16>
    %cst_441 = arith.constant dense<0.000000e+00> : vector<16x32xf32>
    %621 = tpu.matmul %564, %620, %cst_441 {dimension_numbers = #tpu.dot_dimension_numbers<[1], [0], [0], [1], [0, 0, 1, 1], [], []>} : vector<16x128xbf16>, vector<128x32xbf16>, vector<16x32xf32> -> vector<16x32xf32>
    %c2_442 = arith.constant 2 : index
    %c1_443 = arith.constant 1 : index
    %c0_444 = arith.constant 0 : index
    %c0_445 = arith.constant 0 : index
    %622 = vector.load %arg8[%c2_442, %c1_443, %c0_444, %c0_445] : memref<3x4x1x32xf32, #tpu.memory_space<vmem>>, vector<1x1x1x32xf32>
    %623 = vector.shape_cast %622 : vector<1x1x1x32xf32> to vector<1x32xf32>
    %624 = vector.broadcast %623 : vector<1x32xf32> to vector<16x32xf32>
    %625 = arith.addf %621, %624 : vector<16x32xf32>
    %c2_446 = arith.constant 2 : index
    %c1_447 = arith.constant 1 : index
    %c0_448 = arith.constant 0 : index
    %c0_449 = arith.constant 0 : index
    %626 = vector.load %arg9[%c2_446, %c1_447, %c0_448, %c0_449] : memref<3x4x128x32xbf16, #tpu.memory_space<vmem>>, vector<1x1x128x32xbf16>
    %627 = vector.shape_cast %626 : vector<1x1x128x32xbf16> to vector<128x32xbf16>
    %cst_450 = arith.constant dense<0.000000e+00> : vector<16x32xf32>
    %628 = tpu.matmul %564, %627, %cst_450 {dimension_numbers = #tpu.dot_dimension_numbers<[1], [0], [0], [1], [0, 0, 1, 1], [], []>} : vector<16x128xbf16>, vector<128x32xbf16>, vector<16x32xf32> -> vector<16x32xf32>
    %c2_451 = arith.constant 2 : index
    %c1_452 = arith.constant 1 : index
    %c0_453 = arith.constant 0 : index
    %c0_454 = arith.constant 0 : index
    %629 = vector.load %arg10[%c2_451, %c1_452, %c0_453, %c0_454] : memref<3x4x1x32xf32, #tpu.memory_space<vmem>>, vector<1x1x1x32xf32>
    %630 = vector.shape_cast %629 : vector<1x1x1x32xf32> to vector<1x32xf32>
    %631 = vector.broadcast %630 : vector<1x32xf32> to vector<16x32xf32>
    %632 = arith.addf %628, %631 : vector<16x32xf32>
    %633 = arith.truncf %618 : vector<16x32xf32> to vector<16x32xbf16>
    %634 = arith.truncf %625 : vector<16x32xf32> to vector<16x32xbf16>
    %cst_455 = arith.constant dense<0.000000e+00> : vector<16x16xf32>
    %635 = tpu.matmul %633, %634, %cst_455 {dimension_numbers = #tpu.dot_dimension_numbers<[1], [1], [0], [0], [0, 0, 1, 0], [], []>} : vector<16x32xbf16>, vector<16x32xbf16>, vector<16x16xf32> -> vector<16x16xf32>
    %636 = vector.broadcast %28 : vector<1x16xf32> to vector<16x16xf32>
    %637 = arith.addf %635, %636 : vector<16x16xf32>
    %cst_456 = arith.constant dense<0xFF800000> : vector<16xf32>
    %638 = vector.multi_reduction <maximumf>, %637, %cst_456 [1] : vector<16x16xf32> to vector<16xf32>
    %639 = vector.shape_cast %638 : vector<16xf32> to vector<16x1xf32>
    %640 = vector.broadcast %639 : vector<16x1xf32> to vector<16x16xf32>
    %641 = arith.subf %637, %640 : vector<16x16xf32>
    %642 = math.exp %641 : vector<16x16xf32>
    %cst_457 = arith.constant dense<0.000000e+00> : vector<16xf32>
    %643 = vector.multi_reduction <add>, %642, %cst_457 [1] : vector<16x16xf32> to vector<16xf32>
    %644 = vector.shape_cast %643 : vector<16xf32> to vector<16x1xf32>
    %645 = tpu.reciprocal %644 {approx = true} : vector<16x1xf32> -> vector<16x1xf32>
    %646 = vector.broadcast %645 : vector<16x1xf32> to vector<16x16xf32>
    %647 = arith.mulf %642, %646 : vector<16x16xf32>
    %648 = arith.truncf %647 : vector<16x16xf32> to vector<16x16xbf16>
    %649 = arith.truncf %632 : vector<16x32xf32> to vector<16x32xbf16>
    %cst_458 = arith.constant dense<0.000000e+00> : vector<16x32xf32>
    %650 = tpu.matmul %648, %649, %cst_458 {dimension_numbers = #tpu.dot_dimension_numbers<[1], [0], [0], [1], [0, 0, 1, 1], [], []>} : vector<16x16xbf16>, vector<16x32xbf16>, vector<16x32xf32> -> vector<16x32xf32>
    %651 = arith.truncf %650 : vector<16x32xf32> to vector<16x32xbf16>
    %c2_459 = arith.constant 2 : index
    %c1_460 = arith.constant 1 : index
    %c0_461 = arith.constant 0 : index
    %c0_462 = arith.constant 0 : index
    %652 = vector.load %arg11[%c2_459, %c1_460, %c0_461, %c0_462] : memref<3x4x32x128xbf16, #tpu.memory_space<vmem>>, vector<1x1x32x128xbf16>
    %653 = vector.shape_cast %652 : vector<1x1x32x128xbf16> to vector<32x128xbf16>
    %cst_463 = arith.constant dense<0.000000e+00> : vector<16x128xf32>
    %654 = tpu.matmul %651, %653, %cst_463 {dimension_numbers = #tpu.dot_dimension_numbers<[1], [0], [0], [1], [0, 0, 1, 1], [], []>} : vector<16x32xbf16>, vector<32x128xbf16>, vector<16x128xf32> -> vector<16x128xf32>
    %655 = arith.addf %611, %654 : vector<16x128xf32>
    %c2_464 = arith.constant 2 : index
    %c2_465 = arith.constant 2 : index
    %c0_466 = arith.constant 0 : index
    %c0_467 = arith.constant 0 : index
    %656 = vector.load %arg5[%c2_464, %c2_465, %c0_466, %c0_467] : memref<3x4x128x32xbf16, #tpu.memory_space<vmem>>, vector<1x1x128x32xbf16>
    %657 = vector.shape_cast %656 : vector<1x1x128x32xbf16> to vector<128x32xbf16>
    %cst_468 = arith.constant dense<0.000000e+00> : vector<16x32xf32>
    %658 = tpu.matmul %564, %657, %cst_468 {dimension_numbers = #tpu.dot_dimension_numbers<[1], [0], [0], [1], [0, 0, 1, 1], [], []>} : vector<16x128xbf16>, vector<128x32xbf16>, vector<16x32xf32> -> vector<16x32xf32>
    %c2_469 = arith.constant 2 : index
    %c2_470 = arith.constant 2 : index
    %c0_471 = arith.constant 0 : index
    %c0_472 = arith.constant 0 : index
    %659 = vector.load %arg6[%c2_469, %c2_470, %c0_471, %c0_472] : memref<3x4x1x32xf32, #tpu.memory_space<vmem>>, vector<1x1x1x32xf32>
    %660 = vector.shape_cast %659 : vector<1x1x1x32xf32> to vector<1x32xf32>
    %661 = vector.broadcast %660 : vector<1x32xf32> to vector<16x32xf32>
    %662 = arith.addf %658, %661 : vector<16x32xf32>
    %c2_473 = arith.constant 2 : index
    %c2_474 = arith.constant 2 : index
    %c0_475 = arith.constant 0 : index
    %c0_476 = arith.constant 0 : index
    %663 = vector.load %arg7[%c2_473, %c2_474, %c0_475, %c0_476] : memref<3x4x128x32xbf16, #tpu.memory_space<vmem>>, vector<1x1x128x32xbf16>
    %664 = vector.shape_cast %663 : vector<1x1x128x32xbf16> to vector<128x32xbf16>
    %cst_477 = arith.constant dense<0.000000e+00> : vector<16x32xf32>
    %665 = tpu.matmul %564, %664, %cst_477 {dimension_numbers = #tpu.dot_dimension_numbers<[1], [0], [0], [1], [0, 0, 1, 1], [], []>} : vector<16x128xbf16>, vector<128x32xbf16>, vector<16x32xf32> -> vector<16x32xf32>
    %c2_478 = arith.constant 2 : index
    %c2_479 = arith.constant 2 : index
    %c0_480 = arith.constant 0 : index
    %c0_481 = arith.constant 0 : index
    %666 = vector.load %arg8[%c2_478, %c2_479, %c0_480, %c0_481] : memref<3x4x1x32xf32, #tpu.memory_space<vmem>>, vector<1x1x1x32xf32>
    %667 = vector.shape_cast %666 : vector<1x1x1x32xf32> to vector<1x32xf32>
    %668 = vector.broadcast %667 : vector<1x32xf32> to vector<16x32xf32>
    %669 = arith.addf %665, %668 : vector<16x32xf32>
    %c2_482 = arith.constant 2 : index
    %c2_483 = arith.constant 2 : index
    %c0_484 = arith.constant 0 : index
    %c0_485 = arith.constant 0 : index
    %670 = vector.load %arg9[%c2_482, %c2_483, %c0_484, %c0_485] : memref<3x4x128x32xbf16, #tpu.memory_space<vmem>>, vector<1x1x128x32xbf16>
    %671 = vector.shape_cast %670 : vector<1x1x128x32xbf16> to vector<128x32xbf16>
    %cst_486 = arith.constant dense<0.000000e+00> : vector<16x32xf32>
    %672 = tpu.matmul %564, %671, %cst_486 {dimension_numbers = #tpu.dot_dimension_numbers<[1], [0], [0], [1], [0, 0, 1, 1], [], []>} : vector<16x128xbf16>, vector<128x32xbf16>, vector<16x32xf32> -> vector<16x32xf32>
    %c2_487 = arith.constant 2 : index
    %c2_488 = arith.constant 2 : index
    %c0_489 = arith.constant 0 : index
    %c0_490 = arith.constant 0 : index
    %673 = vector.load %arg10[%c2_487, %c2_488, %c0_489, %c0_490] : memref<3x4x1x32xf32, #tpu.memory_space<vmem>>, vector<1x1x1x32xf32>
    %674 = vector.shape_cast %673 : vector<1x1x1x32xf32> to vector<1x32xf32>
    %675 = vector.broadcast %674 : vector<1x32xf32> to vector<16x32xf32>
    %676 = arith.addf %672, %675 : vector<16x32xf32>
    %677 = arith.truncf %662 : vector<16x32xf32> to vector<16x32xbf16>
    %678 = arith.truncf %669 : vector<16x32xf32> to vector<16x32xbf16>
    %cst_491 = arith.constant dense<0.000000e+00> : vector<16x16xf32>
    %679 = tpu.matmul %677, %678, %cst_491 {dimension_numbers = #tpu.dot_dimension_numbers<[1], [1], [0], [0], [0, 0, 1, 0], [], []>} : vector<16x32xbf16>, vector<16x32xbf16>, vector<16x16xf32> -> vector<16x16xf32>
    %680 = vector.broadcast %28 : vector<1x16xf32> to vector<16x16xf32>
    %681 = arith.addf %679, %680 : vector<16x16xf32>
    %cst_492 = arith.constant dense<0xFF800000> : vector<16xf32>
    %682 = vector.multi_reduction <maximumf>, %681, %cst_492 [1] : vector<16x16xf32> to vector<16xf32>
    %683 = vector.shape_cast %682 : vector<16xf32> to vector<16x1xf32>
    %684 = vector.broadcast %683 : vector<16x1xf32> to vector<16x16xf32>
    %685 = arith.subf %681, %684 : vector<16x16xf32>
    %686 = math.exp %685 : vector<16x16xf32>
    %cst_493 = arith.constant dense<0.000000e+00> : vector<16xf32>
    %687 = vector.multi_reduction <add>, %686, %cst_493 [1] : vector<16x16xf32> to vector<16xf32>
    %688 = vector.shape_cast %687 : vector<16xf32> to vector<16x1xf32>
    %689 = tpu.reciprocal %688 {approx = true} : vector<16x1xf32> -> vector<16x1xf32>
    %690 = vector.broadcast %689 : vector<16x1xf32> to vector<16x16xf32>
    %691 = arith.mulf %686, %690 : vector<16x16xf32>
    %692 = arith.truncf %691 : vector<16x16xf32> to vector<16x16xbf16>
    %693 = arith.truncf %676 : vector<16x32xf32> to vector<16x32xbf16>
    %cst_494 = arith.constant dense<0.000000e+00> : vector<16x32xf32>
    %694 = tpu.matmul %692, %693, %cst_494 {dimension_numbers = #tpu.dot_dimension_numbers<[1], [0], [0], [1], [0, 0, 1, 1], [], []>} : vector<16x16xbf16>, vector<16x32xbf16>, vector<16x32xf32> -> vector<16x32xf32>
    %695 = arith.truncf %694 : vector<16x32xf32> to vector<16x32xbf16>
    %c2_495 = arith.constant 2 : index
    %c2_496 = arith.constant 2 : index
    %c0_497 = arith.constant 0 : index
    %c0_498 = arith.constant 0 : index
    %696 = vector.load %arg11[%c2_495, %c2_496, %c0_497, %c0_498] : memref<3x4x32x128xbf16, #tpu.memory_space<vmem>>, vector<1x1x32x128xbf16>
    %697 = vector.shape_cast %696 : vector<1x1x32x128xbf16> to vector<32x128xbf16>
    %cst_499 = arith.constant dense<0.000000e+00> : vector<16x128xf32>
    %698 = tpu.matmul %695, %697, %cst_499 {dimension_numbers = #tpu.dot_dimension_numbers<[1], [0], [0], [1], [0, 0, 1, 1], [], []>} : vector<16x32xbf16>, vector<32x128xbf16>, vector<16x128xf32> -> vector<16x128xf32>
    %699 = arith.addf %655, %698 : vector<16x128xf32>
    %c2_500 = arith.constant 2 : index
    %c3_501 = arith.constant 3 : index
    %c0_502 = arith.constant 0 : index
    %c0_503 = arith.constant 0 : index
    %700 = vector.load %arg5[%c2_500, %c3_501, %c0_502, %c0_503] : memref<3x4x128x32xbf16, #tpu.memory_space<vmem>>, vector<1x1x128x32xbf16>
    %701 = vector.shape_cast %700 : vector<1x1x128x32xbf16> to vector<128x32xbf16>
    %cst_504 = arith.constant dense<0.000000e+00> : vector<16x32xf32>
    %702 = tpu.matmul %564, %701, %cst_504 {dimension_numbers = #tpu.dot_dimension_numbers<[1], [0], [0], [1], [0, 0, 1, 1], [], []>} : vector<16x128xbf16>, vector<128x32xbf16>, vector<16x32xf32> -> vector<16x32xf32>
    %c2_505 = arith.constant 2 : index
    %c3_506 = arith.constant 3 : index
    %c0_507 = arith.constant 0 : index
    %c0_508 = arith.constant 0 : index
    %703 = vector.load %arg6[%c2_505, %c3_506, %c0_507, %c0_508] : memref<3x4x1x32xf32, #tpu.memory_space<vmem>>, vector<1x1x1x32xf32>
    %704 = vector.shape_cast %703 : vector<1x1x1x32xf32> to vector<1x32xf32>
    %705 = vector.broadcast %704 : vector<1x32xf32> to vector<16x32xf32>
    %706 = arith.addf %702, %705 : vector<16x32xf32>
    %c2_509 = arith.constant 2 : index
    %c3_510 = arith.constant 3 : index
    %c0_511 = arith.constant 0 : index
    %c0_512 = arith.constant 0 : index
    %707 = vector.load %arg7[%c2_509, %c3_510, %c0_511, %c0_512] : memref<3x4x128x32xbf16, #tpu.memory_space<vmem>>, vector<1x1x128x32xbf16>
    %708 = vector.shape_cast %707 : vector<1x1x128x32xbf16> to vector<128x32xbf16>
    %cst_513 = arith.constant dense<0.000000e+00> : vector<16x32xf32>
    %709 = tpu.matmul %564, %708, %cst_513 {dimension_numbers = #tpu.dot_dimension_numbers<[1], [0], [0], [1], [0, 0, 1, 1], [], []>} : vector<16x128xbf16>, vector<128x32xbf16>, vector<16x32xf32> -> vector<16x32xf32>
    %c2_514 = arith.constant 2 : index
    %c3_515 = arith.constant 3 : index
    %c0_516 = arith.constant 0 : index
    %c0_517 = arith.constant 0 : index
    %710 = vector.load %arg8[%c2_514, %c3_515, %c0_516, %c0_517] : memref<3x4x1x32xf32, #tpu.memory_space<vmem>>, vector<1x1x1x32xf32>
    %711 = vector.shape_cast %710 : vector<1x1x1x32xf32> to vector<1x32xf32>
    %712 = vector.broadcast %711 : vector<1x32xf32> to vector<16x32xf32>
    %713 = arith.addf %709, %712 : vector<16x32xf32>
    %c2_518 = arith.constant 2 : index
    %c3_519 = arith.constant 3 : index
    %c0_520 = arith.constant 0 : index
    %c0_521 = arith.constant 0 : index
    %714 = vector.load %arg9[%c2_518, %c3_519, %c0_520, %c0_521] : memref<3x4x128x32xbf16, #tpu.memory_space<vmem>>, vector<1x1x128x32xbf16>
    %715 = vector.shape_cast %714 : vector<1x1x128x32xbf16> to vector<128x32xbf16>
    %cst_522 = arith.constant dense<0.000000e+00> : vector<16x32xf32>
    %716 = tpu.matmul %564, %715, %cst_522 {dimension_numbers = #tpu.dot_dimension_numbers<[1], [0], [0], [1], [0, 0, 1, 1], [], []>} : vector<16x128xbf16>, vector<128x32xbf16>, vector<16x32xf32> -> vector<16x32xf32>
    %c2_523 = arith.constant 2 : index
    %c3_524 = arith.constant 3 : index
    %c0_525 = arith.constant 0 : index
    %c0_526 = arith.constant 0 : index
    %717 = vector.load %arg10[%c2_523, %c3_524, %c0_525, %c0_526] : memref<3x4x1x32xf32, #tpu.memory_space<vmem>>, vector<1x1x1x32xf32>
    %718 = vector.shape_cast %717 : vector<1x1x1x32xf32> to vector<1x32xf32>
    %719 = vector.broadcast %718 : vector<1x32xf32> to vector<16x32xf32>
    %720 = arith.addf %716, %719 : vector<16x32xf32>
    %721 = arith.truncf %706 : vector<16x32xf32> to vector<16x32xbf16>
    %722 = arith.truncf %713 : vector<16x32xf32> to vector<16x32xbf16>
    %cst_527 = arith.constant dense<0.000000e+00> : vector<16x16xf32>
    %723 = tpu.matmul %721, %722, %cst_527 {dimension_numbers = #tpu.dot_dimension_numbers<[1], [1], [0], [0], [0, 0, 1, 0], [], []>} : vector<16x32xbf16>, vector<16x32xbf16>, vector<16x16xf32> -> vector<16x16xf32>
    %724 = vector.broadcast %28 : vector<1x16xf32> to vector<16x16xf32>
    %725 = arith.addf %723, %724 : vector<16x16xf32>
    %cst_528 = arith.constant dense<0xFF800000> : vector<16xf32>
    %726 = vector.multi_reduction <maximumf>, %725, %cst_528 [1] : vector<16x16xf32> to vector<16xf32>
    %727 = vector.shape_cast %726 : vector<16xf32> to vector<16x1xf32>
    %728 = vector.broadcast %727 : vector<16x1xf32> to vector<16x16xf32>
    %729 = arith.subf %725, %728 : vector<16x16xf32>
    %730 = math.exp %729 : vector<16x16xf32>
    %cst_529 = arith.constant dense<0.000000e+00> : vector<16xf32>
    %731 = vector.multi_reduction <add>, %730, %cst_529 [1] : vector<16x16xf32> to vector<16xf32>
    %732 = vector.shape_cast %731 : vector<16xf32> to vector<16x1xf32>
    %733 = tpu.reciprocal %732 {approx = true} : vector<16x1xf32> -> vector<16x1xf32>
    %734 = vector.broadcast %733 : vector<16x1xf32> to vector<16x16xf32>
    %735 = arith.mulf %730, %734 : vector<16x16xf32>
    %736 = arith.truncf %735 : vector<16x16xf32> to vector<16x16xbf16>
    %737 = arith.truncf %720 : vector<16x32xf32> to vector<16x32xbf16>
    %cst_530 = arith.constant dense<0.000000e+00> : vector<16x32xf32>
    %738 = tpu.matmul %736, %737, %cst_530 {dimension_numbers = #tpu.dot_dimension_numbers<[1], [0], [0], [1], [0, 0, 1, 1], [], []>} : vector<16x16xbf16>, vector<16x32xbf16>, vector<16x32xf32> -> vector<16x32xf32>
    %739 = arith.truncf %738 : vector<16x32xf32> to vector<16x32xbf16>
    %c2_531 = arith.constant 2 : index
    %c3_532 = arith.constant 3 : index
    %c0_533 = arith.constant 0 : index
    %c0_534 = arith.constant 0 : index
    %740 = vector.load %arg11[%c2_531, %c3_532, %c0_533, %c0_534] : memref<3x4x32x128xbf16, #tpu.memory_space<vmem>>, vector<1x1x32x128xbf16>
    %741 = vector.shape_cast %740 : vector<1x1x32x128xbf16> to vector<32x128xbf16>
    %cst_535 = arith.constant dense<0.000000e+00> : vector<16x128xf32>
    %742 = tpu.matmul %739, %741, %cst_535 {dimension_numbers = #tpu.dot_dimension_numbers<[1], [0], [0], [1], [0, 0, 1, 1], [], []>} : vector<16x32xbf16>, vector<32x128xbf16>, vector<16x128xf32> -> vector<16x128xf32>
    %743 = arith.addf %699, %742 : vector<16x128xf32>
    %744 = arith.extf %564 : vector<16x128xbf16> to vector<16x128xf32>
    %745 = arith.addf %743, %744 : vector<16x128xf32>
    %c2_536 = arith.constant 2 : index
    %c0_537 = arith.constant 0 : index
    %c0_538 = arith.constant 0 : index
    %746 = vector.load %arg13[%c2_536, %c0_537, %c0_538] : memref<3x1x128xf32, #tpu.memory_space<vmem>>, vector<1x1x128xf32>
    %747 = vector.shape_cast %746 : vector<1x1x128xf32> to vector<1x128xf32>
    %c2_539 = arith.constant 2 : index
    %c0_540 = arith.constant 0 : index
    %c0_541 = arith.constant 0 : index
    %748 = vector.load %arg14[%c2_539, %c0_540, %c0_541] : memref<3x1x128xf32, #tpu.memory_space<vmem>>, vector<1x1x128xf32>
    %749 = vector.shape_cast %748 : vector<1x1x128xf32> to vector<1x128xf32>
    %cst_542 = arith.constant dense<0.000000e+00> : vector<16xf32>
    %750 = vector.multi_reduction <add>, %745, %cst_542 [1] : vector<16x128xf32> to vector<16xf32>
    %751 = vector.shape_cast %750 : vector<16xf32> to vector<16x1xf32>
    %cst_543 = arith.constant 1.280000e+02 : f32
    %752 = vector.broadcast %cst_543 : f32 to vector<16x1xf32>
    %753 = arith.divf %751, %752 : vector<16x1xf32>
    %754 = vector.broadcast %753 : vector<16x1xf32> to vector<16x128xf32>
    %755 = arith.subf %745, %754 : vector<16x128xf32>
    %756 = arith.mulf %755, %755 : vector<16x128xf32>
    %cst_544 = arith.constant dense<0.000000e+00> : vector<16xf32>
    %757 = vector.multi_reduction <add>, %756, %cst_544 [1] : vector<16x128xf32> to vector<16xf32>
    %758 = vector.shape_cast %757 : vector<16xf32> to vector<16x1xf32>
    %cst_545 = arith.constant 1.280000e+02 : f32
    %759 = vector.broadcast %cst_545 : f32 to vector<16x1xf32>
    %760 = arith.divf %758, %759 : vector<16x1xf32>
    %761 = vector.broadcast %753 : vector<16x1xf32> to vector<16x128xf32>
    %762 = arith.subf %745, %761 : vector<16x128xf32>
    %cst_546 = arith.constant 9.99999974E-6 : f32
    %763 = vector.broadcast %cst_546 : f32 to vector<16x1xf32>
    %764 = arith.addf %760, %763 : vector<16x1xf32>
    %765 = math.rsqrt %764 : vector<16x1xf32>
    %766 = vector.broadcast %765 : vector<16x1xf32> to vector<16x128xf32>
    %767 = arith.mulf %762, %766 : vector<16x128xf32>
    %768 = vector.broadcast %747 : vector<1x128xf32> to vector<16x128xf32>
    %769 = arith.mulf %767, %768 : vector<16x128xf32>
    %770 = vector.broadcast %749 : vector<1x128xf32> to vector<16x128xf32>
    %771 = arith.addf %769, %770 : vector<16x128xf32>
    %772 = arith.truncf %771 : vector<16x128xf32> to vector<16x128xbf16>
    %c2_547 = arith.constant 2 : index
    %c0_548 = arith.constant 0 : index
    %c0_549 = arith.constant 0 : index
    %773 = vector.load %arg15[%c2_547, %c0_548, %c0_549] : memref<3x128x256xbf16, #tpu.memory_space<vmem>>, vector<1x128x256xbf16>
    %774 = vector.shape_cast %773 : vector<1x128x256xbf16> to vector<128x256xbf16>
    %cst_550 = arith.constant dense<0.000000e+00> : vector<16x256xf32>
    %775 = tpu.matmul %772, %774, %cst_550 {dimension_numbers = #tpu.dot_dimension_numbers<[1], [0], [0], [1], [0, 0, 1, 1], [], []>} : vector<16x128xbf16>, vector<128x256xbf16>, vector<16x256xf32> -> vector<16x256xf32>
    %c2_551 = arith.constant 2 : index
    %c0_552 = arith.constant 0 : index
    %c0_553 = arith.constant 0 : index
    %776 = vector.load %arg16[%c2_551, %c0_552, %c0_553] : memref<3x1x256xf32, #tpu.memory_space<vmem>>, vector<1x1x256xf32>
    %777 = vector.shape_cast %776 : vector<1x1x256xf32> to vector<1x256xf32>
    %778 = vector.broadcast %777 : vector<1x256xf32> to vector<16x256xf32>
    %779 = arith.addf %775, %778 : vector<16x256xf32>
    %780 = arith.mulf %779, %779 : vector<16x256xf32>
    %781 = arith.mulf %779, %780 : vector<16x256xf32>
    %cst_554 = arith.constant 4.471500e-02 : f32
    %782 = vector.broadcast %cst_554 : f32 to vector<16x256xf32>
    %783 = arith.mulf %782, %781 : vector<16x256xf32>
    %784 = arith.addf %779, %783 : vector<16x256xf32>
    %cst_555 = arith.constant 0.797884583 : f32
    %785 = vector.broadcast %cst_555 : f32 to vector<16x256xf32>
    %786 = arith.mulf %785, %784 : vector<16x256xf32>
    %787 = math.tanh %786 : vector<16x256xf32>
    %cst_556 = arith.constant 1.000000e+00 : f32
    %788 = vector.broadcast %cst_556 : f32 to vector<16x256xf32>
    %789 = arith.addf %788, %787 : vector<16x256xf32>
    %cst_557 = arith.constant 5.000000e-01 : f32
    %790 = vector.broadcast %cst_557 : f32 to vector<16x256xf32>
    %791 = arith.mulf %790, %789 : vector<16x256xf32>
    %792 = arith.mulf %779, %791 : vector<16x256xf32>
    %793 = arith.truncf %792 : vector<16x256xf32> to vector<16x256xbf16>
    %c2_558 = arith.constant 2 : index
    %c0_559 = arith.constant 0 : index
    %c0_560 = arith.constant 0 : index
    %794 = vector.load %arg17[%c2_558, %c0_559, %c0_560] : memref<3x256x128xbf16, #tpu.memory_space<vmem>>, vector<1x256x128xbf16>
    %795 = vector.shape_cast %794 : vector<1x256x128xbf16> to vector<256x128xbf16>
    %cst_561 = arith.constant dense<0.000000e+00> : vector<16x128xf32>
    %796 = tpu.matmul %793, %795, %cst_561 {dimension_numbers = #tpu.dot_dimension_numbers<[1], [0], [0], [1], [0, 0, 1, 1], [], []>} : vector<16x256xbf16>, vector<256x128xbf16>, vector<16x128xf32> -> vector<16x128xf32>
    %c2_562 = arith.constant 2 : index
    %c0_563 = arith.constant 0 : index
    %c0_564 = arith.constant 0 : index
    %797 = vector.load %arg18[%c2_562, %c0_563, %c0_564] : memref<3x1x128xf32, #tpu.memory_space<vmem>>, vector<1x1x128xf32>
    %798 = vector.shape_cast %797 : vector<1x1x128xf32> to vector<1x128xf32>
    %799 = vector.broadcast %798 : vector<1x128xf32> to vector<16x128xf32>
    %800 = arith.addf %796, %799 : vector<16x128xf32>
    %801 = arith.extf %772 : vector<16x128xbf16> to vector<16x128xf32>
    %802 = arith.addf %800, %801 : vector<16x128xf32>
    %c2_565 = arith.constant 2 : index
    %c0_566 = arith.constant 0 : index
    %c0_567 = arith.constant 0 : index
    %803 = vector.load %arg19[%c2_565, %c0_566, %c0_567] : memref<3x1x128xf32, #tpu.memory_space<vmem>>, vector<1x1x128xf32>
    %804 = vector.shape_cast %803 : vector<1x1x128xf32> to vector<1x128xf32>
    %c2_568 = arith.constant 2 : index
    %c0_569 = arith.constant 0 : index
    %c0_570 = arith.constant 0 : index
    %805 = vector.load %arg20[%c2_568, %c0_569, %c0_570] : memref<3x1x128xf32, #tpu.memory_space<vmem>>, vector<1x1x128xf32>
    %806 = vector.shape_cast %805 : vector<1x1x128xf32> to vector<1x128xf32>
    %cst_571 = arith.constant dense<0.000000e+00> : vector<16xf32>
    %807 = vector.multi_reduction <add>, %802, %cst_571 [1] : vector<16x128xf32> to vector<16xf32>
    %808 = vector.shape_cast %807 : vector<16xf32> to vector<16x1xf32>
    %cst_572 = arith.constant 1.280000e+02 : f32
    %809 = vector.broadcast %cst_572 : f32 to vector<16x1xf32>
    %810 = arith.divf %808, %809 : vector<16x1xf32>
    %811 = vector.broadcast %810 : vector<16x1xf32> to vector<16x128xf32>
    %812 = arith.subf %802, %811 : vector<16x128xf32>
    %813 = arith.mulf %812, %812 : vector<16x128xf32>
    %cst_573 = arith.constant dense<0.000000e+00> : vector<16xf32>
    %814 = vector.multi_reduction <add>, %813, %cst_573 [1] : vector<16x128xf32> to vector<16xf32>
    %815 = vector.shape_cast %814 : vector<16xf32> to vector<16x1xf32>
    %cst_574 = arith.constant 1.280000e+02 : f32
    %816 = vector.broadcast %cst_574 : f32 to vector<16x1xf32>
    %817 = arith.divf %815, %816 : vector<16x1xf32>
    %818 = vector.broadcast %810 : vector<16x1xf32> to vector<16x128xf32>
    %819 = arith.subf %802, %818 : vector<16x128xf32>
    %cst_575 = arith.constant 9.99999974E-6 : f32
    %820 = vector.broadcast %cst_575 : f32 to vector<16x1xf32>
    %821 = arith.addf %817, %820 : vector<16x1xf32>
    %822 = math.rsqrt %821 : vector<16x1xf32>
    %823 = vector.broadcast %822 : vector<16x1xf32> to vector<16x128xf32>
    %824 = arith.mulf %819, %823 : vector<16x128xf32>
    %825 = vector.broadcast %804 : vector<1x128xf32> to vector<16x128xf32>
    %826 = arith.mulf %824, %825 : vector<16x128xf32>
    %827 = vector.broadcast %806 : vector<1x128xf32> to vector<16x128xf32>
    %828 = arith.addf %826, %827 : vector<16x128xf32>
    %829 = arith.truncf %828 : vector<16x128xf32> to vector<16x128xbf16>
    %c0_576 = arith.constant 0 : index
    %c0_577 = arith.constant 0 : index
    %830 = vector.load %arg23[%c0_576, %c0_577] : memref<128x128xbf16, #tpu.memory_space<vmem>>, vector<128x128xbf16>
    %cst_578 = arith.constant dense<0.000000e+00> : vector<16x128xf32>
    %831 = tpu.matmul %829, %830, %cst_578 {dimension_numbers = #tpu.dot_dimension_numbers<[1], [0], [0], [1], [0, 0, 1, 1], [], []>} : vector<16x128xbf16>, vector<128x128xbf16>, vector<16x128xf32> -> vector<16x128xf32>
    %c0_579 = arith.constant 0 : index
    %c0_580 = arith.constant 0 : index
    %832 = vector.load %arg24[%c0_579, %c0_580] : memref<1x128xf32, #tpu.memory_space<vmem>>, vector<1x128xf32>
    %833 = vector.broadcast %832 : vector<1x128xf32> to vector<16x128xf32>
    %834 = arith.addf %831, %833 : vector<16x128xf32>
    %835 = arith.truncf %834 : vector<16x128xf32> to vector<16x128xbf16>
    %c0_581 = arith.constant 0 : index
    %c0_582 = arith.constant 0 : index
    %c0_583 = arith.constant 0 : index
    %836 = vector.load %arg25[%c0_581, %c0_582, %c0_583] : memref<1x16x128xbf16, #tpu.memory_space<vmem>>, vector<1x16x128xbf16>
    %837 = vector.shape_cast %836 : vector<1x16x128xbf16> to vector<16x128xbf16>
    %838 = vector.shape_cast %835 : vector<16x128xbf16> to vector<1x16x128xbf16>
    tpu.vector_store %arg25[%c0_581, %c0_582, %c0_583], %838 {strides = array<i32>} : memref<1x16x128xbf16, #tpu.memory_space<vmem>>, vector<1x16x128xbf16>,
    return
  }
  func.func @transform_0(%arg0: i32) -> (i32, i32, i32) {
    %c0_i32 = arith.constant 0 : i32
    %c0_i32_0 = arith.constant 0 : i32
    %c0_i32_1 = arith.constant 0 : i32
    return %arg0, %c0_i32, %c0_i32_0 : i32, i32, i32
  }
  func.func @transform_1(%arg0: i32) -> (i32, i32, i32) {
    %c0_i32 = arith.constant 0 : i32
    %c0_i32_0 = arith.constant 0 : i32
    %c0_i32_1 = arith.constant 0 : i32
    return %arg0, %c0_i32, %c0_i32_0 : i32, i32, i32
  }
  func.func @transform_2(%arg0: i32) -> (i32, i32) {
    %c0_i32 = arith.constant 0 : i32
    %c0_i32_0 = arith.constant 0 : i32
    %c0_i32_1 = arith.constant 0 : i32
    return %c0_i32, %c0_i32_0 : i32, i32
  }
  func.func @transform_3(%arg0: i32) -> (i32, i32) {
    %c0_i32 = arith.constant 0 : i32
    %c0_i32_0 = arith.constant 0 : i32
    %c0_i32_1 = arith.constant 0 : i32
    return %c0_i32, %c0_i32_0 : i32, i32
  }
  func.func @transform_4(%arg0: i32) -> (i32, i32, i32, i32) {
    %c0_i32 = arith.constant 0 : i32
    %c0_i32_0 = arith.constant 0 : i32
    %c0_i32_1 = arith.constant 0 : i32
    %c0_i32_2 = arith.constant 0 : i32
    %c0_i32_3 = arith.constant 0 : i32
    return %c0_i32, %c0_i32_0, %c0_i32_1, %c0_i32_2 : i32, i32, i32, i32
  }
  func.func @transform_5(%arg0: i32) -> (i32, i32, i32, i32) {
    %c0_i32 = arith.constant 0 : i32
    %c0_i32_0 = arith.constant 0 : i32
    %c0_i32_1 = arith.constant 0 : i32
    %c0_i32_2 = arith.constant 0 : i32
    %c0_i32_3 = arith.constant 0 : i32
    return %c0_i32, %c0_i32_0, %c0_i32_1, %c0_i32_2 : i32, i32, i32, i32
  }
  func.func @transform_6(%arg0: i32) -> (i32, i32, i32, i32) {
    %c0_i32 = arith.constant 0 : i32
    %c0_i32_0 = arith.constant 0 : i32
    %c0_i32_1 = arith.constant 0 : i32
    %c0_i32_2 = arith.constant 0 : i32
    %c0_i32_3 = arith.constant 0 : i32
    return %c0_i32, %c0_i32_0, %c0_i32_1, %c0_i32_2 : i32, i32, i32, i32
  }
  func.func @transform_7(%arg0: i32) -> (i32, i32, i32, i32) {
    %c0_i32 = arith.constant 0 : i32
    %c0_i32_0 = arith.constant 0 : i32
    %c0_i32_1 = arith.constant 0 : i32
    %c0_i32_2 = arith.constant 0 : i32
    %c0_i32_3 = arith.constant 0 : i32
    return %c0_i32, %c0_i32_0, %c0_i32_1, %c0_i32_2 : i32, i32, i32, i32
  }
  func.func @transform_8(%arg0: i32) -> (i32, i32, i32, i32) {
    %c0_i32 = arith.constant 0 : i32
    %c0_i32_0 = arith.constant 0 : i32
    %c0_i32_1 = arith.constant 0 : i32
    %c0_i32_2 = arith.constant 0 : i32
    %c0_i32_3 = arith.constant 0 : i32
    return %c0_i32, %c0_i32_0, %c0_i32_1, %c0_i32_2 : i32, i32, i32, i32
  }
  func.func @transform_9(%arg0: i32) -> (i32, i32, i32, i32) {
    %c0_i32 = arith.constant 0 : i32
    %c0_i32_0 = arith.constant 0 : i32
    %c0_i32_1 = arith.constant 0 : i32
    %c0_i32_2 = arith.constant 0 : i32
    %c0_i32_3 = arith.constant 0 : i32
    return %c0_i32, %c0_i32_0, %c0_i32_1, %c0_i32_2 : i32, i32, i32, i32
  }
  func.func @transform_10(%arg0: i32) -> (i32, i32, i32, i32) {
    %c0_i32 = arith.constant 0 : i32
    %c0_i32_0 = arith.constant 0 : i32
    %c0_i32_1 = arith.constant 0 : i32
    %c0_i32_2 = arith.constant 0 : i32
    %c0_i32_3 = arith.constant 0 : i32
    return %c0_i32, %c0_i32_0, %c0_i32_1, %c0_i32_2 : i32, i32, i32, i32
  }
  func.func @transform_11(%arg0: i32) -> (i32, i32, i32) {
    %c0_i32 = arith.constant 0 : i32
    %c0_i32_0 = arith.constant 0 : i32
    %c0_i32_1 = arith.constant 0 : i32
    %c0_i32_2 = arith.constant 0 : i32
    return %c0_i32, %c0_i32_0, %c0_i32_1 : i32, i32, i32
  }
  func.func @transform_12(%arg0: i32) -> (i32, i32, i32) {
    %c0_i32 = arith.constant 0 : i32
    %c0_i32_0 = arith.constant 0 : i32
    %c0_i32_1 = arith.constant 0 : i32
    %c0_i32_2 = arith.constant 0 : i32
    return %c0_i32, %c0_i32_0, %c0_i32_1 : i32, i32, i32
  }
  func.func @transform_13(%arg0: i32) -> (i32, i32, i32) {
    %c0_i32 = arith.constant 0 : i32
    %c0_i32_0 = arith.constant 0 : i32
    %c0_i32_1 = arith.constant 0 : i32
    %c0_i32_2 = arith.constant 0 : i32
    return %c0_i32, %c0_i32_0, %c0_i32_1 : i32, i32, i32
  }
  func.func @transform_14(%arg0: i32) -> (i32, i32, i32) {
    %c0_i32 = arith.constant 0 : i32
    %c0_i32_0 = arith.constant 0 : i32
    %c0_i32_1 = arith.constant 0 : i32
    %c0_i32_2 = arith.constant 0 : i32
    return %c0_i32, %c0_i32_0, %c0_i32_1 : i32, i32, i32
  }
  func.func @transform_15(%arg0: i32) -> (i32, i32, i32) {
    %c0_i32 = arith.constant 0 : i32
    %c0_i32_0 = arith.constant 0 : i32
    %c0_i32_1 = arith.constant 0 : i32
    %c0_i32_2 = arith.constant 0 : i32
    return %c0_i32, %c0_i32_0, %c0_i32_1 : i32, i32, i32
  }
  func.func @transform_16(%arg0: i32) -> (i32, i32, i32) {
    %c0_i32 = arith.constant 0 : i32
    %c0_i32_0 = arith.constant 0 : i32
    %c0_i32_1 = arith.constant 0 : i32
    %c0_i32_2 = arith.constant 0 : i32
    return %c0_i32, %c0_i32_0, %c0_i32_1 : i32, i32, i32
  }
  func.func @transform_17(%arg0: i32) -> (i32, i32, i32) {
    %c0_i32 = arith.constant 0 : i32
    %c0_i32_0 = arith.constant 0 : i32
    %c0_i32_1 = arith.constant 0 : i32
    %c0_i32_2 = arith.constant 0 : i32
    return %c0_i32, %c0_i32_0, %c0_i32_1 : i32, i32, i32
  }
  func.func @transform_18(%arg0: i32) -> (i32, i32, i32) {
    %c0_i32 = arith.constant 0 : i32
    %c0_i32_0 = arith.constant 0 : i32
    %c0_i32_1 = arith.constant 0 : i32
    %c0_i32_2 = arith.constant 0 : i32
    return %c0_i32, %c0_i32_0, %c0_i32_1 : i32, i32, i32
  }
  func.func @transform_19(%arg0: i32) -> (i32, i32, i32) {
    %c0_i32 = arith.constant 0 : i32
    %c0_i32_0 = arith.constant 0 : i32
    %c0_i32_1 = arith.constant 0 : i32
    %c0_i32_2 = arith.constant 0 : i32
    return %c0_i32, %c0_i32_0, %c0_i32_1 : i32, i32, i32
  }
  func.func @transform_20(%arg0: i32) -> (i32, i32) {
    %c0_i32 = arith.constant 0 : i32
    %c0_i32_0 = arith.constant 0 : i32
    %c0_i32_1 = arith.constant 0 : i32
    return %c0_i32, %c0_i32_0 : i32, i32
  }
  func.func @transform_21(%arg0: i32) -> (i32, i32) {
    %c0_i32 = arith.constant 0 : i32
    %c0_i32_0 = arith.constant 0 : i32
    %c0_i32_1 = arith.constant 0 : i32
    return %c0_i32, %c0_i32_0 : i32, i32
  }
  func.func @transform_22(%arg0: i32) -> (i32, i32) {
    %c0_i32 = arith.constant 0 : i32
    %c0_i32_0 = arith.constant 0 : i32
    %c0_i32_1 = arith.constant 0 : i32
    return %c0_i32, %c0_i32_0 : i32, i32
  }
  func.func @transform_23(%arg0: i32) -> (i32, i32) {
    %c0_i32 = arith.constant 0 : i32
    %c0_i32_0 = arith.constant 0 : i32
    %c0_i32_1 = arith.constant 0 : i32
    return %c0_i32, %c0_i32_0 : i32, i32
  }
  func.func @transform_24(%arg0: i32) -> (i32, i32, i32) {
    %c0_i32 = arith.constant 0 : i32
    %c0_i32_0 = arith.constant 0 : i32
    %c0_i32_1 = arith.constant 0 : i32
    return %arg0, %c0_i32, %c0_i32_0 : i32, i32, i32
  }
}

</mosaic_0001>

<llo_original>
// kernel: forward.1
$region0: #{forward.1}
  #allocation0 [shape = 'u32[]', space=smem, size = 0x4, offset = 0x4, fixed_abs, tag = 'smem constant byte address 0x4 - core index']
  #allocation1 [shape = 'u32[144,128]{1,0:T(1,128)}', space=vmem, size = 0x12000, scoped, tag = 'internal scratch']
  %s0 = inlined_call_operand.vmem [shape: f32[2,16,128], index: 0, kind: input, shape index: {}]
  %s1 = inlined_call_operand.vmem [shape: f32[2,1,16], index: 1, kind: input, shape index: {}]
  %s2 = inlined_call_operand.vmem [shape: f32[1,128], index: 2, kind: input, shape index: {}]
  %s3 = inlined_call_operand.vmem [shape: f32[1,128], index: 3, kind: input, shape index: {}]
  %s4 = inlined_call_operand.vmem [shape: bf16[3,4,128,32], index: 4, kind: input, shape index: {}]
  %s5 = inlined_call_operand.vmem [shape: f32[3,4,1,32], index: 5, kind: input, shape index: {}]
  %s6 = inlined_call_operand.vmem [shape: bf16[3,4,128,32], index: 6, kind: input, shape index: {}]
  %s7 = inlined_call_operand.vmem [shape: f32[3,4,1,32], index: 7, kind: input, shape index: {}]
  %s8 = inlined_call_operand.vmem [shape: bf16[3,4,128,32], index: 8, kind: input, shape index: {}]
  %s9 = inlined_call_operand.vmem [shape: f32[3,4,1,32], index: 9, kind: input, shape index: {}]
  %s10 = inlined_call_operand.vmem [shape: bf16[3,4,32,128], index: 10, kind: input, shape index: {}]
  %s11 = inlined_call_operand.vmem [shape: f32[3,1,128], index: 11, kind: input, shape index: {}]
  %s12 = inlined_call_operand.vmem [shape: f32[3,1,128], index: 12, kind: input, shape index: {}]
  %s13 = inlined_call_operand.vmem [shape: f32[3,1,128], index: 13, kind: input, shape index: {}]
  %s14 = inlined_call_operand.vmem [shape: bf16[3,128,256], index: 14, kind: input, shape index: {}]
  %s15 = inlined_call_operand.vmem [shape: f32[3,1,256], index: 15, kind: input, shape index: {}]
  %s16 = inlined_call_operand.vmem [shape: bf16[3,256,128], index: 16, kind: input, shape index: {}]
  %s17 = inlined_call_operand.vmem [shape: f32[3,1,128], index: 17, kind: input, shape index: {}]
  %s18 = inlined_call_operand.vmem [shape: f32[3,1,128], index: 18, kind: input, shape index: {}]
  %s19 = inlined_call_operand.vmem [shape: f32[3,1,128], index: 19, kind: input, shape index: {}]
  %s20 = inlined_call_operand.vmem [shape: bf16[128,128], index: 20, kind: input, shape index: {}]
  %s21 = inlined_call_operand.vmem [shape: f32[1,128], index: 21, kind: input, shape index: {}]
  %s22 = inlined_call_operand.vmem [shape: bf16[128,128], index: 22, kind: input, shape index: {}]
  %s23 = inlined_call_operand.vmem [shape: f32[1,128], index: 23, kind: input, shape index: {}]
  %s24 = inlined_call_operand.vmem [shape: bf16[2,16,128], index: 24, kind: output, shape index: {}]
  %s25 = sld [smem:[#allocation0]]
  $region129: #{forward.1} parent=0
    _
  %s27 = ssub.s32 1, %s25
  %s28 = scalar_select 0, %s27, %s25
  loop: start=0, step=1, limit=4
  $region2: #{forward.1} parent=0 // loop_pre_header
    _
  $region3: #{forward.1} parent=0 // loop_header
    %s30 = sphi 0, %s34
    %p31 = scmp.ge.s32.totalorder %s30, 4
    %s40 = sphi 0, %s42
    %s43 = sphi 0, %s40
    %s44 = sphi 0, %s43
    %s60 = sphi 0, %s44
    %s66 = sphi 0, %s68
    %s69 = sphi 0, %s66
    %s70 = sphi 0, %s69
    %s86 = sphi 0, %s70
    %s90 = sphi 0, %s90
    %s92 = sphi 0, %s90
    %s93 = sphi 0, %s92
    %s107 = sphi 0, %s93
    %s111 = sphi 0, %s111
    %s113 = sphi 0, %s111
    %s114 = sphi 0, %s113
    %s128 = sphi 0, %s114
    %s132 = sphi 0, %s132
    %s134 = sphi 0, %s132
    %s135 = sphi 0, %s134
    %s149 = sphi 0, %s135
    %s153 = sphi 0, %s153
    %s155 = sphi 0, %s153
    %s156 = sphi 0, %s155
    %s170 = sphi 0, %s156
    %s174 = sphi 0, %s174
    %s176 = sphi 0, %s174
    %s177 = sphi 0, %s176
    %s191 = sphi 0, %s177
    %s195 = sphi 0, %s195
    %s197 = sphi 0, %s195
    %s198 = sphi 0, %s197
    %s212 = sphi 0, %s198
    %s216 = sphi 0, %s216
    %s218 = sphi 0, %s216
    %s219 = sphi 0, %s218
    %s233 = sphi 0, %s219
    %s237 = sphi 0, %s237
    %s239 = sphi 0, %s237
    %s240 = sphi 0, %s239
    %s254 = sphi 0, %s240
    %s258 = sphi 0, %s258
    %s260 = sphi 0, %s258
    %s261 = sphi 0, %s260
    %s275 = sphi 0, %s261
    %s279 = sphi 0, %s279
    %s281 = sphi 0, %s279
    %s282 = sphi 0, %s281
    %s296 = sphi 0, %s282
    %s300 = sphi 0, %s300
    %s302 = sphi 0, %s300
    %s303 = sphi 0, %s302
    %s317 = sphi 0, %s303
    %s321 = sphi 0, %s321
    %s323 = sphi 0, %s321
    %s324 = sphi 0, %s323
    %s338 = sphi 0, %s324
    %s342 = sphi 0, %s342
    %s344 = sphi 0, %s342
    %s345 = sphi 0, %s344
    %s359 = sphi 0, %s345
    %s363 = sphi 0, %s363
    %s365 = sphi 0, %s363
    %s366 = sphi 0, %s365
    %s380 = sphi 0, %s366
    %s384 = sphi 0, %s384
    %s386 = sphi 0, %s384
    %s387 = sphi 0, %s386
    %s401 = sphi 0, %s387
    %s405 = sphi 0, %s405
    %s407 = sphi 0, %s405
    %s408 = sphi 0, %s407
    %s422 = sphi 0, %s408
    %s426 = sphi 0, %s426
    %s428 = sphi 0, %s426
    %s429 = sphi 0, %s428
    %s443 = sphi 0, %s429
    %s447 = sphi 0, %s447
    %s449 = sphi 0, %s447
    %s450 = sphi 0, %s449
    %s464 = sphi 0, %s450
    %s468 = sphi 0, %s468
    %s470 = sphi 0, %s468
    %s471 = sphi 0, %s470
    %s485 = sphi 0, %s471
    %s489 = sphi 0, %s489
    %s491 = sphi 0, %s489
    %s492 = sphi 0, %s491
    %s506 = sphi 0, %s492
    %s510 = sphi 0, %s510
    %s512 = sphi 0, %s510
    %s513 = sphi 0, %s512
    %s527 = sphi 0, %s513
    %s531 = sphi 0, %s531
    %s533 = sphi 0, %s531
    %s534 = sphi 0, %s533
    %s548 = sphi 0, %s534
    %s554 = sphi 0, %s556
    %s557 = sphi 0, %s554
    %s558 = sphi 0, %s557
    %s574 = sphi 0, %s558
  $region4: #{forward.1} parent=0 // loop_header_branch
    %33 = sbr.rel (%p31) target = $region8
  $region5: #{forward.1} parent=0 // loop_body
    %s35 = ssub.s32 %s30, 1
    %s36 = ssub.s32 %s30, 2
    %s37 = sadd.s32 %s30, 1
    %s38 = ssub.s32 %s30, %s37
    %p39 = scmp.eq.s32.totalorder %s38, 0
    %s41 = sadd.s32 %s40, 1
    %s42 = scalar_select %p39, %s40, %s41
    %p45 = pneg %p39
    %p46 = scmp.eq.s32.totalorder %s30, 1
    %p47 = por %p45, %p46
    %p48 = scmp.ne.s32.totalorder %s40, %s43
    %p49 = scmp.eq.s32.totalorder %s30, 0
    %p50 = por %p48, %p49
    %p51 = scmp.ne.s32.totalorder %s40, %s43
    %p52 = scmp.eq.s32.totalorder %s35, 1
    %p53 = por %p51, %p52
    %p54 = scmp.ne.s32.totalorder %s43, %s44
    %p55 = scmp.eq.s32.totalorder %s35, 0
    %p56 = por %p54, %p55
    %p57 = scmp.ne.s32.totalorder %s43, %s44
    %p58 = scmp.eq.s32.totalorder %s36, 1
    %p59 = por %p57, %p58
    %p61 = scmp.ne.s32.totalorder %s44, %s60
    %p62 = scmp.eq.s32.totalorder %s36, 0
    %p63 = por %p61, %p62
    %s64 = ssub.s32 %s30, %s37
    %p65 = scmp.eq.s32.totalorder %s64, 0
    %s67 = sadd.s32 %s66, 1
    %s68 = scalar_select %p65, %s66, %s67
    %p71 = pneg %p65
    %p72 = scmp.eq.s32.totalorder %s30, 1
    %p73 = por %p71, %p72
    %p74 = scmp.ne.s32.totalorder %s66, %s69
    %p75 = scmp.eq.s32.totalorder %s30, 0
    %p76 = por %p74, %p75
    %p77 = scmp.ne.s32.totalorder %s66, %s69
    %p78 = scmp.eq.s32.totalorder %s35, 1
    %p79 = por %p77, %p78
    %p80 = scmp.ne.s32.totalorder %s69, %s70
    %p81 = scmp.eq.s32.totalorder %s35, 0
    %p82 = por %p80, %p81
    %p83 = scmp.ne.s32.totalorder %s69, %s70
    %p84 = scmp.eq.s32.totalorder %s36, 1
    %p85 = por %p83, %p84
    %p87 = scmp.ne.s32.totalorder %s70, %s86
    %p88 = scmp.eq.s32.totalorder %s36, 0
    %p89 = por %p87, %p88
    %s91 = sadd.s32 %s90, 1
    %p94 = scmp.eq.s32.totalorder %s30, 1
    %p95 = scmp.ne.s32.totalorder %s90, %s92
    %p96 = scmp.eq.s32.totalorder %s30, 0
    %p97 = por %p95, %p96
    %p98 = scmp.ne.s32.totalorder %s90, %s92
    %p99 = scmp.eq.s32.totalorder %s35, 1
    %p100 = por %p98, %p99
    %p101 = scmp.ne.s32.totalorder %s92, %s93
    %p102 = scmp.eq.s32.totalorder %s35, 0
    %p103 = por %p101, %p102
    %p104 = scmp.ne.s32.totalorder %s92, %s93
    %p105 = scmp.eq.s32.totalorder %s36, 1
    %p106 = por %p104, %p105
    %p108 = scmp.ne.s32.totalorder %s93, %s107
    %p109 = scmp.eq.s32.totalorder %s36, 0
    %p110 = por %p108, %p109
    %s112 = sadd.s32 %s111, 1
    %p115 = scmp.eq.s32.totalorder %s30, 1
    %p116 = scmp.ne.s32.totalorder %s111, %s113
    %p117 = scmp.eq.s32.totalorder %s30, 0
    %p118 = por %p116, %p117
    %p119 = scmp.ne.s32.totalorder %s111, %s113
    %p120 = scmp.eq.s32.totalorder %s35, 1
    %p121 = por %p119, %p120
    %p122 = scmp.ne.s32.totalorder %s113, %s114
    %p123 = scmp.eq.s32.totalorder %s35, 0
    %p124 = por %p122, %p123
    %p125 = scmp.ne.s32.totalorder %s113, %s114
    %p126 = scmp.eq.s32.totalorder %s36, 1
    %p127 = por %p125, %p126
    %p129 = scmp.ne.s32.totalorder %s114, %s128
    %p130 = scmp.eq.s32.totalorder %s36, 0
    %p131 = por %p129, %p130
    %s133 = sadd.s32 %s132, 1
    %p136 = scmp.eq.s32.totalorder %s30, 1
    %p137 = scmp.ne.s32.totalorder %s132, %s134
    %p138 = scmp.eq.s32.totalorder %s30, 0
    %p139 = por %p137, %p138
    %p140 = scmp.ne.s32.totalorder %s132, %s134
    %p141 = scmp.eq.s32.totalorder %s35, 1
    %p142 = por %p140, %p141
    %p143 = scmp.ne.s32.totalorder %s134, %s135
    %p144 = scmp.eq.s32.totalorder %s35, 0
    %p145 = por %p143, %p144
    %p146 = scmp.ne.s32.totalorder %s134, %s135
    %p147 = scmp.eq.s32.totalorder %s36, 1
    %p148 = por %p146, %p147
    %p150 = scmp.ne.s32.totalorder %s135, %s149
    %p151 = scmp.eq.s32.totalorder %s36, 0
    %p152 = por %p150, %p151
    %s154 = sadd.s32 %s153, 1
    %p157 = scmp.eq.s32.totalorder %s30, 1
    %p158 = scmp.ne.s32.totalorder %s153, %s155
    %p159 = scmp.eq.s32.totalorder %s30, 0
    %p160 = por %p158, %p159
    %p161 = scmp.ne.s32.totalorder %s153, %s155
    %p162 = scmp.eq.s32.totalorder %s35, 1
    %p163 = por %p161, %p162
    %p164 = scmp.ne.s32.totalorder %s155, %s156
    %p165 = scmp.eq.s32.totalorder %s35, 0
    %p166 = por %p164, %p165
    %p167 = scmp.ne.s32.totalorder %s155, %s156
    %p168 = scmp.eq.s32.totalorder %s36, 1
    %p169 = por %p167, %p168
    %p171 = scmp.ne.s32.totalorder %s156, %s170
    %p172 = scmp.eq.s32.totalorder %s36, 0
    %p173 = por %p171, %p172
    %s175 = sadd.s32 %s174, 1
    %p178 = scmp.eq.s32.totalorder %s30, 1
    %p179 = scmp.ne.s32.totalorder %s174, %s176
    %p180 = scmp.eq.s32.totalorder %s30, 0
    %p181 = por %p179, %p180
    %p182 = scmp.ne.s32.totalorder %s174, %s176
    %p183 = scmp.eq.s32.totalorder %s35, 1
    %p184 = por %p182, %p183
    %p185 = scmp.ne.s32.totalorder %s176, %s177
    %p186 = scmp.eq.s32.totalorder %s35, 0
    %p187 = por %p185, %p186
    %p188 = scmp.ne.s32.totalorder %s176, %s177
    %p189 = scmp.eq.s32.totalorder %s36, 1
    %p190 = por %p188, %p189
    %p192 = scmp.ne.s32.totalorder %s177, %s191
    %p193 = scmp.eq.s32.totalorder %s36, 0
    %p194 = por %p192, %p193
    %s196 = sadd.s32 %s195, 1
    %p199 = scmp.eq.s32.totalorder %s30, 1
    %p200 = scmp.ne.s32.totalorder %s195, %s197
    %p201 = scmp.eq.s32.totalorder %s30, 0
    %p202 = por %p200, %p201
    %p203 = scmp.ne.s32.totalorder %s195, %s197
    %p204 = scmp.eq.s32.totalorder %s35, 1
    %p205 = por %p203, %p204
    %p206 = scmp.ne.s32.totalorder %s197, %s198
    %p207 = scmp.eq.s32.totalorder %s35, 0
    %p208 = por %p206, %p207
    %p209 = scmp.ne.s32.totalorder %s197, %s198
    %p210 = scmp.eq.s32.totalorder %s36, 1
    %p211 = por %p209, %p210
    %p213 = scmp.ne.s32.totalorder %s198, %s212
    %p214 = scmp.eq.s32.totalorder %s36, 0
    %p215 = por %p213, %p214
    %s217 = sadd.s32 %s216, 1
    %p220 = scmp.eq.s32.totalorder %s30, 1
    %p221 = scmp.ne.s32.totalorder %s216, %s218
    %p222 = scmp.eq.s32.totalorder %s30, 0
    %p223 = por %p221, %p222
    %p224 = scmp.ne.s32.totalorder %s216, %s218
    %p225 = scmp.eq.s32.totalorder %s35, 1
    %p226 = por %p224, %p225
    %p227 = scmp.ne.s32.totalorder %s218, %s219
    %p228 = scmp.eq.s32.totalorder %s35, 0
    %p229 = por %p227, %p228
    %p230 = scmp.ne.s32.totalorder %s218, %s219
    %p231 = scmp.eq.s32.totalorder %s36, 1
    %p232 = por %p230, %p231
    %p234 = scmp.ne.s32.totalorder %s219, %s233
    %p235 = scmp.eq.s32.totalorder %s36, 0
    %p236 = por %p234, %p235
    %s238 = sadd.s32 %s237, 1
    %p241 = scmp.eq.s32.totalorder %s30, 1
    %p242 = scmp.ne.s32.totalorder %s237, %s239
    %p243 = scmp.eq.s32.totalorder %s30, 0
    %p244 = por %p242, %p243
    %p245 = scmp.ne.s32.totalorder %s237, %s239
    %p246 = scmp.eq.s32.totalorder %s35, 1
    %p247 = por %p245, %p246
    %p248 = scmp.ne.s32.totalorder %s239, %s240
    %p249 = scmp.eq.s32.totalorder %s35, 0
    %p250 = por %p248, %p249
    %p251 = scmp.ne.s32.totalorder %s239, %s240
    %p252 = scmp.eq.s32.totalorder %s36, 1
    %p253 = por %p251, %p252
    %p255 = scmp.ne.s32.totalorder %s240, %s254
    %p256 = scmp.eq.s32.totalorder %s36, 0
    %p257 = por %p255, %p256
    %s259 = sadd.s32 %s258, 1
    %p262 = scmp.eq.s32.totalorder %s30, 1
    %p263 = scmp.ne.s32.totalorder %s258, %s260
    %p264 = scmp.eq.s32.totalorder %s30, 0
    %p265 = por %p263, %p264
    %p266 = scmp.ne.s32.totalorder %s258, %s260
    %p267 = scmp.eq.s32.totalorder %s35, 1
    %p268 = por %p266, %p267
    %p269 = scmp.ne.s32.totalorder %s260, %s261
    %p270 = scmp.eq.s32.totalorder %s35, 0
    %p271 = por %p269, %p270
    %p272 = scmp.ne.s32.totalorder %s260, %s261
    %p273 = scmp.eq.s32.totalorder %s36, 1
    %p274 = por %p272, %p273
    %p276 = scmp.ne.s32.totalorder %s261, %s275
    %p277 = scmp.eq.s32.totalorder %s36, 0
    %p278 = por %p276, %p277
    %s280 = sadd.s32 %s279, 1
    %p283 = scmp.eq.s32.totalorder %s30, 1
    %p284 = scmp.ne.s32.totalorder %s279, %s281
    %p285 = scmp.eq.s32.totalorder %s30, 0
    %p286 = por %p284, %p285
    %p287 = scmp.ne.s32.totalorder %s279, %s281
    %p288 = scmp.eq.s32.totalorder %s35, 1
    %p289 = por %p287, %p288
    %p290 = scmp.ne.s32.totalorder %s281, %s282
    %p291 = scmp.eq.s32.totalorder %s35, 0
    %p292 = por %p290, %p291
    %p293 = scmp.ne.s32.totalorder %s281, %s282
    %p294 = scmp.eq.s32.totalorder %s36, 1
    %p295 = por %p293, %p294
    %p297 = scmp.ne.s32.totalorder %s282, %s296
    %p298 = scmp.eq.s32.totalorder %s36, 0
    %p299 = por %p297, %p298
    %s301 = sadd.s32 %s300, 1
    %p304 = scmp.eq.s32.totalorder %s30, 1
    %p305 = scmp.ne.s32.totalorder %s300, %s302
    %p306 = scmp.eq.s32.totalorder %s30, 0
    %p307 = por %p305, %p306
    %p308 = scmp.ne.s32.totalorder %s300, %s302
    %p309 = scmp.eq.s32.totalorder %s35, 1
    %p310 = por %p308, %p309
    %p311 = scmp.ne.s32.totalorder %s302, %s303
    %p312 = scmp.eq.s32.totalorder %s35, 0
    %p313 = por %p311, %p312
    %p314 = scmp.ne.s32.totalorder %s302, %s303
    %p315 = scmp.eq.s32.totalorder %s36, 1
    %p316 = por %p314, %p315
    %p318 = scmp.ne.s32.totalorder %s303, %s317
    %p319 = scmp.eq.s32.totalorder %s36, 0
    %p320 = por %p318, %p319
    %s322 = sadd.s32 %s321, 1
    %p325 = scmp.eq.s32.totalorder %s30, 1
    %p326 = scmp.ne.s32.totalorder %s321, %s323
    %p327 = scmp.eq.s32.totalorder %s30, 0
    %p328 = por %p326, %p327
    %p329 = scmp.ne.s32.totalorder %s321, %s323
    %p330 = scmp.eq.s32.totalorder %s35, 1
    %p331 = por %p329, %p330
    %p332 = scmp.ne.s32.totalorder %s323, %s324
    %p333 = scmp.eq.s32.totalorder %s35, 0
    %p334 = por %p332, %p333
    %p335 = scmp.ne.s32.totalorder %s323, %s324
    %p336 = scmp.eq.s32.totalorder %s36, 1
    %p337 = por %p335, %p336
    %p339 = scmp.ne.s32.totalorder %s324, %s338
    %p340 = scmp.eq.s32.totalorder %s36, 0
    %p341 = por %p339, %p340
    %s343 = sadd.s32 %s342, 1
    %p346 = scmp.eq.s32.totalorder %s30, 1
    %p347 = scmp.ne.s32.totalorder %s342, %s344
    %p348 = scmp.eq.s32.totalorder %s30, 0
    %p349 = por %p347, %p348
    %p350 = scmp.ne.s32.totalorder %s342, %s344
    %p351 = scmp.eq.s32.totalorder %s35, 1
    %p352 = por %p350, %p351
    %p353 = scmp.ne.s32.totalorder %s344, %s345
    %p354 = scmp.eq.s32.totalorder %s35, 0
    %p355 = por %p353, %p354
    %p356 = scmp.ne.s32.totalorder %s344, %s345
    %p357 = scmp.eq.s32.totalorder %s36, 1
    %p358 = por %p356, %p357
    %p360 = scmp.ne.s32.totalorder %s345, %s359
    %p361 = scmp.eq.s32.totalorder %s36, 0
    %p362 = por %p360, %p361
    %s364 = sadd.s32 %s363, 1
    %p367 = scmp.eq.s32.totalorder %s30, 1
    %p368 = scmp.ne.s32.totalorder %s363, %s365
    %p369 = scmp.eq.s32.totalorder %s30, 0
    %p370 = por %p368, %p369
    %p371 = scmp.ne.s32.totalorder %s363, %s365
    %p372 = scmp.eq.s32.totalorder %s35, 1
    %p373 = por %p371, %p372
    %p374 = scmp.ne.s32.totalorder %s365, %s366
    %p375 = scmp.eq.s32.totalorder %s35, 0
    %p376 = por %p374, %p375
    %p377 = scmp.ne.s32.totalorder %s365, %s366
    %p378 = scmp.eq.s32.totalorder %s36, 1
    %p379 = por %p377, %p378
    %p381 = scmp.ne.s32.totalorder %s366, %s380
    %p382 = scmp.eq.s32.totalorder %s36, 0
    %p383 = por %p381, %p382
    %s385 = sadd.s32 %s384, 1
    %p388 = scmp.eq.s32.totalorder %s30, 1
    %p389 = scmp.ne.s32.totalorder %s384, %s386
    %p390 = scmp.eq.s32.totalorder %s30, 0
    %p391 = por %p389, %p390
    %p392 = scmp.ne.s32.totalorder %s384, %s386
    %p393 = scmp.eq.s32.totalorder %s35, 1
    %p394 = por %p392, %p393
    %p395 = scmp.ne.s32.totalorder %s386, %s387
    %p396 = scmp.eq.s32.totalorder %s35, 0
    %p397 = por %p395, %p396
    %p398 = scmp.ne.s32.totalorder %s386, %s387
    %p399 = scmp.eq.s32.totalorder %s36, 1
    %p400 = por %p398, %p399
    %p402 = scmp.ne.s32.totalorder %s387, %s401
    %p403 = scmp.eq.s32.totalorder %s36, 0
    %p404 = por %p402, %p403
    %s406 = sadd.s32 %s405, 1
    %p409 = scmp.eq.s32.totalorder %s30, 1
    %p410 = scmp.ne.s32.totalorder %s405, %s407
    %p411 = scmp.eq.s32.totalorder %s30, 0
    %p412 = por %p410, %p411
    %p413 = scmp.ne.s32.totalorder %s405, %s407
    %p414 = scmp.eq.s32.totalorder %s35, 1
    %p415 = por %p413, %p414
    %p416 = scmp.ne.s32.totalorder %s407, %s408
    %p417 = scmp.eq.s32.totalorder %s35, 0
    %p418 = por %p416, %p417
    %p419 = scmp.ne.s32.totalorder %s407, %s408
    %p420 = scmp.eq.s32.totalorder %s36, 1
    %p421 = por %p419, %p420
    %p423 = scmp.ne.s32.totalorder %s408, %s422
    %p424 = scmp.eq.s32.totalorder %s36, 0
    %p425 = por %p423, %p424
    %s427 = sadd.s32 %s426, 1
    %p430 = scmp.eq.s32.totalorder %s30, 1
    %p431 = scmp.ne.s32.totalorder %s426, %s428
    %p432 = scmp.eq.s32.totalorder %s30, 0
    %p433 = por %p431, %p432
    %p434 = scmp.ne.s32.totalorder %s426, %s428
    %p435 = scmp.eq.s32.totalorder %s35, 1
    %p436 = por %p434, %p435
    %p437 = scmp.ne.s32.totalorder %s428, %s429
    %p438 = scmp.eq.s32.totalorder %s35, 0
    %p439 = por %p437, %p438
    %p440 = scmp.ne.s32.totalorder %s428, %s429
    %p441 = scmp.eq.s32.totalorder %s36, 1
    %p442 = por %p440, %p441
    %p444 = scmp.ne.s32.totalorder %s429, %s443
    %p445 = scmp.eq.s32.totalorder %s36, 0
    %p446 = por %p444, %p445
    %s448 = sadd.s32 %s447, 1
    %p451 = scmp.eq.s32.totalorder %s30, 1
    %p452 = scmp.ne.s32.totalorder %s447, %s449
    %p453 = scmp.eq.s32.totalorder %s30, 0
    %p454 = por %p452, %p453
    %p455 = scmp.ne.s32.totalorder %s447, %s449
    %p456 = scmp.eq.s32.totalorder %s35, 1
    %p457 = por %p455, %p456
    %p458 = scmp.ne.s32.totalorder %s449, %s450
    %p459 = scmp.eq.s32.totalorder %s35, 0
    %p460 = por %p458, %p459
    %p461 = scmp.ne.s32.totalorder %s449, %s450
    %p462 = scmp.eq.s32.totalorder %s36, 1
    %p463 = por %p461, %p462
    %p465 = scmp.ne.s32.totalorder %s450, %s464
    %p466 = scmp.eq.s32.totalorder %s36, 0
    %p467 = por %p465, %p466
    %s469 = sadd.s32 %s468, 1
    %p472 = scmp.eq.s32.totalorder %s30, 1
    %p473 = scmp.ne.s32.totalorder %s468, %s470
    %p474 = scmp.eq.s32.totalorder %s30, 0
    %p475 = por %p473, %p474
    %p476 = scmp.ne.s32.totalorder %s468, %s470
    %p477 = scmp.eq.s32.totalorder %s35, 1
    %p478 = por %p476, %p477
    %p479 = scmp.ne.s32.totalorder %s470, %s471
    %p480 = scmp.eq.s32.totalorder %s35, 0
    %p481 = por %p479, %p480
    %p482 = scmp.ne.s32.totalorder %s470, %s471
    %p483 = scmp.eq.s32.totalorder %s36, 1
    %p484 = por %p482, %p483
    %p486 = scmp.ne.s32.totalorder %s471, %s485
    %p487 = scmp.eq.s32.totalorder %s36, 0
    %p488 = por %p486, %p487
    %s490 = sadd.s32 %s489, 1
    %p493 = scmp.eq.s32.totalorder %s30, 1
    %p494 = scmp.ne.s32.totalorder %s489, %s491
    %p495 = scmp.eq.s32.totalorder %s30, 0
    %p496 = por %p494, %p495
    %p497 = scmp.ne.s32.totalorder %s489, %s491
    %p498 = scmp.eq.s32.totalorder %s35, 1
    %p499 = por %p497, %p498
    %p500 = scmp.ne.s32.totalorder %s491, %s492
    %p501 = scmp.eq.s32.totalorder %s35, 0
    %p502 = por %p500, %p501
    %p503 = scmp.ne.s32.totalorder %s491, %s492
    %p504 = scmp.eq.s32.totalorder %s36, 1
    %p505 = por %p503, %p504
    %p507 = scmp.ne.s32.totalorder %s492, %s506
    %p508 = scmp.eq.s32.totalorder %s36, 0
    %p509 = por %p507, %p508
    %s511 = sadd.s32 %s510, 1
    %p514 = scmp.eq.s32.totalorder %s30, 1
    %p515 = scmp.ne.s32.totalorder %s510, %s512
    %p516 = scmp.eq.s32.totalorder %s30, 0
    %p517 = por %p515, %p516
    %p518 = scmp.ne.s32.totalorder %s510, %s512
    %p519 = scmp.eq.s32.totalorder %s35, 1
    %p520 = por %p518, %p519
    %p521 = scmp.ne.s32.totalorder %s512, %s513
    %p522 = scmp.eq.s32.totalorder %s35, 0
    %p523 = por %p521, %p522
    %p524 = scmp.ne.s32.totalorder %s512, %s513
    %p525 = scmp.eq.s32.totalorder %s36, 1
    %p526 = por %p524, %p525
    %p528 = scmp.ne.s32.totalorder %s513, %s527
    %p529 = scmp.eq.s32.totalorder %s36, 0
    %p530 = por %p528, %p529
    %s532 = sadd.s32 %s531, 1
    %p535 = scmp.eq.s32.totalorder %s30, 1
    %p536 = scmp.ne.s32.totalorder %s531, %s533
    %p537 = scmp.eq.s32.totalorder %s30, 0
    %p538 = por %p536, %p537
    %p539 = scmp.ne.s32.totalorder %s531, %s533
    %p540 = scmp.eq.s32.totalorder %s35, 1
    %p541 = por %p539, %p540
    %p542 = scmp.ne.s32.totalorder %s533, %s534
    %p543 = scmp.eq.s32.totalorder %s35, 0
    %p544 = por %p542, %p543
    %p545 = scmp.ne.s32.totalorder %s533, %s534
    %p546 = scmp.eq.s32.totalorder %s36, 1
    %p547 = por %p545, %p546
    %p549 = scmp.ne.s32.totalorder %s534, %s548
    %p550 = scmp.eq.s32.totalorder %s36, 0
    %p551 = por %p549, %p550
    %s552 = ssub.s32 %s30, %s37
    %p553 = scmp.eq.s32.totalorder %s552, 0
    %s555 = sadd.s32 %s554, 1
    %s556 = scalar_select %p553, %s554, %s555
    %p559 = pneg %p553
    %p560 = scmp.eq.s32.totalorder %s30, 1
    %p561 = por %p559, %p560
    %p562 = scmp.ne.s32.totalorder %s554, %s557
    %p563 = scmp.eq.s32.totalorder %s30, 0
    %p564 = por %p562, %p563
    %p565 = scmp.ne.s32.totalorder %s554, %s557
    %p566 = scmp.eq.s32.totalorder %s35, 1
    %p567 = por %p565, %p566
    %p568 = scmp.ne.s32.totalorder %s557, %s558
    %p569 = scmp.eq.s32.totalorder %s35, 0
    %p570 = por %p568, %p569
    %p571 = scmp.ne.s32.totalorder %s557, %s558
    %p572 = scmp.eq.s32.totalorder %s36, 1
    %p573 = por %p571, %p572
    %p575 = scmp.ne.s32.totalorder %s558, %s574
    %p576 = scmp.eq.s32.totalorder %s36, 0
    %p577 = por %p575, %p576
    %p578 = scmp.le.s32.totalorder 1, %s30
    %p579 = scmp.lt.s32.totalorder %s30, 3
    %p580 = pnand %p578, %p579
    %p581 = pneg %p580
    // Predicated region
    $region9: #{forward.1} parent=5 // pred_check
      _
    $region10: #{forward.1} parent=5 // pred_check_branch
      %583 = sbr.rel (%p580) target = $region12
    $region11: #{forward.1} parent=5 // pred_region
      %s584 = ssub.s32 %s30, 1
      // Predicated region
      $region13: #{forward.1} parent=11 // pred_check
        %p585 = pneg %p103
      $region14: #{forward.1} parent=11 // pred_check_branch
        %587 = sbr.rel (%p585) target = $region16
      $region15: #{forward.1} parent=11 // pred_region
        _
      $region16: #{forward.1} parent=11 // pred_fallthru
        _
      // Predicated region
      $region17: #{forward.1} parent=11 // pred_check
        %p588 = pneg %p124
      $region18: #{forward.1} parent=11 // pred_check_branch
        %590 = sbr.rel (%p588) target = $region20
      $region19: #{forward.1} parent=11 // pred_region
        _
      $region20: #{forward.1} parent=11 // pred_fallthru
        _
      // Predicated region
      $region21: #{forward.1} parent=11 // pred_check
        %p591 = pneg %p145
      $region22: #{forward.1} parent=11 // pred_check_branch
        %593 = sbr.rel (%p591) target = $region24
      $region23: #{forward.1} parent=11 // pred_region
        _
      $region24: #{forward.1} parent=11 // pred_fallthru
        _
      // Predicated region
      $region25: #{forward.1} parent=11 // pred_check
        %p594 = pneg %p166
      $region26: #{forward.1} parent=11 // pred_check_branch
        %596 = sbr.rel (%p594) target = $region28
      $region27: #{forward.1} parent=11 // pred_region
        _
      $region28: #{forward.1} parent=11 // pred_fallthru
        _
      // Predicated region
      $region29: #{forward.1} parent=11 // pred_check
        %p597 = pneg %p187
      $region30: #{forward.1} parent=11 // pred_check_branch
        %599 = sbr.rel (%p597) target = $region32
      $region31: #{forward.1} parent=11 // pred_region
        _
      $region32: #{forward.1} parent=11 // pred_fallthru
        _
      // Predicated region
      $region33: #{forward.1} parent=11 // pred_check
        %p600 = pneg %p208
      $region34: #{forward.1} parent=11 // pred_check_branch
        %602 = sbr.rel (%p600) target = $region36
      $region35: #{forward.1} parent=11 // pred_region
        _
      $region36: #{forward.1} parent=11 // pred_fallthru
        _
      // Predicated region
      $region37: #{forward.1} parent=11 // pred_check
        %p603 = pneg %p229
      $region38: #{forward.1} parent=11 // pred_check_branch
        %605 = sbr.rel (%p603) target = $region40
      $region39: #{forward.1} parent=11 // pred_region
        _
      $region40: #{forward.1} parent=11 // pred_fallthru
        _
      // Predicated region
      $region41: #{forward.1} parent=11 // pred_check
        %p606 = pneg %p250
      $region42: #{forward.1} parent=11 // pred_check_branch
        %608 = sbr.rel (%p606) target = $region44
      $region43: #{forward.1} parent=11 // pred_region
        _
      $region44: #{forward.1} parent=11 // pred_fallthru
        _
      // Predicated region
      $region45: #{forward.1} parent=11 // pred_check
        %p609 = pneg %p271
      $region46: #{forward.1} parent=11 // pred_check_branch
        %611 = sbr.rel (%p609) target = $region48
      $region47: #{forward.1} parent=11 // pred_region
        _
      $region48: #{forward.1} parent=11 // pred_fallthru
        _
      // Predicated region
      $region49: #{forward.1} parent=11 // pred_check
        %p612 = pneg %p292
      $region50: #{forward.1} parent=11 // pred_check_branch
        %614 = sbr.rel (%p612) target = $region52
      $region51: #{forward.1} parent=11 // pred_region
        _
      $region52: #{forward.1} parent=11 // pred_fallthru
        _
      // Predicated region
      $region53: #{forward.1} parent=11 // pred_check
        %p615 = pneg %p313
      $region54: #{forward.1} parent=11 // pred_check_branch
        %617 = sbr.rel (%p615) target = $region56
      $region55: #{forward.1} parent=11 // pred_region
        _
      $region56: #{forward.1} parent=11 // pred_fallthru
        _
      // Predicated region
      $region57: #{forward.1} parent=11 // pred_check
        %p618 = pneg %p334
      $region58: #{forward.1} parent=11 // pred_check_branch
        %620 = sbr.rel (%p618) target = $region60
      $region59: #{forward.1} parent=11 // pred_region
        _
      $region60: #{forward.1} parent=11 // pred_fallthru
        _
      // Predicated region
      $region61: #{forward.1} parent=11 // pred_check
        %p621 = pneg %p355
      $region62: #{forward.1} parent=11 // pred_check_branch
        %623 = sbr.rel (%p621) target = $region64
      $region63: #{forward.1} parent=11 // pred_region
        _
      $region64: #{forward.1} parent=11 // pred_fallthru
        _
      // Predicated region
      $region65: #{forward.1} parent=11 // pred_check
        %p624 = pneg %p376
      $region66: #{forward.1} parent=11 // pred_check_branch
        %626 = sbr.rel (%p624) target = $region68
      $region67: #{forward.1} parent=11 // pred_region
        _
      $region68: #{forward.1} parent=11 // pred_fallthru
        _
      // Predicated region
      $region69: #{forward.1} parent=11 // pred_check
        %p627 = pneg %p397
      $region70: #{forward.1} parent=11 // pred_check_branch
        %629 = sbr.rel (%p627) target = $region72
      $region71: #{forward.1} parent=11 // pred_region
        _
      $region72: #{forward.1} parent=11 // pred_fallthru
        _
      // Predicated region
      $region73: #{forward.1} parent=11 // pred_check
        %p630 = pneg %p418
      $region74: #{forward.1} parent=11 // pred_check_branch
        %632 = sbr.rel (%p630) target = $region76
      $region75: #{forward.1} parent=11 // pred_region
        _
      $region76: #{forward.1} parent=11 // pred_fallthru
        _
      // Predicated region
      $region77: #{forward.1} parent=11 // pred_check
        %p633 = pneg %p439
      $region78: #{forward.1} parent=11 // pred_check_branch
        %635 = sbr.rel (%p633) target = $region80
      $region79: #{forward.1} parent=11 // pred_region
        _
      $region80: #{forward.1} parent=11 // pred_fallthru
        _
      // Predicated region
      $region81: #{forward.1} parent=11 // pred_check
        %p636 = pneg %p460
      $region82: #{forward.1} parent=11 // pred_check_branch
        %638 = sbr.rel (%p636) target = $region84
      $region83: #{forward.1} parent=11 // pred_region
        _
      $region84: #{forward.1} parent=11 // pred_fallthru
        _
      // Predicated region
      $region85: #{forward.1} parent=11 // pred_check
        %p639 = pneg %p481
      $region86: #{forward.1} parent=11 // pred_check_branch
        %641 = sbr.rel (%p639) target = $region88
      $region87: #{forward.1} parent=11 // pred_region
        _
      $region88: #{forward.1} parent=11 // pred_fallthru
        _
      // Predicated region
      $region89: #{forward.1} parent=11 // pred_check
        %p642 = pneg %p502
      $region90: #{forward.1} parent=11 // pred_check_branch
        %644 = sbr.rel (%p642) target = $region92
      $region91: #{forward.1} parent=11 // pred_region
        _
      $region92: #{forward.1} parent=11 // pred_fallthru
        _
      // Predicated region
      $region93: #{forward.1} parent=11 // pred_check
        %p645 = pneg %p523
      $region94: #{forward.1} parent=11 // pred_check_branch
        %647 = sbr.rel (%p645) target = $region96
      $region95: #{forward.1} parent=11 // pred_region
        _
      $region96: #{forward.1} parent=11 // pred_fallthru
        _
      // Predicated region
      $region97: #{forward.1} parent=11 // pred_check
        %p648 = pneg %p544
      $region98: #{forward.1} parent=11 // pred_check_branch
        %650 = sbr.rel (%p648) target = $region100
      $region99: #{forward.1} parent=11 // pred_region
        _
      $region100: #{forward.1} parent=11 // pred_fallthru
        _
    $region12: #{forward.1} parent=5 // pred_fallthru
      _
    %p651 = scmp.lt.s32.totalorder %s30, 2
    // Predicated region
    $region101: #{forward.1} parent=5 // pred_check
      %p652 = pneg %p651
    $region102: #{forward.1} parent=5 // pred_check_branch
      %654 = sbr.rel (%p652) target = $region104
    $region103: #{forward.1} parent=5 // pred_region
      // Predicated region
      $region105: #{forward.1} parent=103 // pred_check
        %p655 = pneg %p50
      $region106: #{forward.1} parent=103 // pred_check_branch
        %657 = sbr.rel (%p655) target = $region108
      $region107: #{forward.1} parent=103 // pred_region
        %p658 = scmp.lt.s32.totalorder %s30, 1
        %s659 = scalar_select %p658, %s30, 1
        %s660 = smul.addr %s659, 2
        %s661 = smul.addr %s660, 8
        %s662 = scalar_lea.vmem %s0, %s661
      $region108: #{forward.1} parent=103 // pred_fallthru
        _
      // Predicated region
      $region109: #{forward.1} parent=103 // pred_check
        %p663 = pneg %p76
      $region110: #{forward.1} parent=103 // pred_check_branch
        %665 = sbr.rel (%p663) target = $region112
      $region111: #{forward.1} parent=103 // pred_region
        %p666 = scmp.lt.s32.totalorder %s30, 1
        %s667 = scalar_select %p666, %s30, 1
        %s668 = scalar_lea.vmem %s1, %s667
      $region112: #{forward.1} parent=103 // pred_fallthru
        _
    $region104: #{forward.1} parent=5 // pred_fallthru
      _
    %p669 = scmp.le.s32.totalorder 1, %s30
    %p670 = scmp.lt.s32.totalorder %s30, 3
    %p671 = pnand %p669, %p670
    %p672 = pneg %p671
    // Predicated region
    $region113: #{forward.1} parent=5 // pred_check
      _
    $region114: #{forward.1} parent=5 // pred_check_branch
      %674 = sbr.rel (%p671) target = $region116
    $region115: #{forward.1} parent=5 // pred_region
      %s675 = ssub.s32 %s30, 1
      %p676 = scmp.lt.s32.totalorder %s35, 1
      %s677 = scalar_select %p676, %s35, 1
      %s678 = smul.addr %s677, 2
      %s679 = smul.addr %s678, 8
      %s680 = scalar_lea.vmem %s0, %s679
      %p681 = pneg %p56
      %p682 = pneg %p53
      %p683 = scmp.lt.s32.totalorder %s35, 1
      %s684 = scalar_select %p683, %s35, 1
      %s685 = scalar_lea.vmem %s1, %s684
      %p686 = pneg %p82
      %p687 = pneg %p79
      %p688 = pneg %p103
      %p689 = pneg %p100
      %p690 = pneg %p124
      %p691 = pneg %p121
      %p692 = pneg %p145
      %p693 = pneg %p142
      %p694 = pneg %p166
      %p695 = pneg %p163
      %p696 = pneg %p187
      %p697 = pneg %p184
      %p698 = pneg %p208
      %p699 = pneg %p205
      %p700 = pneg %p229
      %p701 = pneg %p226
      %p702 = pneg %p250
      %p703 = pneg %p247
      %p704 = pneg %p271
      %p705 = pneg %p268
      %p706 = pneg %p292
      %p707 = pneg %p289
      %p708 = pneg %p313
      %p709 = pneg %p310
      %p710 = pneg %p334
      %p711 = pneg %p331
      %p712 = pneg %p355
      %p713 = pneg %p352
      %p714 = pneg %p376
      %p715 = pneg %p373
      %p716 = pneg %p397
      %p717 = pneg %p394
      %p718 = pneg %p418
      %p719 = pneg %p415
      %p720 = pneg %p439
      %p721 = pneg %p436
      %p722 = pneg %p460
      %p723 = pneg %p457
      %p724 = pneg %p481
      %p725 = pneg %p478
      %p726 = pneg %p502
      %p727 = pneg %p499
      %p728 = pneg %p523
      %p729 = pneg %p520
      %p730 = pneg %p544
      %p731 = pneg %p541
      %p732 = pneg %p570
      %p733 = pneg %p567
      %p734 = scmp.lt.s32.totalorder %s35, 1
      %s735 = scalar_select %p734, %s35, 1
      %s736 = smul.addr %s735, 2
      %s737 = smul.addr %s736, 4
      %s738 = scalar_lea.vmem %s24, %s737
      %p739 = scmp.lt.s32.totalorder %s35, 1
      %s740 = scalar_select %p739, %s35, 1
      %s741 = smul.addr %s740, 2
      %s742 = smul.addr %s741, 8
      %s743 = scalar_lea.vmem %s0, %s742
      %p744 = scmp.lt.s32.totalorder %s35, 1
      %s745 = scalar_select %p744, %s35, 1
      %s746 = scalar_lea.vmem %s1, %s745
      %p747 = scmp.lt.s32.totalorder %s35, 1
      %s748 = scalar_select %p747, %s35, 1
      %s749 = smul.addr %s748, 2
      %s750 = smul.addr %s749, 4
      %s751 = scalar_lea.vmem %s24, %s750
      %v753 = vld [vmem:[%s743] sm:$0xff]
      %v754 = vld [vmem:[%s743 + $0x8] sm:$0xff]
      %v755 = vld [vmem:[%s2] sm:$0x1]
      %v756 = vld [vmem:[%s3] sm:$0x1]
      %757 = vadd.xlane.f32.xlu0 %v753
      %v758 = vpop.xlane.xlu0 %757
      %759 = vadd.xlane.f32.xlu0 %v754
      %v760 = vpop.xlane.xlu0 %759
      %v761 = vrcp.pop 128.0
      %v762 = vmul.f32 %v758, %v761
      %v763 = vmul.f32 %v760, %v761
      %v764 = vsub.f32 %v753, %v762
      %v765 = vsub.f32 %v754, %v763
      %v766 = vmul.f32 %v764, %v764
      %v767 = vmul.f32 %v765, %v765
      %768 = vadd.xlane.f32.xlu0 %v766
      %v769 = vpop.xlane.xlu0 %768
      %770 = vadd.xlane.f32.xlu0 %v767
      %v771 = vpop.xlane.xlu0 %770
      %v772 = vmul.f32 %v769, %v761
      %v773 = vmul.f32 %v771, %v761
      %v774 = vadd.f32 %v772, 1e-05
      %v775 = vadd.f32 %v773, 1e-05
      %v776 = vrsqrt.pop %v774
      %v777 = vrsqrt.pop %v775
      %v778 = vmul.f32 %v764, %v776
      %v779 = vmul.f32 %v765, %v777
      %v781 = vlaneseq
      %v782 = vshrl.u32 %v781, 7
      %v783 = vsub.s32 0, %v782
      %v784 = vrot.slane %v755, %v783
      %v786 = vmul.f32 %v778, %v784
      %v787 = vmul.f32 %v779, %v784
      %v789 = vlaneseq
      %v790 = vshrl.u32 %v789, 7
      %v791 = vsub.s32 0, %v790
      %v792 = vrot.slane %v756, %v791
      %v794 = vadd.f32 %v786, %v792
      %v795 = vadd.f32 %v787, %v792
      %v796 = vpack.c.bf16 %v795, %v794
      %v797 = vld [vmem:[%s746] sm:$0x1]
      %v798 = vld [vmem:[%s11] sm:$0x1]
      %v799 = vld [vmem:[%s4] sm:$0xf]
      %v800 = vld [vmem:[%s4 + $0x4] sm:$0xf]
      %v801 = vld [vmem:[%s4 + $0x8] sm:$0xf]
      %v802 = vld [vmem:[%s4 + $0xc] sm:$0xf]
      %v803 = vld [vmem:[%s4 + $0x10] sm:$0xf]
      %v804 = vld [vmem:[%s4 + $0x14] sm:$0xf]
      %v805 = vld [vmem:[%s4 + $0x18] sm:$0xf]
      %v806 = vld [vmem:[%s4 + $0x1c] sm:$0xf]
      %v807 = vld [vmem:[%s4 + $0x20] sm:$0xf]
      %v808 = vld [vmem:[%s4 + $0x24] sm:$0xf]
      %v809 = vld [vmem:[%s4 + $0x28] sm:$0xf]
      %v810 = vld [vmem:[%s4 + $0x2c] sm:$0xf]
      %v811 = vld [vmem:[%s4 + $0x30] sm:$0xf]
      %v812 = vld [vmem:[%s4 + $0x34] sm:$0xf]
      %v813 = vld [vmem:[%s4 + $0x38] sm:$0xf]
      %v814 = vld [vmem:[%s4 + $0x3c] sm:$0xf]
      %v815 = vld [vmem:[%s5] sm:$0x1]
      %v817 = vlaneseq
      %v818 = vshrl.u32 %v817, 7
      %v819 = vsub.s32 0, %v818
      %v820 = vrot.slane %v815, %v819
      %v838 = vunpack.c.l.b16 %v799
      %v839 = vunpack.c.l.b16 %v800
      %v840 = vunpack.c.l.b16 %v801
      %v841 = vunpack.c.l.b16 %v802
      %v842 = vunpack.c.l.b16 %v803
      %v843 = vunpack.c.l.b16 %v804
      %v844 = vunpack.c.l.b16 %v805
      %v845 = vunpack.c.l.b16 %v806
      %v846 = vunpack.c.l.b16 %v807
      %v847 = vunpack.c.l.b16 %v808
      %v848 = vunpack.c.l.b16 %v809
      %v849 = vunpack.c.l.b16 %v810
      %v850 = vunpack.c.l.b16 %v811
      %v851 = vunpack.c.l.b16 %v812
      %v852 = vunpack.c.l.b16 %v813
      %v853 = vunpack.c.l.b16 %v814
      %v854 = vpack.c.b16 %v839, %v838
      %v855 = vpack.c.b16 %v841, %v840
      %v856 = vpack.c.b16 %v843, %v842
      %v857 = vpack.c.b16 %v845, %v844
      %v858 = vpack.c.b16 %v847, %v846
      %v859 = vpack.c.b16 %v849, %v848
      %v860 = vpack.c.b16 %v851, %v850
      %v861 = vpack.c.b16 %v853, %v852
      %870 = vmatprep.subr.bf16.mxu0 0
      %871 = vmatpush1.bf16.msra.mxu0 %v854
      %872 = vmatprep.subr.bf16.mxu0 0
      %873 = vmatpush1.bf16.msra.mxu0 %v855
      %874 = vmatprep.subr.bf16.mxu0 0
      %875 = vmatpush1.bf16.msra.mxu0 %v856
      %876 = vmatprep.subr.bf16.mxu0 0
      %877 = vmatpush1.bf16.msra.mxu0 %v857
      %878 = vmatprep.subr.bf16.mxu0 0
      %879 = vmatpush1.bf16.msra.mxu0 %v858
      %880 = vmatprep.subr.bf16.mxu0 0
      %881 = vmatpush1.bf16.msra.mxu0 %v859
      %882 = vmatprep.subr.bf16.mxu0 0
      %883 = vmatpush1.bf16.msra.mxu0 %v860
      %884 = vmatprep.subr.bf16.mxu0 0
      %885 = vmatpush1.bf16.msra.mxu0 %v861
      %886 = vmatprep.subr.bf16.mxu0 0
      %887 = vmatpush1.bf16.msra.mxu0 0
      %888 = vmatprep.subr.bf16.mxu0 0
      %889 = vmatpush1.bf16.msra.mxu0 0
      %890 = vmatprep.subr.bf16.mxu0 0
      %891 = vmatpush1.bf16.msra.mxu0 0
      %892 = vmatprep.subr.bf16.mxu0 0
      %893 = vmatpush1.bf16.msra.mxu0 0
      %894 = vmatprep.subr.bf16.mxu0 0
      %895 = vmatpush1.bf16.msra.mxu0 0
      %896 = vmatprep.subr.bf16.mxu0 0
      %897 = vmatpush1.bf16.msra.mxu0 0
      %898 = vmatprep.subr.bf16.mxu0 0
      %899 = vmatpush1.bf16.msra.mxu0 0
      %900 = vmatprep.subr.bf16.mxu0 0
      %901 = vmatpush1.bf16.msra.mxu0 0
      %902 = vmatprep.mubr.bf16.mxu0 0
      %903 = vmatmul.mubr.bf16.gmra.mrb[0].mxu0 %v796
      %v904 = vpop.f32.mrb[0].mxu0
      %v905 = vadd.f32 %v820, %v904
      %v906 = vpop.f32.mrb[0].mxu0
      %v907 = vpop.f32.mrb[0].mxu0
      %v908 = vadd.f32 %v820, %v907
      %v909 = vpop.f32.mrb[0].mxu0
      %910 = vdwg.mxu0
      %v911 = vld [vmem:[%s6] sm:$0xf]
      %v912 = vld [vmem:[%s6 + $0x4] sm:$0xf]
      %v913 = vld [vmem:[%s6 + $0x8] sm:$0xf]
      %v914 = vld [vmem:[%s6 + $0xc] sm:$0xf]
      %v915 = vld [vmem:[%s6 + $0x10] sm:$0xf]
      %v916 = vld [vmem:[%s6 + $0x14] sm:$0xf]
      %v917 = vld [vmem:[%s6 + $0x18] sm:$0xf]
      %v918 = vld [vmem:[%s6 + $0x1c] sm:$0xf]
      %v919 = vld [vmem:[%s6 + $0x20] sm:$0xf]
      %v920 = vld [vmem:[%s6 + $0x24] sm:$0xf]
      %v921 = vld [vmem:[%s6 + $0x28] sm:$0xf]
      %v922 = vld [vmem:[%s6 + $0x2c] sm:$0xf]
      %v923 = vld [vmem:[%s6 + $0x30] sm:$0xf]
      %v924 = vld [vmem:[%s6 + $0x34] sm:$0xf]
      %v925 = vld [vmem:[%s6 + $0x38] sm:$0xf]
      %v926 = vld [vmem:[%s6 + $0x3c] sm:$0xf]
      %v927 = vld [vmem:[%s7] sm:$0x1]
      %v929 = vlaneseq
      %v930 = vshrl.u32 %v929, 7
      %v931 = vsub.s32 0, %v930
      %v932 = vrot.slane %v927, %v931
      %v950 = vunpack.c.l.b16 %v911
      %v951 = vunpack.c.l.b16 %v912
      %v952 = vunpack.c.l.b16 %v913
      %v953 = vunpack.c.l.b16 %v914
      %v954 = vunpack.c.l.b16 %v915
      %v955 = vunpack.c.l.b16 %v916
      %v956 = vunpack.c.l.b16 %v917
      %v957 = vunpack.c.l.b16 %v918
      %v958 = vunpack.c.l.b16 %v919
      %v959 = vunpack.c.l.b16 %v920
      %v960 = vunpack.c.l.b16 %v921
      %v961 = vunpack.c.l.b16 %v922
      %v962 = vunpack.c.l.b16 %v923
      %v963 = vunpack.c.l.b16 %v924
      %v964 = vunpack.c.l.b16 %v925
      %v965 = vunpack.c.l.b16 %v926
      %v966 = vpack.c.b16 %v951, %v950
      %v967 = vpack.c.b16 %v953, %v952
      %v968 = vpack.c.b16 %v955, %v954
      %v969 = vpack.c.b16 %v957, %v956
      %v970 = vpack.c.b16 %v959, %v958
      %v971 = vpack.c.b16 %v961, %v960
      %v972 = vpack.c.b16 %v963, %v962
      %v973 = vpack.c.b16 %v965, %v964
      %982 = vmatprep.subr.bf16.mxu0 0
      %983 = vmatpush1.bf16.msra.mxu0 %v966
      %984 = vmatprep.subr.bf16.mxu0 0
      %985 = vmatpush1.bf16.msra.mxu0 %v967
      %986 = vmatprep.subr.bf16.mxu0 0
      %987 = vmatpush1.bf16.msra.mxu0 %v968
      %988 = vmatprep.subr.bf16.mxu0 0
      %989 = vmatpush1.bf16.msra.mxu0 %v969
      %990 = vmatprep.subr.bf16.mxu0 0
      %991 = vmatpush1.bf16.msra.mxu0 %v970
      %992 = vmatprep.subr.bf16.mxu0 0
      %993 = vmatpush1.bf16.msra.mxu0 %v971
      %994 = vmatprep.subr.bf16.mxu0 0
      %995 = vmatpush1.bf16.msra.mxu0 %v972
      %996 = vmatprep.subr.bf16.mxu0 0
      %997 = vmatpush1.bf16.msra.mxu0 %v973
      %998 = vmatprep.subr.bf16.mxu0 0
      %999 = vmatpush1.bf16.msra.mxu0 0
      %1000 = vmatprep.subr.bf16.mxu0 0
      %1001 = vmatpush1.bf16.msra.mxu0 0
      %1002 = vmatprep.subr.bf16.mxu0 0
      %1003 = vmatpush1.bf16.msra.mxu0 0
      %1004 = vmatprep.subr.bf16.mxu0 0
      %1005 = vmatpush1.bf16.msra.mxu0 0
      %1006 = vmatprep.subr.bf16.mxu0 0
      %1007 = vmatpush1.bf16.msra.mxu0 0
      %1008 = vmatprep.subr.bf16.mxu0 0
      %1009 = vmatpush1.bf16.msra.mxu0 0
      %1010 = vmatprep.subr.bf16.mxu0 0
      %1011 = vmatpush1.bf16.msra.mxu0 0
      %1012 = vmatprep.subr.bf16.mxu0 0
      %1013 = vmatpush1.bf16.msra.mxu0 0
      %1014 = vmatprep.mubr.bf16.mxu0 0
      %1015 = vmatmul.mubr.bf16.gmra.mrb[0].mxu0 %v796
      %v1016 = vpop.f32.mrb[0].mxu0
      %v1017 = vadd.f32 %v932, %v1016
      %v1018 = vpop.f32.mrb[0].mxu0
      %v1019 = vpop.f32.mrb[0].mxu0
      %v1020 = vadd.f32 %v932, %v1019
      %v1021 = vpop.f32.mrb[0].mxu0
      %1022 = vdwg.mxu0
      %v1023 = vld [vmem:[%s8] sm:$0xf]
      %v1024 = vld [vmem:[%s8 + $0x4] sm:$0xf]
      %v1025 = vld [vmem:[%s8 + $0x8] sm:$0xf]
      %v1026 = vld [vmem:[%s8 + $0xc] sm:$0xf]
      %v1027 = vld [vmem:[%s8 + $0x10] sm:$0xf]
      %v1028 = vld [vmem:[%s8 + $0x14] sm:$0xf]
      %v1029 = vld [vmem:[%s8 + $0x18] sm:$0xf]
      %v1030 = vld [vmem:[%s8 + $0x1c] sm:$0xf]
      %v1031 = vld [vmem:[%s8 + $0x20] sm:$0xf]
      %v1032 = vld [vmem:[%s8 + $0x24] sm:$0xf]
      %v1033 = vld [vmem:[%s8 + $0x28] sm:$0xf]
      %v1034 = vld [vmem:[%s8 + $0x2c] sm:$0xf]
      %v1035 = vld [vmem:[%s8 + $0x30] sm:$0xf]
      %v1036 = vld [vmem:[%s8 + $0x34] sm:$0xf]
      %v1037 = vld [vmem:[%s8 + $0x38] sm:$0xf]
      %v1038 = vld [vmem:[%s8 + $0x3c] sm:$0xf]
      %v1039 = vld [vmem:[%s9] sm:$0x1]
      %v1041 = vlaneseq
      %v1042 = vshrl.u32 %v1041, 7
      %v1043 = vsub.s32 0, %v1042
      %v1044 = vrot.slane %v1039, %v1043
      %v1062 = vunpack.c.l.b16 %v1023
      %v1063 = vunpack.c.l.b16 %v1024
      %v1064 = vunpack.c.l.b16 %v1025
      %v1065 = vunpack.c.l.b16 %v1026
      %v1066 = vunpack.c.l.b16 %v1027
      %v1067 = vunpack.c.l.b16 %v1028
      %v1068 = vunpack.c.l.b16 %v1029
      %v1069 = vunpack.c.l.b16 %v1030
      %v1070 = vunpack.c.l.b16 %v1031
      %v1071 = vunpack.c.l.b16 %v1032
      %v1072 = vunpack.c.l.b16 %v1033
      %v1073 = vunpack.c.l.b16 %v1034
      %v1074 = vunpack.c.l.b16 %v1035
      %v1075 = vunpack.c.l.b16 %v1036
      %v1076 = vunpack.c.l.b16 %v1037
      %v1077 = vunpack.c.l.b16 %v1038
      %v1078 = vpack.c.b16 %v1063, %v1062
      %v1079 = vpack.c.b16 %v1065, %v1064
      %v1080 = vpack.c.b16 %v1067, %v1066
      %v1081 = vpack.c.b16 %v1069, %v1068
      %v1082 = vpack.c.b16 %v1071, %v1070
      %v1083 = vpack.c.b16 %v1073, %v1072
      %v1084 = vpack.c.b16 %v1075, %v1074
      %v1085 = vpack.c.b16 %v1077, %v1076
      %1094 = vmatprep.subr.bf16.mxu0 0
      %1095 = vmatpush1.bf16.msra.mxu0 %v1078
      %1096 = vmatprep.subr.bf16.mxu0 0
      %1097 = vmatpush1.bf16.msra.mxu0 %v1079
      %1098 = vmatprep.subr.bf16.mxu0 0
      %1099 = vmatpush1.bf16.msra.mxu0 %v1080
      %1100 = vmatprep.subr.bf16.mxu0 0
      %1101 = vmatpush1.bf16.msra.mxu0 %v1081
      %1102 = vmatprep.subr.bf16.mxu0 0
      %1103 = vmatpush1.bf16.msra.mxu0 %v1082
      %1104 = vmatprep.subr.bf16.mxu0 0
      %1105 = vmatpush1.bf16.msra.mxu0 %v1083
      %1106 = vmatprep.subr.bf16.mxu0 0
      %1107 = vmatpush1.bf16.msra.mxu0 %v1084
      %1108 = vmatprep.subr.bf16.mxu0 0
      %1109 = vmatpush1.bf16.msra.mxu0 %v1085
      %1110 = vmatprep.subr.bf16.mxu0 0
      %1111 = vmatpush1.bf16.msra.mxu0 0
      %1112 = vmatprep.subr.bf16.mxu0 0
      %1113 = vmatpush1.bf16.msra.mxu0 0
      %1114 = vmatprep.subr.bf16.mxu0 0
      %1115 = vmatpush1.bf16.msra.mxu0 0
      %1116 = vmatprep.subr.bf16.mxu0 0
      %1117 = vmatpush1.bf16.msra.mxu0 0
      %1118 = vmatprep.subr.bf16.mxu0 0
      %1119 = vmatpush1.bf16.msra.mxu0 0
      %1120 = vmatprep.subr.bf16.mxu0 0
      %1121 = vmatpush1.bf16.msra.mxu0 0
      %1122 = vmatprep.subr.bf16.mxu0 0
      %1123 = vmatpush1.bf16.msra.mxu0 0
      %1124 = vmatprep.subr.bf16.mxu0 0
      %1125 = vmatpush1.bf16.msra.mxu0 0
      %1126 = vmatprep.mubr.bf16.mxu0 0
      %1127 = vmatmul.mubr.bf16.gmra.mrb[0].mxu0 %v796
      %v1128 = vpop.f32.mrb[0].mxu0
      %v1129 = vadd.f32 %v1044, %v1128
      %v1130 = vpop.f32.mrb[0].mxu0
      %v1131 = vpop.f32.mrb[0].mxu0
      %v1132 = vadd.f32 %v1044, %v1131
      %v1133 = vpop.f32.mrb[0].mxu0
      %1134 = vdwg.mxu0
      %v1135 = vpack.c.bf16 %v908, %v905
      %v1136 = vpack.c.bf16 %v1020, %v1017
      %v1138 = vlaneseq
      %v1139 = vshrl.u32 %v1138, 7
      %v1140 = vsub.s32 0, %v1139
      %v1141 = vrot.slane %v797, %v1140
      %vm1143 = vcmask 261120
      %v1145 = vsel %vm1143, %v1135, 0
      %v1148 = vsel %vm1143, %v1136, 0
      %1150 = vmatprep.subr.bf16.mxu0 0
      %1151 = vmatpush1.bf16.xpose.msra.mxu0 %v1148
      %1152 = vmatprep.subr.bf16.mxu0 0
      %1153 = vmatpush1.bf16.xpose.msra.mxu0 0
      %1154 = vmatprep.subr.bf16.mxu0 0
      %1155 = vmatpush1.bf16.xpose.msra.mxu0 0
      %1156 = vmatprep.subr.bf16.mxu0 0
      %1157 = vmatpush1.bf16.xpose.msra.mxu0 0
      %1158 = vmatprep.subr.bf16.mxu0 0
      %1159 = vmatpush1.bf16.xpose.msra.mxu0 0
      %1160 = vmatprep.subr.bf16.mxu0 0
      %1161 = vmatpush1.bf16.xpose.msra.mxu0 0
      %1162 = vmatprep.subr.bf16.mxu0 0
      %1163 = vmatpush1.bf16.xpose.msra.mxu0 0
      %1164 = vmatprep.subr.bf16.mxu0 0
      %1165 = vmatpush1.bf16.xpose.msra.mxu0 0
      %1166 = vmatprep.subr.bf16.mxu0 0
      %1167 = vmatpush1.bf16.xpose.msra.mxu0 0
      %1168 = vmatprep.subr.bf16.mxu0 0
      %1169 = vmatpush1.bf16.xpose.msra.mxu0 0
      %1170 = vmatprep.subr.bf16.mxu0 0
      %1171 = vmatpush1.bf16.xpose.msra.mxu0 0
      %1172 = vmatprep.subr.bf16.mxu0 0
      %1173 = vmatpush1.bf16.xpose.msra.mxu0 0
      %1174 = vmatprep.subr.bf16.mxu0 0
      %1175 = vmatpush1.bf16.xpose.msra.mxu0 0
      %1176 = vmatprep.subr.bf16.mxu0 0
      %1177 = vmatpush1.bf16.xpose.msra.mxu0 0
      %1178 = vmatprep.subr.bf16.mxu0 0
      %1179 = vmatpush1.bf16.xpose.msra.mxu0 0
      %1180 = vmatprep.subr.bf16.mxu0 0
      %1181 = vmatpush1.bf16.xpose.msra.mxu0 0
      %1182 = vmatprep.mubr.bf16.mxu0 0
      %1183 = vmatmul.mubr.bf16.gmra.mrb[0].mxu0 %v1145
      %v1184 = vpop.f32.mrb[0].mxu0
      %v1185 = vadd.f32 %v1141, %v1184
      %v1186 = vpop.f32.mrb[0].mxu0
      %v1187 = vpop.f32.mrb[0].mxu0
      %v1188 = vadd.f32 %v1141, %v1187
      %v1189 = vpop.f32.mrb[0].mxu0
      %1190 = vdwg.mxu0
      %vm1191 = vcmask 130048
      %v1192 = vsel %vm1191, %v1185, -inf
      %1193 = vmax.xlane.f32.xlu0 %v1192
      %v1194 = vpop.xlane.xlu0 %1193
      %v1195 = vsel %vm1191, %v1188, -inf
      %1196 = vmax.xlane.f32.xlu0 %v1195
      %v1197 = vpop.xlane.xlu0 %1196
      %v1198 = vsub.f32 %v1185, %v1194
      %v1199 = vsub.f32 %v1188, %v1197
      %v1200 = vmul.f32 %v1198, 1.442695
      %v1201 = vpow.pop %v1200
      %v1202 = vmul.f32 %v1199, 1.442695
      %v1203 = vpow.pop %v1202
      %v1204 = vsel %vm1191, %v1201, 0.0
      %1205 = vadd.xlane.f32.xlu0 %v1204
      %v1206 = vpop.xlane.xlu0 %1205
      %v1207 = vsel %vm1191, %v1203, 0.0
      %1208 = vadd.xlane.f32.xlu0 %v1207
      %v1209 = vpop.xlane.xlu0 %1208
      %v1210 = vrcp.pop %v1206
      %v1211 = vrcp.pop %v1209
      %v1212 = vmul.f32 %v1201, %v1210
      %v1213 = vmul.f32 %v1203, %v1211
      %v1214 = vpack.c.bf16 %v1213, %v1212
      %v1215 = vpack.c.bf16 %v1132, %v1129
      %v1217 = vsel %vm1191, %v1214, 0
      %1219 = vmatprep.subr.bf16.mxu0 0
      %1220 = vmatpush1.bf16.msra.mxu0 %v1215
      %1221 = vmatprep.subr.bf16.mxu0 0
      %1222 = vmatpush1.bf16.msra.mxu0 0
      %1223 = vmatprep.subr.bf16.mxu0 0
      %1224 = vmatpush1.bf16.msra.mxu0 0
      %1225 = vmatprep.subr.bf16.mxu0 0
      %1226 = vmatpush1.bf16.msra.mxu0 0
      %1227 = vmatprep.subr.bf16.mxu0 0
      %1228 = vmatpush1.bf16.msra.mxu0 0
      %1229 = vmatprep.subr.bf16.mxu0 0
      %1230 = vmatpush1.bf16.msra.mxu0 0
      %1231 = vmatprep.subr.bf16.mxu0 0
      %1232 = vmatpush1.bf16.msra.mxu0 0
      %1233 = vmatprep.subr.bf16.mxu0 0
      %1234 = vmatpush1.bf16.msra.mxu0 0
      %1235 = vmatprep.subr.bf16.mxu0 0
      %1236 = vmatpush1.bf16.msra.mxu0 0
      %1237 = vmatprep.subr.bf16.mxu0 0
      %1238 = vmatpush1.bf16.msra.mxu0 0
      %1239 = vmatprep.subr.bf16.mxu0 0
      %1240 = vmatpush1.bf16.msra.mxu0 0
      %1241 = vmatprep.subr.bf16.mxu0 0
      %1242 = vmatpush1.bf16.msra.mxu0 0
      %1243 = vmatprep.subr.bf16.mxu0 0
      %1244 = vmatpush1.bf16.msra.mxu0 0
      %1245 = vmatprep.subr.bf16.mxu0 0
      %1246 = vmatpush1.bf16.msra.mxu0 0
      %1247 = vmatprep.subr.bf16.mxu0 0
      %1248 = vmatpush1.bf16.msra.mxu0 0
      %1249 = vmatprep.subr.bf16.mxu0 0
      %1250 = vmatpush1.bf16.msra.mxu0 0
      %1251 = vmatprep.mubr.bf16.mxu0 0
      %1252 = vmatmul.mubr.bf16.gmra.mrb[0].mxu0 %v1217
      %v1253 = vpop.f32.mrb[0].mxu0
      %v1254 = vadd.f32 0.0, %v1253
      %v1255 = vpop.f32.mrb[0].mxu0
      %v1256 = vpop.f32.mrb[0].mxu0
      %v1257 = vadd.f32 0.0, %v1256
      %v1258 = vpop.f32.mrb[0].mxu0
      %1259 = vdwg.mxu0
      %v1260 = vpack.c.bf16 %v1257, %v1254
      %v1261 = vld [vmem:[%s10] sm:$0xf]
      %v1262 = vld [vmem:[%s10 + $0x4] sm:$0xf]
      %v1263 = vld [vmem:[%s10 + $0x8] sm:$0xf]
      %v1264 = vld [vmem:[%s10 + $0xc] sm:$0xf]
      %v1269 = vunpack.c.l.b16 %v1261
      %v1270 = vunpack.c.l.b16 %v1262
      %v1271 = vunpack.c.l.b16 %v1263
      %v1272 = vunpack.c.l.b16 %v1264
      %v1273 = vpack.c.b16 %v1270, %v1269
      %v1274 = vpack.c.b16 %v1272, %v1271
      %v1278 = vsel %vm1143, %v1260, 0
      %1280 = vmatprep.subr.bf16.mxu0 0
      %1281 = vmatpush1.bf16.msra.mxu0 %v1273
      %1282 = vmatprep.subr.bf16.mxu0 0
      %1283 = vmatpush1.bf16.msra.mxu0 %v1274
      %1284 = vmatprep.subr.bf16.mxu0 0
      %1285 = vmatpush1.bf16.msra.mxu0 0
      %1286 = vmatprep.subr.bf16.mxu0 0
      %1287 = vmatpush1.bf16.msra.mxu0 0
      %1288 = vmatprep.subr.bf16.mxu0 0
      %1289 = vmatpush1.bf16.msra.mxu0 0
      %1290 = vmatprep.subr.bf16.mxu0 0
      %1291 = vmatpush1.bf16.msra.mxu0 0
      %1292 = vmatprep.subr.bf16.mxu0 0
      %1293 = vmatpush1.bf16.msra.mxu0 0
      %1294 = vmatprep.subr.bf16.mxu0 0
      %1295 = vmatpush1.bf16.msra.mxu0 0
      %1296 = vmatprep.subr.bf16.mxu0 0
      %1297 = vmatpush1.bf16.msra.mxu0 0
      %1298 = vmatprep.subr.bf16.mxu0 0
      %1299 = vmatpush1.bf16.msra.mxu0 0
      %1300 = vmatprep.subr.bf16.mxu0 0
      %1301 = vmatpush1.bf16.msra.mxu0 0
      %1302 = vmatprep.subr.bf16.mxu0 0
      %1303 = vmatpush1.bf16.msra.mxu0 0
      %1304 = vmatprep.subr.bf16.mxu0 0
      %1305 = vmatpush1.bf16.msra.mxu0 0
      %1306 = vmatprep.subr.bf16.mxu0 0
      %1307 = vmatpush1.bf16.msra.mxu0 0
      %1308 = vmatprep.subr.bf16.mxu0 0
      %1309 = vmatpush1.bf16.msra.mxu0 0
      %1310 = vmatprep.subr.bf16.mxu0 0
      %1311 = vmatpush1.bf16.msra.mxu0 0
      %1312 = vmatprep.mubr.bf16.mxu0 0
      %1313 = vmatmul.mubr.bf16.gmra.mrb[0].mxu0 %v1278
      %v1314 = vpop.f32.mrb[0].mxu0
      %v1315 = vadd.f32 0.0, %v1314
      %v1316 = vpop.f32.mrb[0].mxu0
      %v1317 = vpop.f32.mrb[0].mxu0
      %v1318 = vadd.f32 0.0, %v1317
      %v1319 = vpop.f32.mrb[0].mxu0
      %1320 = vdwg.mxu0
      %v1322 = vlaneseq
      %v1323 = vshrl.u32 %v1322, 7
      %v1324 = vsub.s32 0, %v1323
      %v1325 = vrot.slane %v798, %v1324
      %v1327 = vadd.f32 %v1325, %v1315
      %v1328 = vadd.f32 %v1325, %v1318
      %s1329 = scalar_lea.vmem %s4, 64
      %v1330 = vld [vmem:[%s1329] sm:$0xf]
      %v1331 = vld [vmem:[%s1329 + $0x4] sm:$0xf]
      %v1332 = vld [vmem:[%s1329 + $0x8] sm:$0xf]
      %v1333 = vld [vmem:[%s1329 + $0xc] sm:$0xf]
      %v1334 = vld [vmem:[%s1329 + $0x10] sm:$0xf]
      %v1335 = vld [vmem:[%s1329 + $0x14] sm:$0xf]
      %v1336 = vld [vmem:[%s1329 + $0x18] sm:$0xf]
      %v1337 = vld [vmem:[%s1329 + $0x1c] sm:$0xf]
      %v1338 = vld [vmem:[%s1329 + $0x20] sm:$0xf]
      %v1339 = vld [vmem:[%s1329 + $0x24] sm:$0xf]
      %v1340 = vld [vmem:[%s1329 + $0x28] sm:$0xf]
      %v1341 = vld [vmem:[%s1329 + $0x2c] sm:$0xf]
      %v1342 = vld [vmem:[%s1329 + $0x30] sm:$0xf]
      %v1343 = vld [vmem:[%s1329 + $0x34] sm:$0xf]
      %v1344 = vld [vmem:[%s1329 + $0x38] sm:$0xf]
      %v1345 = vld [vmem:[%s1329 + $0x3c] sm:$0xf]
      %s1346 = scalar_lea.vmem %s5, 1
      %v1347 = vld [vmem:[%s1346] sm:$0x1]
      %v1349 = vlaneseq
      %v1350 = vshrl.u32 %v1349, 7
      %v1351 = vsub.s32 0, %v1350
      %v1352 = vrot.slane %v1347, %v1351
      %v1370 = vunpack.c.l.b16 %v1330
      %v1371 = vunpack.c.l.b16 %v1331
      %v1372 = vunpack.c.l.b16 %v1332
      %v1373 = vunpack.c.l.b16 %v1333
      %v1374 = vunpack.c.l.b16 %v1334
      %v1375 = vunpack.c.l.b16 %v1335
      %v1376 = vunpack.c.l.b16 %v1336
      %v1377 = vunpack.c.l.b16 %v1337
      %v1378 = vunpack.c.l.b16 %v1338
      %v1379 = vunpack.c.l.b16 %v1339
      %v1380 = vunpack.c.l.b16 %v1340
      %v1381 = vunpack.c.l.b16 %v1341
      %v1382 = vunpack.c.l.b16 %v1342
      %v1383 = vunpack.c.l.b16 %v1343
      %v1384 = vunpack.c.l.b16 %v1344
      %v1385 = vunpack.c.l.b16 %v1345
      %v1386 = vpack.c.b16 %v1371, %v1370
      %v1387 = vpack.c.b16 %v1373, %v1372
      %v1388 = vpack.c.b16 %v1375, %v1374
      %v1389 = vpack.c.b16 %v1377, %v1376
      %v1390 = vpack.c.b16 %v1379, %v1378
      %v1391 = vpack.c.b16 %v1381, %v1380
      %v1392 = vpack.c.b16 %v1383, %v1382
      %v1393 = vpack.c.b16 %v1385, %v1384
      %1402 = vmatprep.subr.bf16.mxu0 0
      %1403 = vmatpush1.bf16.msra.mxu0 %v1386
      %1404 = vmatprep.subr.bf16.mxu0 0
      %1405 = vmatpush1.bf16.msra.mxu0 %v1387
      %1406 = vmatprep.subr.bf16.mxu0 0
      %1407 = vmatpush1.bf16.msra.mxu0 %v1388
      %1408 = vmatprep.subr.bf16.mxu0 0
      %1409 = vmatpush1.bf16.msra.mxu0 %v1389
      %1410 = vmatprep.subr.bf16.mxu0 0
      %1411 = vmatpush1.bf16.msra.mxu0 %v1390
      %1412 = vmatprep.subr.bf16.mxu0 0
      %1413 = vmatpush1.bf16.msra.mxu0 %v1391
      %1414 = vmatprep.subr.bf16.mxu0 0
      %1415 = vmatpush1.bf16.msra.mxu0 %v1392
      %1416 = vmatprep.subr.bf16.mxu0 0
      %1417 = vmatpush1.bf16.msra.mxu0 %v1393
      %1418 = vmatprep.subr.bf16.mxu0 0
      %1419 = vmatpush1.bf16.msra.mxu0 0
      %1420 = vmatprep.subr.bf16.mxu0 0
      %1421 = vmatpush1.bf16.msra.mxu0 0
      %1422 = vmatprep.subr.bf16.mxu0 0
      %1423 = vmatpush1.bf16.msra.mxu0 0
      %1424 = vmatprep.subr.bf16.mxu0 0
      %1425 = vmatpush1.bf16.msra.mxu0 0
      %1426 = vmatprep.subr.bf16.mxu0 0
      %1427 = vmatpush1.bf16.msra.mxu0 0
      %1428 = vmatprep.subr.bf16.mxu0 0
      %1429 = vmatpush1.bf16.msra.mxu0 0
      %1430 = vmatprep.subr.bf16.mxu0 0
      %1431 = vmatpush1.bf16.msra.mxu0 0
      %1432 = vmatprep.subr.bf16.mxu0 0
      %1433 = vmatpush1.bf16.msra.mxu0 0
      %1434 = vmatprep.mubr.bf16.mxu0 0
      %1435 = vmatmul.mubr.bf16.gmra.mrb[0].mxu0 %v796
      %v1436 = vpop.f32.mrb[0].mxu0
      %v1437 = vadd.f32 %v1352, %v1436
      %v1438 = vpop.f32.mrb[0].mxu0
      %v1439 = vpop.f32.mrb[0].mxu0
      %v1440 = vadd.f32 %v1352, %v1439
      %v1441 = vpop.f32.mrb[0].mxu0
      %1442 = vdwg.mxu0
      %s1443 = scalar_lea.vmem %s6, 64
      %v1444 = vld [vmem:[%s1443] sm:$0xf]
      %v1445 = vld [vmem:[%s1443 + $0x4] sm:$0xf]
      %v1446 = vld [vmem:[%s1443 + $0x8] sm:$0xf]
      %v1447 = vld [vmem:[%s1443 + $0xc] sm:$0xf]
      %v1448 = vld [vmem:[%s1443 + $0x10] sm:$0xf]
      %v1449 = vld [vmem:[%s1443 + $0x14] sm:$0xf]
      %v1450 = vld [vmem:[%s1443 + $0x18] sm:$0xf]
      %v1451 = vld [vmem:[%s1443 + $0x1c] sm:$0xf]
      %v1452 = vld [vmem:[%s1443 + $0x20] sm:$0xf]
      %v1453 = vld [vmem:[%s1443 + $0x24] sm:$0xf]
      %v1454 = vld [vmem:[%s1443 + $0x28] sm:$0xf]
      %v1455 = vld [vmem:[%s1443 + $0x2c] sm:$0xf]
      %v1456 = vld [vmem:[%s1443 + $0x30] sm:$0xf]
      %v1457 = vld [vmem:[%s1443 + $0x34] sm:$0xf]
      %v1458 = vld [vmem:[%s1443 + $0x38] sm:$0xf]
      %v1459 = vld [vmem:[%s1443 + $0x3c] sm:$0xf]
      %s1460 = scalar_lea.vmem %s7, 1
      %v1461 = vld [vmem:[%s1460] sm:$0x1]
      %v1463 = vlaneseq
      %v1464 = vshrl.u32 %v1463, 7
      %v1465 = vsub.s32 0, %v1464
      %v1466 = vrot.slane %v1461, %v1465
      %v1484 = vunpack.c.l.b16 %v1444
      %v1485 = vunpack.c.l.b16 %v1445
      %v1486 = vunpack.c.l.b16 %v1446
      %v1487 = vunpack.c.l.b16 %v1447
      %v1488 = vunpack.c.l.b16 %v1448
      %v1489 = vunpack.c.l.b16 %v1449
      %v1490 = vunpack.c.l.b16 %v1450
      %v1491 = vunpack.c.l.b16 %v1451
      %v1492 = vunpack.c.l.b16 %v1452
      %v1493 = vunpack.c.l.b16 %v1453
      %v1494 = vunpack.c.l.b16 %v1454
      %v1495 = vunpack.c.l.b16 %v1455
      %v1496 = vunpack.c.l.b16 %v1456
      %v1497 = vunpack.c.l.b16 %v1457
      %v1498 = vunpack.c.l.b16 %v1458
      %v1499 = vunpack.c.l.b16 %v1459
      %v1500 = vpack.c.b16 %v1485, %v1484
      %v1501 = vpack.c.b16 %v1487, %v1486
      %v1502 = vpack.c.b16 %v1489, %v1488
      %v1503 = vpack.c.b16 %v1491, %v1490
      %v1504 = vpack.c.b16 %v1493, %v1492
      %v1505 = vpack.c.b16 %v1495, %v1494
      %v1506 = vpack.c.b16 %v1497, %v1496
      %v1507 = vpack.c.b16 %v1499, %v1498
      %1516 = vmatprep.subr.bf16.mxu0 0
      %1517 = vmatpush1.bf16.msra.mxu0 %v1500
      %1518 = vmatprep.subr.bf16.mxu0 0
      %1519 = vmatpush1.bf16.msra.mxu0 %v1501
      %1520 = vmatprep.subr.bf16.mxu0 0
      %1521 = vmatpush1.bf16.msra.mxu0 %v1502
      %1522 = vmatprep.subr.bf16.mxu0 0
      %1523 = vmatpush1.bf16.msra.mxu0 %v1503
      %1524 = vmatprep.subr.bf16.mxu0 0
      %1525 = vmatpush1.bf16.msra.mxu0 %v1504
      %1526 = vmatprep.subr.bf16.mxu0 0
      %1527 = vmatpush1.bf16.msra.mxu0 %v1505
      %1528 = vmatprep.subr.bf16.mxu0 0
      %1529 = vmatpush1.bf16.msra.mxu0 %v1506
      %1530 = vmatprep.subr.bf16.mxu0 0
      %1531 = vmatpush1.bf16.msra.mxu0 %v1507
      %1532 = vmatprep.subr.bf16.mxu0 0
      %1533 = vmatpush1.bf16.msra.mxu0 0
      %1534 = vmatprep.subr.bf16.mxu0 0
      %1535 = vmatpush1.bf16.msra.mxu0 0
      %1536 = vmatprep.subr.bf16.mxu0 0
      %1537 = vmatpush1.bf16.msra.mxu0 0
      %1538 = vmatprep.subr.bf16.mxu0 0
      %1539 = vmatpush1.bf16.msra.mxu0 0
      %1540 = vmatprep.subr.bf16.mxu0 0
      %1541 = vmatpush1.bf16.msra.mxu0 0
      %1542 = vmatprep.subr.bf16.mxu0 0
      %1543 = vmatpush1.bf16.msra.mxu0 0
      %1544 = vmatprep.subr.bf16.mxu0 0
      %1545 = vmatpush1.bf16.msra.mxu0 0
      %1546 = vmatprep.subr.bf16.mxu0 0
      %1547 = vmatpush1.bf16.msra.mxu0 0
      %1548 = vmatprep.mubr.bf16.mxu0 0
      %1549 = vmatmul.mubr.bf16.gmra.mrb[0].mxu0 %v796
      %v1550 = vpop.f32.mrb[0].mxu0
      %v1551 = vadd.f32 %v1466, %v1550
      %v1552 = vpop.f32.mrb[0].mxu0
      %v1553 = vpop.f32.mrb[0].mxu0
      %v1554 = vadd.f32 %v1466, %v1553
      %v1555 = vpop.f32.mrb[0].mxu0
      %1556 = vdwg.mxu0
      %s1557 = scalar_lea.vmem %s8, 64
      %v1558 = vld [vmem:[%s1557] sm:$0xf]
      %v1559 = vld [vmem:[%s1557 + $0x4] sm:$0xf]
      %v1560 = vld [vmem:[%s1557 + $0x8] sm:$0xf]
      %v1561 = vld [vmem:[%s1557 + $0xc] sm:$0xf]
      %v1562 = vld [vmem:[%s1557 + $0x10] sm:$0xf]
      %v1563 = vld [vmem:[%s1557 + $0x14] sm:$0xf]
      %v1564 = vld [vmem:[%s1557 + $0x18] sm:$0xf]
      %v1565 = vld [vmem:[%s1557 + $0x1c] sm:$0xf]
      %v1566 = vld [vmem:[%s1557 + $0x20] sm:$0xf]
      %v1567 = vld [vmem:[%s1557 + $0x24] sm:$0xf]
      %v1568 = vld [vmem:[%s1557 + $0x28] sm:$0xf]
      %v1569 = vld [vmem:[%s1557 + $0x2c] sm:$0xf]
      %v1570 = vld [vmem:[%s1557 + $0x30] sm:$0xf]
      %v1571 = vld [vmem:[%s1557 + $0x34] sm:$0xf]
      %v1572 = vld [vmem:[%s1557 + $0x38] sm:$0xf]
      %v1573 = vld [vmem:[%s1557 + $0x3c] sm:$0xf]
      %s1574 = scalar_lea.vmem %s9, 1
      %v1575 = vld [vmem:[%s1574] sm:$0x1]
      %v1577 = vlaneseq
      %v1578 = vshrl.u32 %v1577, 7
      %v1579 = vsub.s32 0, %v1578
      %v1580 = vrot.slane %v1575, %v1579
      %v1598 = vunpack.c.l.b16 %v1558
      %v1599 = vunpack.c.l.b16 %v1559
      %v1600 = vunpack.c.l.b16 %v1560
      %v1601 = vunpack.c.l.b16 %v1561
      %v1602 = vunpack.c.l.b16 %v1562
      %v1603 = vunpack.c.l.b16 %v1563
      %v1604 = vunpack.c.l.b16 %v1564
      %v1605 = vunpack.c.l.b16 %v1565
      %v1606 = vunpack.c.l.b16 %v1566
      %v1607 = vunpack.c.l.b16 %v1567
      %v1608 = vunpack.c.l.b16 %v1568
      %v1609 = vunpack.c.l.b16 %v1569
      %v1610 = vunpack.c.l.b16 %v1570
      %v1611 = vunpack.c.l.b16 %v1571
      %v1612 = vunpack.c.l.b16 %v1572
      %v1613 = vunpack.c.l.b16 %v1573
      %v1614 = vpack.c.b16 %v1599, %v1598
      %v1615 = vpack.c.b16 %v1601, %v1600
      %v1616 = vpack.c.b16 %v1603, %v1602
      %v1617 = vpack.c.b16 %v1605, %v1604
      %v1618 = vpack.c.b16 %v1607, %v1606
      %v1619 = vpack.c.b16 %v1609, %v1608
      %v1620 = vpack.c.b16 %v1611, %v1610
      %v1621 = vpack.c.b16 %v1613, %v1612
      %1630 = vmatprep.subr.bf16.mxu0 0
      %1631 = vmatpush1.bf16.msra.mxu0 %v1614
      %1632 = vmatprep.subr.bf16.mxu0 0
      %1633 = vmatpush1.bf16.msra.mxu0 %v1615
      %1634 = vmatprep.subr.bf16.mxu0 0
      %1635 = vmatpush1.bf16.msra.mxu0 %v1616
      %1636 = vmatprep.subr.bf16.mxu0 0
      %1637 = vmatpush1.bf16.msra.mxu0 %v1617
      %1638 = vmatprep.subr.bf16.mxu0 0
      %1639 = vmatpush1.bf16.msra.mxu0 %v1618
      %1640 = vmatprep.subr.bf16.mxu0 0
      %1641 = vmatpush1.bf16.msra.mxu0 %v1619
      %1642 = vmatprep.subr.bf16.mxu0 0
      %1643 = vmatpush1.bf16.msra.mxu0 %v1620
      %1644 = vmatprep.subr.bf16.mxu0 0
      %1645 = vmatpush1.bf16.msra.mxu0 %v1621
      %1646 = vmatprep.subr.bf16.mxu0 0
      %1647 = vmatpush1.bf16.msra.mxu0 0
      %1648 = vmatprep.subr.bf16.mxu0 0
      %1649 = vmatpush1.bf16.msra.mxu0 0
      %1650 = vmatprep.subr.bf16.mxu0 0
      %1651 = vmatpush1.bf16.msra.mxu0 0
      %1652 = vmatprep.subr.bf16.mxu0 0
      %1653 = vmatpush1.bf16.msra.mxu0 0
      %1654 = vmatprep.subr.bf16.mxu0 0
      %1655 = vmatpush1.bf16.msra.mxu0 0
      %1656 = vmatprep.subr.bf16.mxu0 0
      %1657 = vmatpush1.bf16.msra.mxu0 0
      %1658 = vmatprep.subr.bf16.mxu0 0
      %1659 = vmatpush1.bf16.msra.mxu0 0
      %1660 = vmatprep.subr.bf16.mxu0 0
      %1661 = vmatpush1.bf16.msra.mxu0 0
      %1662 = vmatprep.mubr.bf16.mxu0 0
      %1663 = vmatmul.mubr.bf16.gmra.mrb[0].mxu0 %v796
      %v1664 = vpop.f32.mrb[0].mxu0
      %v1665 = vadd.f32 %v1580, %v1664
      %v1666 = vpop.f32.mrb[0].mxu0
      %v1667 = vpop.f32.mrb[0].mxu0
      %v1668 = vadd.f32 %v1580, %v1667
      %v1669 = vpop.f32.mrb[0].mxu0
      %1670 = vdwg.mxu0
      %v1671 = vpack.c.bf16 %v1440, %v1437
      %v1672 = vpack.c.bf16 %v1554, %v1551
      %v1674 = vsel %vm1143, %v1671, 0
      %v1677 = vsel %vm1143, %v1672, 0
      %1679 = vmatprep.subr.bf16.mxu0 0
      %1680 = vmatpush1.bf16.xpose.msra.mxu0 %v1677
      %1681 = vmatprep.subr.bf16.mxu0 0
      %1682 = vmatpush1.bf16.xpose.msra.mxu0 0
      %1683 = vmatprep.subr.bf16.mxu0 0
      %1684 = vmatpush1.bf16.xpose.msra.mxu0 0
      %1685 = vmatprep.subr.bf16.mxu0 0
      %1686 = vmatpush1.bf16.xpose.msra.mxu0 0
      %1687 = vmatprep.subr.bf16.mxu0 0
      %1688 = vmatpush1.bf16.xpose.msra.mxu0 0
      %1689 = vmatprep.subr.bf16.mxu0 0
      %1690 = vmatpush1.bf16.xpose.msra.mxu0 0
      %1691 = vmatprep.subr.bf16.mxu0 0
      %1692 = vmatpush1.bf16.xpose.msra.mxu0 0
      %1693 = vmatprep.subr.bf16.mxu0 0
      %1694 = vmatpush1.bf16.xpose.msra.mxu0 0
      %1695 = vmatprep.subr.bf16.mxu0 0
      %1696 = vmatpush1.bf16.xpose.msra.mxu0 0
      %1697 = vmatprep.subr.bf16.mxu0 0
      %1698 = vmatpush1.bf16.xpose.msra.mxu0 0
      %1699 = vmatprep.subr.bf16.mxu0 0
      %1700 = vmatpush1.bf16.xpose.msra.mxu0 0
      %1701 = vmatprep.subr.bf16.mxu0 0
      %1702 = vmatpush1.bf16.xpose.msra.mxu0 0
      %1703 = vmatprep.subr.bf16.mxu0 0
      %1704 = vmatpush1.bf16.xpose.msra.mxu0 0
      %1705 = vmatprep.subr.bf16.mxu0 0
      %1706 = vmatpush1.bf16.xpose.msra.mxu0 0
      %1707 = vmatprep.subr.bf16.mxu0 0
      %1708 = vmatpush1.bf16.xpose.msra.mxu0 0
      %1709 = vmatprep.subr.bf16.mxu0 0
      %1710 = vmatpush1.bf16.xpose.msra.mxu0 0
      %1711 = vmatprep.mubr.bf16.mxu0 0
      %1712 = vmatmul.mubr.bf16.gmra.mrb[0].mxu0 %v1674
      %v1713 = vpop.f32.mrb[0].mxu0
      %v1714 = vadd.f32 %v1141, %v1713
      %v1715 = vpop.f32.mrb[0].mxu0
      %v1716 = vpop.f32.mrb[0].mxu0
      %v1717 = vadd.f32 %v1141, %v1716
      %v1718 = vpop.f32.mrb[0].mxu0
      %1719 = vdwg.mxu0
      %v1720 = vsel %vm1191, %v1714, -inf
      %1721 = vmax.xlane.f32.xlu0 %v1720
      %v1722 = vpop.xlane.xlu0 %1721
      %v1723 = vsel %vm1191, %v1717, -inf
      %1724 = vmax.xlane.f32.xlu0 %v1723
      %v1725 = vpop.xlane.xlu0 %1724
      %v1726 = vsub.f32 %v1714, %v1722
      %v1727 = vsub.f32 %v1717, %v1725
      %v1728 = vmul.f32 %v1726, 1.442695
      %v1729 = vpow.pop %v1728
      %v1730 = vmul.f32 %v1727, 1.442695
      %v1731 = vpow.pop %v1730
      %v1732 = vsel %vm1191, %v1729, 0.0
      %1733 = vadd.xlane.f32.xlu0 %v1732
      %v1734 = vpop.xlane.xlu0 %1733
      %v1735 = vsel %vm1191, %v1731, 0.0
      %1736 = vadd.xlane.f32.xlu0 %v1735
      %v1737 = vpop.xlane.xlu0 %1736
      %v1738 = vrcp.pop %v1734
      %v1739 = vrcp.pop %v1737
      %v1740 = vmul.f32 %v1729, %v1738
      %v1741 = vmul.f32 %v1731, %v1739
      %v1742 = vpack.c.bf16 %v1741, %v1740
      %v1743 = vpack.c.bf16 %v1668, %v1665
      %v1745 = vsel %vm1191, %v1742, 0
      %1747 = vmatprep.subr.bf16.mxu0 0
      %1748 = vmatpush1.bf16.msra.mxu0 %v1743
      %1749 = vmatprep.subr.bf16.mxu0 0
      %1750 = vmatpush1.bf16.msra.mxu0 0
      %1751 = vmatprep.subr.bf16.mxu0 0
      %1752 = vmatpush1.bf16.msra.mxu0 0
      %1753 = vmatprep.subr.bf16.mxu0 0
      %1754 = vmatpush1.bf16.msra.mxu0 0
      %1755 = vmatprep.subr.bf16.mxu0 0
      %1756 = vmatpush1.bf16.msra.mxu0 0
      %1757 = vmatprep.subr.bf16.mxu0 0
      %1758 = vmatpush1.bf16.msra.mxu0 0
      %1759 = vmatprep.subr.bf16.mxu0 0
      %1760 = vmatpush1.bf16.msra.mxu0 0
      %1761 = vmatprep.subr.bf16.mxu0 0
      %1762 = vmatpush1.bf16.msra.mxu0 0
      %1763 = vmatprep.subr.bf16.mxu0 0
      %1764 = vmatpush1.bf16.msra.mxu0 0
      %1765 = vmatprep.subr.bf16.mxu0 0
      %1766 = vmatpush1.bf16.msra.mxu0 0
      %1767 = vmatprep.subr.bf16.mxu0 0
      %1768 = vmatpush1.bf16.msra.mxu0 0
      %1769 = vmatprep.subr.bf16.mxu0 0
      %1770 = vmatpush1.bf16.msra.mxu0 0
      %1771 = vmatprep.subr.bf16.mxu0 0
      %1772 = vmatpush1.bf16.msra.mxu0 0
      %1773 = vmatprep.subr.bf16.mxu0 0
      %1774 = vmatpush1.bf16.msra.mxu0 0
      %1775 = vmatprep.subr.bf16.mxu0 0
      %1776 = vmatpush1.bf16.msra.mxu0 0
      %1777 = vmatprep.subr.bf16.mxu0 0
      %1778 = vmatpush1.bf16.msra.mxu0 0
      %1779 = vmatprep.mubr.bf16.mxu0 0
      %1780 = vmatmul.mubr.bf16.gmra.mrb[0].mxu0 %v1745
      %v1781 = vpop.f32.mrb[0].mxu0
      %v1782 = vadd.f32 0.0, %v1781
      %v1783 = vpop.f32.mrb[0].mxu0
      %v1784 = vpop.f32.mrb[0].mxu0
      %v1785 = vadd.f32 0.0, %v1784
      %v1786 = vpop.f32.mrb[0].mxu0
      %1787 = vdwg.mxu0
      %v1788 = vpack.c.bf16 %v1785, %v1782
      %s1789 = scalar_lea.vmem %s10, 16
      %v1790 = vld [vmem:[%s1789] sm:$0xf]
      %v1791 = vld [vmem:[%s1789 + $0x4] sm:$0xf]
      %v1792 = vld [vmem:[%s1789 + $0x8] sm:$0xf]
      %v1793 = vld [vmem:[%s1789 + $0xc] sm:$0xf]
      %v1798 = vunpack.c.l.b16 %v1790
      %v1799 = vunpack.c.l.b16 %v1791
      %v1800 = vunpack.c.l.b16 %v1792
      %v1801 = vunpack.c.l.b16 %v1793
      %v1802 = vpack.c.b16 %v1799, %v1798
      %v1803 = vpack.c.b16 %v1801, %v1800
      %v1807 = vsel %vm1143, %v1788, 0
      %1809 = vmatprep.subr.bf16.mxu0 0
      %1810 = vmatpush1.bf16.msra.mxu0 %v1802
      %1811 = vmatprep.subr.bf16.mxu0 0
      %1812 = vmatpush1.bf16.msra.mxu0 %v1803
      %1813 = vmatprep.subr.bf16.mxu0 0
      %1814 = vmatpush1.bf16.msra.mxu0 0
      %1815 = vmatprep.subr.bf16.mxu0 0
      %1816 = vmatpush1.bf16.msra.mxu0 0
      %1817 = vmatprep.subr.bf16.mxu0 0
      %1818 = vmatpush1.bf16.msra.mxu0 0
      %1819 = vmatprep.subr.bf16.mxu0 0
      %1820 = vmatpush1.bf16.msra.mxu0 0
      %1821 = vmatprep.subr.bf16.mxu0 0
      %1822 = vmatpush1.bf16.msra.mxu0 0
      %1823 = vmatprep.subr.bf16.mxu0 0
      %1824 = vmatpush1.bf16.msra.mxu0 0
      %1825 = vmatprep.subr.bf16.mxu0 0
      %1826 = vmatpush1.bf16.msra.mxu0 0
      %1827 = vmatprep.subr.bf16.mxu0 0
      %1828 = vmatpush1.bf16.msra.mxu0 0
      %1829 = vmatprep.subr.bf16.mxu0 0
      %1830 = vmatpush1.bf16.msra.mxu0 0
      %1831 = vmatprep.subr.bf16.mxu0 0
      %1832 = vmatpush1.bf16.msra.mxu0 0
      %1833 = vmatprep.subr.bf16.mxu0 0
      %1834 = vmatpush1.bf16.msra.mxu0 0
      %1835 = vmatprep.subr.bf16.mxu0 0
      %1836 = vmatpush1.bf16.msra.mxu0 0
      %1837 = vmatprep.subr.bf16.mxu0 0
      %1838 = vmatpush1.bf16.msra.mxu0 0
      %1839 = vmatprep.subr.bf16.mxu0 0
      %1840 = vmatpush1.bf16.msra.mxu0 0
      %1841 = vmatprep.mubr.bf16.mxu0 0
      %1842 = vmatmul.mubr.bf16.gmra.mrb[0].mxu0 %v1807
      %v1843 = vpop.f32.mrb[0].mxu0
      %v1844 = vadd.f32 0.0, %v1843
      %v1845 = vpop.f32.mrb[0].mxu0
      %v1846 = vpop.f32.mrb[0].mxu0
      %v1847 = vadd.f32 0.0, %v1846
      %v1848 = vpop.f32.mrb[0].mxu0
      %1849 = vdwg.mxu0
      %v1850 = vadd.f32 %v1327, %v1844
      %v1851 = vadd.f32 %v1328, %v1847
      %s1852 = scalar_lea.vmem %s4, 128
      %v1853 = vld [vmem:[%s1852] sm:$0xf]
      %v1854 = vld [vmem:[%s1852 + $0x4] sm:$0xf]
      %v1855 = vld [vmem:[%s1852 + $0x8] sm:$0xf]
      %v1856 = vld [vmem:[%s1852 + $0xc] sm:$0xf]
      %v1857 = vld [vmem:[%s1852 + $0x10] sm:$0xf]
      %v1858 = vld [vmem:[%s1852 + $0x14] sm:$0xf]
      %v1859 = vld [vmem:[%s1852 + $0x18] sm:$0xf]
      %v1860 = vld [vmem:[%s1852 + $0x1c] sm:$0xf]
      %v1861 = vld [vmem:[%s1852 + $0x20] sm:$0xf]
      %v1862 = vld [vmem:[%s1852 + $0x24] sm:$0xf]
      %v1863 = vld [vmem:[%s1852 + $0x28] sm:$0xf]
      %v1864 = vld [vmem:[%s1852 + $0x2c] sm:$0xf]
      %v1865 = vld [vmem:[%s1852 + $0x30] sm:$0xf]
      %v1866 = vld [vmem:[%s1852 + $0x34] sm:$0xf]
      %v1867 = vld [vmem:[%s1852 + $0x38] sm:$0xf]
      %v1868 = vld [vmem:[%s1852 + $0x3c] sm:$0xf]
      %s1869 = scalar_lea.vmem %s5, 2
      %v1870 = vld [vmem:[%s1869] sm:$0x1]
      %v1872 = vlaneseq
      %v1873 = vshrl.u32 %v1872, 7
      %v1874 = vsub.s32 0, %v1873
      %v1875 = vrot.slane %v1870, %v1874
      %v1893 = vunpack.c.l.b16 %v1853
      %v1894 = vunpack.c.l.b16 %v1854
      %v1895 = vunpack.c.l.b16 %v1855
      %v1896 = vunpack.c.l.b16 %v1856
      %v1897 = vunpack.c.l.b16 %v1857
      %v1898 = vunpack.c.l.b16 %v1858
      %v1899 = vunpack.c.l.b16 %v1859
      %v1900 = vunpack.c.l.b16 %v1860
      %v1901 = vunpack.c.l.b16 %v1861
      %v1902 = vunpack.c.l.b16 %v1862
      %v1903 = vunpack.c.l.b16 %v1863
      %v1904 = vunpack.c.l.b16 %v1864
      %v1905 = vunpack.c.l.b16 %v1865
      %v1906 = vunpack.c.l.b16 %v1866
      %v1907 = vunpack.c.l.b16 %v1867
      %v1908 = vunpack.c.l.b16 %v1868
      %v1909 = vpack.c.b16 %v1894, %v1893
      %v1910 = vpack.c.b16 %v1896, %v1895
      %v1911 = vpack.c.b16 %v1898, %v1897
      %v1912 = vpack.c.b16 %v1900, %v1899
      %v1913 = vpack.c.b16 %v1902, %v1901
      %v1914 = vpack.c.b16 %v1904, %v1903
      %v1915 = vpack.c.b16 %v1906, %v1905
      %v1916 = vpack.c.b16 %v1908, %v1907
      %1925 = vmatprep.subr.bf16.mxu0 0
      %1926 = vmatpush1.bf16.msra.mxu0 %v1909
      %1927 = vmatprep.subr.bf16.mxu0 0
      %1928 = vmatpush1.bf16.msra.mxu0 %v1910
      %1929 = vmatprep.subr.bf16.mxu0 0
      %1930 = vmatpush1.bf16.msra.mxu0 %v1911
      %1931 = vmatprep.subr.bf16.mxu0 0
      %1932 = vmatpush1.bf16.msra.mxu0 %v1912
      %1933 = vmatprep.subr.bf16.mxu0 0
      %1934 = vmatpush1.bf16.msra.mxu0 %v1913
      %1935 = vmatprep.subr.bf16.mxu0 0
      %1936 = vmatpush1.bf16.msra.mxu0 %v1914
      %1937 = vmatprep.subr.bf16.mxu0 0
      %1938 = vmatpush1.bf16.msra.mxu0 %v1915
      %1939 = vmatprep.subr.bf16.mxu0 0
      %1940 = vmatpush1.bf16.msra.mxu0 %v1916
      %1941 = vmatprep.subr.bf16.mxu0 0
      %1942 = vmatpush1.bf16.msra.mxu0 0
      %1943 = vmatprep.subr.bf16.mxu0 0
      %1944 = vmatpush1.bf16.msra.mxu0 0
      %1945 = vmatprep.subr.bf16.mxu0 0
      %1946 = vmatpush1.bf16.msra.mxu0 0
      %1947 = vmatprep.subr.bf16.mxu0 0
      %1948 = vmatpush1.bf16.msra.mxu0 0
      %1949 = vmatprep.subr.bf16.mxu0 0
      %1950 = vmatpush1.bf16.msra.mxu0 0
      %1951 = vmatprep.subr.bf16.mxu0 0
      %1952 = vmatpush1.bf16.msra.mxu0 0
      %1953 = vmatprep.subr.bf16.mxu0 0
      %1954 = vmatpush1.bf16.msra.mxu0 0
      %1955 = vmatprep.subr.bf16.mxu0 0
      %1956 = vmatpush1.bf16.msra.mxu0 0
      %1957 = vmatprep.mubr.bf16.mxu0 0
      %1958 = vmatmul.mubr.bf16.gmra.mrb[0].mxu0 %v796
      %v1959 = vpop.f32.mrb[0].mxu0
      %v1960 = vadd.f32 %v1875, %v1959
      %v1961 = vpop.f32.mrb[0].mxu0
      %v1962 = vpop.f32.mrb[0].mxu0
      %v1963 = vadd.f32 %v1875, %v1962
      %v1964 = vpop.f32.mrb[0].mxu0
      %1965 = vdwg.mxu0
      %s1966 = scalar_lea.vmem %s6, 128
      %v1967 = vld [vmem:[%s1966] sm:$0xf]
      %v1968 = vld [vmem:[%s1966 + $0x4] sm:$0xf]
      %v1969 = vld [vmem:[%s1966 + $0x8] sm:$0xf]
      %v1970 = vld [vmem:[%s1966 + $0xc] sm:$0xf]
      %v1971 = vld [vmem:[%s1966 + $0x10] sm:$0xf]
      %v1972 = vld [vmem:[%s1966 + $0x14] sm:$0xf]
      %v1973 = vld [vmem:[%s1966 + $0x18] sm:$0xf]
      %v1974 = vld [vmem:[%s1966 + $0x1c] sm:$0xf]
      %v1975 = vld [vmem:[%s1966 + $0x20] sm:$0xf]
      %v1976 = vld [vmem:[%s1966 + $0x24] sm:$0xf]
      %v1977 = vld [vmem:[%s1966 + $0x28] sm:$0xf]
      %v1978 = vld [vmem:[%s1966 + $0x2c] sm:$0xf]
      %v1979 = vld [vmem:[%s1966 + $0x30] sm:$0xf]
      %v1980 = vld [vmem:[%s1966 + $0x34] sm:$0xf]
      %v1981 = vld [vmem:[%s1966 + $0x38] sm:$0xf]
      %v1982 = vld [vmem:[%s1966 + $0x3c] sm:$0xf]
      %s1983 = scalar_lea.vmem %s7, 2
      %v1984 = vld [vmem:[%s1983] sm:$0x1]
      %v1986 = vlaneseq
      %v1987 = vshrl.u32 %v1986, 7
      %v1988 = vsub.s32 0, %v1987
      %v1989 = vrot.slane %v1984, %v1988
      %v2007 = vunpack.c.l.b16 %v1967
      %v2008 = vunpack.c.l.b16 %v1968
      %v2009 = vunpack.c.l.b16 %v1969
      %v2010 = vunpack.c.l.b16 %v1970
      %v2011 = vunpack.c.l.b16 %v1971
      %v2012 = vunpack.c.l.b16 %v1972
      %v2013 = vunpack.c.l.b16 %v1973
      %v2014 = vunpack.c.l.b16 %v1974
      %v2015 = vunpack.c.l.b16 %v1975
      %v2016 = vunpack.c.l.b16 %v1976
      %v2017 = vunpack.c.l.b16 %v1977
      %v2018 = vunpack.c.l.b16 %v1978
      %v2019 = vunpack.c.l.b16 %v1979
      %v2020 = vunpack.c.l.b16 %v1980
      %v2021 = vunpack.c.l.b16 %v1981
      %v2022 = vunpack.c.l.b16 %v1982
      %v2023 = vpack.c.b16 %v2008, %v2007
      %v2024 = vpack.c.b16 %v2010, %v2009
      %v2025 = vpack.c.b16 %v2012, %v2011
      %v2026 = vpack.c.b16 %v2014, %v2013
      %v2027 = vpack.c.b16 %v2016, %v2015
      %v2028 = vpack.c.b16 %v2018, %v2017
      %v2029 = vpack.c.b16 %v2020, %v2019
      %v2030 = vpack.c.b16 %v2022, %v2021
      %2039 = vmatprep.subr.bf16.mxu0 0
      %2040 = vmatpush1.bf16.msra.mxu0 %v2023
      %2041 = vmatprep.subr.bf16.mxu0 0
      %2042 = vmatpush1.bf16.msra.mxu0 %v2024
      %2043 = vmatprep.subr.bf16.mxu0 0
      %2044 = vmatpush1.bf16.msra.mxu0 %v2025
      %2045 = vmatprep.subr.bf16.mxu0 0
      %2046 = vmatpush1.bf16.msra.mxu0 %v2026
      %2047 = vmatprep.subr.bf16.mxu0 0
      %2048 = vmatpush1.bf16.msra.mxu0 %v2027
      %2049 = vmatprep.subr.bf16.mxu0 0
      %2050 = vmatpush1.bf16.msra.mxu0 %v2028
      %2051 = vmatprep.subr.bf16.mxu0 0
      %2052 = vmatpush1.bf16.msra.mxu0 %v2029
      %2053 = vmatprep.subr.bf16.mxu0 0
      %2054 = vmatpush1.bf16.msra.mxu0 %v2030
      %2055 = vmatprep.subr.bf16.mxu0 0
      %2056 = vmatpush1.bf16.msra.mxu0 0
      %2057 = vmatprep.subr.bf16.mxu0 0
      %2058 = vmatpush1.bf16.msra.mxu0 0
      %2059 = vmatprep.subr.bf16.mxu0 0
      %2060 = vmatpush1.bf16.msra.mxu0 0
      %2061 = vmatprep.subr.bf16.mxu0 0
      %2062 = vmatpush1.bf16.msra.mxu0 0
      %2063 = vmatprep.subr.bf16.mxu0 0
      %2064 = vmatpush1.bf16.msra.mxu0 0
      %2065 = vmatprep.subr.bf16.mxu0 0
      %2066 = vmatpush1.bf16.msra.mxu0 0
      %2067 = vmatprep.subr.bf16.mxu0 0
      %2068 = vmatpush1.bf16.msra.mxu0 0
      %2069 = vmatprep.subr.bf16.mxu0 0
      %2070 = vmatpush1.bf16.msra.mxu0 0
      %2071 = vmatprep.mubr.bf16.mxu0 0
      %2072 = vmatmul.mubr.bf16.gmra.mrb[0].mxu0 %v796
      %v2073 = vpop.f32.mrb[0].mxu0
      %v2074 = vadd.f32 %v1989, %v2073
      %v2075 = vpop.f32.mrb[0].mxu0
      %v2076 = vpop.f32.mrb[0].mxu0
      %v2077 = vadd.f32 %v1989, %v2076
      %v2078 = vpop.f32.mrb[0].mxu0
      %2079 = vdwg.mxu0
      %s2080 = scalar_lea.vmem %s8, 128
      %v2081 = vld [vmem:[%s2080] sm:$0xf]
      %v2082 = vld [vmem:[%s2080 + $0x4] sm:$0xf]
      %v2083 = vld [vmem:[%s2080 + $0x8] sm:$0xf]
      %v2084 = vld [vmem:[%s2080 + $0xc] sm:$0xf]
      %v2085 = vld [vmem:[%s2080 + $0x10] sm:$0xf]
      %v2086 = vld [vmem:[%s2080 + $0x14] sm:$0xf]
      %v2087 = vld [vmem:[%s2080 + $0x18] sm:$0xf]
      %v2088 = vld [vmem:[%s2080 + $0x1c] sm:$0xf]
      %v2089 = vld [vmem:[%s2080 + $0x20] sm:$0xf]
      %v2090 = vld [vmem:[%s2080 + $0x24] sm:$0xf]
      %v2091 = vld [vmem:[%s2080 + $0x28] sm:$0xf]
      %v2092 = vld [vmem:[%s2080 + $0x2c] sm:$0xf]
      %v2093 = vld [vmem:[%s2080 + $0x30] sm:$0xf]
      %v2094 = vld [vmem:[%s2080 + $0x34] sm:$0xf]
      %v2095 = vld [vmem:[%s2080 + $0x38] sm:$0xf]
      %v2096 = vld [vmem:[%s2080 + $0x3c] sm:$0xf]
      %s2097 = scalar_lea.vmem %s9, 2
      %v2098 = vld [vmem:[%s2097] sm:$0x1]
      %v2100 = vlaneseq
      %v2101 = vshrl.u32 %v2100, 7
      %v2102 = vsub.s32 0, %v2101
      %v2103 = vrot.slane %v2098, %v2102
      %v2121 = vunpack.c.l.b16 %v2081
      %v2122 = vunpack.c.l.b16 %v2082
      %v2123 = vunpack.c.l.b16 %v2083
      %v2124 = vunpack.c.l.b16 %v2084
      %v2125 = vunpack.c.l.b16 %v2085
      %v2126 = vunpack.c.l.b16 %v2086
      %v2127 = vunpack.c.l.b16 %v2087
      %v2128 = vunpack.c.l.b16 %v2088
      %v2129 = vunpack.c.l.b16 %v2089
      %v2130 = vunpack.c.l.b16 %v2090
      %v2131 = vunpack.c.l.b16 %v2091
      %v2132 = vunpack.c.l.b16 %v2092
      %v2133 = vunpack.c.l.b16 %v2093
      %v2134 = vunpack.c.l.b16 %v2094
      %v2135 = vunpack.c.l.b16 %v2095
      %v2136 = vunpack.c.l.b16 %v2096
      %v2137 = vpack.c.b16 %v2122, %v2121
      %v2138 = vpack.c.b16 %v2124, %v2123
      %v2139 = vpack.c.b16 %v2126, %v2125
      %v2140 = vpack.c.b16 %v2128, %v2127
      %v2141 = vpack.c.b16 %v2130, %v2129
      %v2142 = vpack.c.b16 %v2132, %v2131
      %v2143 = vpack.c.b16 %v2134, %v2133
      %v2144 = vpack.c.b16 %v2136, %v2135
      %2153 = vmatprep.subr.bf16.mxu0 0
      %2154 = vmatpush1.bf16.msra.mxu0 %v2137
      %2155 = vmatprep.subr.bf16.mxu0 0
      %2156 = vmatpush1.bf16.msra.mxu0 %v2138
      %2157 = vmatprep.subr.bf16.mxu0 0
      %2158 = vmatpush1.bf16.msra.mxu0 %v2139
      %2159 = vmatprep.subr.bf16.mxu0 0
      %2160 = vmatpush1.bf16.msra.mxu0 %v2140
      %2161 = vmatprep.subr.bf16.mxu0 0
      %2162 = vmatpush1.bf16.msra.mxu0 %v2141
      %2163 = vmatprep.subr.bf16.mxu0 0
      %2164 = vmatpush1.bf16.msra.mxu0 %v2142
      %2165 = vmatprep.subr.bf16.mxu0 0
      %2166 = vmatpush1.bf16.msra.mxu0 %v2143
      %2167 = vmatprep.subr.bf16.mxu0 0
      %2168 = vmatpush1.bf16.msra.mxu0 %v2144
      %2169 = vmatprep.subr.bf16.mxu0 0
      %2170 = vmatpush1.bf16.msra.mxu0 0
      %2171 = vmatprep.subr.bf16.mxu0 0
      %2172 = vmatpush1.bf16.msra.mxu0 0
      %2173 = vmatprep.subr.bf16.mxu0 0
      %2174 = vmatpush1.bf16.msra.mxu0 0
      %2175 = vmatprep.subr.bf16.mxu0 0
      %2176 = vmatpush1.bf16.msra.mxu0 0
      %2177 = vmatprep.subr.bf16.mxu0 0
      %2178 = vmatpush1.bf16.msra.mxu0 0
      %2179 = vmatprep.subr.bf16.mxu0 0
      %2180 = vmatpush1.bf16.msra.mxu0 0
      %2181 = vmatprep.subr.bf16.mxu0 0
      %2182 = vmatpush1.bf16.msra.mxu0 0
      %2183 = vmatprep.subr.bf16.mxu0 0
      %2184 = vmatpush1.bf16.msra.mxu0 0
      %2185 = vmatprep.mubr.bf16.mxu0 0
      %2186 = vmatmul.mubr.bf16.gmra.mrb[0].mxu0 %v796
      %v2187 = vpop.f32.mrb[0].mxu0
      %v2188 = vadd.f32 %v2103, %v2187
      %v2189 = vpop.f32.mrb[0].mxu0
      %v2190 = vpop.f32.mrb[0].mxu0
      %v2191 = vadd.f32 %v2103, %v2190
      %v2192 = vpop.f32.mrb[0].mxu0
      %2193 = vdwg.mxu0
      %v2194 = vpack.c.bf16 %v1963, %v1960
      %v2195 = vpack.c.bf16 %v2077, %v2074
      %v2197 = vsel %vm1143, %v2194, 0
      %v2200 = vsel %vm1143, %v2195, 0
      %2202 = vmatprep.subr.bf16.mxu0 0
      %2203 = vmatpush1.bf16.xpose.msra.mxu0 %v2200
      %2204 = vmatprep.subr.bf16.mxu0 0
      %2205 = vmatpush1.bf16.xpose.msra.mxu0 0
      %2206 = vmatprep.subr.bf16.mxu0 0
      %2207 = vmatpush1.bf16.xpose.msra.mxu0 0
      %2208 = vmatprep.subr.bf16.mxu0 0
      %2209 = vmatpush1.bf16.xpose.msra.mxu0 0
      %2210 = vmatprep.subr.bf16.mxu0 0
      %2211 = vmatpush1.bf16.xpose.msra.mxu0 0
      %2212 = vmatprep.subr.bf16.mxu0 0
      %2213 = vmatpush1.bf16.xpose.msra.mxu0 0
      %2214 = vmatprep.subr.bf16.mxu0 0
      %2215 = vmatpush1.bf16.xpose.msra.mxu0 0
      %2216 = vmatprep.subr.bf16.mxu0 0
      %2217 = vmatpush1.bf16.xpose.msra.mxu0 0
      %2218 = vmatprep.subr.bf16.mxu0 0
      %2219 = vmatpush1.bf16.xpose.msra.mxu0 0
      %2220 = vmatprep.subr.bf16.mxu0 0
      %2221 = vmatpush1.bf16.xpose.msra.mxu0 0
      %2222 = vmatprep.subr.bf16.mxu0 0
      %2223 = vmatpush1.bf16.xpose.msra.mxu0 0
      %2224 = vmatprep.subr.bf16.mxu0 0
      %2225 = vmatpush1.bf16.xpose.msra.mxu0 0
      %2226 = vmatprep.subr.bf16.mxu0 0
      %2227 = vmatpush1.bf16.xpose.msra.mxu0 0
      %2228 = vmatprep.subr.bf16.mxu0 0
      %2229 = vmatpush1.bf16.xpose.msra.mxu0 0
      %2230 = vmatprep.subr.bf16.mxu0 0
      %2231 = vmatpush1.bf16.xpose.msra.mxu0 0
      %2232 = vmatprep.subr.bf16.mxu0 0
      %2233 = vmatpush1.bf16.xpose.msra.mxu0 0
      %2234 = vmatprep.mubr.bf16.mxu0 0
      %2235 = vmatmul.mubr.bf16.gmra.mrb[0].mxu0 %v2197
      %v2236 = vpop.f32.mrb[0].mxu0
      %v2237 = vadd.f32 %v1141, %v2236
      %v2238 = vpop.f32.mrb[0].mxu0
      %v2239 = vpop.f32.mrb[0].mxu0
      %v2240 = vadd.f32 %v1141, %v2239
      %v2241 = vpop.f32.mrb[0].mxu0
      %2242 = vdwg.mxu0
      %v2243 = vsel %vm1191, %v2237, -inf
      %2244 = vmax.xlane.f32.xlu0 %v2243
      %v2245 = vpop.xlane.xlu0 %2244
      %v2246 = vsel %vm1191, %v2240, -inf
      %2247 = vmax.xlane.f32.xlu0 %v2246
      %v2248 = vpop.xlane.xlu0 %2247
      %v2249 = vsub.f32 %v2237, %v2245
      %v2250 = vsub.f32 %v2240, %v2248
      %v2251 = vmul.f32 %v2249, 1.442695
      %v2252 = vpow.pop %v2251
      %v2253 = vmul.f32 %v2250, 1.442695
      %v2254 = vpow.pop %v2253
      %v2255 = vsel %vm1191, %v2252, 0.0
      %2256 = vadd.xlane.f32.xlu0 %v2255
      %v2257 = vpop.xlane.xlu0 %2256
      %v2258 = vsel %vm1191, %v2254, 0.0
      %2259 = vadd.xlane.f32.xlu0 %v2258
      %v2260 = vpop.xlane.xlu0 %2259
      %v2261 = vrcp.pop %v2257
      %v2262 = vrcp.pop %v2260
      %v2263 = vmul.f32 %v2252, %v2261
      %v2264 = vmul.f32 %v2254, %v2262
      %v2265 = vpack.c.bf16 %v2264, %v2263
      %v2266 = vpack.c.bf16 %v2191, %v2188
      %v2268 = vsel %vm1191, %v2265, 0
      %2270 = vmatprep.subr.bf16.mxu0 0
      %2271 = vmatpush1.bf16.msra.mxu0 %v2266
      %2272 = vmatprep.subr.bf16.mxu0 0
      %2273 = vmatpush1.bf16.msra.mxu0 0
      %2274 = vmatprep.subr.bf16.mxu0 0
      %2275 = vmatpush1.bf16.msra.mxu0 0
      %2276 = vmatprep.subr.bf16.mxu0 0
      %2277 = vmatpush1.bf16.msra.mxu0 0
      %2278 = vmatprep.subr.bf16.mxu0 0
      %2279 = vmatpush1.bf16.msra.mxu0 0
      %2280 = vmatprep.subr.bf16.mxu0 0
      %2281 = vmatpush1.bf16.msra.mxu0 0
      %2282 = vmatprep.subr.bf16.mxu0 0
      %2283 = vmatpush1.bf16.msra.mxu0 0
      %2284 = vmatprep.subr.bf16.mxu0 0
      %2285 = vmatpush1.bf16.msra.mxu0 0
      %2286 = vmatprep.subr.bf16.mxu0 0
      %2287 = vmatpush1.bf16.msra.mxu0 0
      %2288 = vmatprep.subr.bf16.mxu0 0
      %2289 = vmatpush1.bf16.msra.mxu0 0
      %2290 = vmatprep.subr.bf16.mxu0 0
      %2291 = vmatpush1.bf16.msra.mxu0 0
      %2292 = vmatprep.subr.bf16.mxu0 0
      %2293 = vmatpush1.bf16.msra.mxu0 0
      %2294 = vmatprep.subr.bf16.mxu0 0
      %2295 = vmatpush1.bf16.msra.mxu0 0
      %2296 = vmatprep.subr.bf16.mxu0 0
      %2297 = vmatpush1.bf16.msra.mxu0 0
      %2298 = vmatprep.subr.bf16.mxu0 0
      %2299 = vmatpush1.bf16.msra.mxu0 0
      %2300 = vmatprep.subr.bf16.mxu0 0
      %2301 = vmatpush1.bf16.msra.mxu0 0
      %2302 = vmatprep.mubr.bf16.mxu0 0
      %2303 = vmatmul.mubr.bf16.gmra.mrb[0].mxu0 %v2268
      %v2304 = vpop.f32.mrb[0].mxu0
      %v2305 = vadd.f32 0.0, %v2304
      %v2306 = vpop.f32.mrb[0].mxu0
      %v2307 = vpop.f32.mrb[0].mxu0
      %v2308 = vadd.f32 0.0, %v2307
      %v2309 = vpop.f32.mrb[0].mxu0
      %2310 = vdwg.mxu0
      %v2311 = vpack.c.bf16 %v2308, %v2305
      %s2312 = scalar_lea.vmem %s10, 32
      %v2313 = vld [vmem:[%s2312] sm:$0xf]
      %v2314 = vld [vmem:[%s2312 + $0x4] sm:$0xf]
      %v2315 = vld [vmem:[%s2312 + $0x8] sm:$0xf]
      %v2316 = vld [vmem:[%s2312 + $0xc] sm:$0xf]
      %v2321 = vunpack.c.l.b16 %v2313
      %v2322 = vunpack.c.l.b16 %v2314
      %v2323 = vunpack.c.l.b16 %v2315
      %v2324 = vunpack.c.l.b16 %v2316
      %v2325 = vpack.c.b16 %v2322, %v2321
      %v2326 = vpack.c.b16 %v2324, %v2323
      %v2330 = vsel %vm1143, %v2311, 0
      %2332 = vmatprep.subr.bf16.mxu0 0
      %2333 = vmatpush1.bf16.msra.mxu0 %v2325
      %2334 = vmatprep.subr.bf16.mxu0 0
      %2335 = vmatpush1.bf16.msra.mxu0 %v2326
      %2336 = vmatprep.subr.bf16.mxu0 0
      %2337 = vmatpush1.bf16.msra.mxu0 0
      %2338 = vmatprep.subr.bf16.mxu0 0
      %2339 = vmatpush1.bf16.msra.mxu0 0
      %2340 = vmatprep.subr.bf16.mxu0 0
      %2341 = vmatpush1.bf16.msra.mxu0 0
      %2342 = vmatprep.subr.bf16.mxu0 0
      %2343 = vmatpush1.bf16.msra.mxu0 0
      %2344 = vmatprep.subr.bf16.mxu0 0
      %2345 = vmatpush1.bf16.msra.mxu0 0
      %2346 = vmatprep.subr.bf16.mxu0 0
      %2347 = vmatpush1.bf16.msra.mxu0 0
      %2348 = vmatprep.subr.bf16.mxu0 0
      %2349 = vmatpush1.bf16.msra.mxu0 0
      %2350 = vmatprep.subr.bf16.mxu0 0
      %2351 = vmatpush1.bf16.msra.mxu0 0
      %2352 = vmatprep.subr.bf16.mxu0 0
      %2353 = vmatpush1.bf16.msra.mxu0 0
      %2354 = vmatprep.subr.bf16.mxu0 0
      %2355 = vmatpush1.bf16.msra.mxu0 0
      %2356 = vmatprep.subr.bf16.mxu0 0
      %2357 = vmatpush1.bf16.msra.mxu0 0
      %2358 = vmatprep.subr.bf16.mxu0 0
      %2359 = vmatpush1.bf16.msra.mxu0 0
      %2360 = vmatprep.subr.bf16.mxu0 0
      %2361 = vmatpush1.bf16.msra.mxu0 0
      %2362 = vmatprep.subr.bf16.mxu0 0
      %2363 = vmatpush1.bf16.msra.mxu0 0
      %2364 = vmatprep.mubr.bf16.mxu0 0
      %2365 = vmatmul.mubr.bf16.gmra.mrb[0].mxu0 %v2330
      %v2366 = vpop.f32.mrb[0].mxu0
      %v2367 = vadd.f32 0.0, %v2366
      %v2368 = vpop.f32.mrb[0].mxu0
      %v2369 = vpop.f32.mrb[0].mxu0
      %v2370 = vadd.f32 0.0, %v2369
      %v2371 = vpop.f32.mrb[0].mxu0
      %2372 = vdwg.mxu0
      %v2373 = vadd.f32 %v1850, %v2367
      %v2374 = vadd.f32 %v1851, %v2370
      %s2375 = scalar_lea.vmem %s4, 192
      %v2376 = vld [vmem:[%s2375] sm:$0xf]
      %v2377 = vld [vmem:[%s2375 + $0x4] sm:$0xf]
      %v2378 = vld [vmem:[%s2375 + $0x8] sm:$0xf]
      %v2379 = vld [vmem:[%s2375 + $0xc] sm:$0xf]
      %v2380 = vld [vmem:[%s2375 + $0x10] sm:$0xf]
      %v2381 = vld [vmem:[%s2375 + $0x14] sm:$0xf]
      %v2382 = vld [vmem:[%s2375 + $0x18] sm:$0xf]
      %v2383 = vld [vmem:[%s2375 + $0x1c] sm:$0xf]
      %v2384 = vld [vmem:[%s2375 + $0x20] sm:$0xf]
      %v2385 = vld [vmem:[%s2375 + $0x24] sm:$0xf]
      %v2386 = vld [vmem:[%s2375 + $0x28] sm:$0xf]
      %v2387 = vld [vmem:[%s2375 + $0x2c] sm:$0xf]
      %v2388 = vld [vmem:[%s2375 + $0x30] sm:$0xf]
      %v2389 = vld [vmem:[%s2375 + $0x34] sm:$0xf]
      %v2390 = vld [vmem:[%s2375 + $0x38] sm:$0xf]
      %v2391 = vld [vmem:[%s2375 + $0x3c] sm:$0xf]
      %s2392 = scalar_lea.vmem %s5, 3
      %v2393 = vld [vmem:[%s2392] sm:$0x1]
      %v2395 = vlaneseq
      %v2396 = vshrl.u32 %v2395, 7
      %v2397 = vsub.s32 0, %v2396
      %v2398 = vrot.slane %v2393, %v2397
      %v2416 = vunpack.c.l.b16 %v2376
      %v2417 = vunpack.c.l.b16 %v2377
      %v2418 = vunpack.c.l.b16 %v2378
      %v2419 = vunpack.c.l.b16 %v2379
      %v2420 = vunpack.c.l.b16 %v2380
      %v2421 = vunpack.c.l.b16 %v2381
      %v2422 = vunpack.c.l.b16 %v2382
      %v2423 = vunpack.c.l.b16 %v2383
      %v2424 = vunpack.c.l.b16 %v2384
      %v2425 = vunpack.c.l.b16 %v2385
      %v2426 = vunpack.c.l.b16 %v2386
      %v2427 = vunpack.c.l.b16 %v2387
      %v2428 = vunpack.c.l.b16 %v2388
      %v2429 = vunpack.c.l.b16 %v2389
      %v2430 = vunpack.c.l.b16 %v2390
      %v2431 = vunpack.c.l.b16 %v2391
      %v2432 = vpack.c.b16 %v2417, %v2416
      %v2433 = vpack.c.b16 %v2419, %v2418
      %v2434 = vpack.c.b16 %v2421, %v2420
      %v2435 = vpack.c.b16 %v2423, %v2422
      %v2436 = vpack.c.b16 %v2425, %v2424
      %v2437 = vpack.c.b16 %v2427, %v2426
      %v2438 = vpack.c.b16 %v2429, %v2428
      %v2439 = vpack.c.b16 %v2431, %v2430
      %2448 = vmatprep.subr.bf16.mxu0 0
      %2449 = vmatpush1.bf16.msra.mxu0 %v2432
      %2450 = vmatprep.subr.bf16.mxu0 0
      %2451 = vmatpush1.bf16.msra.mxu0 %v2433
      %2452 = vmatprep.subr.bf16.mxu0 0
      %2453 = vmatpush1.bf16.msra.mxu0 %v2434
      %2454 = vmatprep.subr.bf16.mxu0 0
      %2455 = vmatpush1.bf16.msra.mxu0 %v2435
      %2456 = vmatprep.subr.bf16.mxu0 0
      %2457 = vmatpush1.bf16.msra.mxu0 %v2436
      %2458 = vmatprep.subr.bf16.mxu0 0
      %2459 = vmatpush1.bf16.msra.mxu0 %v2437
      %2460 = vmatprep.subr.bf16.mxu0 0
      %2461 = vmatpush1.bf16.msra.mxu0 %v2438
      %2462 = vmatprep.subr.bf16.mxu0 0
      %2463 = vmatpush1.bf16.msra.mxu0 %v2439
      %2464 = vmatprep.subr.bf16.mxu0 0
      %2465 = vmatpush1.bf16.msra.mxu0 0
      %2466 = vmatprep.subr.bf16.mxu0 0
      %2467 = vmatpush1.bf16.msra.mxu0 0
      %2468 = vmatprep.subr.bf16.mxu0 0
      %2469 = vmatpush1.bf16.msra.mxu0 0
      %2470 = vmatprep.subr.bf16.mxu0 0
      %2471 = vmatpush1.bf16.msra.mxu0 0
      %2472 = vmatprep.subr.bf16.mxu0 0
      %2473 = vmatpush1.bf16.msra.mxu0 0
      %2474 = vmatprep.subr.bf16.mxu0 0
      %2475 = vmatpush1.bf16.msra.mxu0 0
      %2476 = vmatprep.subr.bf16.mxu0 0
      %2477 = vmatpush1.bf16.msra.mxu0 0
      %2478 = vmatprep.subr.bf16.mxu0 0
      %2479 = vmatpush1.bf16.msra.mxu0 0
      %2480 = vmatprep.mubr.bf16.mxu0 0
      %2481 = vmatmul.mubr.bf16.gmra.mrb[0].mxu0 %v796
      %v2482 = vpop.f32.mrb[0].mxu0
      %v2483 = vadd.f32 %v2398, %v2482
      %v2484 = vpop.f32.mrb[0].mxu0
      %v2485 = vpop.f32.mrb[0].mxu0
      %v2486 = vadd.f32 %v2398, %v2485
      %v2487 = vpop.f32.mrb[0].mxu0
      %2488 = vdwg.mxu0
      %s2489 = scalar_lea.vmem %s6, 192
      %v2490 = vld [vmem:[%s2489] sm:$0xf]
      %v2491 = vld [vmem:[%s2489 + $0x4] sm:$0xf]
      %v2492 = vld [vmem:[%s2489 + $0x8] sm:$0xf]
      %v2493 = vld [vmem:[%s2489 + $0xc] sm:$0xf]
      %v2494 = vld [vmem:[%s2489 + $0x10] sm:$0xf]
      %v2495 = vld [vmem:[%s2489 + $0x14] sm:$0xf]
      %v2496 = vld [vmem:[%s2489 + $0x18] sm:$0xf]
      %v2497 = vld [vmem:[%s2489 + $0x1c] sm:$0xf]
      %v2498 = vld [vmem:[%s2489 + $0x20] sm:$0xf]
      %v2499 = vld [vmem:[%s2489 + $0x24] sm:$0xf]
      %v2500 = vld [vmem:[%s2489 + $0x28] sm:$0xf]
      %v2501 = vld [vmem:[%s2489 + $0x2c] sm:$0xf]
      %v2502 = vld [vmem:[%s2489 + $0x30] sm:$0xf]
      %v2503 = vld [vmem:[%s2489 + $0x34] sm:$0xf]
      %v2504 = vld [vmem:[%s2489 + $0x38] sm:$0xf]
      %v2505 = vld [vmem:[%s2489 + $0x3c] sm:$0xf]
      %s2506 = scalar_lea.vmem %s7, 3
      %v2507 = vld [vmem:[%s2506] sm:$0x1]
      %v2509 = vlaneseq
      %v2510 = vshrl.u32 %v2509, 7
      %v2511 = vsub.s32 0, %v2510
      %v2512 = vrot.slane %v2507, %v2511
      %v2530 = vunpack.c.l.b16 %v2490
      %v2531 = vunpack.c.l.b16 %v2491
      %v2532 = vunpack.c.l.b16 %v2492
      %v2533 = vunpack.c.l.b16 %v2493
      %v2534 = vunpack.c.l.b16 %v2494
      %v2535 = vunpack.c.l.b16 %v2495
      %v2536 = vunpack.c.l.b16 %v2496
      %v2537 = vunpack.c.l.b16 %v2497
      %v2538 = vunpack.c.l.b16 %v2498
      %v2539 = vunpack.c.l.b16 %v2499
      %v2540 = vunpack.c.l.b16 %v2500
      %v2541 = vunpack.c.l.b16 %v2501
      %v2542 = vunpack.c.l.b16 %v2502
      %v2543 = vunpack.c.l.b16 %v2503
      %v2544 = vunpack.c.l.b16 %v2504
      %v2545 = vunpack.c.l.b16 %v2505
      %v2546 = vpack.c.b16 %v2531, %v2530
      %v2547 = vpack.c.b16 %v2533, %v2532
      %v2548 = vpack.c.b16 %v2535, %v2534
      %v2549 = vpack.c.b16 %v2537, %v2536
      %v2550 = vpack.c.b16 %v2539, %v2538
      %v2551 = vpack.c.b16 %v2541, %v2540
      %v2552 = vpack.c.b16 %v2543, %v2542
      %v2553 = vpack.c.b16 %v2545, %v2544
      %2562 = vmatprep.subr.bf16.mxu0 0
      %2563 = vmatpush1.bf16.msra.mxu0 %v2546
      %2564 = vmatprep.subr.bf16.mxu0 0
      %2565 = vmatpush1.bf16.msra.mxu0 %v2547
      %2566 = vmatprep.subr.bf16.mxu0 0
      %2567 = vmatpush1.bf16.msra.mxu0 %v2548
      %2568 = vmatprep.subr.bf16.mxu0 0
      %2569 = vmatpush1.bf16.msra.mxu0 %v2549
      %2570 = vmatprep.subr.bf16.mxu0 0
      %2571 = vmatpush1.bf16.msra.mxu0 %v2550
      %2572 = vmatprep.subr.bf16.mxu0 0
      %2573 = vmatpush1.bf16.msra.mxu0 %v2551
      %2574 = vmatprep.subr.bf16.mxu0 0
      %2575 = vmatpush1.bf16.msra.mxu0 %v2552
      %2576 = vmatprep.subr.bf16.mxu0 0
      %2577 = vmatpush1.bf16.msra.mxu0 %v2553
      %2578 = vmatprep.subr.bf16.mxu0 0
      %2579 = vmatpush1.bf16.msra.mxu0 0
      %2580 = vmatprep.subr.bf16.mxu0 0
      %2581 = vmatpush1.bf16.msra.mxu0 0
      %2582 = vmatprep.subr.bf16.mxu0 0
      %2583 = vmatpush1.bf16.msra.mxu0 0
      %2584 = vmatprep.subr.bf16.mxu0 0
      %2585 = vmatpush1.bf16.msra.mxu0 0
      %2586 = vmatprep.subr.bf16.mxu0 0
      %2587 = vmatpush1.bf16.msra.mxu0 0
      %2588 = vmatprep.subr.bf16.mxu0 0
      %2589 = vmatpush1.bf16.msra.mxu0 0
      %2590 = vmatprep.subr.bf16.mxu0 0
      %2591 = vmatpush1.bf16.msra.mxu0 0
      %2592 = vmatprep.subr.bf16.mxu0 0
      %2593 = vmatpush1.bf16.msra.mxu0 0
      %2594 = vmatprep.mubr.bf16.mxu0 0
      %2595 = vmatmul.mubr.bf16.gmra.mrb[0].mxu0 %v796
      %v2596 = vpop.f32.mrb[0].mxu0
      %v2597 = vadd.f32 %v2512, %v2596
      %v2598 = vpop.f32.mrb[0].mxu0
      %v2599 = vpop.f32.mrb[0].mxu0
      %v2600 = vadd.f32 %v2512, %v2599
      %v2601 = vpop.f32.mrb[0].mxu0
      %2602 = vdwg.mxu0
      %s2603 = scalar_lea.vmem %s8, 192
      %v2604 = vld [vmem:[%s2603] sm:$0xf]
      %v2605 = vld [vmem:[%s2603 + $0x4] sm:$0xf]
      %v2606 = vld [vmem:[%s2603 + $0x8] sm:$0xf]
      %v2607 = vld [vmem:[%s2603 + $0xc] sm:$0xf]
      %v2608 = vld [vmem:[%s2603 + $0x10] sm:$0xf]
      %v2609 = vld [vmem:[%s2603 + $0x14] sm:$0xf]
      %v2610 = vld [vmem:[%s2603 + $0x18] sm:$0xf]
      %v2611 = vld [vmem:[%s2603 + $0x1c] sm:$0xf]
      %v2612 = vld [vmem:[%s2603 + $0x20] sm:$0xf]
      %v2613 = vld [vmem:[%s2603 + $0x24] sm:$0xf]
      %v2614 = vld [vmem:[%s2603 + $0x28] sm:$0xf]
      %v2615 = vld [vmem:[%s2603 + $0x2c] sm:$0xf]
      %v2616 = vld [vmem:[%s2603 + $0x30] sm:$0xf]
      %v2617 = vld [vmem:[%s2603 + $0x34] sm:$0xf]
      %v2618 = vld [vmem:[%s2603 + $0x38] sm:$0xf]
      %v2619 = vld [vmem:[%s2603 + $0x3c] sm:$0xf]
      %s2620 = scalar_lea.vmem %s9, 3
      %v2621 = vld [vmem:[%s2620] sm:$0x1]
      %v2623 = vlaneseq
      %v2624 = vshrl.u32 %v2623, 7
      %v2625 = vsub.s32 0, %v2624
      %v2626 = vrot.slane %v2621, %v2625
      %v2644 = vunpack.c.l.b16 %v2604
      %v2645 = vunpack.c.l.b16 %v2605
      %v2646 = vunpack.c.l.b16 %v2606
      %v2647 = vunpack.c.l.b16 %v2607
      %v2648 = vunpack.c.l.b16 %v2608
      %v2649 = vunpack.c.l.b16 %v2609
      %v2650 = vunpack.c.l.b16 %v2610
      %v2651 = vunpack.c.l.b16 %v2611
      %v2652 = vunpack.c.l.b16 %v2612
      %v2653 = vunpack.c.l.b16 %v2613
      %v2654 = vunpack.c.l.b16 %v2614
      %v2655 = vunpack.c.l.b16 %v2615
      %v2656 = vunpack.c.l.b16 %v2616
      %v2657 = vunpack.c.l.b16 %v2617
      %v2658 = vunpack.c.l.b16 %v2618
      %v2659 = vunpack.c.l.b16 %v2619
      %v2660 = vpack.c.b16 %v2645, %v2644
      %v2661 = vpack.c.b16 %v2647, %v2646
      %v2662 = vpack.c.b16 %v2649, %v2648
      %v2663 = vpack.c.b16 %v2651, %v2650
      %v2664 = vpack.c.b16 %v2653, %v2652
      %v2665 = vpack.c.b16 %v2655, %v2654
      %v2666 = vpack.c.b16 %v2657, %v2656
      %v2667 = vpack.c.b16 %v2659, %v2658
      %2676 = vmatprep.subr.bf16.mxu0 0
      %2677 = vmatpush1.bf16.msra.mxu0 %v2660
      %2678 = vmatprep.subr.bf16.mxu0 0
      %2679 = vmatpush1.bf16.msra.mxu0 %v2661
      %2680 = vmatprep.subr.bf16.mxu0 0
      %2681 = vmatpush1.bf16.msra.mxu0 %v2662
      %2682 = vmatprep.subr.bf16.mxu0 0
      %2683 = vmatpush1.bf16.msra.mxu0 %v2663
      %2684 = vmatprep.subr.bf16.mxu0 0
      %2685 = vmatpush1.bf16.msra.mxu0 %v2664
      %2686 = vmatprep.subr.bf16.mxu0 0
      %2687 = vmatpush1.bf16.msra.mxu0 %v2665
      %2688 = vmatprep.subr.bf16.mxu0 0
      %2689 = vmatpush1.bf16.msra.mxu0 %v2666
      %2690 = vmatprep.subr.bf16.mxu0 0
      %2691 = vmatpush1.bf16.msra.mxu0 %v2667
      %2692 = vmatprep.subr.bf16.mxu0 0
      %2693 = vmatpush1.bf16.msra.mxu0 0
      %2694 = vmatprep.subr.bf16.mxu0 0
      %2695 = vmatpush1.bf16.msra.mxu0 0
      %2696 = vmatprep.subr.bf16.mxu0 0
      %2697 = vmatpush1.bf16.msra.mxu0 0
      %2698 = vmatprep.subr.bf16.mxu0 0
      %2699 = vmatpush1.bf16.msra.mxu0 0
      %2700 = vmatprep.subr.bf16.mxu0 0
      %2701 = vmatpush1.bf16.msra.mxu0 0
      %2702 = vmatprep.subr.bf16.mxu0 0
      %2703 = vmatpush1.bf16.msra.mxu0 0
      %2704 = vmatprep.subr.bf16.mxu0 0
      %2705 = vmatpush1.bf16.msra.mxu0 0
      %2706 = vmatprep.subr.bf16.mxu0 0
      %2707 = vmatpush1.bf16.msra.mxu0 0
      %2708 = vmatprep.mubr.bf16.mxu0 0
      %2709 = vmatmul.mubr.bf16.gmra.mrb[0].mxu0 %v796
      %v2710 = vpop.f32.mrb[0].mxu0
      %v2711 = vadd.f32 %v2626, %v2710
      %v2712 = vpop.f32.mrb[0].mxu0
      %v2713 = vpop.f32.mrb[0].mxu0
      %v2714 = vadd.f32 %v2626, %v2713
      %v2715 = vpop.f32.mrb[0].mxu0
      %2716 = vdwg.mxu0
      %v2717 = vpack.c.bf16 %v2486, %v2483
      %v2718 = vpack.c.bf16 %v2600, %v2597
      %v2720 = vsel %vm1143, %v2717, 0
      %v2723 = vsel %vm1143, %v2718, 0
      %2725 = vmatprep.subr.bf16.mxu0 0
      %2726 = vmatpush1.bf16.xpose.msra.mxu0 %v2723
      %2727 = vmatprep.subr.bf16.mxu0 0
      %2728 = vmatpush1.bf16.xpose.msra.mxu0 0
      %2729 = vmatprep.subr.bf16.mxu0 0
      %2730 = vmatpush1.bf16.xpose.msra.mxu0 0
      %2731 = vmatprep.subr.bf16.mxu0 0
      %2732 = vmatpush1.bf16.xpose.msra.mxu0 0
      %2733 = vmatprep.subr.bf16.mxu0 0
      %2734 = vmatpush1.bf16.xpose.msra.mxu0 0
      %2735 = vmatprep.subr.bf16.mxu0 0
      %2736 = vmatpush1.bf16.xpose.msra.mxu0 0
      %2737 = vmatprep.subr.bf16.mxu0 0
      %2738 = vmatpush1.bf16.xpose.msra.mxu0 0
      %2739 = vmatprep.subr.bf16.mxu0 0
      %2740 = vmatpush1.bf16.xpose.msra.mxu0 0
      %2741 = vmatprep.subr.bf16.mxu0 0
      %2742 = vmatpush1.bf16.xpose.msra.mxu0 0
      %2743 = vmatprep.subr.bf16.mxu0 0
      %2744 = vmatpush1.bf16.xpose.msra.mxu0 0
      %2745 = vmatprep.subr.bf16.mxu0 0
      %2746 = vmatpush1.bf16.xpose.msra.mxu0 0
      %2747 = vmatprep.subr.bf16.mxu0 0
      %2748 = vmatpush1.bf16.xpose.msra.mxu0 0
      %2749 = vmatprep.subr.bf16.mxu0 0
      %2750 = vmatpush1.bf16.xpose.msra.mxu0 0
      %2751 = vmatprep.subr.bf16.mxu0 0
      %2752 = vmatpush1.bf16.xpose.msra.mxu0 0
      %2753 = vmatprep.subr.bf16.mxu0 0
      %2754 = vmatpush1.bf16.xpose.msra.mxu0 0
      %2755 = vmatprep.subr.bf16.mxu0 0
      %2756 = vmatpush1.bf16.xpose.msra.mxu0 0
      %2757 = vmatprep.mubr.bf16.mxu0 0
      %2758 = vmatmul.mubr.bf16.gmra.mrb[0].mxu0 %v2720
      %v2759 = vpop.f32.mrb[0].mxu0
      %v2760 = vadd.f32 %v1141, %v2759
      %v2761 = vpop.f32.mrb[0].mxu0
      %v2762 = vpop.f32.mrb[0].mxu0
      %v2763 = vadd.f32 %v1141, %v2762
      %v2764 = vpop.f32.mrb[0].mxu0
      %2765 = vdwg.mxu0
      %v2766 = vsel %vm1191, %v2760, -inf
      %2767 = vmax.xlane.f32.xlu0 %v2766
      %v2768 = vpop.xlane.xlu0 %2767
      %v2769 = vsel %vm1191, %v2763, -inf
      %2770 = vmax.xlane.f32.xlu0 %v2769
      %v2771 = vpop.xlane.xlu0 %2770
      %v2772 = vsub.f32 %v2760, %v2768
      %v2773 = vsub.f32 %v2763, %v2771
      %v2774 = vmul.f32 %v2772, 1.442695
      %v2775 = vpow.pop %v2774
      %v2776 = vmul.f32 %v2773, 1.442695
      %v2777 = vpow.pop %v2776
      %v2778 = vsel %vm1191, %v2775, 0.0
      %2779 = vadd.xlane.f32.xlu0 %v2778
      %v2780 = vpop.xlane.xlu0 %2779
      %v2781 = vsel %vm1191, %v2777, 0.0
      %2782 = vadd.xlane.f32.xlu0 %v2781
      %v2783 = vpop.xlane.xlu0 %2782
      %v2784 = vrcp.pop %v2780
      %v2785 = vrcp.pop %v2783
      %v2786 = vmul.f32 %v2775, %v2784
      %v2787 = vmul.f32 %v2777, %v2785
      %v2788 = vpack.c.bf16 %v2787, %v2786
      %v2789 = vpack.c.bf16 %v2714, %v2711
      %v2791 = vsel %vm1191, %v2788, 0
      %2793 = vmatprep.subr.bf16.mxu0 0
      %2794 = vmatpush1.bf16.msra.mxu0 %v2789
      %2795 = vmatprep.subr.bf16.mxu0 0
      %2796 = vmatpush1.bf16.msra.mxu0 0
      %2797 = vmatprep.subr.bf16.mxu0 0
      %2798 = vmatpush1.bf16.msra.mxu0 0
      %2799 = vmatprep.subr.bf16.mxu0 0
      %2800 = vmatpush1.bf16.msra.mxu0 0
      %2801 = vmatprep.subr.bf16.mxu0 0
      %2802 = vmatpush1.bf16.msra.mxu0 0
      %2803 = vmatprep.subr.bf16.mxu0 0
      %2804 = vmatpush1.bf16.msra.mxu0 0
      %2805 = vmatprep.subr.bf16.mxu0 0
      %2806 = vmatpush1.bf16.msra.mxu0 0
      %2807 = vmatprep.subr.bf16.mxu0 0
      %2808 = vmatpush1.bf16.msra.mxu0 0
      %2809 = vmatprep.subr.bf16.mxu0 0
      %2810 = vmatpush1.bf16.msra.mxu0 0
      %2811 = vmatprep.subr.bf16.mxu0 0
      %2812 = vmatpush1.bf16.msra.mxu0 0
      %2813 = vmatprep.subr.bf16.mxu0 0
      %2814 = vmatpush1.bf16.msra.mxu0 0
      %2815 = vmatprep.subr.bf16.mxu0 0
      %2816 = vmatpush1.bf16.msra.mxu0 0
      %2817 = vmatprep.subr.bf16.mxu0 0
      %2818 = vmatpush1.bf16.msra.mxu0 0
      %2819 = vmatprep.subr.bf16.mxu0 0
      %2820 = vmatpush1.bf16.msra.mxu0 0
      %2821 = vmatprep.subr.bf16.mxu0 0
      %2822 = vmatpush1.bf16.msra.mxu0 0
      %2823 = vmatprep.subr.bf16.mxu0 0
      %2824 = vmatpush1.bf16.msra.mxu0 0
      %2825 = vmatprep.mubr.bf16.mxu0 0
      %2826 = vmatmul.mubr.bf16.gmra.mrb[0].mxu0 %v2791
      %v2827 = vpop.f32.mrb[0].mxu0
      %v2828 = vadd.f32 0.0, %v2827
      %v2829 = vpop.f32.mrb[0].mxu0
      %v2830 = vpop.f32.mrb[0].mxu0
      %v2831 = vadd.f32 0.0, %v2830
      %v2832 = vpop.f32.mrb[0].mxu0
      %2833 = vdwg.mxu0
      %v2834 = vpack.c.bf16 %v2831, %v2828
      %s2835 = scalar_lea.vmem %s10, 48
      %v2836 = vld [vmem:[%s2835] sm:$0xf]
      %v2837 = vld [vmem:[%s2835 + $0x4] sm:$0xf]
      %v2838 = vld [vmem:[%s2835 + $0x8] sm:$0xf]
      %v2839 = vld [vmem:[%s2835 + $0xc] sm:$0xf]
      %v2844 = vunpack.c.l.b16 %v2836
      %v2845 = vunpack.c.l.b16 %v2837
      %v2846 = vunpack.c.l.b16 %v2838
      %v2847 = vunpack.c.l.b16 %v2839
      %v2848 = vpack.c.b16 %v2845, %v2844
      %v2849 = vpack.c.b16 %v2847, %v2846
      %v2853 = vsel %vm1143, %v2834, 0
      %2855 = vmatprep.subr.bf16.mxu0 0
      %2856 = vmatpush1.bf16.msra.mxu0 %v2848
      %2857 = vmatprep.subr.bf16.mxu0 0
      %2858 = vmatpush1.bf16.msra.mxu0 %v2849
      %2859 = vmatprep.subr.bf16.mxu0 0
      %2860 = vmatpush1.bf16.msra.mxu0 0
      %2861 = vmatprep.subr.bf16.mxu0 0
      %2862 = vmatpush1.bf16.msra.mxu0 0
      %2863 = vmatprep.subr.bf16.mxu0 0
      %2864 = vmatpush1.bf16.msra.mxu0 0
      %2865 = vmatprep.subr.bf16.mxu0 0
      %2866 = vmatpush1.bf16.msra.mxu0 0
      %2867 = vmatprep.subr.bf16.mxu0 0
      %2868 = vmatpush1.bf16.msra.mxu0 0
      %2869 = vmatprep.subr.bf16.mxu0 0
      %2870 = vmatpush1.bf16.msra.mxu0 0
      %2871 = vmatprep.subr.bf16.mxu0 0
      %2872 = vmatpush1.bf16.msra.mxu0 0
      %2873 = vmatprep.subr.bf16.mxu0 0
      %2874 = vmatpush1.bf16.msra.mxu0 0
      %2875 = vmatprep.subr.bf16.mxu0 0
      %2876 = vmatpush1.bf16.msra.mxu0 0
      %2877 = vmatprep.subr.bf16.mxu0 0
      %2878 = vmatpush1.bf16.msra.mxu0 0
      %2879 = vmatprep.subr.bf16.mxu0 0
      %2880 = vmatpush1.bf16.msra.mxu0 0
      %2881 = vmatprep.subr.bf16.mxu0 0
      %2882 = vmatpush1.bf16.msra.mxu0 0
      %2883 = vmatprep.subr.bf16.mxu0 0
      %2884 = vmatpush1.bf16.msra.mxu0 0
      %2885 = vmatprep.subr.bf16.mxu0 0
      %2886 = vmatpush1.bf16.msra.mxu0 0
      %2887 = vmatprep.mubr.bf16.mxu0 0
      %2888 = vmatmul.mubr.bf16.gmra.mrb[0].mxu0 %v2853
      %v2889 = vpop.f32.mrb[0].mxu0
      %v2890 = vadd.f32 0.0, %v2889
      %v2891 = vpop.f32.mrb[0].mxu0
      %v2892 = vpop.f32.mrb[0].mxu0
      %v2893 = vadd.f32 0.0, %v2892
      %v2894 = vpop.f32.mrb[0].mxu0
      %2895 = vdwg.mxu0
      %v2896 = vadd.f32 %v2373, %v2890
      %v2897 = vadd.f32 %v2374, %v2893
      %v2898 = vunpack.c.l.bf16 %v796
      %v2899 = vunpack.c.h.bf16 %v796
      %v2900 = vadd.f32 %v2896, %v2898
      %v2901 = vadd.f32 %v2897, %v2899
      %v2902 = vld [vmem:[%s12] sm:$0x1]
      %v2903 = vld [vmem:[%s13] sm:$0x1]
      %2904 = vadd.xlane.f32.xlu0 %v2900
      %v2905 = vpop.xlane.xlu0 %2904
      %2906 = vadd.xlane.f32.xlu0 %v2901
      %v2907 = vpop.xlane.xlu0 %2906
      %v2908 = vmul.f32 %v2905, %v761
      %v2909 = vmul.f32 %v2907, %v761
      %v2910 = vsub.f32 %v2900, %v2908
      %v2911 = vsub.f32 %v2901, %v2909
      %v2912 = vmul.f32 %v2910, %v2910
      %v2913 = vmul.f32 %v2911, %v2911
      %2914 = vadd.xlane.f32.xlu0 %v2912
      %v2915 = vpop.xlane.xlu0 %2914
      %2916 = vadd.xlane.f32.xlu0 %v2913
      %v2917 = vpop.xlane.xlu0 %2916
      %v2918 = vmul.f32 %v2915, %v761
      %v2919 = vmul.f32 %v2917, %v761
      %v2920 = vadd.f32 %v2918, 1e-05
      %v2921 = vadd.f32 %v2919, 1e-05
      %v2922 = vrsqrt.pop %v2920
      %v2923 = vrsqrt.pop %v2921
      %v2924 = vmul.f32 %v2910, %v2922
      %v2925 = vmul.f32 %v2911, %v2923
      %v2927 = vlaneseq
      %v2928 = vshrl.u32 %v2927, 7
      %v2929 = vsub.s32 0, %v2928
      %v2930 = vrot.slane %v2902, %v2929
      %v2932 = vmul.f32 %v2924, %v2930
      %v2933 = vmul.f32 %v2925, %v2930
      %v2935 = vlaneseq
      %v2936 = vshrl.u32 %v2935, 7
      %v2937 = vsub.s32 0, %v2936
      %v2938 = vrot.slane %v2903, %v2937
      %v2940 = vadd.f32 %v2932, %v2938
      %v2941 = vadd.f32 %v2933, %v2938
      %v2942 = vpack.c.bf16 %v2941, %v2940
      %v2943 = vld [vmem:[%s14] sm:$0xff]
      %v2944 = vld [vmem:[%s14 + $0x8] sm:$0xff]
      %v2945 = vld [vmem:[%s14 + $0x10] sm:$0xff]
      %v2946 = vld [vmem:[%s14 + $0x18] sm:$0xff]
      %v2947 = vld [vmem:[%s14 + $0x20] sm:$0xff]
      %v2948 = vld [vmem:[%s14 + $0x28] sm:$0xff]
      %v2949 = vld [vmem:[%s14 + $0x30] sm:$0xff]
      %v2950 = vld [vmem:[%s14 + $0x38] sm:$0xff]
      %v2951 = vld [vmem:[%s14 + $0x40] sm:$0xff]
      %v2952 = vld [vmem:[%s14 + $0x48] sm:$0xff]
      %v2953 = vld [vmem:[%s14 + $0x50] sm:$0xff]
      %v2954 = vld [vmem:[%s14 + $0x58] sm:$0xff]
      %v2955 = vld [vmem:[%s14 + $0x60] sm:$0xff]
      %v2956 = vld [vmem:[%s14 + $0x68] sm:$0xff]
      %v2957 = vld [vmem:[%s14 + $0x70] sm:$0xff]
      %v2958 = vld [vmem:[%s14 + $0x78] sm:$0xff]
      %v2959 = vld [vmem:[%s15] sm:$0x3]
      %v2961 = vlaneseq
      %v2962 = vshrl.u32 %v2961, 7
      %v2963 = vsub.s32 0, %v2962
      %v2964 = vrot.slane %v2959, %v2963
      %v2965 = vlaneseq
      %v2966 = vshrl.u32 %v2965, 7
      %v2967 = vsub.s32 1, %v2966
      %v2968 = vrot.slane %v2959, %v2967
      %v2987 = vunpack.c.l.b16 %v2943
      %v2988 = vunpack.c.h.b16 %v2943
      %v2989 = vunpack.c.l.b16 %v2944
      %v2990 = vunpack.c.h.b16 %v2944
      %v2991 = vunpack.c.l.b16 %v2945
      %v2992 = vunpack.c.h.b16 %v2945
      %v2993 = vunpack.c.l.b16 %v2946
      %v2994 = vunpack.c.h.b16 %v2946
      %v2995 = vunpack.c.l.b16 %v2947
      %v2996 = vunpack.c.h.b16 %v2947
      %v2997 = vunpack.c.l.b16 %v2948
      %v2998 = vunpack.c.h.b16 %v2948
      %v2999 = vunpack.c.l.b16 %v2949
      %v3000 = vunpack.c.h.b16 %v2949
      %v3001 = vunpack.c.l.b16 %v2950
      %v3002 = vunpack.c.h.b16 %v2950
      %v3003 = vunpack.c.l.b16 %v2951
      %v3004 = vunpack.c.h.b16 %v2951
      %v3005 = vunpack.c.l.b16 %v2952
      %v3006 = vunpack.c.h.b16 %v2952
      %v3007 = vunpack.c.l.b16 %v2953
      %v3008 = vunpack.c.h.b16 %v2953
      %v3009 = vunpack.c.l.b16 %v2954
      %v3010 = vunpack.c.h.b16 %v2954
      %v3011 = vunpack.c.l.b16 %v2955
      %v3012 = vunpack.c.h.b16 %v2955
      %v3013 = vunpack.c.l.b16 %v2956
      %v3014 = vunpack.c.h.b16 %v2956
      %v3015 = vunpack.c.l.b16 %v2957
      %v3016 = vunpack.c.h.b16 %v2957
      %v3017 = vunpack.c.l.b16 %v2958
      %v3018 = vunpack.c.h.b16 %v2958
      %v3019 = vpack.c.b16 %v2989, %v2987
      %v3020 = vpack.c.b16 %v2990, %v2988
      %v3021 = vpack.c.b16 %v2993, %v2991
      %v3022 = vpack.c.b16 %v2994, %v2992
      %v3023 = vpack.c.b16 %v2997, %v2995
      %v3024 = vpack.c.b16 %v2998, %v2996
      %v3025 = vpack.c.b16 %v3001, %v2999
      %v3026 = vpack.c.b16 %v3002, %v3000
      %v3027 = vpack.c.b16 %v3005, %v3003
      %v3028 = vpack.c.b16 %v3006, %v3004
      %v3029 = vpack.c.b16 %v3009, %v3007
      %v3030 = vpack.c.b16 %v3010, %v3008
      %v3031 = vpack.c.b16 %v3013, %v3011
      %v3032 = vpack.c.b16 %v3014, %v3012
      %v3033 = vpack.c.b16 %v3017, %v3015
      %v3034 = vpack.c.b16 %v3018, %v3016
      %3051 = vmatprep.subr.bf16.mxu0 %v3020
      %3052 = vmatpush1.bf16.msra.mxu0 %v3019
      %3053 = vmatprep.subr.bf16.mxu0 %v3022
      %3054 = vmatpush1.bf16.msra.mxu0 %v3021
      %3055 = vmatprep.subr.bf16.mxu0 %v3024
      %3056 = vmatpush1.bf16.msra.mxu0 %v3023
      %3057 = vmatprep.subr.bf16.mxu0 %v3026
      %3058 = vmatpush1.bf16.msra.mxu0 %v3025
      %3059 = vmatprep.subr.bf16.mxu0 %v3028
      %3060 = vmatpush1.bf16.msra.mxu0 %v3027
      %3061 = vmatprep.subr.bf16.mxu0 %v3030
      %3062 = vmatpush1.bf16.msra.mxu0 %v3029
      %3063 = vmatprep.subr.bf16.mxu0 %v3032
      %3064 = vmatpush1.bf16.msra.mxu0 %v3031
      %3065 = vmatprep.subr.bf16.mxu0 %v3034
      %3066 = vmatpush1.bf16.msra.mxu0 %v3033
      %3067 = vmatprep.subr.bf16.mxu0 0
      %3068 = vmatpush1.bf16.msra.mxu0 0
      %3069 = vmatprep.subr.bf16.mxu0 0
      %3070 = vmatpush1.bf16.msra.mxu0 0
      %3071 = vmatprep.subr.bf16.mxu0 0
      %3072 = vmatpush1.bf16.msra.mxu0 0
      %3073 = vmatprep.subr.bf16.mxu0 0
      %3074 = vmatpush1.bf16.msra.mxu0 0
      %3075 = vmatprep.subr.bf16.mxu0 0
      %3076 = vmatpush1.bf16.msra.mxu0 0
      %3077 = vmatprep.subr.bf16.mxu0 0
      %3078 = vmatpush1.bf16.msra.mxu0 0
      %3079 = vmatprep.subr.bf16.mxu0 0
      %3080 = vmatpush1.bf16.msra.mxu0 0
      %3081 = vmatprep.subr.bf16.mxu0 0
      %3082 = vmatpush1.bf16.msra.mxu0 0
      %3083 = vmatprep.mubr.bf16.mxu0 0
      %3084 = vmatmul.mubr.bf16.gmra.mrb[0].mxu0 %v2942
      %v3085 = vpop.f32.mrb[0].mxu0
      %v3086 = vadd.f32 %v2964, %v3085
      %v3087 = vpop.f32.mrb[0].mxu0
      %v3088 = vadd.f32 %v2968, %v3087
      %v3089 = vpop.f32.mrb[0].mxu0
      %v3090 = vadd.f32 %v2964, %v3089
      %v3091 = vpop.f32.mrb[0].mxu0
      %v3092 = vadd.f32 %v2968, %v3091
      %3093 = vdwg.mxu0
      %v3094 = vmul.f32 %v3086, %v3086
      %v3095 = vmul.f32 %v3088, %v3088
      %v3096 = vmul.f32 %v3090, %v3090
      %v3097 = vmul.f32 %v3092, %v3092
      %v3098 = vmul.f32 %v3086, %v3094
      %v3099 = vmul.f32 %v3088, %v3095
      %v3100 = vmul.f32 %v3090, %v3096
      %v3101 = vmul.f32 %v3092, %v3097
      %v3102 = vmul.f32 %v3098, 0.044715
      %v3103 = vmul.f32 %v3099, 0.044715
      %v3104 = vmul.f32 %v3100, 0.044715
      %v3105 = vmul.f32 %v3101, 0.044715
      %v3106 = vadd.f32 %v3086, %v3102
      %v3107 = vadd.f32 %v3088, %v3103
      %v3108 = vadd.f32 %v3090, %v3104
      %v3109 = vadd.f32 %v3092, %v3105
      %v3110 = vmul.f32 %v3106, 0.7978846
      %v3111 = vmul.f32 %v3107, 0.7978846
      %v3112 = vmul.f32 %v3108, 0.7978846
      %v3113 = vmul.f32 %v3109, 0.7978846
      %v3114 = vtanh.pop %v3110
      %v3115 = vtanh.pop %v3111
      %v3116 = vtanh.pop %v3112
      %v3117 = vtanh.pop %v3113
      %v3118 = vadd.f32 %v3114, 1.0
      %v3119 = vadd.f32 %v3115, 1.0
      %v3120 = vadd.f32 %v3116, 1.0
      %v3121 = vadd.f32 %v3117, 1.0
      %v3122 = vmul.f32 %v3118, 0.5
      %v3123 = vmul.f32 %v3119, 0.5
      %v3124 = vmul.f32 %v3120, 0.5
      %v3125 = vmul.f32 %v3121, 0.5
      %v3126 = vmul.f32 %v3086, %v3122
      %v3127 = vmul.f32 %v3088, %v3123
      %v3128 = vmul.f32 %v3090, %v3124
      %v3129 = vmul.f32 %v3092, %v3125
      %v3130 = vpack.c.bf16 %v3128, %v3126
      %v3131 = vpack.c.bf16 %v3129, %v3127
      %v3132 = vld [vmem:[%s16] sm:$0xf]
      %v3133 = vld [vmem:[%s16 + $0x4] sm:$0xf]
      %v3134 = vld [vmem:[%s16 + $0x8] sm:$0xf]
      %v3135 = vld [vmem:[%s16 + $0xc] sm:$0xf]
      %v3136 = vld [vmem:[%s16 + $0x10] sm:$0xf]
      %v3137 = vld [vmem:[%s16 + $0x14] sm:$0xf]
      %v3138 = vld [vmem:[%s16 + $0x18] sm:$0xf]
      %v3139 = vld [vmem:[%s16 + $0x1c] sm:$0xf]
      %v3140 = vld [vmem:[%s16 + $0x20] sm:$0xf]
      %v3141 = vld [vmem:[%s16 + $0x24] sm:$0xf]
      %v3142 = vld [vmem:[%s16 + $0x28] sm:$0xf]
      %v3143 = vld [vmem:[%s16 + $0x2c] sm:$0xf]
      %v3144 = vld [vmem:[%s16 + $0x30] sm:$0xf]
      %v3145 = vld [vmem:[%s16 + $0x34] sm:$0xf]
      %v3146 = vld [vmem:[%s16 + $0x38] sm:$0xf]
      %v3147 = vld [vmem:[%s16 + $0x3c] sm:$0xf]
      %v3148 = vld [vmem:[%s16 + $0x40] sm:$0xf]
      %v3149 = vld [vmem:[%s16 + $0x44] sm:$0xf]
      %v3150 = vld [vmem:[%s16 + $0x48] sm:$0xf]
      %v3151 = vld [vmem:[%s16 + $0x4c] sm:$0xf]
      %v3152 = vld [vmem:[%s16 + $0x50] sm:$0xf]
      %v3153 = vld [vmem:[%s16 + $0x54] sm:$0xf]
      %v3154 = vld [vmem:[%s16 + $0x58] sm:$0xf]
      %v3155 = vld [vmem:[%s16 + $0x5c] sm:$0xf]
      %v3156 = vld [vmem:[%s16 + $0x60] sm:$0xf]
      %v3157 = vld [vmem:[%s16 + $0x64] sm:$0xf]
      %v3158 = vld [vmem:[%s16 + $0x68] sm:$0xf]
      %v3159 = vld [vmem:[%s16 + $0x6c] sm:$0xf]
      %v3160 = vld [vmem:[%s16 + $0x70] sm:$0xf]
      %v3161 = vld [vmem:[%s16 + $0x74] sm:$0xf]
      %v3162 = vld [vmem:[%s16 + $0x78] sm:$0xf]
      %v3163 = vld [vmem:[%s16 + $0x7c] sm:$0xf]
      %v3164 = vld [vmem:[%s17] sm:$0x1]
      %v3166 = vlaneseq
      %v3167 = vshrl.u32 %v3166, 7
      %v3168 = vsub.s32 0, %v3167
      %v3169 = vrot.slane %v3164, %v3168
      %v3203 = vunpack.c.l.b16 %v3132
      %v3204 = vunpack.c.l.b16 %v3133
      %v3205 = vunpack.c.l.b16 %v3134
      %v3206 = vunpack.c.l.b16 %v3135
      %v3207 = vunpack.c.l.b16 %v3136
      %v3208 = vunpack.c.l.b16 %v3137
      %v3209 = vunpack.c.l.b16 %v3138
      %v3210 = vunpack.c.l.b16 %v3139
      %v3211 = vunpack.c.l.b16 %v3140
      %v3212 = vunpack.c.l.b16 %v3141
      %v3213 = vunpack.c.l.b16 %v3142
      %v3214 = vunpack.c.l.b16 %v3143
      %v3215 = vunpack.c.l.b16 %v3144
      %v3216 = vunpack.c.l.b16 %v3145
      %v3217 = vunpack.c.l.b16 %v3146
      %v3218 = vunpack.c.l.b16 %v3147
      %v3219 = vunpack.c.l.b16 %v3148
      %v3220 = vunpack.c.l.b16 %v3149
      %v3221 = vunpack.c.l.b16 %v3150
      %v3222 = vunpack.c.l.b16 %v3151
      %v3223 = vunpack.c.l.b16 %v3152
      %v3224 = vunpack.c.l.b16 %v3153
      %v3225 = vunpack.c.l.b16 %v3154
      %v3226 = vunpack.c.l.b16 %v3155
      %v3227 = vunpack.c.l.b16 %v3156
      %v3228 = vunpack.c.l.b16 %v3157
      %v3229 = vunpack.c.l.b16 %v3158
      %v3230 = vunpack.c.l.b16 %v3159
      %v3231 = vunpack.c.l.b16 %v3160
      %v3232 = vunpack.c.l.b16 %v3161
      %v3233 = vunpack.c.l.b16 %v3162
      %v3234 = vunpack.c.l.b16 %v3163
      %v3235 = vpack.c.b16 %v3204, %v3203
      %v3236 = vpack.c.b16 %v3206, %v3205
      %v3237 = vpack.c.b16 %v3208, %v3207
      %v3238 = vpack.c.b16 %v3210, %v3209
      %v3239 = vpack.c.b16 %v3212, %v3211
      %v3240 = vpack.c.b16 %v3214, %v3213
      %v3241 = vpack.c.b16 %v3216, %v3215
      %v3242 = vpack.c.b16 %v3218, %v3217
      %v3243 = vpack.c.b16 %v3220, %v3219
      %v3244 = vpack.c.b16 %v3222, %v3221
      %v3245 = vpack.c.b16 %v3224, %v3223
      %v3246 = vpack.c.b16 %v3226, %v3225
      %v3247 = vpack.c.b16 %v3228, %v3227
      %v3248 = vpack.c.b16 %v3230, %v3229
      %v3249 = vpack.c.b16 %v3232, %v3231
      %v3250 = vpack.c.b16 %v3234, %v3233
      %3267 = vmatprep.subr.bf16.mxu0 0
      %3268 = vmatpush1.bf16.msra.mxu0 %v3235
      %3269 = vmatprep.subr.bf16.mxu0 0
      %3270 = vmatpush1.bf16.msra.mxu0 %v3236
      %3271 = vmatprep.subr.bf16.mxu0 0
      %3272 = vmatpush1.bf16.msra.mxu0 %v3237
      %3273 = vmatprep.subr.bf16.mxu0 0
      %3274 = vmatpush1.bf16.msra.mxu0 %v3238
      %3275 = vmatprep.subr.bf16.mxu0 0
      %3276 = vmatpush1.bf16.msra.mxu0 %v3239
      %3277 = vmatprep.subr.bf16.mxu0 0
      %3278 = vmatpush1.bf16.msra.mxu0 %v3240
      %3279 = vmatprep.subr.bf16.mxu0 0
      %3280 = vmatpush1.bf16.msra.mxu0 %v3241
      %3281 = vmatprep.subr.bf16.mxu0 0
      %3282 = vmatpush1.bf16.msra.mxu0 %v3242
      %3283 = vmatprep.subr.bf16.mxu0 0
      %3284 = vmatpush1.bf16.msra.mxu0 %v3243
      %3285 = vmatprep.subr.bf16.mxu0 0
      %3286 = vmatpush1.bf16.msra.mxu0 %v3244
      %3287 = vmatprep.subr.bf16.mxu0 0
      %3288 = vmatpush1.bf16.msra.mxu0 %v3245
      %3289 = vmatprep.subr.bf16.mxu0 0
      %3290 = vmatpush1.bf16.msra.mxu0 %v3246
      %3291 = vmatprep.subr.bf16.mxu0 0
      %3292 = vmatpush1.bf16.msra.mxu0 %v3247
      %3293 = vmatprep.subr.bf16.mxu0 0
      %3294 = vmatpush1.bf16.msra.mxu0 %v3248
      %3295 = vmatprep.subr.bf16.mxu0 0
      %3296 = vmatpush1.bf16.msra.mxu0 %v3249
      %3297 = vmatprep.subr.bf16.mxu0 0
      %3298 = vmatpush1.bf16.msra.mxu0 %v3250
      %3299 = vmatprep.mubr.bf16.mxu0 %v3131
      %3300 = vmatmul.mubr.bf16.gmra.mrb[0].mxu0 %v3130
      %v3301 = vpop.f32.mrb[0].mxu0
      %v3302 = vadd.f32 %v3169, %v3301
      %v3303 = vpop.f32.mrb[0].mxu0
      %v3304 = vpop.f32.mrb[0].mxu0
      %v3305 = vadd.f32 %v3169, %v3304
      %v3306 = vpop.f32.mrb[0].mxu0
      %3307 = vdwg.mxu0
      %v3308 = vunpack.c.l.bf16 %v2942
      %v3309 = vunpack.c.h.bf16 %v2942
      %v3310 = vadd.f32 %v3302, %v3308
      %v3311 = vadd.f32 %v3305, %v3309
      %v3312 = vld [vmem:[%s18] sm:$0x1]
      %v3313 = vld [vmem:[%s19] sm:$0x1]
      %3314 = vadd.xlane.f32.xlu0 %v3310
      %v3315 = vpop.xlane.xlu0 %3314
      %3316 = vadd.xlane.f32.xlu0 %v3311
      %v3317 = vpop.xlane.xlu0 %3316
      %v3318 = vmul.f32 %v3315, %v761
      %v3319 = vmul.f32 %v3317, %v761
      %v3320 = vsub.f32 %v3310, %v3318
      %v3321 = vsub.f32 %v3311, %v3319
      %v3322 = vmul.f32 %v3320, %v3320
      %v3323 = vmul.f32 %v3321, %v3321
      %3324 = vadd.xlane.f32.xlu0 %v3322
      %v3325 = vpop.xlane.xlu0 %3324
      %3326 = vadd.xlane.f32.xlu0 %v3323
      %v3327 = vpop.xlane.xlu0 %3326
      %v3328 = vmul.f32 %v3325, %v761
      %v3329 = vmul.f32 %v3327, %v761
      %v3330 = vadd.f32 %v3328, 1e-05
      %v3331 = vadd.f32 %v3329, 1e-05
      %v3332 = vrsqrt.pop %v3330
      %v3333 = vrsqrt.pop %v3331
      %v3334 = vmul.f32 %v3320, %v3332
      %v3335 = vmul.f32 %v3321, %v3333
      %v3337 = vlaneseq
      %v3338 = vshrl.u32 %v3337, 7
      %v3339 = vsub.s32 0, %v3338
      %v3340 = vrot.slane %v3312, %v3339
      %v3342 = vmul.f32 %v3334, %v3340
      %v3343 = vmul.f32 %v3335, %v3340
      %v3345 = vlaneseq
      %v3346 = vshrl.u32 %v3345, 7
      %v3347 = vsub.s32 0, %v3346
      %v3348 = vrot.slane %v3313, %v3347
      %v3350 = vadd.f32 %v3342, %v3348
      %v3351 = vadd.f32 %v3343, %v3348
      %v3352 = vpack.c.bf16 %v3351, %v3350
      %v3353 = vld [vmem:[%s20] sm:$0xf]
      %v3354 = vld [vmem:[%s20 + $0x4] sm:$0xf]
      %v3355 = vld [vmem:[%s20 + $0x8] sm:$0xf]
      %v3356 = vld [vmem:[%s20 + $0xc] sm:$0xf]
      %v3357 = vld [vmem:[%s20 + $0x10] sm:$0xf]
      %v3358 = vld [vmem:[%s20 + $0x14] sm:$0xf]
      %v3359 = vld [vmem:[%s20 + $0x18] sm:$0xf]
      %v3360 = vld [vmem:[%s20 + $0x1c] sm:$0xf]
      %v3361 = vld [vmem:[%s20 + $0x20] sm:$0xf]
      %v3362 = vld [vmem:[%s20 + $0x24] sm:$0xf]
      %v3363 = vld [vmem:[%s20 + $0x28] sm:$0xf]
      %v3364 = vld [vmem:[%s20 + $0x2c] sm:$0xf]
      %v3365 = vld [vmem:[%s20 + $0x30] sm:$0xf]
      %v3366 = vld [vmem:[%s20 + $0x34] sm:$0xf]
      %v3367 = vld [vmem:[%s20 + $0x38] sm:$0xf]
      %v3368 = vld [vmem:[%s20 + $0x3c] sm:$0xf]
      %v3369 = vld [vmem:[%s21] sm:$0x1]
      %v3371 = vlaneseq
      %v3372 = vshrl.u32 %v3371, 7
      %v3373 = vsub.s32 0, %v3372
      %v3374 = vrot.slane %v3369, %v3373
      %v3392 = vunpack.c.l.b16 %v3353
      %v3393 = vunpack.c.l.b16 %v3354
      %v3394 = vunpack.c.l.b16 %v3355
      %v3395 = vunpack.c.l.b16 %v3356
      %v3396 = vunpack.c.l.b16 %v3357
      %v3397 = vunpack.c.l.b16 %v3358
      %v3398 = vunpack.c.l.b16 %v3359
      %v3399 = vunpack.c.l.b16 %v3360
      %v3400 = vunpack.c.l.b16 %v3361
      %v3401 = vunpack.c.l.b16 %v3362
      %v3402 = vunpack.c.l.b16 %v3363
      %v3403 = vunpack.c.l.b16 %v3364
      %v3404 = vunpack.c.l.b16 %v3365
      %v3405 = vunpack.c.l.b16 %v3366
      %v3406 = vunpack.c.l.b16 %v3367
      %v3407 = vunpack.c.l.b16 %v3368
      %v3408 = vpack.c.b16 %v3393, %v3392
      %v3409 = vpack.c.b16 %v3395, %v3394
      %v3410 = vpack.c.b16 %v3397, %v3396
      %v3411 = vpack.c.b16 %v3399, %v3398
      %v3412 = vpack.c.b16 %v3401, %v3400
      %v3413 = vpack.c.b16 %v3403, %v3402
      %v3414 = vpack.c.b16 %v3405, %v3404
      %v3415 = vpack.c.b16 %v3407, %v3406
      %3424 = vmatprep.subr.bf16.mxu0 0
      %3425 = vmatpush1.bf16.msra.mxu0 %v3408
      %3426 = vmatprep.subr.bf16.mxu0 0
      %3427 = vmatpush1.bf16.msra.mxu0 %v3409
      %3428 = vmatprep.subr.bf16.mxu0 0
      %3429 = vmatpush1.bf16.msra.mxu0 %v3410
      %3430 = vmatprep.subr.bf16.mxu0 0
      %3431 = vmatpush1.bf16.msra.mxu0 %v3411
      %3432 = vmatprep.subr.bf16.mxu0 0
      %3433 = vmatpush1.bf16.msra.mxu0 %v3412
      %3434 = vmatprep.subr.bf16.mxu0 0
      %3435 = vmatpush1.bf16.msra.mxu0 %v3413
      %3436 = vmatprep.subr.bf16.mxu0 0
      %3437 = vmatpush1.bf16.msra.mxu0 %v3414
      %3438 = vmatprep.subr.bf16.mxu0 0
      %3439 = vmatpush1.bf16.msra.mxu0 %v3415
      %3440 = vmatprep.subr.bf16.mxu0 0
      %3441 = vmatpush1.bf16.msra.mxu0 0
      %3442 = vmatprep.subr.bf16.mxu0 0
      %3443 = vmatpush1.bf16.msra.mxu0 0
      %3444 = vmatprep.subr.bf16.mxu0 0
      %3445 = vmatpush1.bf16.msra.mxu0 0
      %3446 = vmatprep.subr.bf16.mxu0 0
      %3447 = vmatpush1.bf16.msra.mxu0 0
      %3448 = vmatprep.subr.bf16.mxu0 0
      %3449 = vmatpush1.bf16.msra.mxu0 0
      %3450 = vmatprep.subr.bf16.mxu0 0
      %3451 = vmatpush1.bf16.msra.mxu0 0
      %3452 = vmatprep.subr.bf16.mxu0 0
      %3453 = vmatpush1.bf16.msra.mxu0 0
      %3454 = vmatprep.subr.bf16.mxu0 0
      %3455 = vmatpush1.bf16.msra.mxu0 0
      %3456 = vmatprep.mubr.bf16.mxu0 0
      %3457 = vmatmul.mubr.bf16.gmra.mrb[0].mxu0 %v3352
      %v3458 = vpop.f32.mrb[0].mxu0
      %v3459 = vadd.f32 %v3374, %v3458
      %v3460 = vpop.f32.mrb[0].mxu0
      %v3461 = vpop.f32.mrb[0].mxu0
      %v3462 = vadd.f32 %v3374, %v3461
      %v3463 = vpop.f32.mrb[0].mxu0
      %3464 = vdwg.mxu0
      %v3465 = vpack.c.bf16 %v3462, %v3459
      %s3466 = scalar_lea.vmem %s11, 1
      %v3467 = vld [vmem:[%s3466] sm:$0x1]
      %s3468 = scalar_lea.vmem %s4, 256
      %v3469 = vld [vmem:[%s3468] sm:$0xf]
      %v3470 = vld [vmem:[%s3468 + $0x4] sm:$0xf]
      %v3471 = vld [vmem:[%s3468 + $0x8] sm:$0xf]
      %v3472 = vld [vmem:[%s3468 + $0xc] sm:$0xf]
      %v3473 = vld [vmem:[%s3468 + $0x10] sm:$0xf]
      %v3474 = vld [vmem:[%s3468 + $0x14] sm:$0xf]
      %v3475 = vld [vmem:[%s3468 + $0x18] sm:$0xf]
      %v3476 = vld [vmem:[%s3468 + $0x1c] sm:$0xf]
      %v3477 = vld [vmem:[%s3468 + $0x20] sm:$0xf]
      %v3478 = vld [vmem:[%s3468 + $0x24] sm:$0xf]
      %v3479 = vld [vmem:[%s3468 + $0x28] sm:$0xf]
      %v3480 = vld [vmem:[%s3468 + $0x2c] sm:$0xf]
      %v3481 = vld [vmem:[%s3468 + $0x30] sm:$0xf]
      %v3482 = vld [vmem:[%s3468 + $0x34] sm:$0xf]
      %v3483 = vld [vmem:[%s3468 + $0x38] sm:$0xf]
      %v3484 = vld [vmem:[%s3468 + $0x3c] sm:$0xf]
      %s3485 = scalar_lea.vmem %s5, 4
      %v3486 = vld [vmem:[%s3485] sm:$0x1]
      %v3488 = vlaneseq
      %v3489 = vshrl.u32 %v3488, 7
      %v3490 = vsub.s32 0, %v3489
      %v3491 = vrot.slane %v3486, %v3490
      %v3509 = vunpack.c.l.b16 %v3469
      %v3510 = vunpack.c.l.b16 %v3470
      %v3511 = vunpack.c.l.b16 %v3471
      %v3512 = vunpack.c.l.b16 %v3472
      %v3513 = vunpack.c.l.b16 %v3473
      %v3514 = vunpack.c.l.b16 %v3474
      %v3515 = vunpack.c.l.b16 %v3475
      %v3516 = vunpack.c.l.b16 %v3476
      %v3517 = vunpack.c.l.b16 %v3477
      %v3518 = vunpack.c.l.b16 %v3478
      %v3519 = vunpack.c.l.b16 %v3479
      %v3520 = vunpack.c.l.b16 %v3480
      %v3521 = vunpack.c.l.b16 %v3481
      %v3522 = vunpack.c.l.b16 %v3482
      %v3523 = vunpack.c.l.b16 %v3483
      %v3524 = vunpack.c.l.b16 %v3484
      %v3525 = vpack.c.b16 %v3510, %v3509
      %v3526 = vpack.c.b16 %v3512, %v3511
      %v3527 = vpack.c.b16 %v3514, %v3513
      %v3528 = vpack.c.b16 %v3516, %v3515
      %v3529 = vpack.c.b16 %v3518, %v3517
      %v3530 = vpack.c.b16 %v3520, %v3519
      %v3531 = vpack.c.b16 %v3522, %v3521
      %v3532 = vpack.c.b16 %v3524, %v3523
      %3541 = vmatprep.subr.bf16.mxu0 0
      %3542 = vmatpush1.bf16.msra.mxu0 %v3525
      %3543 = vmatprep.subr.bf16.mxu0 0
      %3544 = vmatpush1.bf16.msra.mxu0 %v3526
      %3545 = vmatprep.subr.bf16.mxu0 0
      %3546 = vmatpush1.bf16.msra.mxu0 %v3527
      %3547 = vmatprep.subr.bf16.mxu0 0
      %3548 = vmatpush1.bf16.msra.mxu0 %v3528
      %3549 = vmatprep.subr.bf16.mxu0 0
      %3550 = vmatpush1.bf16.msra.mxu0 %v3529
      %3551 = vmatprep.subr.bf16.mxu0 0
      %3552 = vmatpush1.bf16.msra.mxu0 %v3530
      %3553 = vmatprep.subr.bf16.mxu0 0
      %3554 = vmatpush1.bf16.msra.mxu0 %v3531
      %3555 = vmatprep.subr.bf16.mxu0 0
      %3556 = vmatpush1.bf16.msra.mxu0 %v3532
      %3557 = vmatprep.subr.bf16.mxu0 0
      %3558 = vmatpush1.bf16.msra.mxu0 0
      %3559 = vmatprep.subr.bf16.mxu0 0
      %3560 = vmatpush1.bf16.msra.mxu0 0
      %3561 = vmatprep.subr.bf16.mxu0 0
      %3562 = vmatpush1.bf16.msra.mxu0 0
      %3563 = vmatprep.subr.bf16.mxu0 0
      %3564 = vmatpush1.bf16.msra.mxu0 0
      %3565 = vmatprep.subr.bf16.mxu0 0
      %3566 = vmatpush1.bf16.msra.mxu0 0
      %3567 = vmatprep.subr.bf16.mxu0 0
      %3568 = vmatpush1.bf16.msra.mxu0 0
      %3569 = vmatprep.subr.bf16.mxu0 0
      %3570 = vmatpush1.bf16.msra.mxu0 0
      %3571 = vmatprep.subr.bf16.mxu0 0
      %3572 = vmatpush1.bf16.msra.mxu0 0
      %3573 = vmatprep.mubr.bf16.mxu0 0
      %3574 = vmatmul.mubr.bf16.gmra.mrb[0].mxu0 %v3465
      %v3575 = vpop.f32.mrb[0].mxu0
      %v3576 = vadd.f32 %v3491, %v3575
      %v3577 = vpop.f32.mrb[0].mxu0
      %v3578 = vpop.f32.mrb[0].mxu0
      %v3579 = vadd.f32 %v3491, %v3578
      %v3580 = vpop.f32.mrb[0].mxu0
      %3581 = vdwg.mxu0
      %s3582 = scalar_lea.vmem %s6, 256
      %v3583 = vld [vmem:[%s3582] sm:$0xf]
      %v3584 = vld [vmem:[%s3582 + $0x4] sm:$0xf]
      %v3585 = vld [vmem:[%s3582 + $0x8] sm:$0xf]
      %v3586 = vld [vmem:[%s3582 + $0xc] sm:$0xf]
      %v3587 = vld [vmem:[%s3582 + $0x10] sm:$0xf]
      %v3588 = vld [vmem:[%s3582 + $0x14] sm:$0xf]
      %v3589 = vld [vmem:[%s3582 + $0x18] sm:$0xf]
      %v3590 = vld [vmem:[%s3582 + $0x1c] sm:$0xf]
      %v3591 = vld [vmem:[%s3582 + $0x20] sm:$0xf]
      %v3592 = vld [vmem:[%s3582 + $0x24] sm:$0xf]
      %v3593 = vld [vmem:[%s3582 + $0x28] sm:$0xf]
      %v3594 = vld [vmem:[%s3582 + $0x2c] sm:$0xf]
      %v3595 = vld [vmem:[%s3582 + $0x30] sm:$0xf]
      %v3596 = vld [vmem:[%s3582 + $0x34] sm:$0xf]
      %v3597 = vld [vmem:[%s3582 + $0x38] sm:$0xf]
      %v3598 = vld [vmem:[%s3582 + $0x3c] sm:$0xf]
      %s3599 = scalar_lea.vmem %s7, 4
      %v3600 = vld [vmem:[%s3599] sm:$0x1]
      %v3602 = vlaneseq
      %v3603 = vshrl.u32 %v3602, 7
      %v3604 = vsub.s32 0, %v3603
      %v3605 = vrot.slane %v3600, %v3604
      %v3623 = vunpack.c.l.b16 %v3583
      %v3624 = vunpack.c.l.b16 %v3584
      %v3625 = vunpack.c.l.b16 %v3585
      %v3626 = vunpack.c.l.b16 %v3586
      %v3627 = vunpack.c.l.b16 %v3587
      %v3628 = vunpack.c.l.b16 %v3588
      %v3629 = vunpack.c.l.b16 %v3589
      %v3630 = vunpack.c.l.b16 %v3590
      %v3631 = vunpack.c.l.b16 %v3591
      %v3632 = vunpack.c.l.b16 %v3592
      %v3633 = vunpack.c.l.b16 %v3593
      %v3634 = vunpack.c.l.b16 %v3594
      %v3635 = vunpack.c.l.b16 %v3595
      %v3636 = vunpack.c.l.b16 %v3596
      %v3637 = vunpack.c.l.b16 %v3597
      %v3638 = vunpack.c.l.b16 %v3598
      %v3639 = vpack.c.b16 %v3624, %v3623
      %v3640 = vpack.c.b16 %v3626, %v3625
      %v3641 = vpack.c.b16 %v3628, %v3627
      %v3642 = vpack.c.b16 %v3630, %v3629
      %v3643 = vpack.c.b16 %v3632, %v3631
      %v3644 = vpack.c.b16 %v3634, %v3633
      %v3645 = vpack.c.b16 %v3636, %v3635
      %v3646 = vpack.c.b16 %v3638, %v3637
      %3655 = vmatprep.subr.bf16.mxu0 0
      %3656 = vmatpush1.bf16.msra.mxu0 %v3639
      %3657 = vmatprep.subr.bf16.mxu0 0
      %3658 = vmatpush1.bf16.msra.mxu0 %v3640
      %3659 = vmatprep.subr.bf16.mxu0 0
      %3660 = vmatpush1.bf16.msra.mxu0 %v3641
      %3661 = vmatprep.subr.bf16.mxu0 0
      %3662 = vmatpush1.bf16.msra.mxu0 %v3642
      %3663 = vmatprep.subr.bf16.mxu0 0
      %3664 = vmatpush1.bf16.msra.mxu0 %v3643
      %3665 = vmatprep.subr.bf16.mxu0 0
      %3666 = vmatpush1.bf16.msra.mxu0 %v3644
      %3667 = vmatprep.subr.bf16.mxu0 0
      %3668 = vmatpush1.bf16.msra.mxu0 %v3645
      %3669 = vmatprep.subr.bf16.mxu0 0
      %3670 = vmatpush1.bf16.msra.mxu0 %v3646
      %3671 = vmatprep.subr.bf16.mxu0 0
      %3672 = vmatpush1.bf16.msra.mxu0 0
      %3673 = vmatprep.subr.bf16.mxu0 0
      %3674 = vmatpush1.bf16.msra.mxu0 0
      %3675 = vmatprep.subr.bf16.mxu0 0
      %3676 = vmatpush1.bf16.msra.mxu0 0
      %3677 = vmatprep.subr.bf16.mxu0 0
      %3678 = vmatpush1.bf16.msra.mxu0 0
      %3679 = vmatprep.subr.bf16.mxu0 0
      %3680 = vmatpush1.bf16.msra.mxu0 0
      %3681 = vmatprep.subr.bf16.mxu0 0
      %3682 = vmatpush1.bf16.msra.mxu0 0
      %3683 = vmatprep.subr.bf16.mxu0 0
      %3684 = vmatpush1.bf16.msra.mxu0 0
      %3685 = vmatprep.subr.bf16.mxu0 0
      %3686 = vmatpush1.bf16.msra.mxu0 0
      %3687 = vmatprep.mubr.bf16.mxu0 0
      %3688 = vmatmul.mubr.bf16.gmra.mrb[0].mxu0 %v3465
      %v3689 = vpop.f32.mrb[0].mxu0
      %v3690 = vadd.f32 %v3605, %v3689
      %v3691 = vpop.f32.mrb[0].mxu0
      %v3692 = vpop.f32.mrb[0].mxu0
      %v3693 = vadd.f32 %v3605, %v3692
      %v3694 = vpop.f32.mrb[0].mxu0
      %3695 = vdwg.mxu0
      %s3696 = scalar_lea.vmem %s8, 256
      %v3697 = vld [vmem:[%s3696] sm:$0xf]
      %v3698 = vld [vmem:[%s3696 + $0x4] sm:$0xf]
      %v3699 = vld [vmem:[%s3696 + $0x8] sm:$0xf]
      %v3700 = vld [vmem:[%s3696 + $0xc] sm:$0xf]
      %v3701 = vld [vmem:[%s3696 + $0x10] sm:$0xf]
      %v3702 = vld [vmem:[%s3696 + $0x14] sm:$0xf]
      %v3703 = vld [vmem:[%s3696 + $0x18] sm:$0xf]
      %v3704 = vld [vmem:[%s3696 + $0x1c] sm:$0xf]
      %v3705 = vld [vmem:[%s3696 + $0x20] sm:$0xf]
      %v3706 = vld [vmem:[%s3696 + $0x24] sm:$0xf]
      %v3707 = vld [vmem:[%s3696 + $0x28] sm:$0xf]
      %v3708 = vld [vmem:[%s3696 + $0x2c] sm:$0xf]
      %v3709 = vld [vmem:[%s3696 + $0x30] sm:$0xf]
      %v3710 = vld [vmem:[%s3696 + $0x34] sm:$0xf]
      %v3711 = vld [vmem:[%s3696 + $0x38] sm:$0xf]
      %v3712 = vld [vmem:[%s3696 + $0x3c] sm:$0xf]
      %s3713 = scalar_lea.vmem %s9, 4
      %v3714 = vld [vmem:[%s3713] sm:$0x1]
      %v3716 = vlaneseq
      %v3717 = vshrl.u32 %v3716, 7
      %v3718 = vsub.s32 0, %v3717
      %v3719 = vrot.slane %v3714, %v3718
      %v3737 = vunpack.c.l.b16 %v3697
      %v3738 = vunpack.c.l.b16 %v3698
      %v3739 = vunpack.c.l.b16 %v3699
      %v3740 = vunpack.c.l.b16 %v3700
      %v3741 = vunpack.c.l.b16 %v3701
      %v3742 = vunpack.c.l.b16 %v3702
      %v3743 = vunpack.c.l.b16 %v3703
      %v3744 = vunpack.c.l.b16 %v3704
      %v3745 = vunpack.c.l.b16 %v3705
      %v3746 = vunpack.c.l.b16 %v3706
      %v3747 = vunpack.c.l.b16 %v3707
      %v3748 = vunpack.c.l.b16 %v3708
      %v3749 = vunpack.c.l.b16 %v3709
      %v3750 = vunpack.c.l.b16 %v3710
      %v3751 = vunpack.c.l.b16 %v3711
      %v3752 = vunpack.c.l.b16 %v3712
      %v3753 = vpack.c.b16 %v3738, %v3737
      %v3754 = vpack.c.b16 %v3740, %v3739
      %v3755 = vpack.c.b16 %v3742, %v3741
      %v3756 = vpack.c.b16 %v3744, %v3743
      %v3757 = vpack.c.b16 %v3746, %v3745
      %v3758 = vpack.c.b16 %v3748, %v3747
      %v3759 = vpack.c.b16 %v3750, %v3749
      %v3760 = vpack.c.b16 %v3752, %v3751
      %3769 = vmatprep.subr.bf16.mxu0 0
      %3770 = vmatpush1.bf16.msra.mxu0 %v3753
      %3771 = vmatprep.subr.bf16.mxu0 0
      %3772 = vmatpush1.bf16.msra.mxu0 %v3754
      %3773 = vmatprep.subr.bf16.mxu0 0
      %3774 = vmatpush1.bf16.msra.mxu0 %v3755
      %3775 = vmatprep.subr.bf16.mxu0 0
      %3776 = vmatpush1.bf16.msra.mxu0 %v3756
      %3777 = vmatprep.subr.bf16.mxu0 0
      %3778 = vmatpush1.bf16.msra.mxu0 %v3757
      %3779 = vmatprep.subr.bf16.mxu0 0
      %3780 = vmatpush1.bf16.msra.mxu0 %v3758
      %3781 = vmatprep.subr.bf16.mxu0 0
      %3782 = vmatpush1.bf16.msra.mxu0 %v3759
      %3783 = vmatprep.subr.bf16.mxu0 0
      %3784 = vmatpush1.bf16.msra.mxu0 %v3760
      %3785 = vmatprep.subr.bf16.mxu0 0
      %3786 = vmatpush1.bf16.msra.mxu0 0
      %3787 = vmatprep.subr.bf16.mxu0 0
      %3788 = vmatpush1.bf16.msra.mxu0 0
      %3789 = vmatprep.subr.bf16.mxu0 0
      %3790 = vmatpush1.bf16.msra.mxu0 0
      %3791 = vmatprep.subr.bf16.mxu0 0
      %3792 = vmatpush1.bf16.msra.mxu0 0
      %3793 = vmatprep.subr.bf16.mxu0 0
      %3794 = vmatpush1.bf16.msra.mxu0 0
      %3795 = vmatprep.subr.bf16.mxu0 0
      %3796 = vmatpush1.bf16.msra.mxu0 0
      %3797 = vmatprep.subr.bf16.mxu0 0
      %3798 = vmatpush1.bf16.msra.mxu0 0
      %3799 = vmatprep.subr.bf16.mxu0 0
      %3800 = vmatpush1.bf16.msra.mxu0 0
      %3801 = vmatprep.mubr.bf16.mxu0 0
      %3802 = vmatmul.mubr.bf16.gmra.mrb[0].mxu0 %v3465
      %v3803 = vpop.f32.mrb[0].mxu0
      %v3804 = vadd.f32 %v3719, %v3803
      %v3805 = vpop.f32.mrb[0].mxu0
      %v3806 = vpop.f32.mrb[0].mxu0
      %v3807 = vadd.f32 %v3719, %v3806
      %v3808 = vpop.f32.mrb[0].mxu0
      %3809 = vdwg.mxu0
      %v3810 = vpack.c.bf16 %v3579, %v3576
      %v3811 = vpack.c.bf16 %v3693, %v3690
      %v3813 = vsel %vm1143, %v3810, 0
      %v3816 = vsel %vm1143, %v3811, 0
      %3818 = vmatprep.subr.bf16.mxu0 0
      %3819 = vmatpush1.bf16.xpose.msra.mxu0 %v3816
      %3820 = vmatprep.subr.bf16.mxu0 0
      %3821 = vmatpush1.bf16.xpose.msra.mxu0 0
      %3822 = vmatprep.subr.bf16.mxu0 0
      %3823 = vmatpush1.bf16.xpose.msra.mxu0 0
      %3824 = vmatprep.subr.bf16.mxu0 0
      %3825 = vmatpush1.bf16.xpose.msra.mxu0 0
      %3826 = vmatprep.subr.bf16.mxu0 0
      %3827 = vmatpush1.bf16.xpose.msra.mxu0 0
      %3828 = vmatprep.subr.bf16.mxu0 0
      %3829 = vmatpush1.bf16.xpose.msra.mxu0 0
      %3830 = vmatprep.subr.bf16.mxu0 0
      %3831 = vmatpush1.bf16.xpose.msra.mxu0 0
      %3832 = vmatprep.subr.bf16.mxu0 0
      %3833 = vmatpush1.bf16.xpose.msra.mxu0 0
      %3834 = vmatprep.subr.bf16.mxu0 0
      %3835 = vmatpush1.bf16.xpose.msra.mxu0 0
      %3836 = vmatprep.subr.bf16.mxu0 0
      %3837 = vmatpush1.bf16.xpose.msra.mxu0 0
      %3838 = vmatprep.subr.bf16.mxu0 0
      %3839 = vmatpush1.bf16.xpose.msra.mxu0 0
      %3840 = vmatprep.subr.bf16.mxu0 0
      %3841 = vmatpush1.bf16.xpose.msra.mxu0 0
      %3842 = vmatprep.subr.bf16.mxu0 0
      %3843 = vmatpush1.bf16.xpose.msra.mxu0 0
      %3844 = vmatprep.subr.bf16.mxu0 0
      %3845 = vmatpush1.bf16.xpose.msra.mxu0 0
      %3846 = vmatprep.subr.bf16.mxu0 0
      %3847 = vmatpush1.bf16.xpose.msra.mxu0 0
      %3848 = vmatprep.subr.bf16.mxu0 0
      %3849 = vmatpush1.bf16.xpose.msra.mxu0 0
      %3850 = vmatprep.mubr.bf16.mxu0 0
      %3851 = vmatmul.mubr.bf16.gmra.mrb[0].mxu0 %v3813
      %v3852 = vpop.f32.mrb[0].mxu0
      %v3853 = vadd.f32 %v1141, %v3852
      %v3854 = vpop.f32.mrb[0].mxu0
      %v3855 = vpop.f32.mrb[0].mxu0
      %v3856 = vadd.f32 %v1141, %v3855
      %v3857 = vpop.f32.mrb[0].mxu0
      %3858 = vdwg.mxu0
      %v3859 = vsel %vm1191, %v3853, -inf
      %3860 = vmax.xlane.f32.xlu0 %v3859
      %v3861 = vpop.xlane.xlu0 %3860
      %v3862 = vsel %vm1191, %v3856, -inf
      %3863 = vmax.xlane.f32.xlu0 %v3862
      %v3864 = vpop.xlane.xlu0 %3863
      %v3865 = vsub.f32 %v3853, %v3861
      %v3866 = vsub.f32 %v3856, %v3864
      %v3867 = vmul.f32 %v3865, 1.442695
      %v3868 = vpow.pop %v3867
      %v3869 = vmul.f32 %v3866, 1.442695
      %v3870 = vpow.pop %v3869
      %v3871 = vsel %vm1191, %v3868, 0.0
      %3872 = vadd.xlane.f32.xlu0 %v3871
      %v3873 = vpop.xlane.xlu0 %3872
      %v3874 = vsel %vm1191, %v3870, 0.0
      %3875 = vadd.xlane.f32.xlu0 %v3874
      %v3876 = vpop.xlane.xlu0 %3875
      %v3877 = vrcp.pop %v3873
      %v3878 = vrcp.pop %v3876
      %v3879 = vmul.f32 %v3868, %v3877
      %v3880 = vmul.f32 %v3870, %v3878
      %v3881 = vpack.c.bf16 %v3880, %v3879
      %v3882 = vpack.c.bf16 %v3807, %v3804
      %v3884 = vsel %vm1191, %v3881, 0
      %3886 = vmatprep.subr.bf16.mxu0 0
      %3887 = vmatpush1.bf16.msra.mxu0 %v3882
      %3888 = vmatprep.subr.bf16.mxu0 0
      %3889 = vmatpush1.bf16.msra.mxu0 0
      %3890 = vmatprep.subr.bf16.mxu0 0
      %3891 = vmatpush1.bf16.msra.mxu0 0
      %3892 = vmatprep.subr.bf16.mxu0 0
      %3893 = vmatpush1.bf16.msra.mxu0 0
      %3894 = vmatprep.subr.bf16.mxu0 0
      %3895 = vmatpush1.bf16.msra.mxu0 0
      %3896 = vmatprep.subr.bf16.mxu0 0
      %3897 = vmatpush1.bf16.msra.mxu0 0
      %3898 = vmatprep.subr.bf16.mxu0 0
      %3899 = vmatpush1.bf16.msra.mxu0 0
      %3900 = vmatprep.subr.bf16.mxu0 0
      %3901 = vmatpush1.bf16.msra.mxu0 0
      %3902 = vmatprep.subr.bf16.mxu0 0
      %3903 = vmatpush1.bf16.msra.mxu0 0
      %3904 = vmatprep.subr.bf16.mxu0 0
      %3905 = vmatpush1.bf16.msra.mxu0 0
      %3906 = vmatprep.subr.bf16.mxu0 0
      %3907 = vmatpush1.bf16.msra.mxu0 0
      %3908 = vmatprep.subr.bf16.mxu0 0
      %3909 = vmatpush1.bf16.msra.mxu0 0
      %3910 = vmatprep.subr.bf16.mxu0 0
      %3911 = vmatpush1.bf16.msra.mxu0 0
      %3912 = vmatprep.subr.bf16.mxu0 0
      %3913 = vmatpush1.bf16.msra.mxu0 0
      %3914 = vmatprep.subr.bf16.mxu0 0
      %3915 = vmatpush1.bf16.msra.mxu0 0
      %3916 = vmatprep.subr.bf16.mxu0 0
      %3917 = vmatpush1.bf16.msra.mxu0 0
      %3918 = vmatprep.mubr.bf16.mxu0 0
      %3919 = vmatmul.mubr.bf16.gmra.mrb[0].mxu0 %v3884
      %v3920 = vpop.f32.mrb[0].mxu0
      %v3921 = vadd.f32 0.0, %v3920
      %v3922 = vpop.f32.mrb[0].mxu0
      %v3923 = vpop.f32.mrb[0].mxu0
      %v3924 = vadd.f32 0.0, %v3923
      %v3925 = vpop.f32.mrb[0].mxu0
      %3926 = vdwg.mxu0
      %v3927 = vpack.c.bf16 %v3924, %v3921
      %s3928 = scalar_lea.vmem %s10, 64
      %v3929 = vld [vmem:[%s3928] sm:$0xf]
      %v3930 = vld [vmem:[%s3928 + $0x4] sm:$0xf]
      %v3931 = vld [vmem:[%s3928 + $0x8] sm:$0xf]
      %v3932 = vld [vmem:[%s3928 + $0xc] sm:$0xf]
      %v3937 = vunpack.c.l.b16 %v3929
      %v3938 = vunpack.c.l.b16 %v3930
      %v3939 = vunpack.c.l.b16 %v3931
      %v3940 = vunpack.c.l.b16 %v3932
      %v3941 = vpack.c.b16 %v3938, %v3937
      %v3942 = vpack.c.b16 %v3940, %v3939
      %v3946 = vsel %vm1143, %v3927, 0
      %3948 = vmatprep.subr.bf16.mxu0 0
      %3949 = vmatpush1.bf16.msra.mxu0 %v3941
      %3950 = vmatprep.subr.bf16.mxu0 0
      %3951 = vmatpush1.bf16.msra.mxu0 %v3942
      %3952 = vmatprep.subr.bf16.mxu0 0
      %3953 = vmatpush1.bf16.msra.mxu0 0
      %3954 = vmatprep.subr.bf16.mxu0 0
      %3955 = vmatpush1.bf16.msra.mxu0 0
      %3956 = vmatprep.subr.bf16.mxu0 0
      %3957 = vmatpush1.bf16.msra.mxu0 0
      %3958 = vmatprep.subr.bf16.mxu0 0
      %3959 = vmatpush1.bf16.msra.mxu0 0
      %3960 = vmatprep.subr.bf16.mxu0 0
      %3961 = vmatpush1.bf16.msra.mxu0 0
      %3962 = vmatprep.subr.bf16.mxu0 0
      %3963 = vmatpush1.bf16.msra.mxu0 0
      %3964 = vmatprep.subr.bf16.mxu0 0
      %3965 = vmatpush1.bf16.msra.mxu0 0
      %3966 = vmatprep.subr.bf16.mxu0 0
      %3967 = vmatpush1.bf16.msra.mxu0 0
      %3968 = vmatprep.subr.bf16.mxu0 0
      %3969 = vmatpush1.bf16.msra.mxu0 0
      %3970 = vmatprep.subr.bf16.mxu0 0
      %3971 = vmatpush1.bf16.msra.mxu0 0
      %3972 = vmatprep.subr.bf16.mxu0 0
      %3973 = vmatpush1.bf16.msra.mxu0 0
      %3974 = vmatprep.subr.bf16.mxu0 0
      %3975 = vmatpush1.bf16.msra.mxu0 0
      %3976 = vmatprep.subr.bf16.mxu0 0
      %3977 = vmatpush1.bf16.msra.mxu0 0
      %3978 = vmatprep.subr.bf16.mxu0 0
      %3979 = vmatpush1.bf16.msra.mxu0 0
      %3980 = vmatprep.mubr.bf16.mxu0 0
      %3981 = vmatmul.mubr.bf16.gmra.mrb[0].mxu0 %v3946
      %v3982 = vpop.f32.mrb[0].mxu0
      %v3983 = vadd.f32 0.0, %v3982
      %v3984 = vpop.f32.mrb[0].mxu0
      %v3985 = vpop.f32.mrb[0].mxu0
      %v3986 = vadd.f32 0.0, %v3985
      %v3987 = vpop.f32.mrb[0].mxu0
      %3988 = vdwg.mxu0
      %v3990 = vlaneseq
      %v3991 = vshrl.u32 %v3990, 7
      %v3992 = vsub.s32 0, %v3991
      %v3993 = vrot.slane %v3467, %v3992
      %v3995 = vadd.f32 %v3993, %v3983
      %v3996 = vadd.f32 %v3993, %v3986
      %s3997 = scalar_lea.vmem %s4, 320
      %v3998 = vld [vmem:[%s3997] sm:$0xf]
      %v3999 = vld [vmem:[%s3997 + $0x4] sm:$0xf]
      %v4000 = vld [vmem:[%s3997 + $0x8] sm:$0xf]
      %v4001 = vld [vmem:[%s3997 + $0xc] sm:$0xf]
      %v4002 = vld [vmem:[%s3997 + $0x10] sm:$0xf]
      %v4003 = vld [vmem:[%s3997 + $0x14] sm:$0xf]
      %v4004 = vld [vmem:[%s3997 + $0x18] sm:$0xf]
      %v4005 = vld [vmem:[%s3997 + $0x1c] sm:$0xf]
      %v4006 = vld [vmem:[%s3997 + $0x20] sm:$0xf]
      %v4007 = vld [vmem:[%s3997 + $0x24] sm:$0xf]
      %v4008 = vld [vmem:[%s3997 + $0x28] sm:$0xf]
      %v4009 = vld [vmem:[%s3997 + $0x2c] sm:$0xf]
      %v4010 = vld [vmem:[%s3997 + $0x30] sm:$0xf]
      %v4011 = vld [vmem:[%s3997 + $0x34] sm:$0xf]
      %v4012 = vld [vmem:[%s3997 + $0x38] sm:$0xf]
      %v4013 = vld [vmem:[%s3997 + $0x3c] sm:$0xf]
      %s4014 = scalar_lea.vmem %s5, 5
      %v4015 = vld [vmem:[%s4014] sm:$0x1]
      %v4017 = vlaneseq
      %v4018 = vshrl.u32 %v4017, 7
      %v4019 = vsub.s32 0, %v4018
      %v4020 = vrot.slane %v4015, %v4019
      %v4038 = vunpack.c.l.b16 %v3998
      %v4039 = vunpack.c.l.b16 %v3999
      %v4040 = vunpack.c.l.b16 %v4000
      %v4041 = vunpack.c.l.b16 %v4001
      %v4042 = vunpack.c.l.b16 %v4002
      %v4043 = vunpack.c.l.b16 %v4003
      %v4044 = vunpack.c.l.b16 %v4004
      %v4045 = vunpack.c.l.b16 %v4005
      %v4046 = vunpack.c.l.b16 %v4006
      %v4047 = vunpack.c.l.b16 %v4007
      %v4048 = vunpack.c.l.b16 %v4008
      %v4049 = vunpack.c.l.b16 %v4009
      %v4050 = vunpack.c.l.b16 %v4010
      %v4051 = vunpack.c.l.b16 %v4011
      %v4052 = vunpack.c.l.b16 %v4012
      %v4053 = vunpack.c.l.b16 %v4013
      %v4054 = vpack.c.b16 %v4039, %v4038
      %v4055 = vpack.c.b16 %v4041, %v4040
      %v4056 = vpack.c.b16 %v4043, %v4042
      %v4057 = vpack.c.b16 %v4045, %v4044
      %v4058 = vpack.c.b16 %v4047, %v4046
      %v4059 = vpack.c.b16 %v4049, %v4048
      %v4060 = vpack.c.b16 %v4051, %v4050
      %v4061 = vpack.c.b16 %v4053, %v4052
      %4070 = vmatprep.subr.bf16.mxu0 0
      %4071 = vmatpush1.bf16.msra.mxu0 %v4054
      %4072 = vmatprep.subr.bf16.mxu0 0
      %4073 = vmatpush1.bf16.msra.mxu0 %v4055
      %4074 = vmatprep.subr.bf16.mxu0 0
      %4075 = vmatpush1.bf16.msra.mxu0 %v4056
      %4076 = vmatprep.subr.bf16.mxu0 0
      %4077 = vmatpush1.bf16.msra.mxu0 %v4057
      %4078 = vmatprep.subr.bf16.mxu0 0
      %4079 = vmatpush1.bf16.msra.mxu0 %v4058
      %4080 = vmatprep.subr.bf16.mxu0 0
      %4081 = vmatpush1.bf16.msra.mxu0 %v4059
      %4082 = vmatprep.subr.bf16.mxu0 0
      %4083 = vmatpush1.bf16.msra.mxu0 %v4060
      %4084 = vmatprep.subr.bf16.mxu0 0
      %4085 = vmatpush1.bf16.msra.mxu0 %v4061
      %4086 = vmatprep.subr.bf16.mxu0 0
      %4087 = vmatpush1.bf16.msra.mxu0 0
      %4088 = vmatprep.subr.bf16.mxu0 0
      %4089 = vmatpush1.bf16.msra.mxu0 0
      %4090 = vmatprep.subr.bf16.mxu0 0
      %4091 = vmatpush1.bf16.msra.mxu0 0
      %4092 = vmatprep.subr.bf16.mxu0 0
      %4093 = vmatpush1.bf16.msra.mxu0 0
      %4094 = vmatprep.subr.bf16.mxu0 0
      %4095 = vmatpush1.bf16.msra.mxu0 0
      %4096 = vmatprep.subr.bf16.mxu0 0
      %4097 = vmatpush1.bf16.msra.mxu0 0
      %4098 = vmatprep.subr.bf16.mxu0 0
      %4099 = vmatpush1.bf16.msra.mxu0 0
      %4100 = vmatprep.subr.bf16.mxu0 0
      %4101 = vmatpush1.bf16.msra.mxu0 0
      %4102 = vmatprep.mubr.bf16.mxu0 0
      %4103 = vmatmul.mubr.bf16.gmra.mrb[0].mxu0 %v3465
      %v4104 = vpop.f32.mrb[0].mxu0
      %v4105 = vadd.f32 %v4020, %v4104
      %v4106 = vpop.f32.mrb[0].mxu0
      %v4107 = vpop.f32.mrb[0].mxu0
      %v4108 = vadd.f32 %v4020, %v4107
      %v4109 = vpop.f32.mrb[0].mxu0
      %4110 = vdwg.mxu0
      %s4111 = scalar_lea.vmem %s6, 320
      %v4112 = vld [vmem:[%s4111] sm:$0xf]
      %v4113 = vld [vmem:[%s4111 + $0x4] sm:$0xf]
      %v4114 = vld [vmem:[%s4111 + $0x8] sm:$0xf]
      %v4115 = vld [vmem:[%s4111 + $0xc] sm:$0xf]
      %v4116 = vld [vmem:[%s4111 + $0x10] sm:$0xf]
      %v4117 = vld [vmem:[%s4111 + $0x14] sm:$0xf]
      %v4118 = vld [vmem:[%s4111 + $0x18] sm:$0xf]
      %v4119 = vld [vmem:[%s4111 + $0x1c] sm:$0xf]
      %v4120 = vld [vmem:[%s4111 + $0x20] sm:$0xf]
      %v4121 = vld [vmem:[%s4111 + $0x24] sm:$0xf]
      %v4122 = vld [vmem:[%s4111 + $0x28] sm:$0xf]
      %v4123 = vld [vmem:[%s4111 + $0x2c] sm:$0xf]
      %v4124 = vld [vmem:[%s4111 + $0x30] sm:$0xf]
      %v4125 = vld [vmem:[%s4111 + $0x34] sm:$0xf]
      %v4126 = vld [vmem:[%s4111 + $0x38] sm:$0xf]
      %v4127 = vld [vmem:[%s4111 + $0x3c] sm:$0xf]
      %s4128 = scalar_lea.vmem %s7, 5
      %v4129 = vld [vmem:[%s4128] sm:$0x1]
      %v4131 = vlaneseq
      %v4132 = vshrl.u32 %v4131, 7
      %v4133 = vsub.s32 0, %v4132
      %v4134 = vrot.slane %v4129, %v4133
      %v4152 = vunpack.c.l.b16 %v4112
      %v4153 = vunpack.c.l.b16 %v4113
      %v4154 = vunpack.c.l.b16 %v4114
      %v4155 = vunpack.c.l.b16 %v4115
      %v4156 = vunpack.c.l.b16 %v4116
      %v4157 = vunpack.c.l.b16 %v4117
      %v4158 = vunpack.c.l.b16 %v4118
      %v4159 = vunpack.c.l.b16 %v4119
      %v4160 = vunpack.c.l.b16 %v4120
      %v4161 = vunpack.c.l.b16 %v4121
      %v4162 = vunpack.c.l.b16 %v4122
      %v4163 = vunpack.c.l.b16 %v4123
      %v4164 = vunpack.c.l.b16 %v4124
      %v4165 = vunpack.c.l.b16 %v4125
      %v4166 = vunpack.c.l.b16 %v4126
      %v4167 = vunpack.c.l.b16 %v4127
      %v4168 = vpack.c.b16 %v4153, %v4152
      %v4169 = vpack.c.b16 %v4155, %v4154
      %v4170 = vpack.c.b16 %v4157, %v4156
      %v4171 = vpack.c.b16 %v4159, %v4158
      %v4172 = vpack.c.b16 %v4161, %v4160
      %v4173 = vpack.c.b16 %v4163, %v4162
      %v4174 = vpack.c.b16 %v4165, %v4164
      %v4175 = vpack.c.b16 %v4167, %v4166
      %4184 = vmatprep.subr.bf16.mxu0 0
      %4185 = vmatpush1.bf16.msra.mxu0 %v4168
      %4186 = vmatprep.subr.bf16.mxu0 0
      %4187 = vmatpush1.bf16.msra.mxu0 %v4169
      %4188 = vmatprep.subr.bf16.mxu0 0
      %4189 = vmatpush1.bf16.msra.mxu0 %v4170
      %4190 = vmatprep.subr.bf16.mxu0 0
      %4191 = vmatpush1.bf16.msra.mxu0 %v4171
      %4192 = vmatprep.subr.bf16.mxu0 0
      %4193 = vmatpush1.bf16.msra.mxu0 %v4172
      %4194 = vmatprep.subr.bf16.mxu0 0
      %4195 = vmatpush1.bf16.msra.mxu0 %v4173
      %4196 = vmatprep.subr.bf16.mxu0 0
      %4197 = vmatpush1.bf16.msra.mxu0 %v4174
      %4198 = vmatprep.subr.bf16.mxu0 0
      %4199 = vmatpush1.bf16.msra.mxu0 %v4175
      %4200 = vmatprep.subr.bf16.mxu0 0
      %4201 = vmatpush1.bf16.msra.mxu0 0
      %4202 = vmatprep.subr.bf16.mxu0 0
      %4203 = vmatpush1.bf16.msra.mxu0 0
      %4204 = vmatprep.subr.bf16.mxu0 0
      %4205 = vmatpush1.bf16.msra.mxu0 0
      %4206 = vmatprep.subr.bf16.mxu0 0
      %4207 = vmatpush1.bf16.msra.mxu0 0
      %4208 = vmatprep.subr.bf16.mxu0 0
      %4209 = vmatpush1.bf16.msra.mxu0 0
      %4210 = vmatprep.subr.bf16.mxu0 0
      %4211 = vmatpush1.bf16.msra.mxu0 0
      %4212 = vmatprep.subr.bf16.mxu0 0
      %4213 = vmatpush1.bf16.msra.mxu0 0
      %4214 = vmatprep.subr.bf16.mxu0 0
      %4215 = vmatpush1.bf16.msra.mxu0 0
      %4216 = vmatprep.mubr.bf16.mxu0 0
      %4217 = vmatmul.mubr.bf16.gmra.mrb[0].mxu0 %v3465
      %v4218 = vpop.f32.mrb[0].mxu0
      %v4219 = vadd.f32 %v4134, %v4218
      %v4220 = vpop.f32.mrb[0].mxu0
      %v4221 = vpop.f32.mrb[0].mxu0
      %v4222 = vadd.f32 %v4134, %v4221
      %v4223 = vpop.f32.mrb[0].mxu0
      %4224 = vdwg.mxu0
      %s4225 = scalar_lea.vmem %s8, 320
      %v4226 = vld [vmem:[%s4225] sm:$0xf]
      %v4227 = vld [vmem:[%s4225 + $0x4] sm:$0xf]
      %v4228 = vld [vmem:[%s4225 + $0x8] sm:$0xf]
      %v4229 = vld [vmem:[%s4225 + $0xc] sm:$0xf]
      %v4230 = vld [vmem:[%s4225 + $0x10] sm:$0xf]
      %v4231 = vld [vmem:[%s4225 + $0x14] sm:$0xf]
      %v4232 = vld [vmem:[%s4225 + $0x18] sm:$0xf]
      %v4233 = vld [vmem:[%s4225 + $0x1c] sm:$0xf]
      %v4234 = vld [vmem:[%s4225 + $0x20] sm:$0xf]
      %v4235 = vld [vmem:[%s4225 + $0x24] sm:$0xf]
      %v4236 = vld [vmem:[%s4225 + $0x28] sm:$0xf]
      %v4237 = vld [vmem:[%s4225 + $0x2c] sm:$0xf]
      %v4238 = vld [vmem:[%s4225 + $0x30] sm:$0xf]
      %v4239 = vld [vmem:[%s4225 + $0x34] sm:$0xf]
      %v4240 = vld [vmem:[%s4225 + $0x38] sm:$0xf]
      %v4241 = vld [vmem:[%s4225 + $0x3c] sm:$0xf]
      %s4242 = scalar_lea.vmem %s9, 5
      %v4243 = vld [vmem:[%s4242] sm:$0x1]
      %v4245 = vlaneseq
      %v4246 = vshrl.u32 %v4245, 7
      %v4247 = vsub.s32 0, %v4246
      %v4248 = vrot.slane %v4243, %v4247
      %v4266 = vunpack.c.l.b16 %v4226
      %v4267 = vunpack.c.l.b16 %v4227
      %v4268 = vunpack.c.l.b16 %v4228
      %v4269 = vunpack.c.l.b16 %v4229
      %v4270 = vunpack.c.l.b16 %v4230
      %v4271 = vunpack.c.l.b16 %v4231
      %v4272 = vunpack.c.l.b16 %v4232
      %v4273 = vunpack.c.l.b16 %v4233
      %v4274 = vunpack.c.l.b16 %v4234
      %v4275 = vunpack.c.l.b16 %v4235
      %v4276 = vunpack.c.l.b16 %v4236
      %v4277 = vunpack.c.l.b16 %v4237
      %v4278 = vunpack.c.l.b16 %v4238
      %v4279 = vunpack.c.l.b16 %v4239
      %v4280 = vunpack.c.l.b16 %v4240
      %v4281 = vunpack.c.l.b16 %v4241
      %v4282 = vpack.c.b16 %v4267, %v4266
      %v4283 = vpack.c.b16 %v4269, %v4268
      %v4284 = vpack.c.b16 %v4271, %v4270
      %v4285 = vpack.c.b16 %v4273, %v4272
      %v4286 = vpack.c.b16 %v4275, %v4274
      %v4287 = vpack.c.b16 %v4277, %v4276
      %v4288 = vpack.c.b16 %v4279, %v4278
      %v4289 = vpack.c.b16 %v4281, %v4280
      %4298 = vmatprep.subr.bf16.mxu0 0
      %4299 = vmatpush1.bf16.msra.mxu0 %v4282
      %4300 = vmatprep.subr.bf16.mxu0 0
      %4301 = vmatpush1.bf16.msra.mxu0 %v4283
      %4302 = vmatprep.subr.bf16.mxu0 0
      %4303 = vmatpush1.bf16.msra.mxu0 %v4284
      %4304 = vmatprep.subr.bf16.mxu0 0
      %4305 = vmatpush1.bf16.msra.mxu0 %v4285
      %4306 = vmatprep.subr.bf16.mxu0 0
      %4307 = vmatpush1.bf16.msra.mxu0 %v4286
      %4308 = vmatprep.subr.bf16.mxu0 0
      %4309 = vmatpush1.bf16.msra.mxu0 %v4287
      %4310 = vmatprep.subr.bf16.mxu0 0
      %4311 = vmatpush1.bf16.msra.mxu0 %v4288
      %4312 = vmatprep.subr.bf16.mxu0 0
      %4313 = vmatpush1.bf16.msra.mxu0 %v4289
      %4314 = vmatprep.subr.bf16.mxu0 0
      %4315 = vmatpush1.bf16.msra.mxu0 0
      %4316 = vmatprep.subr.bf16.mxu0 0
      %4317 = vmatpush1.bf16.msra.mxu0 0
      %4318 = vmatprep.subr.bf16.mxu0 0
      %4319 = vmatpush1.bf16.msra.mxu0 0
      %4320 = vmatprep.subr.bf16.mxu0 0
      %4321 = vmatpush1.bf16.msra.mxu0 0
      %4322 = vmatprep.subr.bf16.mxu0 0
      %4323 = vmatpush1.bf16.msra.mxu0 0
      %4324 = vmatprep.subr.bf16.mxu0 0
      %4325 = vmatpush1.bf16.msra.mxu0 0
      %4326 = vmatprep.subr.bf16.mxu0 0
      %4327 = vmatpush1.bf16.msra.mxu0 0
      %4328 = vmatprep.subr.bf16.mxu0 0
      %4329 = vmatpush1.bf16.msra.mxu0 0
      %4330 = vmatprep.mubr.bf16.mxu0 0
      %4331 = vmatmul.mubr.bf16.gmra.mrb[0].mxu0 %v3465
      %v4332 = vpop.f32.mrb[0].mxu0
      %v4333 = vadd.f32 %v4248, %v4332
      %v4334 = vpop.f32.mrb[0].mxu0
      %v4335 = vpop.f32.mrb[0].mxu0
      %v4336 = vadd.f32 %v4248, %v4335
      %v4337 = vpop.f32.mrb[0].mxu0
      %4338 = vdwg.mxu0
      %v4339 = vpack.c.bf16 %v4108, %v4105
      %v4340 = vpack.c.bf16 %v4222, %v4219
      %v4342 = vsel %vm1143, %v4339, 0
      %v4345 = vsel %vm1143, %v4340, 0
      %4347 = vmatprep.subr.bf16.mxu0 0
      %4348 = vmatpush1.bf16.xpose.msra.mxu0 %v4345
      %4349 = vmatprep.subr.bf16.mxu0 0
      %4350 = vmatpush1.bf16.xpose.msra.mxu0 0
      %4351 = vmatprep.subr.bf16.mxu0 0
      %4352 = vmatpush1.bf16.xpose.msra.mxu0 0
      %4353 = vmatprep.subr.bf16.mxu0 0
      %4354 = vmatpush1.bf16.xpose.msra.mxu0 0
      %4355 = vmatprep.subr.bf16.mxu0 0
      %4356 = vmatpush1.bf16.xpose.msra.mxu0 0
      %4357 = vmatprep.subr.bf16.mxu0 0
      %4358 = vmatpush1.bf16.xpose.msra.mxu0 0
      %4359 = vmatprep.subr.bf16.mxu0 0
      %4360 = vmatpush1.bf16.xpose.msra.mxu0 0
      %4361 = vmatprep.subr.bf16.mxu0 0
      %4362 = vmatpush1.bf16.xpose.msra.mxu0 0
      %4363 = vmatprep.subr.bf16.mxu0 0
      %4364 = vmatpush1.bf16.xpose.msra.mxu0 0
      %4365 = vmatprep.subr.bf16.mxu0 0
      %4366 = vmatpush1.bf16.xpose.msra.mxu0 0
      %4367 = vmatprep.subr.bf16.mxu0 0
      %4368 = vmatpush1.bf16.xpose.msra.mxu0 0
      %4369 = vmatprep.subr.bf16.mxu0 0
      %4370 = vmatpush1.bf16.xpose.msra.mxu0 0
      %4371 = vmatprep.subr.bf16.mxu0 0
      %4372 = vmatpush1.bf16.xpose.msra.mxu0 0
      %4373 = vmatprep.subr.bf16.mxu0 0
      %4374 = vmatpush1.bf16.xpose.msra.mxu0 0
      %4375 = vmatprep.subr.bf16.mxu0 0
      %4376 = vmatpush1.bf16.xpose.msra.mxu0 0
      %4377 = vmatprep.subr.bf16.mxu0 0
      %4378 = vmatpush1.bf16.xpose.msra.mxu0 0
      %4379 = vmatprep.mubr.bf16.mxu0 0
      %4380 = vmatmul.mubr.bf16.gmra.mrb[0].mxu0 %v4342
      %v4381 = vpop.f32.mrb[0].mxu0
      %v4382 = vadd.f32 %v1141, %v4381
      %v4383 = vpop.f32.mrb[0].mxu0
      %v4384 = vpop.f32.mrb[0].mxu0
      %v4385 = vadd.f32 %v1141, %v4384
      %v4386 = vpop.f32.mrb[0].mxu0
      %4387 = vdwg.mxu0
      %v4388 = vsel %vm1191, %v4382, -inf
      %4389 = vmax.xlane.f32.xlu0 %v4388
      %v4390 = vpop.xlane.xlu0 %4389
      %v4391 = vsel %vm1191, %v4385, -inf
      %4392 = vmax.xlane.f32.xlu0 %v4391
      %v4393 = vpop.xlane.xlu0 %4392
      %v4394 = vsub.f32 %v4382, %v4390
      %v4395 = vsub.f32 %v4385, %v4393
      %v4396 = vmul.f32 %v4394, 1.442695
      %v4397 = vpow.pop %v4396
      %v4398 = vmul.f32 %v4395, 1.442695
      %v4399 = vpow.pop %v4398
      %v4400 = vsel %vm1191, %v4397, 0.0
      %4401 = vadd.xlane.f32.xlu0 %v4400
      %v4402 = vpop.xlane.xlu0 %4401
      %v4403 = vsel %vm1191, %v4399, 0.0
      %4404 = vadd.xlane.f32.xlu0 %v4403
      %v4405 = vpop.xlane.xlu0 %4404
      %v4406 = vrcp.pop %v4402
      %v4407 = vrcp.pop %v4405
      %v4408 = vmul.f32 %v4397, %v4406
      %v4409 = vmul.f32 %v4399, %v4407
      %v4410 = vpack.c.bf16 %v4409, %v4408
      %v4411 = vpack.c.bf16 %v4336, %v4333
      %v4413 = vsel %vm1191, %v4410, 0
      %4415 = vmatprep.subr.bf16.mxu0 0
      %4416 = vmatpush1.bf16.msra.mxu0 %v4411
      %4417 = vmatprep.subr.bf16.mxu0 0
      %4418 = vmatpush1.bf16.msra.mxu0 0
      %4419 = vmatprep.subr.bf16.mxu0 0
      %4420 = vmatpush1.bf16.msra.mxu0 0
      %4421 = vmatprep.subr.bf16.mxu0 0
      %4422 = vmatpush1.bf16.msra.mxu0 0
      %4423 = vmatprep.subr.bf16.mxu0 0
      %4424 = vmatpush1.bf16.msra.mxu0 0
      %4425 = vmatprep.subr.bf16.mxu0 0
      %4426 = vmatpush1.bf16.msra.mxu0 0
      %4427 = vmatprep.subr.bf16.mxu0 0
      %4428 = vmatpush1.bf16.msra.mxu0 0
      %4429 = vmatprep.subr.bf16.mxu0 0
      %4430 = vmatpush1.bf16.msra.mxu0 0
      %4431 = vmatprep.subr.bf16.mxu0 0
      %4432 = vmatpush1.bf16.msra.mxu0 0
      %4433 = vmatprep.subr.bf16.mxu0 0
      %4434 = vmatpush1.bf16.msra.mxu0 0
      %4435 = vmatprep.subr.bf16.mxu0 0
      %4436 = vmatpush1.bf16.msra.mxu0 0
      %4437 = vmatprep.subr.bf16.mxu0 0
      %4438 = vmatpush1.bf16.msra.mxu0 0
      %4439 = vmatprep.subr.bf16.mxu0 0
      %4440 = vmatpush1.bf16.msra.mxu0 0
      %4441 = vmatprep.subr.bf16.mxu0 0
      %4442 = vmatpush1.bf16.msra.mxu0 0
      %4443 = vmatprep.subr.bf16.mxu0 0
      %4444 = vmatpush1.bf16.msra.mxu0 0
      %4445 = vmatprep.subr.bf16.mxu0 0
      %4446 = vmatpush1.bf16.msra.mxu0 0
      %4447 = vmatprep.mubr.bf16.mxu0 0
      %4448 = vmatmul.mubr.bf16.gmra.mrb[0].mxu0 %v4413
      %v4449 = vpop.f32.mrb[0].mxu0
      %v4450 = vadd.f32 0.0, %v4449
      %v4451 = vpop.f32.mrb[0].mxu0
      %v4452 = vpop.f32.mrb[0].mxu0
      %v4453 = vadd.f32 0.0, %v4452
      %v4454 = vpop.f32.mrb[0].mxu0
      %4455 = vdwg.mxu0
      %v4456 = vpack.c.bf16 %v4453, %v4450
      %s4457 = scalar_lea.vmem %s10, 80
      %v4458 = vld [vmem:[%s4457] sm:$0xf]
      %v4459 = vld [vmem:[%s4457 + $0x4] sm:$0xf]
      %v4460 = vld [vmem:[%s4457 + $0x8] sm:$0xf]
      %v4461 = vld [vmem:[%s4457 + $0xc] sm:$0xf]
      %v4466 = vunpack.c.l.b16 %v4458
      %v4467 = vunpack.c.l.b16 %v4459
      %v4468 = vunpack.c.l.b16 %v4460
      %v4469 = vunpack.c.l.b16 %v4461
      %v4470 = vpack.c.b16 %v4467, %v4466
      %v4471 = vpack.c.b16 %v4469, %v4468
      %v4475 = vsel %vm1143, %v4456, 0
      %4477 = vmatprep.subr.bf16.mxu0 0
      %4478 = vmatpush1.bf16.msra.mxu0 %v4470
      %4479 = vmatprep.subr.bf16.mxu0 0
      %4480 = vmatpush1.bf16.msra.mxu0 %v4471
      %4481 = vmatprep.subr.bf16.mxu0 0
      %4482 = vmatpush1.bf16.msra.mxu0 0
      %4483 = vmatprep.subr.bf16.mxu0 0
      %4484 = vmatpush1.bf16.msra.mxu0 0
      %4485 = vmatprep.subr.bf16.mxu0 0
      %4486 = vmatpush1.bf16.msra.mxu0 0
      %4487 = vmatprep.subr.bf16.mxu0 0
      %4488 = vmatpush1.bf16.msra.mxu0 0
      %4489 = vmatprep.subr.bf16.mxu0 0
      %4490 = vmatpush1.bf16.msra.mxu0 0
      %4491 = vmatprep.subr.bf16.mxu0 0
      %4492 = vmatpush1.bf16.msra.mxu0 0
      %4493 = vmatprep.subr.bf16.mxu0 0
      %4494 = vmatpush1.bf16.msra.mxu0 0
      %4495 = vmatprep.subr.bf16.mxu0 0
      %4496 = vmatpush1.bf16.msra.mxu0 0
      %4497 = vmatprep.subr.bf16.mxu0 0
      %4498 = vmatpush1.bf16.msra.mxu0 0
      %4499 = vmatprep.subr.bf16.mxu0 0
      %4500 = vmatpush1.bf16.msra.mxu0 0
      %4501 = vmatprep.subr.bf16.mxu0 0
      %4502 = vmatpush1.bf16.msra.mxu0 0
      %4503 = vmatprep.subr.bf16.mxu0 0
      %4504 = vmatpush1.bf16.msra.mxu0 0
      %4505 = vmatprep.subr.bf16.mxu0 0
      %4506 = vmatpush1.bf16.msra.mxu0 0
      %4507 = vmatprep.subr.bf16.mxu0 0
      %4508 = vmatpush1.bf16.msra.mxu0 0
      %4509 = vmatprep.mubr.bf16.mxu0 0
      %4510 = vmatmul.mubr.bf16.gmra.mrb[0].mxu0 %v4475
      %v4511 = vpop.f32.mrb[0].mxu0
      %v4512 = vadd.f32 0.0, %v4511
      %v4513 = vpop.f32.mrb[0].mxu0
      %v4514 = vpop.f32.mrb[0].mxu0
      %v4515 = vadd.f32 0.0, %v4514
      %v4516 = vpop.f32.mrb[0].mxu0
      %4517 = vdwg.mxu0
      %v4518 = vadd.f32 %v3995, %v4512
      %v4519 = vadd.f32 %v3996, %v4515
      %s4520 = scalar_lea.vmem %s4, 384
      %v4521 = vld [vmem:[%s4520] sm:$0xf]
      %v4522 = vld [vmem:[%s4520 + $0x4] sm:$0xf]
      %v4523 = vld [vmem:[%s4520 + $0x8] sm:$0xf]
      %v4524 = vld [vmem:[%s4520 + $0xc] sm:$0xf]
      %v4525 = vld [vmem:[%s4520 + $0x10] sm:$0xf]
      %v4526 = vld [vmem:[%s4520 + $0x14] sm:$0xf]
      %v4527 = vld [vmem:[%s4520 + $0x18] sm:$0xf]
      %v4528 = vld [vmem:[%s4520 + $0x1c] sm:$0xf]
      %v4529 = vld [vmem:[%s4520 + $0x20] sm:$0xf]
      %v4530 = vld [vmem:[%s4520 + $0x24] sm:$0xf]
      %v4531 = vld [vmem:[%s4520 + $0x28] sm:$0xf]
      %v4532 = vld [vmem:[%s4520 + $0x2c] sm:$0xf]
      %v4533 = vld [vmem:[%s4520 + $0x30] sm:$0xf]
      %v4534 = vld [vmem:[%s4520 + $0x34] sm:$0xf]
      %v4535 = vld [vmem:[%s4520 + $0x38] sm:$0xf]
      %v4536 = vld [vmem:[%s4520 + $0x3c] sm:$0xf]
      %s4537 = scalar_lea.vmem %s5, 6
      %v4538 = vld [vmem:[%s4537] sm:$0x1]
      %v4540 = vlaneseq
      %v4541 = vshrl.u32 %v4540, 7
      %v4542 = vsub.s32 0, %v4541
      %v4543 = vrot.slane %v4538, %v4542
      %v4561 = vunpack.c.l.b16 %v4521
      %v4562 = vunpack.c.l.b16 %v4522
      %v4563 = vunpack.c.l.b16 %v4523
      %v4564 = vunpack.c.l.b16 %v4524
      %v4565 = vunpack.c.l.b16 %v4525
      %v4566 = vunpack.c.l.b16 %v4526
      %v4567 = vunpack.c.l.b16 %v4527
      %v4568 = vunpack.c.l.b16 %v4528
      %v4569 = vunpack.c.l.b16 %v4529
      %v4570 = vunpack.c.l.b16 %v4530
      %v4571 = vunpack.c.l.b16 %v4531
      %v4572 = vunpack.c.l.b16 %v4532
      %v4573 = vunpack.c.l.b16 %v4533
      %v4574 = vunpack.c.l.b16 %v4534
      %v4575 = vunpack.c.l.b16 %v4535
      %v4576 = vunpack.c.l.b16 %v4536
      %v4577 = vpack.c.b16 %v4562, %v4561
      %v4578 = vpack.c.b16 %v4564, %v4563
      %v4579 = vpack.c.b16 %v4566, %v4565
      %v4580 = vpack.c.b16 %v4568, %v4567
      %v4581 = vpack.c.b16 %v4570, %v4569
      %v4582 = vpack.c.b16 %v4572, %v4571
      %v4583 = vpack.c.b16 %v4574, %v4573
      %v4584 = vpack.c.b16 %v4576, %v4575
      %4593 = vmatprep.subr.bf16.mxu0 0
      %4594 = vmatpush1.bf16.msra.mxu0 %v4577
      %4595 = vmatprep.subr.bf16.mxu0 0
      %4596 = vmatpush1.bf16.msra.mxu0 %v4578
      %4597 = vmatprep.subr.bf16.mxu0 0
      %4598 = vmatpush1.bf16.msra.mxu0 %v4579
      %4599 = vmatprep.subr.bf16.mxu0 0
      %4600 = vmatpush1.bf16.msra.mxu0 %v4580
      %4601 = vmatprep.subr.bf16.mxu0 0
      %4602 = vmatpush1.bf16.msra.mxu0 %v4581
      %4603 = vmatprep.subr.bf16.mxu0 0
      %4604 = vmatpush1.bf16.msra.mxu0 %v4582
      %4605 = vmatprep.subr.bf16.mxu0 0
      %4606 = vmatpush1.bf16.msra.mxu0 %v4583
      %4607 = vmatprep.subr.bf16.mxu0 0
      %4608 = vmatpush1.bf16.msra.mxu0 %v4584
      %4609 = vmatprep.subr.bf16.mxu0 0
      %4610 = vmatpush1.bf16.msra.mxu0 0
      %4611 = vmatprep.subr.bf16.mxu0 0
      %4612 = vmatpush1.bf16.msra.mxu0 0
      %4613 = vmatprep.subr.bf16.mxu0 0
      %4614 = vmatpush1.bf16.msra.mxu0 0
      %4615 = vmatprep.subr.bf16.mxu0 0
      %4616 = vmatpush1.bf16.msra.mxu0 0
      %4617 = vmatprep.subr.bf16.mxu0 0
      %4618 = vmatpush1.bf16.msra.mxu0 0
      %4619 = vmatprep.subr.bf16.mxu0 0
      %4620 = vmatpush1.bf16.msra.mxu0 0
      %4621 = vmatprep.subr.bf16.mxu0 0
      %4622 = vmatpush1.bf16.msra.mxu0 0
      %4623 = vmatprep.subr.bf16.mxu0 0
      %4624 = vmatpush1.bf16.msra.mxu0 0
      %4625 = vmatprep.mubr.bf16.mxu0 0
      %4626 = vmatmul.mubr.bf16.gmra.mrb[0].mxu0 %v3465
      %v4627 = vpop.f32.mrb[0].mxu0
      %v4628 = vadd.f32 %v4543, %v4627
      %v4629 = vpop.f32.mrb[0].mxu0
      %v4630 = vpop.f32.mrb[0].mxu0
      %v4631 = vadd.f32 %v4543, %v4630
      %v4632 = vpop.f32.mrb[0].mxu0
      %4633 = vdwg.mxu0
      %s4634 = scalar_lea.vmem %s6, 384
      %v4635 = vld [vmem:[%s4634] sm:$0xf]
      %v4636 = vld [vmem:[%s4634 + $0x4] sm:$0xf]
      %v4637 = vld [vmem:[%s4634 + $0x8] sm:$0xf]
      %v4638 = vld [vmem:[%s4634 + $0xc] sm:$0xf]
      %v4639 = vld [vmem:[%s4634 + $0x10] sm:$0xf]
      %v4640 = vld [vmem:[%s4634 + $0x14] sm:$0xf]
      %v4641 = vld [vmem:[%s4634 + $0x18] sm:$0xf]
      %v4642 = vld [vmem:[%s4634 + $0x1c] sm:$0xf]
      %v4643 = vld [vmem:[%s4634 + $0x20] sm:$0xf]
      %v4644 = vld [vmem:[%s4634 + $0x24] sm:$0xf]
      %v4645 = vld [vmem:[%s4634 + $0x28] sm:$0xf]
      %v4646 = vld [vmem:[%s4634 + $0x2c] sm:$0xf]
      %v4647 = vld [vmem:[%s4634 + $0x30] sm:$0xf]
      %v4648 = vld [vmem:[%s4634 + $0x34] sm:$0xf]
      %v4649 = vld [vmem:[%s4634 + $0x38] sm:$0xf]
      %v4650 = vld [vmem:[%s4634 + $0x3c] sm:$0xf]
      %s4651 = scalar_lea.vmem %s7, 6
      %v4652 = vld [vmem:[%s4651] sm:$0x1]
      %v4654 = vlaneseq
      %v4655 = vshrl.u32 %v4654, 7
      %v4656 = vsub.s32 0, %v4655
      %v4657 = vrot.slane %v4652, %v4656
      %v4675 = vunpack.c.l.b16 %v4635
      %v4676 = vunpack.c.l.b16 %v4636
      %v4677 = vunpack.c.l.b16 %v4637
      %v4678 = vunpack.c.l.b16 %v4638
      %v4679 = vunpack.c.l.b16 %v4639
      %v4680 = vunpack.c.l.b16 %v4640
      %v4681 = vunpack.c.l.b16 %v4641
      %v4682 = vunpack.c.l.b16 %v4642
      %v4683 = vunpack.c.l.b16 %v4643
      %v4684 = vunpack.c.l.b16 %v4644
      %v4685 = vunpack.c.l.b16 %v4645
      %v4686 = vunpack.c.l.b16 %v4646
      %v4687 = vunpack.c.l.b16 %v4647
      %v4688 = vunpack.c.l.b16 %v4648
      %v4689 = vunpack.c.l.b16 %v4649
      %v4690 = vunpack.c.l.b16 %v4650
      %v4691 = vpack.c.b16 %v4676, %v4675
      %v4692 = vpack.c.b16 %v4678, %v4677
      %v4693 = vpack.c.b16 %v4680, %v4679
      %v4694 = vpack.c.b16 %v4682, %v4681
      %v4695 = vpack.c.b16 %v4684, %v4683
      %v4696 = vpack.c.b16 %v4686, %v4685
      %v4697 = vpack.c.b16 %v4688, %v4687
      %v4698 = vpack.c.b16 %v4690, %v4689
      %4707 = vmatprep.subr.bf16.mxu0 0
      %4708 = vmatpush1.bf16.msra.mxu0 %v4691
      %4709 = vmatprep.subr.bf16.mxu0 0
      %4710 = vmatpush1.bf16.msra.mxu0 %v4692
      %4711 = vmatprep.subr.bf16.mxu0 0
      %4712 = vmatpush1.bf16.msra.mxu0 %v4693
      %4713 = vmatprep.subr.bf16.mxu0 0
      %4714 = vmatpush1.bf16.msra.mxu0 %v4694
      %4715 = vmatprep.subr.bf16.mxu0 0
      %4716 = vmatpush1.bf16.msra.mxu0 %v4695
      %4717 = vmatprep.subr.bf16.mxu0 0
      %4718 = vmatpush1.bf16.msra.mxu0 %v4696
      %4719 = vmatprep.subr.bf16.mxu0 0
      %4720 = vmatpush1.bf16.msra.mxu0 %v4697
      %4721 = vmatprep.subr.bf16.mxu0 0
      %4722 = vmatpush1.bf16.msra.mxu0 %v4698
      %4723 = vmatprep.subr.bf16.mxu0 0
      %4724 = vmatpush1.bf16.msra.mxu0 0
      %4725 = vmatprep.subr.bf16.mxu0 0
      %4726 = vmatpush1.bf16.msra.mxu0 0
      %4727 = vmatprep.subr.bf16.mxu0 0
      %4728 = vmatpush1.bf16.msra.mxu0 0
      %4729 = vmatprep.subr.bf16.mxu0 0
      %4730 = vmatpush1.bf16.msra.mxu0 0
      %4731 = vmatprep.subr.bf16.mxu0 0
      %4732 = vmatpush1.bf16.msra.mxu0 0
      %4733 = vmatprep.subr.bf16.mxu0 0
      %4734 = vmatpush1.bf16.msra.mxu0 0
      %4735 = vmatprep.subr.bf16.mxu0 0
      %4736 = vmatpush1.bf16.msra.mxu0 0
      %4737 = vmatprep.subr.bf16.mxu0 0
      %4738 = vmatpush1.bf16.msra.mxu0 0
      %4739 = vmatprep.mubr.bf16.mxu0 0
      %4740 = vmatmul.mubr.bf16.gmra.mrb[0].mxu0 %v3465
      %v4741 = vpop.f32.mrb[0].mxu0
      %v4742 = vadd.f32 %v4657, %v4741
      %v4743 = vpop.f32.mrb[0].mxu0
      %v4744 = vpop.f32.mrb[0].mxu0
      %v4745 = vadd.f32 %v4657, %v4744
      %v4746 = vpop.f32.mrb[0].mxu0
      %4747 = vdwg.mxu0
      %s4748 = scalar_lea.vmem %s8, 384
      %v4749 = vld [vmem:[%s4748] sm:$0xf]
      %v4750 = vld [vmem:[%s4748 + $0x4] sm:$0xf]
      %v4751 = vld [vmem:[%s4748 + $0x8] sm:$0xf]
      %v4752 = vld [vmem:[%s4748 + $0xc] sm:$0xf]
      %v4753 = vld [vmem:[%s4748 + $0x10] sm:$0xf]
      %v4754 = vld [vmem:[%s4748 + $0x14] sm:$0xf]
      %v4755 = vld [vmem:[%s4748 + $0x18] sm:$0xf]
      %v4756 = vld [vmem:[%s4748 + $0x1c] sm:$0xf]
      %v4757 = vld [vmem:[%s4748 + $0x20] sm:$0xf]
      %v4758 = vld [vmem:[%s4748 + $0x24] sm:$0xf]
      %v4759 = vld [vmem:[%s4748 + $0x28] sm:$0xf]
      %v4760 = vld [vmem:[%s4748 + $0x2c] sm:$0xf]
      %v4761 = vld [vmem:[%s4748 + $0x30] sm:$0xf]
      %v4762 = vld [vmem:[%s4748 + $0x34] sm:$0xf]
      %v4763 = vld [vmem:[%s4748 + $0x38] sm:$0xf]
      %v4764 = vld [vmem:[%s4748 + $0x3c] sm:$0xf]
      %s4765 = scalar_lea.vmem %s9, 6
      %v4766 = vld [vmem:[%s4765] sm:$0x1]
      %v4768 = vlaneseq
      %v4769 = vshrl.u32 %v4768, 7
      %v4770 = vsub.s32 0, %v4769
      %v4771 = vrot.slane %v4766, %v4770
      %v4789 = vunpack.c.l.b16 %v4749
      %v4790 = vunpack.c.l.b16 %v4750
      %v4791 = vunpack.c.l.b16 %v4751
      %v4792 = vunpack.c.l.b16 %v4752
      %v4793 = vunpack.c.l.b16 %v4753
      %v4794 = vunpack.c.l.b16 %v4754
      %v4795 = vunpack.c.l.b16 %v4755
      %v4796 = vunpack.c.l.b16 %v4756
      %v4797 = vunpack.c.l.b16 %v4757
      %v4798 = vunpack.c.l.b16 %v4758
      %v4799 = vunpack.c.l.b16 %v4759
      %v4800 = vunpack.c.l.b16 %v4760
      %v4801 = vunpack.c.l.b16 %v4761
      %v4802 = vunpack.c.l.b16 %v4762
      %v4803 = vunpack.c.l.b16 %v4763
      %v4804 = vunpack.c.l.b16 %v4764
      %v4805 = vpack.c.b16 %v4790, %v4789
      %v4806 = vpack.c.b16 %v4792, %v4791
      %v4807 = vpack.c.b16 %v4794, %v4793
      %v4808 = vpack.c.b16 %v4796, %v4795
      %v4809 = vpack.c.b16 %v4798, %v4797
      %v4810 = vpack.c.b16 %v4800, %v4799
      %v4811 = vpack.c.b16 %v4802, %v4801
      %v4812 = vpack.c.b16 %v4804, %v4803
      %4821 = vmatprep.subr.bf16.mxu0 0
      %4822 = vmatpush1.bf16.msra.mxu0 %v4805
      %4823 = vmatprep.subr.bf16.mxu0 0
      %4824 = vmatpush1.bf16.msra.mxu0 %v4806
      %4825 = vmatprep.subr.bf16.mxu0 0
      %4826 = vmatpush1.bf16.msra.mxu0 %v4807
      %4827 = vmatprep.subr.bf16.mxu0 0
      %4828 = vmatpush1.bf16.msra.mxu0 %v4808
      %4829 = vmatprep.subr.bf16.mxu0 0
      %4830 = vmatpush1.bf16.msra.mxu0 %v4809
      %4831 = vmatprep.subr.bf16.mxu0 0
      %4832 = vmatpush1.bf16.msra.mxu0 %v4810
      %4833 = vmatprep.subr.bf16.mxu0 0
      %4834 = vmatpush1.bf16.msra.mxu0 %v4811
      %4835 = vmatprep.subr.bf16.mxu0 0
      %4836 = vmatpush1.bf16.msra.mxu0 %v4812
      %4837 = vmatprep.subr.bf16.mxu0 0
      %4838 = vmatpush1.bf16.msra.mxu0 0
      %4839 = vmatprep.subr.bf16.mxu0 0
      %4840 = vmatpush1.bf16.msra.mxu0 0
      %4841 = vmatprep.subr.bf16.mxu0 0
      %4842 = vmatpush1.bf16.msra.mxu0 0
      %4843 = vmatprep.subr.bf16.mxu0 0
      %4844 = vmatpush1.bf16.msra.mxu0 0
      %4845 = vmatprep.subr.bf16.mxu0 0
      %4846 = vmatpush1.bf16.msra.mxu0 0
      %4847 = vmatprep.subr.bf16.mxu0 0
      %4848 = vmatpush1.bf16.msra.mxu0 0
      %4849 = vmatprep.subr.bf16.mxu0 0
      %4850 = vmatpush1.bf16.msra.mxu0 0
      %4851 = vmatprep.subr.bf16.mxu0 0
      %4852 = vmatpush1.bf16.msra.mxu0 0
      %4853 = vmatprep.mubr.bf16.mxu0 0
      %4854 = vmatmul.mubr.bf16.gmra.mrb[0].mxu0 %v3465
      %v4855 = vpop.f32.mrb[0].mxu0
      %v4856 = vadd.f32 %v4771, %v4855
      %v4857 = vpop.f32.mrb[0].mxu0
      %v4858 = vpop.f32.mrb[0].mxu0
      %v4859 = vadd.f32 %v4771, %v4858
      %v4860 = vpop.f32.mrb[0].mxu0
      %4861 = vdwg.mxu0
      %v4862 = vpack.c.bf16 %v4631, %v4628
      %v4863 = vpack.c.bf16 %v4745, %v4742
      %v4865 = vsel %vm1143, %v4862, 0
      %v4868 = vsel %vm1143, %v4863, 0
      %4870 = vmatprep.subr.bf16.mxu0 0
      %4871 = vmatpush1.bf16.xpose.msra.mxu0 %v4868
      %4872 = vmatprep.subr.bf16.mxu0 0
      %4873 = vmatpush1.bf16.xpose.msra.mxu0 0
      %4874 = vmatprep.subr.bf16.mxu0 0
      %4875 = vmatpush1.bf16.xpose.msra.mxu0 0
      %4876 = vmatprep.subr.bf16.mxu0 0
      %4877 = vmatpush1.bf16.xpose.msra.mxu0 0
      %4878 = vmatprep.subr.bf16.mxu0 0
      %4879 = vmatpush1.bf16.xpose.msra.mxu0 0
      %4880 = vmatprep.subr.bf16.mxu0 0
      %4881 = vmatpush1.bf16.xpose.msra.mxu0 0
      %4882 = vmatprep.subr.bf16.mxu0 0
      %4883 = vmatpush1.bf16.xpose.msra.mxu0 0
      %4884 = vmatprep.subr.bf16.mxu0 0
      %4885 = vmatpush1.bf16.xpose.msra.mxu0 0
      %4886 = vmatprep.subr.bf16.mxu0 0
      %4887 = vmatpush1.bf16.xpose.msra.mxu0 0
      %4888 = vmatprep.subr.bf16.mxu0 0
      %4889 = vmatpush1.bf16.xpose.msra.mxu0 0
      %4890 = vmatprep.subr.bf16.mxu0 0
      %4891 = vmatpush1.bf16.xpose.msra.mxu0 0
      %4892 = vmatprep.subr.bf16.mxu0 0
      %4893 = vmatpush1.bf16.xpose.msra.mxu0 0
      %4894 = vmatprep.subr.bf16.mxu0 0
      %4895 = vmatpush1.bf16.xpose.msra.mxu0 0
      %4896 = vmatprep.subr.bf16.mxu0 0
      %4897 = vmatpush1.bf16.xpose.msra.mxu0 0
      %4898 = vmatprep.subr.bf16.mxu0 0
      %4899 = vmatpush1.bf16.xpose.msra.mxu0 0
      %4900 = vmatprep.subr.bf16.mxu0 0
      %4901 = vmatpush1.bf16.xpose.msra.mxu0 0
      %4902 = vmatprep.mubr.bf16.mxu0 0
      %4903 = vmatmul.mubr.bf16.gmra.mrb[0].mxu0 %v4865
      %v4904 = vpop.f32.mrb[0].mxu0
      %v4905 = vadd.f32 %v1141, %v4904
      %v4906 = vpop.f32.mrb[0].mxu0
      %v4907 = vpop.f32.mrb[0].mxu0
      %v4908 = vadd.f32 %v1141, %v4907
      %v4909 = vpop.f32.mrb[0].mxu0
      %4910 = vdwg.mxu0
      %v4911 = vsel %vm1191, %v4905, -inf
      %4912 = vmax.xlane.f32.xlu0 %v4911
      %v4913 = vpop.xlane.xlu0 %4912
      %v4914 = vsel %vm1191, %v4908, -inf
      %4915 = vmax.xlane.f32.xlu0 %v4914
      %v4916 = vpop.xlane.xlu0 %4915
      %v4917 = vsub.f32 %v4905, %v4913
      %v4918 = vsub.f32 %v4908, %v4916
      %v4919 = vmul.f32 %v4917, 1.442695
      %v4920 = vpow.pop %v4919
      %v4921 = vmul.f32 %v4918, 1.442695
      %v4922 = vpow.pop %v4921
      %v4923 = vsel %vm1191, %v4920, 0.0
      %4924 = vadd.xlane.f32.xlu0 %v4923
      %v4925 = vpop.xlane.xlu0 %4924
      %v4926 = vsel %vm1191, %v4922, 0.0
      %4927 = vadd.xlane.f32.xlu0 %v4926
      %v4928 = vpop.xlane.xlu0 %4927
      %v4929 = vrcp.pop %v4925
      %v4930 = vrcp.pop %v4928
      %v4931 = vmul.f32 %v4920, %v4929
      %v4932 = vmul.f32 %v4922, %v4930
      %v4933 = vpack.c.bf16 %v4932, %v4931
      %v4934 = vpack.c.bf16 %v4859, %v4856
      %v4936 = vsel %vm1191, %v4933, 0
      %4938 = vmatprep.subr.bf16.mxu0 0
      %4939 = vmatpush1.bf16.msra.mxu0 %v4934
      %4940 = vmatprep.subr.bf16.mxu0 0
      %4941 = vmatpush1.bf16.msra.mxu0 0
      %4942 = vmatprep.subr.bf16.mxu0 0
      %4943 = vmatpush1.bf16.msra.mxu0 0
      %4944 = vmatprep.subr.bf16.mxu0 0
      %4945 = vmatpush1.bf16.msra.mxu0 0
      %4946 = vmatprep.subr.bf16.mxu0 0
      %4947 = vmatpush1.bf16.msra.mxu0 0
      %4948 = vmatprep.subr.bf16.mxu0 0
      %4949 = vmatpush1.bf16.msra.mxu0 0
      %4950 = vmatprep.subr.bf16.mxu0 0
      %4951 = vmatpush1.bf16.msra.mxu0 0
      %4952 = vmatprep.subr.bf16.mxu0 0
      %4953 = vmatpush1.bf16.msra.mxu0 0
      %4954 = vmatprep.subr.bf16.mxu0 0
      %4955 = vmatpush1.bf16.msra.mxu0 0
      %4956 = vmatprep.subr.bf16.mxu0 0
      %4957 = vmatpush1.bf16.msra.mxu0 0
      %4958 = vmatprep.subr.bf16.mxu0 0
      %4959 = vmatpush1.bf16.msra.mxu0 0
      %4960 = vmatprep.subr.bf16.mxu0 0
      %4961 = vmatpush1.bf16.msra.mxu0 0
      %4962 = vmatprep.subr.bf16.mxu0 0
      %4963 = vmatpush1.bf16.msra.mxu0 0
      %4964 = vmatprep.subr.bf16.mxu0 0
      %4965 = vmatpush1.bf16.msra.mxu0 0
      %4966 = vmatprep.subr.bf16.mxu0 0
      %4967 = vmatpush1.bf16.msra.mxu0 0
      %4968 = vmatprep.subr.bf16.mxu0 0
      %4969 = vmatpush1.bf16.msra.mxu0 0
      %4970 = vmatprep.mubr.bf16.mxu0 0
      %4971 = vmatmul.mubr.bf16.gmra.mrb[0].mxu0 %v4936
      %v4972 = vpop.f32.mrb[0].mxu0
      %v4973 = vadd.f32 0.0, %v4972
      %v4974 = vpop.f32.mrb[0].mxu0
      %v4975 = vpop.f32.mrb[0].mxu0
      %v4976 = vadd.f32 0.0, %v4975
      %v4977 = vpop.f32.mrb[0].mxu0
      %4978 = vdwg.mxu0
      %v4979 = vpack.c.bf16 %v4976, %v4973
      %s4980 = scalar_lea.vmem %s10, 96
      %v4981 = vld [vmem:[%s4980] sm:$0xf]
      %v4982 = vld [vmem:[%s4980 + $0x4] sm:$0xf]
      %v4983 = vld [vmem:[%s4980 + $0x8] sm:$0xf]
      %v4984 = vld [vmem:[%s4980 + $0xc] sm:$0xf]
      %v4989 = vunpack.c.l.b16 %v4981
      %v4990 = vunpack.c.l.b16 %v4982
      %v4991 = vunpack.c.l.b16 %v4983
      %v4992 = vunpack.c.l.b16 %v4984
      %v4993 = vpack.c.b16 %v4990, %v4989
      %v4994 = vpack.c.b16 %v4992, %v4991
      %v4998 = vsel %vm1143, %v4979, 0
      %5000 = vmatprep.subr.bf16.mxu0 0
      %5001 = vmatpush1.bf16.msra.mxu0 %v4993
      %5002 = vmatprep.subr.bf16.mxu0 0
      %5003 = vmatpush1.bf16.msra.mxu0 %v4994
      %5004 = vmatprep.subr.bf16.mxu0 0
      %5005 = vmatpush1.bf16.msra.mxu0 0
      %5006 = vmatprep.subr.bf16.mxu0 0
      %5007 = vmatpush1.bf16.msra.mxu0 0
      %5008 = vmatprep.subr.bf16.mxu0 0
      %5009 = vmatpush1.bf16.msra.mxu0 0
      %5010 = vmatprep.subr.bf16.mxu0 0
      %5011 = vmatpush1.bf16.msra.mxu0 0
      %5012 = vmatprep.subr.bf16.mxu0 0
      %5013 = vmatpush1.bf16.msra.mxu0 0
      %5014 = vmatprep.subr.bf16.mxu0 0
      %5015 = vmatpush1.bf16.msra.mxu0 0
      %5016 = vmatprep.subr.bf16.mxu0 0
      %5017 = vmatpush1.bf16.msra.mxu0 0
      %5018 = vmatprep.subr.bf16.mxu0 0
      %5019 = vmatpush1.bf16.msra.mxu0 0
      %5020 = vmatprep.subr.bf16.mxu0 0
      %5021 = vmatpush1.bf16.msra.mxu0 0
      %5022 = vmatprep.subr.bf16.mxu0 0
      %5023 = vmatpush1.bf16.msra.mxu0 0
      %5024 = vmatprep.subr.bf16.mxu0 0
      %5025 = vmatpush1.bf16.msra.mxu0 0
      %5026 = vmatprep.subr.bf16.mxu0 0
      %5027 = vmatpush1.bf16.msra.mxu0 0
      %5028 = vmatprep.subr.bf16.mxu0 0
      %5029 = vmatpush1.bf16.msra.mxu0 0
      %5030 = vmatprep.subr.bf16.mxu0 0
      %5031 = vmatpush1.bf16.msra.mxu0 0
      %5032 = vmatprep.mubr.bf16.mxu0 0
      %5033 = vmatmul.mubr.bf16.gmra.mrb[0].mxu0 %v4998
      %v5034 = vpop.f32.mrb[0].mxu0
      %v5035 = vadd.f32 0.0, %v5034
      %v5036 = vpop.f32.mrb[0].mxu0
      %v5037 = vpop.f32.mrb[0].mxu0
      %v5038 = vadd.f32 0.0, %v5037
      %v5039 = vpop.f32.mrb[0].mxu0
      %5040 = vdwg.mxu0
      %v5041 = vadd.f32 %v4518, %v5035
      %v5042 = vadd.f32 %v4519, %v5038
      %s5043 = scalar_lea.vmem %s4, 448
      %v5044 = vld [vmem:[%s5043] sm:$0xf]
      %v5045 = vld [vmem:[%s5043 + $0x4] sm:$0xf]
      %v5046 = vld [vmem:[%s5043 + $0x8] sm:$0xf]
      %v5047 = vld [vmem:[%s5043 + $0xc] sm:$0xf]
      %v5048 = vld [vmem:[%s5043 + $0x10] sm:$0xf]
      %v5049 = vld [vmem:[%s5043 + $0x14] sm:$0xf]
      %v5050 = vld [vmem:[%s5043 + $0x18] sm:$0xf]
      %v5051 = vld [vmem:[%s5043 + $0x1c] sm:$0xf]
      %v5052 = vld [vmem:[%s5043 + $0x20] sm:$0xf]
      %v5053 = vld [vmem:[%s5043 + $0x24] sm:$0xf]
      %v5054 = vld [vmem:[%s5043 + $0x28] sm:$0xf]
      %v5055 = vld [vmem:[%s5043 + $0x2c] sm:$0xf]
      %v5056 = vld [vmem:[%s5043 + $0x30] sm:$0xf]
      %v5057 = vld [vmem:[%s5043 + $0x34] sm:$0xf]
      %v5058 = vld [vmem:[%s5043 + $0x38] sm:$0xf]
      %v5059 = vld [vmem:[%s5043 + $0x3c] sm:$0xf]
      %s5060 = scalar_lea.vmem %s5, 7
      %v5061 = vld [vmem:[%s5060] sm:$0x1]
      %v5063 = vlaneseq
      %v5064 = vshrl.u32 %v5063, 7
      %v5065 = vsub.s32 0, %v5064
      %v5066 = vrot.slane %v5061, %v5065
      %v5084 = vunpack.c.l.b16 %v5044
      %v5085 = vunpack.c.l.b16 %v5045
      %v5086 = vunpack.c.l.b16 %v5046
      %v5087 = vunpack.c.l.b16 %v5047
      %v5088 = vunpack.c.l.b16 %v5048
      %v5089 = vunpack.c.l.b16 %v5049
      %v5090 = vunpack.c.l.b16 %v5050
      %v5091 = vunpack.c.l.b16 %v5051
      %v5092 = vunpack.c.l.b16 %v5052
      %v5093 = vunpack.c.l.b16 %v5053
      %v5094 = vunpack.c.l.b16 %v5054
      %v5095 = vunpack.c.l.b16 %v5055
      %v5096 = vunpack.c.l.b16 %v5056
      %v5097 = vunpack.c.l.b16 %v5057
      %v5098 = vunpack.c.l.b16 %v5058
      %v5099 = vunpack.c.l.b16 %v5059
      %v5100 = vpack.c.b16 %v5085, %v5084
      %v5101 = vpack.c.b16 %v5087, %v5086
      %v5102 = vpack.c.b16 %v5089, %v5088
      %v5103 = vpack.c.b16 %v5091, %v5090
      %v5104 = vpack.c.b16 %v5093, %v5092
      %v5105 = vpack.c.b16 %v5095, %v5094
      %v5106 = vpack.c.b16 %v5097, %v5096
      %v5107 = vpack.c.b16 %v5099, %v5098
      %5116 = vmatprep.subr.bf16.mxu0 0
      %5117 = vmatpush1.bf16.msra.mxu0 %v5100
      %5118 = vmatprep.subr.bf16.mxu0 0
      %5119 = vmatpush1.bf16.msra.mxu0 %v5101
      %5120 = vmatprep.subr.bf16.mxu0 0
      %5121 = vmatpush1.bf16.msra.mxu0 %v5102
      %5122 = vmatprep.subr.bf16.mxu0 0
      %5123 = vmatpush1.bf16.msra.mxu0 %v5103
      %5124 = vmatprep.subr.bf16.mxu0 0
      %5125 = vmatpush1.bf16.msra.mxu0 %v5104
      %5126 = vmatprep.subr.bf16.mxu0 0
      %5127 = vmatpush1.bf16.msra.mxu0 %v5105
      %5128 = vmatprep.subr.bf16.mxu0 0
      %5129 = vmatpush1.bf16.msra.mxu0 %v5106
      %5130 = vmatprep.subr.bf16.mxu0 0
      %5131 = vmatpush1.bf16.msra.mxu0 %v5107
      %5132 = vmatprep.subr.bf16.mxu0 0
      %5133 = vmatpush1.bf16.msra.mxu0 0
      %5134 = vmatprep.subr.bf16.mxu0 0
      %5135 = vmatpush1.bf16.msra.mxu0 0
      %5136 = vmatprep.subr.bf16.mxu0 0
      %5137 = vmatpush1.bf16.msra.mxu0 0
      %5138 = vmatprep.subr.bf16.mxu0 0
      %5139 = vmatpush1.bf16.msra.mxu0 0
      %5140 = vmatprep.subr.bf16.mxu0 0
      %5141 = vmatpush1.bf16.msra.mxu0 0
      %5142 = vmatprep.subr.bf16.mxu0 0
      %5143 = vmatpush1.bf16.msra.mxu0 0
      %5144 = vmatprep.subr.bf16.mxu0 0
      %5145 = vmatpush1.bf16.msra.mxu0 0
      %5146 = vmatprep.subr.bf16.mxu0 0
      %5147 = vmatpush1.bf16.msra.mxu0 0
      %5148 = vmatprep.mubr.bf16.mxu0 0
      %5149 = vmatmul.mubr.bf16.gmra.mrb[0].mxu0 %v3465
      %v5150 = vpop.f32.mrb[0].mxu0
      %v5151 = vadd.f32 %v5066, %v5150
      %v5152 = vpop.f32.mrb[0].mxu0
      %v5153 = vpop.f32.mrb[0].mxu0
      %v5154 = vadd.f32 %v5066, %v5153
      %v5155 = vpop.f32.mrb[0].mxu0
      %5156 = vdwg.mxu0
      %s5157 = scalar_lea.vmem %s6, 448
      %v5158 = vld [vmem:[%s5157] sm:$0xf]
      %v5159 = vld [vmem:[%s5157 + $0x4] sm:$0xf]
      %v5160 = vld [vmem:[%s5157 + $0x8] sm:$0xf]
      %v5161 = vld [vmem:[%s5157 + $0xc] sm:$0xf]
      %v5162 = vld [vmem:[%s5157 + $0x10] sm:$0xf]
      %v5163 = vld [vmem:[%s5157 + $0x14] sm:$0xf]
      %v5164 = vld [vmem:[%s5157 + $0x18] sm:$0xf]
      %v5165 = vld [vmem:[%s5157 + $0x1c] sm:$0xf]
      %v5166 = vld [vmem:[%s5157 + $0x20] sm:$0xf]
      %v5167 = vld [vmem:[%s5157 + $0x24] sm:$0xf]
      %v5168 = vld [vmem:[%s5157 + $0x28] sm:$0xf]
      %v5169 = vld [vmem:[%s5157 + $0x2c] sm:$0xf]
      %v5170 = vld [vmem:[%s5157 + $0x30] sm:$0xf]
      %v5171 = vld [vmem:[%s5157 + $0x34] sm:$0xf]
      %v5172 = vld [vmem:[%s5157 + $0x38] sm:$0xf]
      %v5173 = vld [vmem:[%s5157 + $0x3c] sm:$0xf]
      %s5174 = scalar_lea.vmem %s7, 7
      %v5175 = vld [vmem:[%s5174] sm:$0x1]
      %v5177 = vlaneseq
      %v5178 = vshrl.u32 %v5177, 7
      %v5179 = vsub.s32 0, %v5178
      %v5180 = vrot.slane %v5175, %v5179
      %v5198 = vunpack.c.l.b16 %v5158
      %v5199 = vunpack.c.l.b16 %v5159
      %v5200 = vunpack.c.l.b16 %v5160
      %v5201 = vunpack.c.l.b16 %v5161
      %v5202 = vunpack.c.l.b16 %v5162
      %v5203 = vunpack.c.l.b16 %v5163
      %v5204 = vunpack.c.l.b16 %v5164
      %v5205 = vunpack.c.l.b16 %v5165
      %v5206 = vunpack.c.l.b16 %v5166
      %v5207 = vunpack.c.l.b16 %v5167
      %v5208 = vunpack.c.l.b16 %v5168
      %v5209 = vunpack.c.l.b16 %v5169
      %v5210 = vunpack.c.l.b16 %v5170
      %v5211 = vunpack.c.l.b16 %v5171
      %v5212 = vunpack.c.l.b16 %v5172
      %v5213 = vunpack.c.l.b16 %v5173
      %v5214 = vpack.c.b16 %v5199, %v5198
      %v5215 = vpack.c.b16 %v5201, %v5200
      %v5216 = vpack.c.b16 %v5203, %v5202
      %v5217 = vpack.c.b16 %v5205, %v5204
      %v5218 = vpack.c.b16 %v5207, %v5206
      %v5219 = vpack.c.b16 %v5209, %v5208
      %v5220 = vpack.c.b16 %v5211, %v5210
      %v5221 = vpack.c.b16 %v5213, %v5212
      %5230 = vmatprep.subr.bf16.mxu0 0
      %5231 = vmatpush1.bf16.msra.mxu0 %v5214
      %5232 = vmatprep.subr.bf16.mxu0 0
      %5233 = vmatpush1.bf16.msra.mxu0 %v5215
      %5234 = vmatprep.subr.bf16.mxu0 0
      %5235 = vmatpush1.bf16.msra.mxu0 %v5216
      %5236 = vmatprep.subr.bf16.mxu0 0
      %5237 = vmatpush1.bf16.msra.mxu0 %v5217
      %5238 = vmatprep.subr.bf16.mxu0 0
      %5239 = vmatpush1.bf16.msra.mxu0 %v5218
      %5240 = vmatprep.subr.bf16.mxu0 0
      %5241 = vmatpush1.bf16.msra.mxu0 %v5219
      %5242 = vmatprep.subr.bf16.mxu0 0
      %5243 = vmatpush1.bf16.msra.mxu0 %v5220
      %5244 = vmatprep.subr.bf16.mxu0 0
      %5245 = vmatpush1.bf16.msra.mxu0 %v5221
      %5246 = vmatprep.subr.bf16.mxu0 0
      %5247 = vmatpush1.bf16.msra.mxu0 0
      %5248 = vmatprep.subr.bf16.mxu0 0
      %5249 = vmatpush1.bf16.msra.mxu0 0
      %5250 = vmatprep.subr.bf16.mxu0 0
      %5251 = vmatpush1.bf16.msra.mxu0 0
      %5252 = vmatprep.subr.bf16.mxu0 0
      %5253 = vmatpush1.bf16.msra.mxu0 0
      %5254 = vmatprep.subr.bf16.mxu0 0
      %5255 = vmatpush1.bf16.msra.mxu0 0
      %5256 = vmatprep.subr.bf16.mxu0 0
      %5257 = vmatpush1.bf16.msra.mxu0 0
      %5258 = vmatprep.subr.bf16.mxu0 0
      %5259 = vmatpush1.bf16.msra.mxu0 0
      %5260 = vmatprep.subr.bf16.mxu0 0
      %5261 = vmatpush1.bf16.msra.mxu0 0
      %5262 = vmatprep.mubr.bf16.mxu0 0
      %5263 = vmatmul.mubr.bf16.gmra.mrb[0].mxu0 %v3465
      %v5264 = vpop.f32.mrb[0].mxu0
      %v5265 = vadd.f32 %v5180, %v5264
      %v5266 = vpop.f32.mrb[0].mxu0
      %v5267 = vpop.f32.mrb[0].mxu0
      %v5268 = vadd.f32 %v5180, %v5267
      %v5269 = vpop.f32.mrb[0].mxu0
      %5270 = vdwg.mxu0
      %s5271 = scalar_lea.vmem %s8, 448
      %v5272 = vld [vmem:[%s5271] sm:$0xf]
      %v5273 = vld [vmem:[%s5271 + $0x4] sm:$0xf]
      %v5274 = vld [vmem:[%s5271 + $0x8] sm:$0xf]
      %v5275 = vld [vmem:[%s5271 + $0xc] sm:$0xf]
      %v5276 = vld [vmem:[%s5271 + $0x10] sm:$0xf]
      %v5277 = vld [vmem:[%s5271 + $0x14] sm:$0xf]
      %v5278 = vld [vmem:[%s5271 + $0x18] sm:$0xf]
      %v5279 = vld [vmem:[%s5271 + $0x1c] sm:$0xf]
      %v5280 = vld [vmem:[%s5271 + $0x20] sm:$0xf]
      %v5281 = vld [vmem:[%s5271 + $0x24] sm:$0xf]
      %v5282 = vld [vmem:[%s5271 + $0x28] sm:$0xf]
      %v5283 = vld [vmem:[%s5271 + $0x2c] sm:$0xf]
      %v5284 = vld [vmem:[%s5271 + $0x30] sm:$0xf]
      %v5285 = vld [vmem:[%s5271 + $0x34] sm:$0xf]
      %v5286 = vld [vmem:[%s5271 + $0x38] sm:$0xf]
      %v5287 = vld [vmem:[%s5271 + $0x3c] sm:$0xf]
      %s5288 = scalar_lea.vmem %s9, 7
      %v5289 = vld [vmem:[%s5288] sm:$0x1]
      %v5291 = vlaneseq
      %v5292 = vshrl.u32 %v5291, 7
      %v5293 = vsub.s32 0, %v5292
      %v5294 = vrot.slane %v5289, %v5293
      %v5312 = vunpack.c.l.b16 %v5272
      %v5313 = vunpack.c.l.b16 %v5273
      %v5314 = vunpack.c.l.b16 %v5274
      %v5315 = vunpack.c.l.b16 %v5275
      %v5316 = vunpack.c.l.b16 %v5276
      %v5317 = vunpack.c.l.b16 %v5277
      %v5318 = vunpack.c.l.b16 %v5278
      %v5319 = vunpack.c.l.b16 %v5279
      %v5320 = vunpack.c.l.b16 %v5280
      %v5321 = vunpack.c.l.b16 %v5281
      %v5322 = vunpack.c.l.b16 %v5282
      %v5323 = vunpack.c.l.b16 %v5283
      %v5324 = vunpack.c.l.b16 %v5284
      %v5325 = vunpack.c.l.b16 %v5285
      %v5326 = vunpack.c.l.b16 %v5286
      %v5327 = vunpack.c.l.b16 %v5287
      %v5328 = vpack.c.b16 %v5313, %v5312
      %v5329 = vpack.c.b16 %v5315, %v5314
      %v5330 = vpack.c.b16 %v5317, %v5316
      %v5331 = vpack.c.b16 %v5319, %v5318
      %v5332 = vpack.c.b16 %v5321, %v5320
      %v5333 = vpack.c.b16 %v5323, %v5322
      %v5334 = vpack.c.b16 %v5325, %v5324
      %v5335 = vpack.c.b16 %v5327, %v5326
      %5344 = vmatprep.subr.bf16.mxu0 0
      %5345 = vmatpush1.bf16.msra.mxu0 %v5328
      %5346 = vmatprep.subr.bf16.mxu0 0
      %5347 = vmatpush1.bf16.msra.mxu0 %v5329
      %5348 = vmatprep.subr.bf16.mxu0 0
      %5349 = vmatpush1.bf16.msra.mxu0 %v5330
      %5350 = vmatprep.subr.bf16.mxu0 0
      %5351 = vmatpush1.bf16.msra.mxu0 %v5331
      %5352 = vmatprep.subr.bf16.mxu0 0
      %5353 = vmatpush1.bf16.msra.mxu0 %v5332
      %5354 = vmatprep.subr.bf16.mxu0 0
      %5355 = vmatpush1.bf16.msra.mxu0 %v5333
      %5356 = vmatprep.subr.bf16.mxu0 0
      %5357 = vmatpush1.bf16.msra.mxu0 %v5334
      %5358 = vmatprep.subr.bf16.mxu0 0
      %5359 = vmatpush1.bf16.msra.mxu0 %v5335
      %5360 = vmatprep.subr.bf16.mxu0 0
      %5361 = vmatpush1.bf16.msra.mxu0 0
      %5362 = vmatprep.subr.bf16.mxu0 0
      %5363 = vmatpush1.bf16.msra.mxu0 0
      %5364 = vmatprep.subr.bf16.mxu0 0
      %5365 = vmatpush1.bf16.msra.mxu0 0
      %5366 = vmatprep.subr.bf16.mxu0 0
      %5367 = vmatpush1.bf16.msra.mxu0 0
      %5368 = vmatprep.subr.bf16.mxu0 0
      %5369 = vmatpush1.bf16.msra.mxu0 0
      %5370 = vmatprep.subr.bf16.mxu0 0
      %5371 = vmatpush1.bf16.msra.mxu0 0
      %5372 = vmatprep.subr.bf16.mxu0 0
      %5373 = vmatpush1.bf16.msra.mxu0 0
      %5374 = vmatprep.subr.bf16.mxu0 0
      %5375 = vmatpush1.bf16.msra.mxu0 0
      %5376 = vmatprep.mubr.bf16.mxu0 0
      %5377 = vmatmul.mubr.bf16.gmra.mrb[0].mxu0 %v3465
      %v5378 = vpop.f32.mrb[0].mxu0
      %v5379 = vadd.f32 %v5294, %v5378
      %v5380 = vpop.f32.mrb[0].mxu0
      %v5381 = vpop.f32.mrb[0].mxu0
      %v5382 = vadd.f32 %v5294, %v5381
      %v5383 = vpop.f32.mrb[0].mxu0
      %5384 = vdwg.mxu0
      %v5385 = vpack.c.bf16 %v5154, %v5151
      %v5386 = vpack.c.bf16 %v5268, %v5265
      %v5388 = vsel %vm1143, %v5385, 0
      %v5391 = vsel %vm1143, %v5386, 0
      %5393 = vmatprep.subr.bf16.mxu0 0
      %5394 = vmatpush1.bf16.xpose.msra.mxu0 %v5391
      %5395 = vmatprep.subr.bf16.mxu0 0
      %5396 = vmatpush1.bf16.xpose.msra.mxu0 0
      %5397 = vmatprep.subr.bf16.mxu0 0
      %5398 = vmatpush1.bf16.xpose.msra.mxu0 0
      %5399 = vmatprep.subr.bf16.mxu0 0
      %5400 = vmatpush1.bf16.xpose.msra.mxu0 0
      %5401 = vmatprep.subr.bf16.mxu0 0
      %5402 = vmatpush1.bf16.xpose.msra.mxu0 0
      %5403 = vmatprep.subr.bf16.mxu0 0
      %5404 = vmatpush1.bf16.xpose.msra.mxu0 0
      %5405 = vmatprep.subr.bf16.mxu0 0
      %5406 = vmatpush1.bf16.xpose.msra.mxu0 0
      %5407 = vmatprep.subr.bf16.mxu0 0
      %5408 = vmatpush1.bf16.xpose.msra.mxu0 0
      %5409 = vmatprep.subr.bf16.mxu0 0
      %5410 = vmatpush1.bf16.xpose.msra.mxu0 0
      %5411 = vmatprep.subr.bf16.mxu0 0
      %5412 = vmatpush1.bf16.xpose.msra.mxu0 0
      %5413 = vmatprep.subr.bf16.mxu0 0
      %5414 = vmatpush1.bf16.xpose.msra.mxu0 0
      %5415 = vmatprep.subr.bf16.mxu0 0
      %5416 = vmatpush1.bf16.xpose.msra.mxu0 0
      %5417 = vmatprep.subr.bf16.mxu0 0
      %5418 = vmatpush1.bf16.xpose.msra.mxu0 0
      %5419 = vmatprep.subr.bf16.mxu0 0
      %5420 = vmatpush1.bf16.xpose.msra.mxu0 0
      %5421 = vmatprep.subr.bf16.mxu0 0
      %5422 = vmatpush1.bf16.xpose.msra.mxu0 0
      %5423 = vmatprep.subr.bf16.mxu0 0
      %5424 = vmatpush1.bf16.xpose.msra.mxu0 0
      %5425 = vmatprep.mubr.bf16.mxu0 0
      %5426 = vmatmul.mubr.bf16.gmra.mrb[0].mxu0 %v5388
      %v5427 = vpop.f32.mrb[0].mxu0
      %v5428 = vadd.f32 %v1141, %v5427
      %v5429 = vpop.f32.mrb[0].mxu0
      %v5430 = vpop.f32.mrb[0].mxu0
      %v5431 = vadd.f32 %v1141, %v5430
      %v5432 = vpop.f32.mrb[0].mxu0
      %5433 = vdwg.mxu0
      %v5434 = vsel %vm1191, %v5428, -inf
      %5435 = vmax.xlane.f32.xlu0 %v5434
      %v5436 = vpop.xlane.xlu0 %5435
      %v5437 = vsel %vm1191, %v5431, -inf
      %5438 = vmax.xlane.f32.xlu0 %v5437
      %v5439 = vpop.xlane.xlu0 %5438
      %v5440 = vsub.f32 %v5428, %v5436
      %v5441 = vsub.f32 %v5431, %v5439
      %v5442 = vmul.f32 %v5440, 1.442695
      %v5443 = vpow.pop %v5442
      %v5444 = vmul.f32 %v5441, 1.442695
      %v5445 = vpow.pop %v5444
      %v5446 = vsel %vm1191, %v5443, 0.0
      %5447 = vadd.xlane.f32.xlu0 %v5446
      %v5448 = vpop.xlane.xlu0 %5447
      %v5449 = vsel %vm1191, %v5445, 0.0
      %5450 = vadd.xlane.f32.xlu0 %v5449
      %v5451 = vpop.xlane.xlu0 %5450
      %v5452 = vrcp.pop %v5448
      %v5453 = vrcp.pop %v5451
      %v5454 = vmul.f32 %v5443, %v5452
      %v5455 = vmul.f32 %v5445, %v5453
      %v5456 = vpack.c.bf16 %v5455, %v5454
      %v5457 = vpack.c.bf16 %v5382, %v5379
      %v5459 = vsel %vm1191, %v5456, 0
      %5461 = vmatprep.subr.bf16.mxu0 0
      %5462 = vmatpush1.bf16.msra.mxu0 %v5457
      %5463 = vmatprep.subr.bf16.mxu0 0
      %5464 = vmatpush1.bf16.msra.mxu0 0
      %5465 = vmatprep.subr.bf16.mxu0 0
      %5466 = vmatpush1.bf16.msra.mxu0 0
      %5467 = vmatprep.subr.bf16.mxu0 0
      %5468 = vmatpush1.bf16.msra.mxu0 0
      %5469 = vmatprep.subr.bf16.mxu0 0
      %5470 = vmatpush1.bf16.msra.mxu0 0
      %5471 = vmatprep.subr.bf16.mxu0 0
      %5472 = vmatpush1.bf16.msra.mxu0 0
      %5473 = vmatprep.subr.bf16.mxu0 0
      %5474 = vmatpush1.bf16.msra.mxu0 0
      %5475 = vmatprep.subr.bf16.mxu0 0
      %5476 = vmatpush1.bf16.msra.mxu0 0
      %5477 = vmatprep.subr.bf16.mxu0 0
      %5478 = vmatpush1.bf16.msra.mxu0 0
      %5479 = vmatprep.subr.bf16.mxu0 0
      %5480 = vmatpush1.bf16.msra.mxu0 0
      %5481 = vmatprep.subr.bf16.mxu0 0
      %5482 = vmatpush1.bf16.msra.mxu0 0
      %5483 = vmatprep.subr.bf16.mxu0 0
      %5484 = vmatpush1.bf16.msra.mxu0 0
      %5485 = vmatprep.subr.bf16.mxu0 0
      %5486 = vmatpush1.bf16.msra.mxu0 0
      %5487 = vmatprep.subr.bf16.mxu0 0
      %5488 = vmatpush1.bf16.msra.mxu0 0
      %5489 = vmatprep.subr.bf16.mxu0 0
      %5490 = vmatpush1.bf16.msra.mxu0 0
      %5491 = vmatprep.subr.bf16.mxu0 0
      %5492 = vmatpush1.bf16.msra.mxu0 0
      %5493 = vmatprep.mubr.bf16.mxu0 0
      %5494 = vmatmul.mubr.bf16.gmra.mrb[0].mxu0 %v5459
      %v5495 = vpop.f32.mrb[0].mxu0
      %v5496 = vadd.f32 0.0, %v5495
      %v5497 = vpop.f32.mrb[0].mxu0
      %v5498 = vpop.f32.mrb[0].mxu0
      %v5499 = vadd.f32 0.0, %v5498
      %v5500 = vpop.f32.mrb[0].mxu0
      %5501 = vdwg.mxu0
      %v5502 = vpack.c.bf16 %v5499, %v5496
      %s5503 = scalar_lea.vmem %s10, 112
      %v5504 = vld [vmem:[%s5503] sm:$0xf]
      %v5505 = vld [vmem:[%s5503 + $0x4] sm:$0xf]
      %v5506 = vld [vmem:[%s5503 + $0x8] sm:$0xf]
      %v5507 = vld [vmem:[%s5503 + $0xc] sm:$0xf]
      %v5512 = vunpack.c.l.b16 %v5504
      %v5513 = vunpack.c.l.b16 %v5505
      %v5514 = vunpack.c.l.b16 %v5506
      %v5515 = vunpack.c.l.b16 %v5507
      %v5516 = vpack.c.b16 %v5513, %v5512
      %v5517 = vpack.c.b16 %v5515, %v5514
      %v5521 = vsel %vm1143, %v5502, 0
      %5523 = vmatprep.subr.bf16.mxu0 0
      %5524 = vmatpush1.bf16.msra.mxu0 %v5516
      %5525 = vmatprep.subr.bf16.mxu0 0
      %5526 = vmatpush1.bf16.msra.mxu0 %v5517
      %5527 = vmatprep.subr.bf16.mxu0 0
      %5528 = vmatpush1.bf16.msra.mxu0 0
      %5529 = vmatprep.subr.bf16.mxu0 0
      %5530 = vmatpush1.bf16.msra.mxu0 0
      %5531 = vmatprep.subr.bf16.mxu0 0
      %5532 = vmatpush1.bf16.msra.mxu0 0
      %5533 = vmatprep.subr.bf16.mxu0 0
      %5534 = vmatpush1.bf16.msra.mxu0 0
      %5535 = vmatprep.subr.bf16.mxu0 0
      %5536 = vmatpush1.bf16.msra.mxu0 0
      %5537 = vmatprep.subr.bf16.mxu0 0
      %5538 = vmatpush1.bf16.msra.mxu0 0
      %5539 = vmatprep.subr.bf16.mxu0 0
      %5540 = vmatpush1.bf16.msra.mxu0 0
      %5541 = vmatprep.subr.bf16.mxu0 0
      %5542 = vmatpush1.bf16.msra.mxu0 0
      %5543 = vmatprep.subr.bf16.mxu0 0
      %5544 = vmatpush1.bf16.msra.mxu0 0
      %5545 = vmatprep.subr.bf16.mxu0 0
      %5546 = vmatpush1.bf16.msra.mxu0 0
      %5547 = vmatprep.subr.bf16.mxu0 0
      %5548 = vmatpush1.bf16.msra.mxu0 0
      %5549 = vmatprep.subr.bf16.mxu0 0
      %5550 = vmatpush1.bf16.msra.mxu0 0
      %5551 = vmatprep.subr.bf16.mxu0 0
      %5552 = vmatpush1.bf16.msra.mxu0 0
      %5553 = vmatprep.subr.bf16.mxu0 0
      %5554 = vmatpush1.bf16.msra.mxu0 0
      %5555 = vmatprep.mubr.bf16.mxu0 0
      %5556 = vmatmul.mubr.bf16.gmra.mrb[0].mxu0 %v5521
      %v5557 = vpop.f32.mrb[0].mxu0
      %v5558 = vadd.f32 0.0, %v5557
      %v5559 = vpop.f32.mrb[0].mxu0
      %v5560 = vpop.f32.mrb[0].mxu0
      %v5561 = vadd.f32 0.0, %v5560
      %v5562 = vpop.f32.mrb[0].mxu0
      %5563 = vdwg.mxu0
      %v5564 = vadd.f32 %v5041, %v5558
      %v5565 = vadd.f32 %v5042, %v5561
      %v5566 = vunpack.c.l.bf16 %v3465
      %v5567 = vunpack.c.h.bf16 %v3465
      %v5568 = vadd.f32 %v5564, %v5566
      %v5569 = vadd.f32 %v5565, %v5567
      %s5570 = scalar_lea.vmem %s12, 1
      %v5571 = vld [vmem:[%s5570] sm:$0x1]
      %s5572 = scalar_lea.vmem %s13, 1
      %v5573 = vld [vmem:[%s5572] sm:$0x1]
      %5574 = vadd.xlane.f32.xlu0 %v5568
      %v5575 = vpop.xlane.xlu0 %5574
      %5576 = vadd.xlane.f32.xlu0 %v5569
      %v5577 = vpop.xlane.xlu0 %5576
      %v5578 = vmul.f32 %v5575, %v761
      %v5579 = vmul.f32 %v5577, %v761
      %v5580 = vsub.f32 %v5568, %v5578
      %v5581 = vsub.f32 %v5569, %v5579
      %v5582 = vmul.f32 %v5580, %v5580
      %v5583 = vmul.f32 %v5581, %v5581
      %5584 = vadd.xlane.f32.xlu0 %v5582
      %v5585 = vpop.xlane.xlu0 %5584
      %5586 = vadd.xlane.f32.xlu0 %v5583
      %v5587 = vpop.xlane.xlu0 %5586
      %v5588 = vmul.f32 %v5585, %v761
      %v5589 = vmul.f32 %v5587, %v761
      %v5590 = vadd.f32 %v5588, 1e-05
      %v5591 = vadd.f32 %v5589, 1e-05
      %v5592 = vrsqrt.pop %v5590
      %v5593 = vrsqrt.pop %v5591
      %v5594 = vmul.f32 %v5580, %v5592
      %v5595 = vmul.f32 %v5581, %v5593
      %v5597 = vlaneseq
      %v5598 = vshrl.u32 %v5597, 7
      %v5599 = vsub.s32 0, %v5598
      %v5600 = vrot.slane %v5571, %v5599
      %v5602 = vmul.f32 %v5594, %v5600
      %v5603 = vmul.f32 %v5595, %v5600
      %v5605 = vlaneseq
      %v5606 = vshrl.u32 %v5605, 7
      %v5607 = vsub.s32 0, %v5606
      %v5608 = vrot.slane %v5573, %v5607
      %v5610 = vadd.f32 %v5602, %v5608
      %v5611 = vadd.f32 %v5603, %v5608
      %v5612 = vpack.c.bf16 %v5611, %v5610
      %s5613 = scalar_lea.vmem %s14, 128
      %v5614 = vld [vmem:[%s5613] sm:$0xff]
      %v5615 = vld [vmem:[%s5613 + $0x8] sm:$0xff]
      %v5616 = vld [vmem:[%s5613 + $0x10] sm:$0xff]
      %v5617 = vld [vmem:[%s5613 + $0x18] sm:$0xff]
      %v5618 = vld [vmem:[%s5613 + $0x20] sm:$0xff]
      %v5619 = vld [vmem:[%s5613 + $0x28] sm:$0xff]
      %v5620 = vld [vmem:[%s5613 + $0x30] sm:$0xff]
      %v5621 = vld [vmem:[%s5613 + $0x38] sm:$0xff]
      %v5622 = vld [vmem:[%s5613 + $0x40] sm:$0xff]
      %v5623 = vld [vmem:[%s5613 + $0x48] sm:$0xff]
      %v5624 = vld [vmem:[%s5613 + $0x50] sm:$0xff]
      %v5625 = vld [vmem:[%s5613 + $0x58] sm:$0xff]
      %v5626 = vld [vmem:[%s5613 + $0x60] sm:$0xff]
      %v5627 = vld [vmem:[%s5613 + $0x68] sm:$0xff]
      %v5628 = vld [vmem:[%s5613 + $0x70] sm:$0xff]
      %v5629 = vld [vmem:[%s5613 + $0x78] sm:$0xff]
      %s5630 = scalar_lea.vmem %s15, 2
      %v5631 = vld [vmem:[%s5630] sm:$0x3]
      %v5633 = vlaneseq
      %v5634 = vshrl.u32 %v5633, 7
      %v5635 = vsub.s32 0, %v5634
      %v5636 = vrot.slane %v5631, %v5635
      %v5637 = vlaneseq
      %v5638 = vshrl.u32 %v5637, 7
      %v5639 = vsub.s32 1, %v5638
      %v5640 = vrot.slane %v5631, %v5639
      %v5659 = vunpack.c.l.b16 %v5614
      %v5660 = vunpack.c.h.b16 %v5614
      %v5661 = vunpack.c.l.b16 %v5615
      %v5662 = vunpack.c.h.b16 %v5615
      %v5663 = vunpack.c.l.b16 %v5616
      %v5664 = vunpack.c.h.b16 %v5616
      %v5665 = vunpack.c.l.b16 %v5617
      %v5666 = vunpack.c.h.b16 %v5617
      %v5667 = vunpack.c.l.b16 %v5618
      %v5668 = vunpack.c.h.b16 %v5618
      %v5669 = vunpack.c.l.b16 %v5619
      %v5670 = vunpack.c.h.b16 %v5619
      %v5671 = vunpack.c.l.b16 %v5620
      %v5672 = vunpack.c.h.b16 %v5620
      %v5673 = vunpack.c.l.b16 %v5621
      %v5674 = vunpack.c.h.b16 %v5621
      %v5675 = vunpack.c.l.b16 %v5622
      %v5676 = vunpack.c.h.b16 %v5622
      %v5677 = vunpack.c.l.b16 %v5623
      %v5678 = vunpack.c.h.b16 %v5623
      %v5679 = vunpack.c.l.b16 %v5624
      %v5680 = vunpack.c.h.b16 %v5624
      %v5681 = vunpack.c.l.b16 %v5625
      %v5682 = vunpack.c.h.b16 %v5625
      %v5683 = vunpack.c.l.b16 %v5626
      %v5684 = vunpack.c.h.b16 %v5626
      %v5685 = vunpack.c.l.b16 %v5627
      %v5686 = vunpack.c.h.b16 %v5627
      %v5687 = vunpack.c.l.b16 %v5628
      %v5688 = vunpack.c.h.b16 %v5628
      %v5689 = vunpack.c.l.b16 %v5629
      %v5690 = vunpack.c.h.b16 %v5629
      %v5691 = vpack.c.b16 %v5661, %v5659
      %v5692 = vpack.c.b16 %v5662, %v5660
      %v5693 = vpack.c.b16 %v5665, %v5663
      %v5694 = vpack.c.b16 %v5666, %v5664
      %v5695 = vpack.c.b16 %v5669, %v5667
      %v5696 = vpack.c.b16 %v5670, %v5668
      %v5697 = vpack.c.b16 %v5673, %v5671
      %v5698 = vpack.c.b16 %v5674, %v5672
      %v5699 = vpack.c.b16 %v5677, %v5675
      %v5700 = vpack.c.b16 %v5678, %v5676
      %v5701 = vpack.c.b16 %v5681, %v5679
      %v5702 = vpack.c.b16 %v5682, %v5680
      %v5703 = vpack.c.b16 %v5685, %v5683
      %v5704 = vpack.c.b16 %v5686, %v5684
      %v5705 = vpack.c.b16 %v5689, %v5687
      %v5706 = vpack.c.b16 %v5690, %v5688
      %5723 = vmatprep.subr.bf16.mxu0 %v5692
      %5724 = vmatpush1.bf16.msra.mxu0 %v5691
      %5725 = vmatprep.subr.bf16.mxu0 %v5694
      %5726 = vmatpush1.bf16.msra.mxu0 %v5693
      %5727 = vmatprep.subr.bf16.mxu0 %v5696
      %5728 = vmatpush1.bf16.msra.mxu0 %v5695
      %5729 = vmatprep.subr.bf16.mxu0 %v5698
      %5730 = vmatpush1.bf16.msra.mxu0 %v5697
      %5731 = vmatprep.subr.bf16.mxu0 %v5700
      %5732 = vmatpush1.bf16.msra.mxu0 %v5699
      %5733 = vmatprep.subr.bf16.mxu0 %v5702
      %5734 = vmatpush1.bf16.msra.mxu0 %v5701
      %5735 = vmatprep.subr.bf16.mxu0 %v5704
      %5736 = vmatpush1.bf16.msra.mxu0 %v5703
      %5737 = vmatprep.subr.bf16.mxu0 %v5706
      %5738 = vmatpush1.bf16.msra.mxu0 %v5705
      %5739 = vmatprep.subr.bf16.mxu0 0
      %5740 = vmatpush1.bf16.msra.mxu0 0
      %5741 = vmatprep.subr.bf16.mxu0 0
      %5742 = vmatpush1.bf16.msra.mxu0 0
      %5743 = vmatprep.subr.bf16.mxu0 0
      %5744 = vmatpush1.bf16.msra.mxu0 0
      %5745 = vmatprep.subr.bf16.mxu0 0
      %5746 = vmatpush1.bf16.msra.mxu0 0
      %5747 = vmatprep.subr.bf16.mxu0 0
      %5748 = vmatpush1.bf16.msra.mxu0 0
      %5749 = vmatprep.subr.bf16.mxu0 0
      %5750 = vmatpush1.bf16.msra.mxu0 0
      %5751 = vmatprep.subr.bf16.mxu0 0
      %5752 = vmatpush1.bf16.msra.mxu0 0
      %5753 = vmatprep.subr.bf16.mxu0 0
      %5754 = vmatpush1.bf16.msra.mxu0 0
      %5755 = vmatprep.mubr.bf16.mxu0 0
      %5756 = vmatmul.mubr.bf16.gmra.mrb[0].mxu0 %v5612
      %v5757 = vpop.f32.mrb[0].mxu0
      %v5758 = vadd.f32 %v5636, %v5757
      %v5759 = vpop.f32.mrb[0].mxu0
      %v5760 = vadd.f32 %v5640, %v5759
      %v5761 = vpop.f32.mrb[0].mxu0
      %v5762 = vadd.f32 %v5636, %v5761
      %v5763 = vpop.f32.mrb[0].mxu0
      %v5764 = vadd.f32 %v5640, %v5763
      %5765 = vdwg.mxu0
      %v5766 = vmul.f32 %v5758, %v5758
      %v5767 = vmul.f32 %v5760, %v5760
      %v5768 = vmul.f32 %v5762, %v5762
      %v5769 = vmul.f32 %v5764, %v5764
      %v5770 = vmul.f32 %v5758, %v5766
      %v5771 = vmul.f32 %v5760, %v5767
      %v5772 = vmul.f32 %v5762, %v5768
      %v5773 = vmul.f32 %v5764, %v5769
      %v5774 = vmul.f32 %v5770, 0.044715
      %v5775 = vmul.f32 %v5771, 0.044715
      %v5776 = vmul.f32 %v5772, 0.044715
      %v5777 = vmul.f32 %v5773, 0.044715
      %v5778 = vadd.f32 %v5758, %v5774
      %v5779 = vadd.f32 %v5760, %v5775
      %v5780 = vadd.f32 %v5762, %v5776
      %v5781 = vadd.f32 %v5764, %v5777
      %v5782 = vmul.f32 %v5778, 0.7978846
      %v5783 = vmul.f32 %v5779, 0.7978846
      %v5784 = vmul.f32 %v5780, 0.7978846
      %v5785 = vmul.f32 %v5781, 0.7978846
      %v5786 = vtanh.pop %v5782
      %v5787 = vtanh.pop %v5783
      %v5788 = vtanh.pop %v5784
      %v5789 = vtanh.pop %v5785
      %v5790 = vadd.f32 %v5786, 1.0
      %v5791 = vadd.f32 %v5787, 1.0
      %v5792 = vadd.f32 %v5788, 1.0
      %v5793 = vadd.f32 %v5789, 1.0
      %v5794 = vmul.f32 %v5790, 0.5
      %v5795 = vmul.f32 %v5791, 0.5
      %v5796 = vmul.f32 %v5792, 0.5
      %v5797 = vmul.f32 %v5793, 0.5
      %v5798 = vmul.f32 %v5758, %v5794
      %v5799 = vmul.f32 %v5760, %v5795
      %v5800 = vmul.f32 %v5762, %v5796
      %v5801 = vmul.f32 %v5764, %v5797
      %v5802 = vpack.c.bf16 %v5800, %v5798
      %v5803 = vpack.c.bf16 %v5801, %v5799
      %s5804 = scalar_lea.vmem %s16, 128
      %v5805 = vld [vmem:[%s5804] sm:$0xf]
      %v5806 = vld [vmem:[%s5804 + $0x4] sm:$0xf]
      %v5807 = vld [vmem:[%s5804 + $0x8] sm:$0xf]
      %v5808 = vld [vmem:[%s5804 + $0xc] sm:$0xf]
      %v5809 = vld [vmem:[%s5804 + $0x10] sm:$0xf]
      %v5810 = vld [vmem:[%s5804 + $0x14] sm:$0xf]
      %v5811 = vld [vmem:[%s5804 + $0x18] sm:$0xf]
      %v5812 = vld [vmem:[%s5804 + $0x1c] sm:$0xf]
      %v5813 = vld [vmem:[%s5804 + $0x20] sm:$0xf]
      %v5814 = vld [vmem:[%s5804 + $0x24] sm:$0xf]
      %v5815 = vld [vmem:[%s5804 + $0x28] sm:$0xf]
      %v5816 = vld [vmem:[%s5804 + $0x2c] sm:$0xf]
      %v5817 = vld [vmem:[%s5804 + $0x30] sm:$0xf]
      %v5818 = vld [vmem:[%s5804 + $0x34] sm:$0xf]
      %v5819 = vld [vmem:[%s5804 + $0x38] sm:$0xf]
      %v5820 = vld [vmem:[%s5804 + $0x3c] sm:$0xf]
      %v5821 = vld [vmem:[%s5804 + $0x40] sm:$0xf]
      %v5822 = vld [vmem:[%s5804 + $0x44] sm:$0xf]
      %v5823 = vld [vmem:[%s5804 + $0x48] sm:$0xf]
      %v5824 = vld [vmem:[%s5804 + $0x4c] sm:$0xf]
      %v5825 = vld [vmem:[%s5804 + $0x50] sm:$0xf]
      %v5826 = vld [vmem:[%s5804 + $0x54] sm:$0xf]
      %v5827 = vld [vmem:[%s5804 + $0x58] sm:$0xf]
      %v5828 = vld [vmem:[%s5804 + $0x5c] sm:$0xf]
      %v5829 = vld [vmem:[%s5804 + $0x60] sm:$0xf]
      %v5830 = vld [vmem:[%s5804 + $0x64] sm:$0xf]
      %v5831 = vld [vmem:[%s5804 + $0x68] sm:$0xf]
      %v5832 = vld [vmem:[%s5804 + $0x6c] sm:$0xf]
      %v5833 = vld [vmem:[%s5804 + $0x70] sm:$0xf]
      %v5834 = vld [vmem:[%s5804 + $0x74] sm:$0xf]
      %v5835 = vld [vmem:[%s5804 + $0x78] sm:$0xf]
      %v5836 = vld [vmem:[%s5804 + $0x7c] sm:$0xf]
      %s5837 = scalar_lea.vmem %s17, 1
      %v5838 = vld [vmem:[%s5837] sm:$0x1]
      %v5840 = vlaneseq
      %v5841 = vshrl.u32 %v5840, 7
      %v5842 = vsub.s32 0, %v5841
      %v5843 = vrot.slane %v5838, %v5842
      %v5877 = vunpack.c.l.b16 %v5805
      %v5878 = vunpack.c.l.b16 %v5806
      %v5879 = vunpack.c.l.b16 %v5807
      %v5880 = vunpack.c.l.b16 %v5808
      %v5881 = vunpack.c.l.b16 %v5809
      %v5882 = vunpack.c.l.b16 %v5810
      %v5883 = vunpack.c.l.b16 %v5811
      %v5884 = vunpack.c.l.b16 %v5812
      %v5885 = vunpack.c.l.b16 %v5813
      %v5886 = vunpack.c.l.b16 %v5814
      %v5887 = vunpack.c.l.b16 %v5815
      %v5888 = vunpack.c.l.b16 %v5816
      %v5889 = vunpack.c.l.b16 %v5817
      %v5890 = vunpack.c.l.b16 %v5818
      %v5891 = vunpack.c.l.b16 %v5819
      %v5892 = vunpack.c.l.b16 %v5820
      %v5893 = vunpack.c.l.b16 %v5821
      %v5894 = vunpack.c.l.b16 %v5822
      %v5895 = vunpack.c.l.b16 %v5823
      %v5896 = vunpack.c.l.b16 %v5824
      %v5897 = vunpack.c.l.b16 %v5825
      %v5898 = vunpack.c.l.b16 %v5826
      %v5899 = vunpack.c.l.b16 %v5827
      %v5900 = vunpack.c.l.b16 %v5828
      %v5901 = vunpack.c.l.b16 %v5829
      %v5902 = vunpack.c.l.b16 %v5830
      %v5903 = vunpack.c.l.b16 %v5831
      %v5904 = vunpack.c.l.b16 %v5832
      %v5905 = vunpack.c.l.b16 %v5833
      %v5906 = vunpack.c.l.b16 %v5834
      %v5907 = vunpack.c.l.b16 %v5835
      %v5908 = vunpack.c.l.b16 %v5836
      %v5909 = vpack.c.b16 %v5878, %v5877
      %v5910 = vpack.c.b16 %v5880, %v5879
      %v5911 = vpack.c.b16 %v5882, %v5881
      %v5912 = vpack.c.b16 %v5884, %v5883
      %v5913 = vpack.c.b16 %v5886, %v5885
      %v5914 = vpack.c.b16 %v5888, %v5887
      %v5915 = vpack.c.b16 %v5890, %v5889
      %v5916 = vpack.c.b16 %v5892, %v5891
      %v5917 = vpack.c.b16 %v5894, %v5893
      %v5918 = vpack.c.b16 %v5896, %v5895
      %v5919 = vpack.c.b16 %v5898, %v5897
      %v5920 = vpack.c.b16 %v5900, %v5899
      %v5921 = vpack.c.b16 %v5902, %v5901
      %v5922 = vpack.c.b16 %v5904, %v5903
      %v5923 = vpack.c.b16 %v5906, %v5905
      %v5924 = vpack.c.b16 %v5908, %v5907
      %5941 = vmatprep.subr.bf16.mxu0 0
      %5942 = vmatpush1.bf16.msra.mxu0 %v5909
      %5943 = vmatprep.subr.bf16.mxu0 0
      %5944 = vmatpush1.bf16.msra.mxu0 %v5910
      %5945 = vmatprep.subr.bf16.mxu0 0
      %5946 = vmatpush1.bf16.msra.mxu0 %v5911
      %5947 = vmatprep.subr.bf16.mxu0 0
      %5948 = vmatpush1.bf16.msra.mxu0 %v5912
      %5949 = vmatprep.subr.bf16.mxu0 0
      %5950 = vmatpush1.bf16.msra.mxu0 %v5913
      %5951 = vmatprep.subr.bf16.mxu0 0
      %5952 = vmatpush1.bf16.msra.mxu0 %v5914
      %5953 = vmatprep.subr.bf16.mxu0 0
      %5954 = vmatpush1.bf16.msra.mxu0 %v5915
      %5955 = vmatprep.subr.bf16.mxu0 0
      %5956 = vmatpush1.bf16.msra.mxu0 %v5916
      %5957 = vmatprep.subr.bf16.mxu0 0
      %5958 = vmatpush1.bf16.msra.mxu0 %v5917
      %5959 = vmatprep.subr.bf16.mxu0 0
      %5960 = vmatpush1.bf16.msra.mxu0 %v5918
      %5961 = vmatprep.subr.bf16.mxu0 0
      %5962 = vmatpush1.bf16.msra.mxu0 %v5919
      %5963 = vmatprep.subr.bf16.mxu0 0
      %5964 = vmatpush1.bf16.msra.mxu0 %v5920
      %5965 = vmatprep.subr.bf16.mxu0 0
      %5966 = vmatpush1.bf16.msra.mxu0 %v5921
      %5967 = vmatprep.subr.bf16.mxu0 0
      %5968 = vmatpush1.bf16.msra.mxu0 %v5922
      %5969 = vmatprep.subr.bf16.mxu0 0
      %5970 = vmatpush1.bf16.msra.mxu0 %v5923
      %5971 = vmatprep.subr.bf16.mxu0 0
      %5972 = vmatpush1.bf16.msra.mxu0 %v5924
      %5973 = vmatprep.mubr.bf16.mxu0 %v5803
      %5974 = vmatmul.mubr.bf16.gmra.mrb[0].mxu0 %v5802
      %v5975 = vpop.f32.mrb[0].mxu0
      %v5976 = vadd.f32 %v5843, %v5975
      %v5977 = vpop.f32.mrb[0].mxu0
      %v5978 = vpop.f32.mrb[0].mxu0
      %v5979 = vadd.f32 %v5843, %v5978
      %v5980 = vpop.f32.mrb[0].mxu0
      %5981 = vdwg.mxu0
      %v5982 = vunpack.c.l.bf16 %v5612
      %v5983 = vunpack.c.h.bf16 %v5612
      %v5984 = vadd.f32 %v5976, %v5982
      %v5985 = vadd.f32 %v5979, %v5983
      %s5986 = scalar_lea.vmem %s18, 1
      %v5987 = vld [vmem:[%s5986] sm:$0x1]
      %s5988 = scalar_lea.vmem %s19, 1
      %v5989 = vld [vmem:[%s5988] sm:$0x1]
      %5990 = vadd.xlane.f32.xlu0 %v5984
      %v5991 = vpop.xlane.xlu0 %5990
      %5992 = vadd.xlane.f32.xlu0 %v5985
      %v5993 = vpop.xlane.xlu0 %5992
      %v5994 = vmul.f32 %v5991, %v761
      %v5995 = vmul.f32 %v5993, %v761
      %v5996 = vsub.f32 %v5984, %v5994
      %v5997 = vsub.f32 %v5985, %v5995
      %v5998 = vmul.f32 %v5996, %v5996
      %v5999 = vmul.f32 %v5997, %v5997
      %6000 = vadd.xlane.f32.xlu0 %v5998
      %v6001 = vpop.xlane.xlu0 %6000
      %6002 = vadd.xlane.f32.xlu0 %v5999
      %v6003 = vpop.xlane.xlu0 %6002
      %v6004 = vmul.f32 %v6001, %v761
      %v6005 = vmul.f32 %v6003, %v761
      %v6006 = vadd.f32 %v6004, 1e-05
      %v6007 = vadd.f32 %v6005, 1e-05
      %v6008 = vrsqrt.pop %v6006
      %v6009 = vrsqrt.pop %v6007
      %v6010 = vmul.f32 %v5996, %v6008
      %v6011 = vmul.f32 %v5997, %v6009
      %v6013 = vlaneseq
      %v6014 = vshrl.u32 %v6013, 7
      %v6015 = vsub.s32 0, %v6014
      %v6016 = vrot.slane %v5987, %v6015
      %v6018 = vmul.f32 %v6010, %v6016
      %v6019 = vmul.f32 %v6011, %v6016
      %v6021 = vlaneseq
      %v6022 = vshrl.u32 %v6021, 7
      %v6023 = vsub.s32 0, %v6022
      %v6024 = vrot.slane %v5989, %v6023
      %v6026 = vadd.f32 %v6018, %v6024
      %v6027 = vadd.f32 %v6019, %v6024
      %v6028 = vpack.c.bf16 %v6027, %v6026
      %s6029 = scalar_lea.vmem %s11, 2
      %v6030 = vld [vmem:[%s6029] sm:$0x1]
      %s6031 = scalar_lea.vmem %s4, 512
      %v6032 = vld [vmem:[%s6031] sm:$0xf]
      %v6033 = vld [vmem:[%s6031 + $0x4] sm:$0xf]
      %v6034 = vld [vmem:[%s6031 + $0x8] sm:$0xf]
      %v6035 = vld [vmem:[%s6031 + $0xc] sm:$0xf]
      %v6036 = vld [vmem:[%s6031 + $0x10] sm:$0xf]
      %v6037 = vld [vmem:[%s6031 + $0x14] sm:$0xf]
      %v6038 = vld [vmem:[%s6031 + $0x18] sm:$0xf]
      %v6039 = vld [vmem:[%s6031 + $0x1c] sm:$0xf]
      %v6040 = vld [vmem:[%s6031 + $0x20] sm:$0xf]
      %v6041 = vld [vmem:[%s6031 + $0x24] sm:$0xf]
      %v6042 = vld [vmem:[%s6031 + $0x28] sm:$0xf]
      %v6043 = vld [vmem:[%s6031 + $0x2c] sm:$0xf]
      %v6044 = vld [vmem:[%s6031 + $0x30] sm:$0xf]
      %v6045 = vld [vmem:[%s6031 + $0x34] sm:$0xf]
      %v6046 = vld [vmem:[%s6031 + $0x38] sm:$0xf]
      %v6047 = vld [vmem:[%s6031 + $0x3c] sm:$0xf]
      %s6048 = scalar_lea.vmem %s5, 8
      %v6049 = vld [vmem:[%s6048] sm:$0x1]
      %v6051 = vlaneseq
      %v6052 = vshrl.u32 %v6051, 7
      %v6053 = vsub.s32 0, %v6052
      %v6054 = vrot.slane %v6049, %v6053
      %v6072 = vunpack.c.l.b16 %v6032
      %v6073 = vunpack.c.l.b16 %v6033
      %v6074 = vunpack.c.l.b16 %v6034
      %v6075 = vunpack.c.l.b16 %v6035
      %v6076 = vunpack.c.l.b16 %v6036
      %v6077 = vunpack.c.l.b16 %v6037
      %v6078 = vunpack.c.l.b16 %v6038
      %v6079 = vunpack.c.l.b16 %v6039
      %v6080 = vunpack.c.l.b16 %v6040
      %v6081 = vunpack.c.l.b16 %v6041
      %v6082 = vunpack.c.l.b16 %v6042
      %v6083 = vunpack.c.l.b16 %v6043
      %v6084 = vunpack.c.l.b16 %v6044
      %v6085 = vunpack.c.l.b16 %v6045
      %v6086 = vunpack.c.l.b16 %v6046
      %v6087 = vunpack.c.l.b16 %v6047
      %v6088 = vpack.c.b16 %v6073, %v6072
      %v6089 = vpack.c.b16 %v6075, %v6074
      %v6090 = vpack.c.b16 %v6077, %v6076
      %v6091 = vpack.c.b16 %v6079, %v6078
      %v6092 = vpack.c.b16 %v6081, %v6080
      %v6093 = vpack.c.b16 %v6083, %v6082
      %v6094 = vpack.c.b16 %v6085, %v6084
      %v6095 = vpack.c.b16 %v6087, %v6086
      %6104 = vmatprep.subr.bf16.mxu0 0
      %6105 = vmatpush1.bf16.msra.mxu0 %v6088
      %6106 = vmatprep.subr.bf16.mxu0 0
      %6107 = vmatpush1.bf16.msra.mxu0 %v6089
      %6108 = vmatprep.subr.bf16.mxu0 0
      %6109 = vmatpush1.bf16.msra.mxu0 %v6090
      %6110 = vmatprep.subr.bf16.mxu0 0
      %6111 = vmatpush1.bf16.msra.mxu0 %v6091
      %6112 = vmatprep.subr.bf16.mxu0 0
      %6113 = vmatpush1.bf16.msra.mxu0 %v6092
      %6114 = vmatprep.subr.bf16.mxu0 0
      %6115 = vmatpush1.bf16.msra.mxu0 %v6093
      %6116 = vmatprep.subr.bf16.mxu0 0
      %6117 = vmatpush1.bf16.msra.mxu0 %v6094
      %6118 = vmatprep.subr.bf16.mxu0 0
      %6119 = vmatpush1.bf16.msra.mxu0 %v6095
      %6120 = vmatprep.subr.bf16.mxu0 0
      %6121 = vmatpush1.bf16.msra.mxu0 0
      %6122 = vmatprep.subr.bf16.mxu0 0
      %6123 = vmatpush1.bf16.msra.mxu0 0
      %6124 = vmatprep.subr.bf16.mxu0 0
      %6125 = vmatpush1.bf16.msra.mxu0 0
      %6126 = vmatprep.subr.bf16.mxu0 0
      %6127 = vmatpush1.bf16.msra.mxu0 0
      %6128 = vmatprep.subr.bf16.mxu0 0
      %6129 = vmatpush1.bf16.msra.mxu0 0
      %6130 = vmatprep.subr.bf16.mxu0 0
      %6131 = vmatpush1.bf16.msra.mxu0 0
      %6132 = vmatprep.subr.bf16.mxu0 0
      %6133 = vmatpush1.bf16.msra.mxu0 0
      %6134 = vmatprep.subr.bf16.mxu0 0
      %6135 = vmatpush1.bf16.msra.mxu0 0
      %6136 = vmatprep.mubr.bf16.mxu0 0
      %6137 = vmatmul.mubr.bf16.gmra.mrb[0].mxu0 %v6028
      %v6138 = vpop.f32.mrb[0].mxu0
      %v6139 = vadd.f32 %v6054, %v6138
      %v6140 = vpop.f32.mrb[0].mxu0
      %v6141 = vpop.f32.mrb[0].mxu0
      %v6142 = vadd.f32 %v6054, %v6141
      %v6143 = vpop.f32.mrb[0].mxu0
      %6144 = vdwg.mxu0
      %s6145 = scalar_lea.vmem %s6, 512
      %v6146 = vld [vmem:[%s6145] sm:$0xf]
      %v6147 = vld [vmem:[%s6145 + $0x4] sm:$0xf]
      %v6148 = vld [vmem:[%s6145 + $0x8] sm:$0xf]
      %v6149 = vld [vmem:[%s6145 + $0xc] sm:$0xf]
      %v6150 = vld [vmem:[%s6145 + $0x10] sm:$0xf]
      %v6151 = vld [vmem:[%s6145 + $0x14] sm:$0xf]
      %v6152 = vld [vmem:[%s6145 + $0x18] sm:$0xf]
      %v6153 = vld [vmem:[%s6145 + $0x1c] sm:$0xf]
      %v6154 = vld [vmem:[%s6145 + $0x20] sm:$0xf]
      %v6155 = vld [vmem:[%s6145 + $0x24] sm:$0xf]
      %v6156 = vld [vmem:[%s6145 + $0x28] sm:$0xf]
      %v6157 = vld [vmem:[%s6145 + $0x2c] sm:$0xf]
      %v6158 = vld [vmem:[%s6145 + $0x30] sm:$0xf]
      %v6159 = vld [vmem:[%s6145 + $0x34] sm:$0xf]
      %v6160 = vld [vmem:[%s6145 + $0x38] sm:$0xf]
      %v6161 = vld [vmem:[%s6145 + $0x3c] sm:$0xf]
      %s6162 = scalar_lea.vmem %s7, 8
      %v6163 = vld [vmem:[%s6162] sm:$0x1]
      %v6165 = vlaneseq
      %v6166 = vshrl.u32 %v6165, 7
      %v6167 = vsub.s32 0, %v6166
      %v6168 = vrot.slane %v6163, %v6167
      %v6186 = vunpack.c.l.b16 %v6146
      %v6187 = vunpack.c.l.b16 %v6147
      %v6188 = vunpack.c.l.b16 %v6148
      %v6189 = vunpack.c.l.b16 %v6149
      %v6190 = vunpack.c.l.b16 %v6150
      %v6191 = vunpack.c.l.b16 %v6151
      %v6192 = vunpack.c.l.b16 %v6152
      %v6193 = vunpack.c.l.b16 %v6153
      %v6194 = vunpack.c.l.b16 %v6154
      %v6195 = vunpack.c.l.b16 %v6155
      %v6196 = vunpack.c.l.b16 %v6156
      %v6197 = vunpack.c.l.b16 %v6157
      %v6198 = vunpack.c.l.b16 %v6158
      %v6199 = vunpack.c.l.b16 %v6159
      %v6200 = vunpack.c.l.b16 %v6160
      %v6201 = vunpack.c.l.b16 %v6161
      %v6202 = vpack.c.b16 %v6187, %v6186
      %v6203 = vpack.c.b16 %v6189, %v6188
      %v6204 = vpack.c.b16 %v6191, %v6190
      %v6205 = vpack.c.b16 %v6193, %v6192
      %v6206 = vpack.c.b16 %v6195, %v6194
      %v6207 = vpack.c.b16 %v6197, %v6196
      %v6208 = vpack.c.b16 %v6199, %v6198
      %v6209 = vpack.c.b16 %v6201, %v6200
      %6218 = vmatprep.subr.bf16.mxu0 0
      %6219 = vmatpush1.bf16.msra.mxu0 %v6202
      %6220 = vmatprep.subr.bf16.mxu0 0
      %6221 = vmatpush1.bf16.msra.mxu0 %v6203
      %6222 = vmatprep.subr.bf16.mxu0 0
      %6223 = vmatpush1.bf16.msra.mxu0 %v6204
      %6224 = vmatprep.subr.bf16.mxu0 0
      %6225 = vmatpush1.bf16.msra.mxu0 %v6205
      %6226 = vmatprep.subr.bf16.mxu0 0
      %6227 = vmatpush1.bf16.msra.mxu0 %v6206
      %6228 = vmatprep.subr.bf16.mxu0 0
      %6229 = vmatpush1.bf16.msra.mxu0 %v6207
      %6230 = vmatprep.subr.bf16.mxu0 0
      %6231 = vmatpush1.bf16.msra.mxu0 %v6208
      %6232 = vmatprep.subr.bf16.mxu0 0
      %6233 = vmatpush1.bf16.msra.mxu0 %v6209
      %6234 = vmatprep.subr.bf16.mxu0 0
      %6235 = vmatpush1.bf16.msra.mxu0 0
      %6236 = vmatprep.subr.bf16.mxu0 0
      %6237 = vmatpush1.bf16.msra.mxu0 0
      %6238 = vmatprep.subr.bf16.mxu0 0
      %6239 = vmatpush1.bf16.msra.mxu0 0
      %6240 = vmatprep.subr.bf16.mxu0 0
      %6241 = vmatpush1.bf16.msra.mxu0 0
      %6242 = vmatprep.subr.bf16.mxu0 0
      %6243 = vmatpush1.bf16.msra.mxu0 0
      %6244 = vmatprep.subr.bf16.mxu0 0
      %6245 = vmatpush1.bf16.msra.mxu0 0
      %6246 = vmatprep.subr.bf16.mxu0 0
      %6247 = vmatpush1.bf16.msra.mxu0 0
      %6248 = vmatprep.subr.bf16.mxu0 0
      %6249 = vmatpush1.bf16.msra.mxu0 0
      %6250 = vmatprep.mubr.bf16.mxu0 0
      %6251 = vmatmul.mubr.bf16.gmra.mrb[0].mxu0 %v6028
      %v6252 = vpop.f32.mrb[0].mxu0
      %v6253 = vadd.f32 %v6168, %v6252
      %v6254 = vpop.f32.mrb[0].mxu0
      %v6255 = vpop.f32.mrb[0].mxu0
      %v6256 = vadd.f32 %v6168, %v6255
      %v6257 = vpop.f32.mrb[0].mxu0
      %6258 = vdwg.mxu0
      %s6259 = scalar_lea.vmem %s8, 512
      %v6260 = vld [vmem:[%s6259] sm:$0xf]
      %v6261 = vld [vmem:[%s6259 + $0x4] sm:$0xf]
      %v6262 = vld [vmem:[%s6259 + $0x8] sm:$0xf]
      %v6263 = vld [vmem:[%s6259 + $0xc] sm:$0xf]
      %v6264 = vld [vmem:[%s6259 + $0x10] sm:$0xf]
      %v6265 = vld [vmem:[%s6259 + $0x14] sm:$0xf]
      %v6266 = vld [vmem:[%s6259 + $0x18] sm:$0xf]
      %v6267 = vld [vmem:[%s6259 + $0x1c] sm:$0xf]
      %v6268 = vld [vmem:[%s6259 + $0x20] sm:$0xf]
      %v6269 = vld [vmem:[%s6259 + $0x24] sm:$0xf]
      %v6270 = vld [vmem:[%s6259 + $0x28] sm:$0xf]
      %v6271 = vld [vmem:[%s6259 + $0x2c] sm:$0xf]
      %v6272 = vld [vmem:[%s6259 + $0x30] sm:$0xf]
      %v6273 = vld [vmem:[%s6259 + $0x34] sm:$0xf]
      %v6274 = vld [vmem:[%s6259 + $0x38] sm:$0xf]
      %v6275 = vld [vmem:[%s6259 + $0x3c] sm:$0xf]
      %s6276 = scalar_lea.vmem %s9, 8
      %v6277 = vld [vmem:[%s6276] sm:$0x1]
      %v6279 = vlaneseq
      %v6280 = vshrl.u32 %v6279, 7
      %v6281 = vsub.s32 0, %v6280
      %v6282 = vrot.slane %v6277, %v6281
      %v6300 = vunpack.c.l.b16 %v6260
      %v6301 = vunpack.c.l.b16 %v6261
      %v6302 = vunpack.c.l.b16 %v6262
      %v6303 = vunpack.c.l.b16 %v6263
      %v6304 = vunpack.c.l.b16 %v6264
      %v6305 = vunpack.c.l.b16 %v6265
      %v6306 = vunpack.c.l.b16 %v6266
      %v6307 = vunpack.c.l.b16 %v6267
      %v6308 = vunpack.c.l.b16 %v6268
      %v6309 = vunpack.c.l.b16 %v6269
      %v6310 = vunpack.c.l.b16 %v6270
      %v6311 = vunpack.c.l.b16 %v6271
      %v6312 = vunpack.c.l.b16 %v6272
      %v6313 = vunpack.c.l.b16 %v6273
      %v6314 = vunpack.c.l.b16 %v6274
      %v6315 = vunpack.c.l.b16 %v6275
      %v6316 = vpack.c.b16 %v6301, %v6300
      %v6317 = vpack.c.b16 %v6303, %v6302
      %v6318 = vpack.c.b16 %v6305, %v6304
      %v6319 = vpack.c.b16 %v6307, %v6306
      %v6320 = vpack.c.b16 %v6309, %v6308
      %v6321 = vpack.c.b16 %v6311, %v6310
      %v6322 = vpack.c.b16 %v6313, %v6312
      %v6323 = vpack.c.b16 %v6315, %v6314
      %6332 = vmatprep.subr.bf16.mxu0 0
      %6333 = vmatpush1.bf16.msra.mxu0 %v6316
      %6334 = vmatprep.subr.bf16.mxu0 0
      %6335 = vmatpush1.bf16.msra.mxu0 %v6317
      %6336 = vmatprep.subr.bf16.mxu0 0
      %6337 = vmatpush1.bf16.msra.mxu0 %v6318
      %6338 = vmatprep.subr.bf16.mxu0 0
      %6339 = vmatpush1.bf16.msra.mxu0 %v6319
      %6340 = vmatprep.subr.bf16.mxu0 0
      %6341 = vmatpush1.bf16.msra.mxu0 %v6320
      %6342 = vmatprep.subr.bf16.mxu0 0
      %6343 = vmatpush1.bf16.msra.mxu0 %v6321
      %6344 = vmatprep.subr.bf16.mxu0 0
      %6345 = vmatpush1.bf16.msra.mxu0 %v6322
      %6346 = vmatprep.subr.bf16.mxu0 0
      %6347 = vmatpush1.bf16.msra.mxu0 %v6323
      %6348 = vmatprep.subr.bf16.mxu0 0
      %6349 = vmatpush1.bf16.msra.mxu0 0
      %6350 = vmatprep.subr.bf16.mxu0 0
      %6351 = vmatpush1.bf16.msra.mxu0 0
      %6352 = vmatprep.subr.bf16.mxu0 0
      %6353 = vmatpush1.bf16.msra.mxu0 0
      %6354 = vmatprep.subr.bf16.mxu0 0
      %6355 = vmatpush1.bf16.msra.mxu0 0
      %6356 = vmatprep.subr.bf16.mxu0 0
      %6357 = vmatpush1.bf16.msra.mxu0 0
      %6358 = vmatprep.subr.bf16.mxu0 0
      %6359 = vmatpush1.bf16.msra.mxu0 0
      %6360 = vmatprep.subr.bf16.mxu0 0
      %6361 = vmatpush1.bf16.msra.mxu0 0
      %6362 = vmatprep.subr.bf16.mxu0 0
      %6363 = vmatpush1.bf16.msra.mxu0 0
      %6364 = vmatprep.mubr.bf16.mxu0 0
      %6365 = vmatmul.mubr.bf16.gmra.mrb[0].mxu0 %v6028
      %v6366 = vpop.f32.mrb[0].mxu0
      %v6367 = vadd.f32 %v6282, %v6366
      %v6368 = vpop.f32.mrb[0].mxu0
      %v6369 = vpop.f32.mrb[0].mxu0
      %v6370 = vadd.f32 %v6282, %v6369
      %v6371 = vpop.f32.mrb[0].mxu0
      %6372 = vdwg.mxu0
      %v6373 = vpack.c.bf16 %v6142, %v6139
      %v6374 = vpack.c.bf16 %v6256, %v6253
      %v6376 = vsel %vm1143, %v6373, 0
      %v6379 = vsel %vm1143, %v6374, 0
      %6381 = vmatprep.subr.bf16.mxu0 0
      %6382 = vmatpush1.bf16.xpose.msra.mxu0 %v6379
      %6383 = vmatprep.subr.bf16.mxu0 0
      %6384 = vmatpush1.bf16.xpose.msra.mxu0 0
      %6385 = vmatprep.subr.bf16.mxu0 0
      %6386 = vmatpush1.bf16.xpose.msra.mxu0 0
      %6387 = vmatprep.subr.bf16.mxu0 0
      %6388 = vmatpush1.bf16.xpose.msra.mxu0 0
      %6389 = vmatprep.subr.bf16.mxu0 0
      %6390 = vmatpush1.bf16.xpose.msra.mxu0 0
      %6391 = vmatprep.subr.bf16.mxu0 0
      %6392 = vmatpush1.bf16.xpose.msra.mxu0 0
      %6393 = vmatprep.subr.bf16.mxu0 0
      %6394 = vmatpush1.bf16.xpose.msra.mxu0 0
      %6395 = vmatprep.subr.bf16.mxu0 0
      %6396 = vmatpush1.bf16.xpose.msra.mxu0 0
      %6397 = vmatprep.subr.bf16.mxu0 0
      %6398 = vmatpush1.bf16.xpose.msra.mxu0 0
      %6399 = vmatprep.subr.bf16.mxu0 0
      %6400 = vmatpush1.bf16.xpose.msra.mxu0 0
      %6401 = vmatprep.subr.bf16.mxu0 0
      %6402 = vmatpush1.bf16.xpose.msra.mxu0 0
      %6403 = vmatprep.subr.bf16.mxu0 0
      %6404 = vmatpush1.bf16.xpose.msra.mxu0 0
      %6405 = vmatprep.subr.bf16.mxu0 0
      %6406 = vmatpush1.bf16.xpose.msra.mxu0 0
      %6407 = vmatprep.subr.bf16.mxu0 0
      %6408 = vmatpush1.bf16.xpose.msra.mxu0 0
      %6409 = vmatprep.subr.bf16.mxu0 0
      %6410 = vmatpush1.bf16.xpose.msra.mxu0 0
      %6411 = vmatprep.subr.bf16.mxu0 0
      %6412 = vmatpush1.bf16.xpose.msra.mxu0 0
      %6413 = vmatprep.mubr.bf16.mxu0 0
      %6414 = vmatmul.mubr.bf16.gmra.mrb[0].mxu0 %v6376
      %v6415 = vpop.f32.mrb[0].mxu0
      %v6416 = vadd.f32 %v1141, %v6415
      %v6417 = vpop.f32.mrb[0].mxu0
      %v6418 = vpop.f32.mrb[0].mxu0
      %v6419 = vadd.f32 %v1141, %v6418
      %v6420 = vpop.f32.mrb[0].mxu0
      %6421 = vdwg.mxu0
      %v6422 = vsel %vm1191, %v6416, -inf
      %6423 = vmax.xlane.f32.xlu0 %v6422
      %v6424 = vpop.xlane.xlu0 %6423
      %v6425 = vsel %vm1191, %v6419, -inf
      %6426 = vmax.xlane.f32.xlu0 %v6425
      %v6427 = vpop.xlane.xlu0 %6426
      %v6428 = vsub.f32 %v6416, %v6424
      %v6429 = vsub.f32 %v6419, %v6427
      %v6430 = vmul.f32 %v6428, 1.442695
      %v6431 = vpow.pop %v6430
      %v6432 = vmul.f32 %v6429, 1.442695
      %v6433 = vpow.pop %v6432
      %v6434 = vsel %vm1191, %v6431, 0.0
      %6435 = vadd.xlane.f32.xlu0 %v6434
      %v6436 = vpop.xlane.xlu0 %6435
      %v6437 = vsel %vm1191, %v6433, 0.0
      %6438 = vadd.xlane.f32.xlu0 %v6437
      %v6439 = vpop.xlane.xlu0 %6438
      %v6440 = vrcp.pop %v6436
      %v6441 = vrcp.pop %v6439
      %v6442 = vmul.f32 %v6431, %v6440
      %v6443 = vmul.f32 %v6433, %v6441
      %v6444 = vpack.c.bf16 %v6443, %v6442
      %v6445 = vpack.c.bf16 %v6370, %v6367
      %v6447 = vsel %vm1191, %v6444, 0
      %6449 = vmatprep.subr.bf16.mxu0 0
      %6450 = vmatpush1.bf16.msra.mxu0 %v6445
      %6451 = vmatprep.subr.bf16.mxu0 0
      %6452 = vmatpush1.bf16.msra.mxu0 0
      %6453 = vmatprep.subr.bf16.mxu0 0
      %6454 = vmatpush1.bf16.msra.mxu0 0
      %6455 = vmatprep.subr.bf16.mxu0 0
      %6456 = vmatpush1.bf16.msra.mxu0 0
      %6457 = vmatprep.subr.bf16.mxu0 0
      %6458 = vmatpush1.bf16.msra.mxu0 0
      %6459 = vmatprep.subr.bf16.mxu0 0
      %6460 = vmatpush1.bf16.msra.mxu0 0
      %6461 = vmatprep.subr.bf16.mxu0 0
      %6462 = vmatpush1.bf16.msra.mxu0 0
      %6463 = vmatprep.subr.bf16.mxu0 0
      %6464 = vmatpush1.bf16.msra.mxu0 0
      %6465 = vmatprep.subr.bf16.mxu0 0
      %6466 = vmatpush1.bf16.msra.mxu0 0
      %6467 = vmatprep.subr.bf16.mxu0 0
      %6468 = vmatpush1.bf16.msra.mxu0 0
      %6469 = vmatprep.subr.bf16.mxu0 0
      %6470 = vmatpush1.bf16.msra.mxu0 0
      %6471 = vmatprep.subr.bf16.mxu0 0
      %6472 = vmatpush1.bf16.msra.mxu0 0
      %6473 = vmatprep.subr.bf16.mxu0 0
      %6474 = vmatpush1.bf16.msra.mxu0 0
      %6475 = vmatprep.subr.bf16.mxu0 0
      %6476 = vmatpush1.bf16.msra.mxu0 0
      %6477 = vmatprep.subr.bf16.mxu0 0
      %6478 = vmatpush1.bf16.msra.mxu0 0
      %6479 = vmatprep.subr.bf16.mxu0 0
      %6480 = vmatpush1.bf16.msra.mxu0 0
      %6481 = vmatprep.mubr.bf16.mxu0 0
      %6482 = vmatmul.mubr.bf16.gmra.mrb[0].mxu0 %v6447
      %v6483 = vpop.f32.mrb[0].mxu0
      %v6484 = vadd.f32 0.0, %v6483
      %v6485 = vpop.f32.mrb[0].mxu0
      %v6486 = vpop.f32.mrb[0].mxu0
      %v6487 = vadd.f32 0.0, %v6486
      %v6488 = vpop.f32.mrb[0].mxu0
      %6489 = vdwg.mxu0
      %v6490 = vpack.c.bf16 %v6487, %v6484
      %s6491 = scalar_lea.vmem %s10, 128
      %v6492 = vld [vmem:[%s6491] sm:$0xf]
      %v6493 = vld [vmem:[%s6491 + $0x4] sm:$0xf]
      %v6494 = vld [vmem:[%s6491 + $0x8] sm:$0xf]
      %v6495 = vld [vmem:[%s6491 + $0xc] sm:$0xf]
      %v6500 = vunpack.c.l.b16 %v6492
      %v6501 = vunpack.c.l.b16 %v6493
      %v6502 = vunpack.c.l.b16 %v6494
      %v6503 = vunpack.c.l.b16 %v6495
      %v6504 = vpack.c.b16 %v6501, %v6500
      %v6505 = vpack.c.b16 %v6503, %v6502
      %v6509 = vsel %vm1143, %v6490, 0
      %6511 = vmatprep.subr.bf16.mxu0 0
      %6512 = vmatpush1.bf16.msra.mxu0 %v6504
      %6513 = vmatprep.subr.bf16.mxu0 0
      %6514 = vmatpush1.bf16.msra.mxu0 %v6505
      %6515 = vmatprep.subr.bf16.mxu0 0
      %6516 = vmatpush1.bf16.msra.mxu0 0
      %6517 = vmatprep.subr.bf16.mxu0 0
      %6518 = vmatpush1.bf16.msra.mxu0 0
      %6519 = vmatprep.subr.bf16.mxu0 0
      %6520 = vmatpush1.bf16.msra.mxu0 0
      %6521 = vmatprep.subr.bf16.mxu0 0
      %6522 = vmatpush1.bf16.msra.mxu0 0
      %6523 = vmatprep.subr.bf16.mxu0 0
      %6524 = vmatpush1.bf16.msra.mxu0 0
      %6525 = vmatprep.subr.bf16.mxu0 0
      %6526 = vmatpush1.bf16.msra.mxu0 0
      %6527 = vmatprep.subr.bf16.mxu0 0
      %6528 = vmatpush1.bf16.msra.mxu0 0
      %6529 = vmatprep.subr.bf16.mxu0 0
      %6530 = vmatpush1.bf16.msra.mxu0 0
      %6531 = vmatprep.subr.bf16.mxu0 0
      %6532 = vmatpush1.bf16.msra.mxu0 0
      %6533 = vmatprep.subr.bf16.mxu0 0
      %6534 = vmatpush1.bf16.msra.mxu0 0
      %6535 = vmatprep.subr.bf16.mxu0 0
      %6536 = vmatpush1.bf16.msra.mxu0 0
      %6537 = vmatprep.subr.bf16.mxu0 0
      %6538 = vmatpush1.bf16.msra.mxu0 0
      %6539 = vmatprep.subr.bf16.mxu0 0
      %6540 = vmatpush1.bf16.msra.mxu0 0
      %6541 = vmatprep.subr.bf16.mxu0 0
      %6542 = vmatpush1.bf16.msra.mxu0 0
      %6543 = vmatprep.mubr.bf16.mxu0 0
      %6544 = vmatmul.mubr.bf16.gmra.mrb[0].mxu0 %v6509
      %v6545 = vpop.f32.mrb[0].mxu0
      %v6546 = vadd.f32 0.0, %v6545
      %v6547 = vpop.f32.mrb[0].mxu0
      %v6548 = vpop.f32.mrb[0].mxu0
      %v6549 = vadd.f32 0.0, %v6548
      %v6550 = vpop.f32.mrb[0].mxu0
      %6551 = vdwg.mxu0
      %v6553 = vlaneseq
      %v6554 = vshrl.u32 %v6553, 7
      %v6555 = vsub.s32 0, %v6554
      %v6556 = vrot.slane %v6030, %v6555
      %v6558 = vadd.f32 %v6556, %v6546
      %v6559 = vadd.f32 %v6556, %v6549
      %s6560 = scalar_lea.vmem %s4, 576
      %v6561 = vld [vmem:[%s6560] sm:$0xf]
      %v6562 = vld [vmem:[%s6560 + $0x4] sm:$0xf]
      %v6563 = vld [vmem:[%s6560 + $0x8] sm:$0xf]
      %v6564 = vld [vmem:[%s6560 + $0xc] sm:$0xf]
      %v6565 = vld [vmem:[%s6560 + $0x10] sm:$0xf]
      %v6566 = vld [vmem:[%s6560 + $0x14] sm:$0xf]
      %v6567 = vld [vmem:[%s6560 + $0x18] sm:$0xf]
      %v6568 = vld [vmem:[%s6560 + $0x1c] sm:$0xf]
      %v6569 = vld [vmem:[%s6560 + $0x20] sm:$0xf]
      %v6570 = vld [vmem:[%s6560 + $0x24] sm:$0xf]
      %v6571 = vld [vmem:[%s6560 + $0x28] sm:$0xf]
      %v6572 = vld [vmem:[%s6560 + $0x2c] sm:$0xf]
      %v6573 = vld [vmem:[%s6560 + $0x30] sm:$0xf]
      %v6574 = vld [vmem:[%s6560 + $0x34] sm:$0xf]
      %v6575 = vld [vmem:[%s6560 + $0x38] sm:$0xf]
      %v6576 = vld [vmem:[%s6560 + $0x3c] sm:$0xf]
      %s6577 = scalar_lea.vmem %s5, 9
      %v6578 = vld [vmem:[%s6577] sm:$0x1]
      %v6580 = vlaneseq
      %v6581 = vshrl.u32 %v6580, 7
      %v6582 = vsub.s32 0, %v6581
      %v6583 = vrot.slane %v6578, %v6582
      %v6601 = vunpack.c.l.b16 %v6561
      %v6602 = vunpack.c.l.b16 %v6562
      %v6603 = vunpack.c.l.b16 %v6563
      %v6604 = vunpack.c.l.b16 %v6564
      %v6605 = vunpack.c.l.b16 %v6565
      %v6606 = vunpack.c.l.b16 %v6566
      %v6607 = vunpack.c.l.b16 %v6567
      %v6608 = vunpack.c.l.b16 %v6568
      %v6609 = vunpack.c.l.b16 %v6569
      %v6610 = vunpack.c.l.b16 %v6570
      %v6611 = vunpack.c.l.b16 %v6571
      %v6612 = vunpack.c.l.b16 %v6572
      %v6613 = vunpack.c.l.b16 %v6573
      %v6614 = vunpack.c.l.b16 %v6574
      %v6615 = vunpack.c.l.b16 %v6575
      %v6616 = vunpack.c.l.b16 %v6576
      %v6617 = vpack.c.b16 %v6602, %v6601
      %v6618 = vpack.c.b16 %v6604, %v6603
      %v6619 = vpack.c.b16 %v6606, %v6605
      %v6620 = vpack.c.b16 %v6608, %v6607
      %v6621 = vpack.c.b16 %v6610, %v6609
      %v6622 = vpack.c.b16 %v6612, %v6611
      %v6623 = vpack.c.b16 %v6614, %v6613
      %v6624 = vpack.c.b16 %v6616, %v6615
      %6633 = vmatprep.subr.bf16.mxu0 0
      %6634 = vmatpush1.bf16.msra.mxu0 %v6617
      %6635 = vmatprep.subr.bf16.mxu0 0
      %6636 = vmatpush1.bf16.msra.mxu0 %v6618
      %6637 = vmatprep.subr.bf16.mxu0 0
      %6638 = vmatpush1.bf16.msra.mxu0 %v6619
      %6639 = vmatprep.subr.bf16.mxu0 0
      %6640 = vmatpush1.bf16.msra.mxu0 %v6620
      %6641 = vmatprep.subr.bf16.mxu0 0
      %6642 = vmatpush1.bf16.msra.mxu0 %v6621
      %6643 = vmatprep.subr.bf16.mxu0 0
      %6644 = vmatpush1.bf16.msra.mxu0 %v6622
      %6645 = vmatprep.subr.bf16.mxu0 0
      %6646 = vmatpush1.bf16.msra.mxu0 %v6623
      %6647 = vmatprep.subr.bf16.mxu0 0
      %6648 = vmatpush1.bf16.msra.mxu0 %v6624
      %6649 = vmatprep.subr.bf16.mxu0 0
      %6650 = vmatpush1.bf16.msra.mxu0 0
      %6651 = vmatprep.subr.bf16.mxu0 0
      %6652 = vmatpush1.bf16.msra.mxu0 0
      %6653 = vmatprep.subr.bf16.mxu0 0
      %6654 = vmatpush1.bf16.msra.mxu0 0
      %6655 = vmatprep.subr.bf16.mxu0 0
      %6656 = vmatpush1.bf16.msra.mxu0 0
      %6657 = vmatprep.subr.bf16.mxu0 0
      %6658 = vmatpush1.bf16.msra.mxu0 0
      %6659 = vmatprep.subr.bf16.mxu0 0
      %6660 = vmatpush1.bf16.msra.mxu0 0
      %6661 = vmatprep.subr.bf16.mxu0 0
      %6662 = vmatpush1.bf16.msra.mxu0 0
      %6663 = vmatprep.subr.bf16.mxu0 0
      %6664 = vmatpush1.bf16.msra.mxu0 0
      %6665 = vmatprep.mubr.bf16.mxu0 0
      %6666 = vmatmul.mubr.bf16.gmra.mrb[0].mxu0 %v6028
      %v6667 = vpop.f32.mrb[0].mxu0
      %v6668 = vadd.f32 %v6583, %v6667
      %v6669 = vpop.f32.mrb[0].mxu0
      %v6670 = vpop.f32.mrb[0].mxu0
      %v6671 = vadd.f32 %v6583, %v6670
      %v6672 = vpop.f32.mrb[0].mxu0
      %6673 = vdwg.mxu0
      %s6674 = scalar_lea.vmem %s6, 576
      %v6675 = vld [vmem:[%s6674] sm:$0xf]
      %v6676 = vld [vmem:[%s6674 + $0x4] sm:$0xf]
      %v6677 = vld [vmem:[%s6674 + $0x8] sm:$0xf]
      %v6678 = vld [vmem:[%s6674 + $0xc] sm:$0xf]
      %v6679 = vld [vmem:[%s6674 + $0x10] sm:$0xf]
      %v6680 = vld [vmem:[%s6674 + $0x14] sm:$0xf]
      %v6681 = vld [vmem:[%s6674 + $0x18] sm:$0xf]
      %v6682 = vld [vmem:[%s6674 + $0x1c] sm:$0xf]
      %v6683 = vld [vmem:[%s6674 + $0x20] sm:$0xf]
      %v6684 = vld [vmem:[%s6674 + $0x24] sm:$0xf]
      %v6685 = vld [vmem:[%s6674 + $0x28] sm:$0xf]
      %v6686 = vld [vmem:[%s6674 + $0x2c] sm:$0xf]
      %v6687 = vld [vmem:[%s6674 + $0x30] sm:$0xf]
      %v6688 = vld [vmem:[%s6674 + $0x34] sm:$0xf]
      %v6689 = vld [vmem:[%s6674 + $0x38] sm:$0xf]
      %v6690 = vld [vmem:[%s6674 + $0x3c] sm:$0xf]
      %s6691 = scalar_lea.vmem %s7, 9
      %v6692 = vld [vmem:[%s6691] sm:$0x1]
      %v6694 = vlaneseq
      %v6695 = vshrl.u32 %v6694, 7
      %v6696 = vsub.s32 0, %v6695
      %v6697 = vrot.slane %v6692, %v6696
      %v6715 = vunpack.c.l.b16 %v6675
      %v6716 = vunpack.c.l.b16 %v6676
      %v6717 = vunpack.c.l.b16 %v6677
      %v6718 = vunpack.c.l.b16 %v6678
      %v6719 = vunpack.c.l.b16 %v6679
      %v6720 = vunpack.c.l.b16 %v6680
      %v6721 = vunpack.c.l.b16 %v6681
      %v6722 = vunpack.c.l.b16 %v6682
      %v6723 = vunpack.c.l.b16 %v6683
      %v6724 = vunpack.c.l.b16 %v6684
      %v6725 = vunpack.c.l.b16 %v6685
      %v6726 = vunpack.c.l.b16 %v6686
      %v6727 = vunpack.c.l.b16 %v6687
      %v6728 = vunpack.c.l.b16 %v6688
      %v6729 = vunpack.c.l.b16 %v6689
      %v6730 = vunpack.c.l.b16 %v6690
      %v6731 = vpack.c.b16 %v6716, %v6715
      %v6732 = vpack.c.b16 %v6718, %v6717
      %v6733 = vpack.c.b16 %v6720, %v6719
      %v6734 = vpack.c.b16 %v6722, %v6721
      %v6735 = vpack.c.b16 %v6724, %v6723
      %v6736 = vpack.c.b16 %v6726, %v6725
      %v6737 = vpack.c.b16 %v6728, %v6727
      %v6738 = vpack.c.b16 %v6730, %v6729
      %6747 = vmatprep.subr.bf16.mxu0 0
      %6748 = vmatpush1.bf16.msra.mxu0 %v6731
      %6749 = vmatprep.subr.bf16.mxu0 0
      %6750 = vmatpush1.bf16.msra.mxu0 %v6732
      %6751 = vmatprep.subr.bf16.mxu0 0
      %6752 = vmatpush1.bf16.msra.mxu0 %v6733
      %6753 = vmatprep.subr.bf16.mxu0 0
      %6754 = vmatpush1.bf16.msra.mxu0 %v6734
      %6755 = vmatprep.subr.bf16.mxu0 0
      %6756 = vmatpush1.bf16.msra.mxu0 %v6735
      %6757 = vmatprep.subr.bf16.mxu0 0
      %6758 = vmatpush1.bf16.msra.mxu0 %v6736
      %6759 = vmatprep.subr.bf16.mxu0 0
      %6760 = vmatpush1.bf16.msra.mxu0 %v6737
      %6761 = vmatprep.subr.bf16.mxu0 0
      %6762 = vmatpush1.bf16.msra.mxu0 %v6738
      %6763 = vmatprep.subr.bf16.mxu0 0
      %6764 = vmatpush1.bf16.msra.mxu0 0
      %6765 = vmatprep.subr.bf16.mxu0 0
      %6766 = vmatpush1.bf16.msra.mxu0 0
      %6767 = vmatprep.subr.bf16.mxu0 0
      %6768 = vmatpush1.bf16.msra.mxu0 0
      %6769 = vmatprep.subr.bf16.mxu0 0
      %6770 = vmatpush1.bf16.msra.mxu0 0
      %6771 = vmatprep.subr.bf16.mxu0 0
      %6772 = vmatpush1.bf16.msra.mxu0 0
      %6773 = vmatprep.subr.bf16.mxu0 0
      %6774 = vmatpush1.bf16.msra.mxu0 0
      %6775 = vmatprep.subr.bf16.mxu0 0
      %6776 = vmatpush1.bf16.msra.mxu0 0
      %6777 = vmatprep.subr.bf16.mxu0 0
      %6778 = vmatpush1.bf16.msra.mxu0 0
      %6779 = vmatprep.mubr.bf16.mxu0 0
      %6780 = vmatmul.mubr.bf16.gmra.mrb[0].mxu0 %v6028
      %v6781 = vpop.f32.mrb[0].mxu0
      %v6782 = vadd.f32 %v6697, %v6781
      %v6783 = vpop.f32.mrb[0].mxu0
      %v6784 = vpop.f32.mrb[0].mxu0
      %v6785 = vadd.f32 %v6697, %v6784
      %v6786 = vpop.f32.mrb[0].mxu0
      %6787 = vdwg.mxu0
      %s6788 = scalar_lea.vmem %s8, 576
      %v6789 = vld [vmem:[%s6788] sm:$0xf]
      %v6790 = vld [vmem:[%s6788 + $0x4] sm:$0xf]
      %v6791 = vld [vmem:[%s6788 + $0x8] sm:$0xf]
      %v6792 = vld [vmem:[%s6788 + $0xc] sm:$0xf]
      %v6793 = vld [vmem:[%s6788 + $0x10] sm:$0xf]
      %v6794 = vld [vmem:[%s6788 + $0x14] sm:$0xf]
      %v6795 = vld [vmem:[%s6788 + $0x18] sm:$0xf]
      %v6796 = vld [vmem:[%s6788 + $0x1c] sm:$0xf]
      %v6797 = vld [vmem:[%s6788 + $0x20] sm:$0xf]
      %v6798 = vld [vmem:[%s6788 + $0x24] sm:$0xf]
      %v6799 = vld [vmem:[%s6788 + $0x28] sm:$0xf]
      %v6800 = vld [vmem:[%s6788 + $0x2c] sm:$0xf]
      %v6801 = vld [vmem:[%s6788 + $0x30] sm:$0xf]
      %v6802 = vld [vmem:[%s6788 + $0x34] sm:$0xf]
      %v6803 = vld [vmem:[%s6788 + $0x38] sm:$0xf]
      %v6804 = vld [vmem:[%s6788 + $0x3c] sm:$0xf]
      %s6805 = scalar_lea.vmem %s9, 9
      %v6806 = vld [vmem:[%s6805] sm:$0x1]
      %v6808 = vlaneseq
      %v6809 = vshrl.u32 %v6808, 7
      %v6810 = vsub.s32 0, %v6809
      %v6811 = vrot.slane %v6806, %v6810
      %v6829 = vunpack.c.l.b16 %v6789
      %v6830 = vunpack.c.l.b16 %v6790
      %v6831 = vunpack.c.l.b16 %v6791
      %v6832 = vunpack.c.l.b16 %v6792
      %v6833 = vunpack.c.l.b16 %v6793
      %v6834 = vunpack.c.l.b16 %v6794
      %v6835 = vunpack.c.l.b16 %v6795
      %v6836 = vunpack.c.l.b16 %v6796
      %v6837 = vunpack.c.l.b16 %v6797
      %v6838 = vunpack.c.l.b16 %v6798
      %v6839 = vunpack.c.l.b16 %v6799
      %v6840 = vunpack.c.l.b16 %v6800
      %v6841 = vunpack.c.l.b16 %v6801
      %v6842 = vunpack.c.l.b16 %v6802
      %v6843 = vunpack.c.l.b16 %v6803
      %v6844 = vunpack.c.l.b16 %v6804
      %v6845 = vpack.c.b16 %v6830, %v6829
      %v6846 = vpack.c.b16 %v6832, %v6831
      %v6847 = vpack.c.b16 %v6834, %v6833
      %v6848 = vpack.c.b16 %v6836, %v6835
      %v6849 = vpack.c.b16 %v6838, %v6837
      %v6850 = vpack.c.b16 %v6840, %v6839
      %v6851 = vpack.c.b16 %v6842, %v6841
      %v6852 = vpack.c.b16 %v6844, %v6843
      %6861 = vmatprep.subr.bf16.mxu0 0
      %6862 = vmatpush1.bf16.msra.mxu0 %v6845
      %6863 = vmatprep.subr.bf16.mxu0 0
      %6864 = vmatpush1.bf16.msra.mxu0 %v6846
      %6865 = vmatprep.subr.bf16.mxu0 0
      %6866 = vmatpush1.bf16.msra.mxu0 %v6847
      %6867 = vmatprep.subr.bf16.mxu0 0
      %6868 = vmatpush1.bf16.msra.mxu0 %v6848
      %6869 = vmatprep.subr.bf16.mxu0 0
      %6870 = vmatpush1.bf16.msra.mxu0 %v6849
      %6871 = vmatprep.subr.bf16.mxu0 0
      %6872 = vmatpush1.bf16.msra.mxu0 %v6850
      %6873 = vmatprep.subr.bf16.mxu0 0
      %6874 = vmatpush1.bf16.msra.mxu0 %v6851
      %6875 = vmatprep.subr.bf16.mxu0 0
      %6876 = vmatpush1.bf16.msra.mxu0 %v6852
      %6877 = vmatprep.subr.bf16.mxu0 0
      %6878 = vmatpush1.bf16.msra.mxu0 0
      %6879 = vmatprep.subr.bf16.mxu0 0
      %6880 = vmatpush1.bf16.msra.mxu0 0
      %6881 = vmatprep.subr.bf16.mxu0 0
      %6882 = vmatpush1.bf16.msra.mxu0 0
      %6883 = vmatprep.subr.bf16.mxu0 0
      %6884 = vmatpush1.bf16.msra.mxu0 0
      %6885 = vmatprep.subr.bf16.mxu0 0
      %6886 = vmatpush1.bf16.msra.mxu0 0
      %6887 = vmatprep.subr.bf16.mxu0 0
      %6888 = vmatpush1.bf16.msra.mxu0 0
      %6889 = vmatprep.subr.bf16.mxu0 0
      %6890 = vmatpush1.bf16.msra.mxu0 0
      %6891 = vmatprep.subr.bf16.mxu0 0
      %6892 = vmatpush1.bf16.msra.mxu0 0
      %6893 = vmatprep.mubr.bf16.mxu0 0
      %6894 = vmatmul.mubr.bf16.gmra.mrb[0].mxu0 %v6028
      %v6895 = vpop.f32.mrb[0].mxu0
      %v6896 = vadd.f32 %v6811, %v6895
      %v6897 = vpop.f32.mrb[0].mxu0
      %v6898 = vpop.f32.mrb[0].mxu0
      %v6899 = vadd.f32 %v6811, %v6898
      %v6900 = vpop.f32.mrb[0].mxu0
      %6901 = vdwg.mxu0
      %v6902 = vpack.c.bf16 %v6671, %v6668
      %v6903 = vpack.c.bf16 %v6785, %v6782
      %v6905 = vsel %vm1143, %v6902, 0
      %v6908 = vsel %vm1143, %v6903, 0
      %6910 = vmatprep.subr.bf16.mxu0 0
      %6911 = vmatpush1.bf16.xpose.msra.mxu0 %v6908
      %6912 = vmatprep.subr.bf16.mxu0 0
      %6913 = vmatpush1.bf16.xpose.msra.mxu0 0
      %6914 = vmatprep.subr.bf16.mxu0 0
      %6915 = vmatpush1.bf16.xpose.msra.mxu0 0
      %6916 = vmatprep.subr.bf16.mxu0 0
      %6917 = vmatpush1.bf16.xpose.msra.mxu0 0
      %6918 = vmatprep.subr.bf16.mxu0 0
      %6919 = vmatpush1.bf16.xpose.msra.mxu0 0
      %6920 = vmatprep.subr.bf16.mxu0 0
      %6921 = vmatpush1.bf16.xpose.msra.mxu0 0
      %6922 = vmatprep.subr.bf16.mxu0 0
      %6923 = vmatpush1.bf16.xpose.msra.mxu0 0
      %6924 = vmatprep.subr.bf16.mxu0 0
      %6925 = vmatpush1.bf16.xpose.msra.mxu0 0
      %6926 = vmatprep.subr.bf16.mxu0 0
      %6927 = vmatpush1.bf16.xpose.msra.mxu0 0
      %6928 = vmatprep.subr.bf16.mxu0 0
      %6929 = vmatpush1.bf16.xpose.msra.mxu0 0
      %6930 = vmatprep.subr.bf16.mxu0 0
      %6931 = vmatpush1.bf16.xpose.msra.mxu0 0
      %6932 = vmatprep.subr.bf16.mxu0 0
      %6933 = vmatpush1.bf16.xpose.msra.mxu0 0
      %6934 = vmatprep.subr.bf16.mxu0 0
      %6935 = vmatpush1.bf16.xpose.msra.mxu0 0
      %6936 = vmatprep.subr.bf16.mxu0 0
      %6937 = vmatpush1.bf16.xpose.msra.mxu0 0
      %6938 = vmatprep.subr.bf16.mxu0 0
      %6939 = vmatpush1.bf16.xpose.msra.mxu0 0
      %6940 = vmatprep.subr.bf16.mxu0 0
      %6941 = vmatpush1.bf16.xpose.msra.mxu0 0
      %6942 = vmatprep.mubr.bf16.mxu0 0
      %6943 = vmatmul.mubr.bf16.gmra.mrb[0].mxu0 %v6905
      %v6944 = vpop.f32.mrb[0].mxu0
      %v6945 = vadd.f32 %v1141, %v6944
      %v6946 = vpop.f32.mrb[0].mxu0
      %v6947 = vpop.f32.mrb[0].mxu0
      %v6948 = vadd.f32 %v1141, %v6947
      %v6949 = vpop.f32.mrb[0].mxu0
      %6950 = vdwg.mxu0
      %v6951 = vsel %vm1191, %v6945, -inf
      %6952 = vmax.xlane.f32.xlu0 %v6951
      %v6953 = vpop.xlane.xlu0 %6952
      %v6954 = vsel %vm1191, %v6948, -inf
      %6955 = vmax.xlane.f32.xlu0 %v6954
      %v6956 = vpop.xlane.xlu0 %6955
      %v6957 = vsub.f32 %v6945, %v6953
      %v6958 = vsub.f32 %v6948, %v6956
      %v6959 = vmul.f32 %v6957, 1.442695
      %v6960 = vpow.pop %v6959
      %v6961 = vmul.f32 %v6958, 1.442695
      %v6962 = vpow.pop %v6961
      %v6963 = vsel %vm1191, %v6960, 0.0
      %6964 = vadd.xlane.f32.xlu0 %v6963
      %v6965 = vpop.xlane.xlu0 %6964
      %v6966 = vsel %vm1191, %v6962, 0.0
      %6967 = vadd.xlane.f32.xlu0 %v6966
      %v6968 = vpop.xlane.xlu0 %6967
      %v6969 = vrcp.pop %v6965
      %v6970 = vrcp.pop %v6968
      %v6971 = vmul.f32 %v6960, %v6969
      %v6972 = vmul.f32 %v6962, %v6970
      %v6973 = vpack.c.bf16 %v6972, %v6971
      %v6974 = vpack.c.bf16 %v6899, %v6896
      %v6976 = vsel %vm1191, %v6973, 0
      %6978 = vmatprep.subr.bf16.mxu0 0
      %6979 = vmatpush1.bf16.msra.mxu0 %v6974
      %6980 = vmatprep.subr.bf16.mxu0 0
      %6981 = vmatpush1.bf16.msra.mxu0 0
      %6982 = vmatprep.subr.bf16.mxu0 0
      %6983 = vmatpush1.bf16.msra.mxu0 0
      %6984 = vmatprep.subr.bf16.mxu0 0
      %6985 = vmatpush1.bf16.msra.mxu0 0
      %6986 = vmatprep.subr.bf16.mxu0 0
      %6987 = vmatpush1.bf16.msra.mxu0 0
      %6988 = vmatprep.subr.bf16.mxu0 0
      %6989 = vmatpush1.bf16.msra.mxu0 0
      %6990 = vmatprep.subr.bf16.mxu0 0
      %6991 = vmatpush1.bf16.msra.mxu0 0
      %6992 = vmatprep.subr.bf16.mxu0 0
      %6993 = vmatpush1.bf16.msra.mxu0 0
      %6994 = vmatprep.subr.bf16.mxu0 0
      %6995 = vmatpush1.bf16.msra.mxu0 0
      %6996 = vmatprep.subr.bf16.mxu0 0
      %6997 = vmatpush1.bf16.msra.mxu0 0
      %6998 = vmatprep.subr.bf16.mxu0 0
      %6999 = vmatpush1.bf16.msra.mxu0 0
      %7000 = vmatprep.subr.bf16.mxu0 0
      %7001 = vmatpush1.bf16.msra.mxu0 0
      %7002 = vmatprep.subr.bf16.mxu0 0
      %7003 = vmatpush1.bf16.msra.mxu0 0
      %7004 = vmatprep.subr.bf16.mxu0 0
      %7005 = vmatpush1.bf16.msra.mxu0 0
      %7006 = vmatprep.subr.bf16.mxu0 0
      %7007 = vmatpush1.bf16.msra.mxu0 0
      %7008 = vmatprep.subr.bf16.mxu0 0
      %7009 = vmatpush1.bf16.msra.mxu0 0
      %7010 = vmatprep.mubr.bf16.mxu0 0
      %7011 = vmatmul.mubr.bf16.gmra.mrb[0].mxu0 %v6976
      %v7012 = vpop.f32.mrb[0].mxu0
      %v7013 = vadd.f32 0.0, %v7012
      %v7014 = vpop.f32.mrb[0].mxu0
      %v7015 = vpop.f32.mrb[0].mxu0
      %v7016 = vadd.f32 0.0, %v7015
      %v7017 = vpop.f32.mrb[0].mxu0
      %7018 = vdwg.mxu0
      %v7019 = vpack.c.bf16 %v7016, %v7013
      %s7020 = scalar_lea.vmem %s10, 144
      %v7021 = vld [vmem:[%s7020] sm:$0xf]
      %v7022 = vld [vmem:[%s7020 + $0x4] sm:$0xf]
      %v7023 = vld [vmem:[%s7020 + $0x8] sm:$0xf]
      %v7024 = vld [vmem:[%s7020 + $0xc] sm:$0xf]
      %v7029 = vunpack.c.l.b16 %v7021
      %v7030 = vunpack.c.l.b16 %v7022
      %v7031 = vunpack.c.l.b16 %v7023
      %v7032 = vunpack.c.l.b16 %v7024
      %v7033 = vpack.c.b16 %v7030, %v7029
      %v7034 = vpack.c.b16 %v7032, %v7031
      %v7038 = vsel %vm1143, %v7019, 0
      %7040 = vmatprep.subr.bf16.mxu0 0
      %7041 = vmatpush1.bf16.msra.mxu0 %v7033
      %7042 = vmatprep.subr.bf16.mxu0 0
      %7043 = vmatpush1.bf16.msra.mxu0 %v7034
      %7044 = vmatprep.subr.bf16.mxu0 0
      %7045 = vmatpush1.bf16.msra.mxu0 0
      %7046 = vmatprep.subr.bf16.mxu0 0
      %7047 = vmatpush1.bf16.msra.mxu0 0
      %7048 = vmatprep.subr.bf16.mxu0 0
      %7049 = vmatpush1.bf16.msra.mxu0 0
      %7050 = vmatprep.subr.bf16.mxu0 0
      %7051 = vmatpush1.bf16.msra.mxu0 0
      %7052 = vmatprep.subr.bf16.mxu0 0
      %7053 = vmatpush1.bf16.msra.mxu0 0
      %7054 = vmatprep.subr.bf16.mxu0 0
      %7055 = vmatpush1.bf16.msra.mxu0 0
      %7056 = vmatprep.subr.bf16.mxu0 0
      %7057 = vmatpush1.bf16.msra.mxu0 0
      %7058 = vmatprep.subr.bf16.mxu0 0
      %7059 = vmatpush1.bf16.msra.mxu0 0
      %7060 = vmatprep.subr.bf16.mxu0 0
      %7061 = vmatpush1.bf16.msra.mxu0 0
      %7062 = vmatprep.subr.bf16.mxu0 0
      %7063 = vmatpush1.bf16.msra.mxu0 0
      %7064 = vmatprep.subr.bf16.mxu0 0
      %7065 = vmatpush1.bf16.msra.mxu0 0
      %7066 = vmatprep.subr.bf16.mxu0 0
      %7067 = vmatpush1.bf16.msra.mxu0 0
      %7068 = vmatprep.subr.bf16.mxu0 0
      %7069 = vmatpush1.bf16.msra.mxu0 0
      %7070 = vmatprep.subr.bf16.mxu0 0
      %7071 = vmatpush1.bf16.msra.mxu0 0
      %7072 = vmatprep.mubr.bf16.mxu0 0
      %7073 = vmatmul.mubr.bf16.gmra.mrb[0].mxu0 %v7038
      %v7074 = vpop.f32.mrb[0].mxu0
      %v7075 = vadd.f32 0.0, %v7074
      %v7076 = vpop.f32.mrb[0].mxu0
      %v7077 = vpop.f32.mrb[0].mxu0
      %v7078 = vadd.f32 0.0, %v7077
      %v7079 = vpop.f32.mrb[0].mxu0
      %7080 = vdwg.mxu0
      %v7081 = vadd.f32 %v6558, %v7075
      %v7082 = vadd.f32 %v6559, %v7078
      %s7083 = scalar_lea.vmem %s4, 640
      %v7084 = vld [vmem:[%s7083] sm:$0xf]
      %v7085 = vld [vmem:[%s7083 + $0x4] sm:$0xf]
      %v7086 = vld [vmem:[%s7083 + $0x8] sm:$0xf]
      %v7087 = vld [vmem:[%s7083 + $0xc] sm:$0xf]
      %v7088 = vld [vmem:[%s7083 + $0x10] sm:$0xf]
      %v7089 = vld [vmem:[%s7083 + $0x14] sm:$0xf]
      %v7090 = vld [vmem:[%s7083 + $0x18] sm:$0xf]
      %v7091 = vld [vmem:[%s7083 + $0x1c] sm:$0xf]
      %v7092 = vld [vmem:[%s7083 + $0x20] sm:$0xf]
      %v7093 = vld [vmem:[%s7083 + $0x24] sm:$0xf]
      %v7094 = vld [vmem:[%s7083 + $0x28] sm:$0xf]
      %v7095 = vld [vmem:[%s7083 + $0x2c] sm:$0xf]
      %v7096 = vld [vmem:[%s7083 + $0x30] sm:$0xf]
      %v7097 = vld [vmem:[%s7083 + $0x34] sm:$0xf]
      %v7098 = vld [vmem:[%s7083 + $0x38] sm:$0xf]
      %v7099 = vld [vmem:[%s7083 + $0x3c] sm:$0xf]
      %s7100 = scalar_lea.vmem %s5, 10
      %v7101 = vld [vmem:[%s7100] sm:$0x1]
      %v7103 = vlaneseq
      %v7104 = vshrl.u32 %v7103, 7
      %v7105 = vsub.s32 0, %v7104
      %v7106 = vrot.slane %v7101, %v7105
      %v7124 = vunpack.c.l.b16 %v7084
      %v7125 = vunpack.c.l.b16 %v7085
      %v7126 = vunpack.c.l.b16 %v7086
      %v7127 = vunpack.c.l.b16 %v7087
      %v7128 = vunpack.c.l.b16 %v7088
      %v7129 = vunpack.c.l.b16 %v7089
      %v7130 = vunpack.c.l.b16 %v7090
      %v7131 = vunpack.c.l.b16 %v7091
      %v7132 = vunpack.c.l.b16 %v7092
      %v7133 = vunpack.c.l.b16 %v7093
      %v7134 = vunpack.c.l.b16 %v7094
      %v7135 = vunpack.c.l.b16 %v7095
      %v7136 = vunpack.c.l.b16 %v7096
      %v7137 = vunpack.c.l.b16 %v7097
      %v7138 = vunpack.c.l.b16 %v7098
      %v7139 = vunpack.c.l.b16 %v7099
      %v7140 = vpack.c.b16 %v7125, %v7124
      %v7141 = vpack.c.b16 %v7127, %v7126
      %v7142 = vpack.c.b16 %v7129, %v7128
      %v7143 = vpack.c.b16 %v7131, %v7130
      %v7144 = vpack.c.b16 %v7133, %v7132
      %v7145 = vpack.c.b16 %v7135, %v7134
      %v7146 = vpack.c.b16 %v7137, %v7136
      %v7147 = vpack.c.b16 %v7139, %v7138
      %7156 = vmatprep.subr.bf16.mxu0 0
      %7157 = vmatpush1.bf16.msra.mxu0 %v7140
      %7158 = vmatprep.subr.bf16.mxu0 0
      %7159 = vmatpush1.bf16.msra.mxu0 %v7141
      %7160 = vmatprep.subr.bf16.mxu0 0
      %7161 = vmatpush1.bf16.msra.mxu0 %v7142
      %7162 = vmatprep.subr.bf16.mxu0 0
      %7163 = vmatpush1.bf16.msra.mxu0 %v7143
      %7164 = vmatprep.subr.bf16.mxu0 0
      %7165 = vmatpush1.bf16.msra.mxu0 %v7144
      %7166 = vmatprep.subr.bf16.mxu0 0
      %7167 = vmatpush1.bf16.msra.mxu0 %v7145
      %7168 = vmatprep.subr.bf16.mxu0 0
      %7169 = vmatpush1.bf16.msra.mxu0 %v7146
      %7170 = vmatprep.subr.bf16.mxu0 0
      %7171 = vmatpush1.bf16.msra.mxu0 %v7147
      %7172 = vmatprep.subr.bf16.mxu0 0
      %7173 = vmatpush1.bf16.msra.mxu0 0
      %7174 = vmatprep.subr.bf16.mxu0 0
      %7175 = vmatpush1.bf16.msra.mxu0 0
      %7176 = vmatprep.subr.bf16.mxu0 0
      %7177 = vmatpush1.bf16.msra.mxu0 0
      %7178 = vmatprep.subr.bf16.mxu0 0
      %7179 = vmatpush1.bf16.msra.mxu0 0
      %7180 = vmatprep.subr.bf16.mxu0 0
      %7181 = vmatpush1.bf16.msra.mxu0 0
      %7182 = vmatprep.subr.bf16.mxu0 0
      %7183 = vmatpush1.bf16.msra.mxu0 0
      %7184 = vmatprep.subr.bf16.mxu0 0
      %7185 = vmatpush1.bf16.msra.mxu0 0
      %7186 = vmatprep.subr.bf16.mxu0 0
      %7187 = vmatpush1.bf16.msra.mxu0 0
      %7188 = vmatprep.mubr.bf16.mxu0 0
      %7189 = vmatmul.mubr.bf16.gmra.mrb[0].mxu0 %v6028
      %v7190 = vpop.f32.mrb[0].mxu0
      %v7191 = vadd.f32 %v7106, %v7190
      %v7192 = vpop.f32.mrb[0].mxu0
      %v7193 = vpop.f32.mrb[0].mxu0
      %v7194 = vadd.f32 %v7106, %v7193
      %v7195 = vpop.f32.mrb[0].mxu0
      %7196 = vdwg.mxu0
      %s7197 = scalar_lea.vmem %s6, 640
      %v7198 = vld [vmem:[%s7197] sm:$0xf]
      %v7199 = vld [vmem:[%s7197 + $0x4] sm:$0xf]
      %v7200 = vld [vmem:[%s7197 + $0x8] sm:$0xf]
      %v7201 = vld [vmem:[%s7197 + $0xc] sm:$0xf]
      %v7202 = vld [vmem:[%s7197 + $0x10] sm:$0xf]
      %v7203 = vld [vmem:[%s7197 + $0x14] sm:$0xf]
      %v7204 = vld [vmem:[%s7197 + $0x18] sm:$0xf]
      %v7205 = vld [vmem:[%s7197 + $0x1c] sm:$0xf]
      %v7206 = vld [vmem:[%s7197 + $0x20] sm:$0xf]
      %v7207 = vld [vmem:[%s7197 + $0x24] sm:$0xf]
      %v7208 = vld [vmem:[%s7197 + $0x28] sm:$0xf]
      %v7209 = vld [vmem:[%s7197 + $0x2c] sm:$0xf]
      %v7210 = vld [vmem:[%s7197 + $0x30] sm:$0xf]
      %v7211 = vld [vmem:[%s7197 + $0x34] sm:$0xf]
      %v7212 = vld [vmem:[%s7197 + $0x38] sm:$0xf]
      %v7213 = vld [vmem:[%s7197 + $0x3c] sm:$0xf]
      %s7214 = scalar_lea.vmem %s7, 10
      %v7215 = vld [vmem:[%s7214] sm:$0x1]
      %v7217 = vlaneseq
      %v7218 = vshrl.u32 %v7217, 7
      %v7219 = vsub.s32 0, %v7218
      %v7220 = vrot.slane %v7215, %v7219
      %v7238 = vunpack.c.l.b16 %v7198
      %v7239 = vunpack.c.l.b16 %v7199
      %v7240 = vunpack.c.l.b16 %v7200
      %v7241 = vunpack.c.l.b16 %v7201
      %v7242 = vunpack.c.l.b16 %v7202
      %v7243 = vunpack.c.l.b16 %v7203
      %v7244 = vunpack.c.l.b16 %v7204
      %v7245 = vunpack.c.l.b16 %v7205
      %v7246 = vunpack.c.l.b16 %v7206
      %v7247 = vunpack.c.l.b16 %v7207
      %v7248 = vunpack.c.l.b16 %v7208
      %v7249 = vunpack.c.l.b16 %v7209
      %v7250 = vunpack.c.l.b16 %v7210
      %v7251 = vunpack.c.l.b16 %v7211
      %v7252 = vunpack.c.l.b16 %v7212
      %v7253 = vunpack.c.l.b16 %v7213
      %v7254 = vpack.c.b16 %v7239, %v7238
      %v7255 = vpack.c.b16 %v7241, %v7240
      %v7256 = vpack.c.b16 %v7243, %v7242
      %v7257 = vpack.c.b16 %v7245, %v7244
      %v7258 = vpack.c.b16 %v7247, %v7246
      %v7259 = vpack.c.b16 %v7249, %v7248
      %v7260 = vpack.c.b16 %v7251, %v7250
      %v7261 = vpack.c.b16 %v7253, %v7252
      %7270 = vmatprep.subr.bf16.mxu0 0
      %7271 = vmatpush1.bf16.msra.mxu0 %v7254
      %7272 = vmatprep.subr.bf16.mxu0 0
      %7273 = vmatpush1.bf16.msra.mxu0 %v7255
      %7274 = vmatprep.subr.bf16.mxu0 0
      %7275 = vmatpush1.bf16.msra.mxu0 %v7256
      %7276 = vmatprep.subr.bf16.mxu0 0
      %7277 = vmatpush1.bf16.msra.mxu0 %v7257
      %7278 = vmatprep.subr.bf16.mxu0 0
      %7279 = vmatpush1.bf16.msra.mxu0 %v7258
      %7280 = vmatprep.subr.bf16.mxu0 0
      %7281 = vmatpush1.bf16.msra.mxu0 %v7259
      %7282 = vmatprep.subr.bf16.mxu0 0
      %7283 = vmatpush1.bf16.msra.mxu0 %v7260
      %7284 = vmatprep.subr.bf16.mxu0 0
      %7285 = vmatpush1.bf16.msra.mxu0 %v7261
      %7286 = vmatprep.subr.bf16.mxu0 0
      %7287 = vmatpush1.bf16.msra.mxu0 0
      %7288 = vmatprep.subr.bf16.mxu0 0
      %7289 = vmatpush1.bf16.msra.mxu0 0
      %7290 = vmatprep.subr.bf16.mxu0 0
      %7291 = vmatpush1.bf16.msra.mxu0 0
      %7292 = vmatprep.subr.bf16.mxu0 0
      %7293 = vmatpush1.bf16.msra.mxu0 0
      %7294 = vmatprep.subr.bf16.mxu0 0
      %7295 = vmatpush1.bf16.msra.mxu0 0
      %7296 = vmatprep.subr.bf16.mxu0 0
      %7297 = vmatpush1.bf16.msra.mxu0 0
      %7298 = vmatprep.subr.bf16.mxu0 0
      %7299 = vmatpush1.bf16.msra.mxu0 0
      %7300 = vmatprep.subr.bf16.mxu0 0
      %7301 = vmatpush1.bf16.msra.mxu0 0
      %7302 = vmatprep.mubr.bf16.mxu0 0
      %7303 = vmatmul.mubr.bf16.gmra.mrb[0].mxu0 %v6028
      %v7304 = vpop.f32.mrb[0].mxu0
      %v7305 = vadd.f32 %v7220, %v7304
      %v7306 = vpop.f32.mrb[0].mxu0
      %v7307 = vpop.f32.mrb[0].mxu0
      %v7308 = vadd.f32 %v7220, %v7307
      %v7309 = vpop.f32.mrb[0].mxu0
      %7310 = vdwg.mxu0
      %s7311 = scalar_lea.vmem %s8, 640
      %v7312 = vld [vmem:[%s7311] sm:$0xf]
      %v7313 = vld [vmem:[%s7311 + $0x4] sm:$0xf]
      %v7314 = vld [vmem:[%s7311 + $0x8] sm:$0xf]
      %v7315 = vld [vmem:[%s7311 + $0xc] sm:$0xf]
      %v7316 = vld [vmem:[%s7311 + $0x10] sm:$0xf]
      %v7317 = vld [vmem:[%s7311 + $0x14] sm:$0xf]
      %v7318 = vld [vmem:[%s7311 + $0x18] sm:$0xf]
      %v7319 = vld [vmem:[%s7311 + $0x1c] sm:$0xf]
      %v7320 = vld [vmem:[%s7311 + $0x20] sm:$0xf]
      %v7321 = vld [vmem:[%s7311 + $0x24] sm:$0xf]
      %v7322 = vld [vmem:[%s7311 + $0x28] sm:$0xf]
      %v7323 = vld [vmem:[%s7311 + $0x2c] sm:$0xf]
      %v7324 = vld [vmem:[%s7311 + $0x30] sm:$0xf]
      %v7325 = vld [vmem:[%s7311 + $0x34] sm:$0xf]
      %v7326 = vld [vmem:[%s7311 + $0x38] sm:$0xf]
      %v7327 = vld [vmem:[%s7311 + $0x3c] sm:$0xf]
      %s7328 = scalar_lea.vmem %s9, 10
      %v7329 = vld [vmem:[%s7328] sm:$0x1]
      %v7331 = vlaneseq
      %v7332 = vshrl.u32 %v7331, 7
      %v7333 = vsub.s32 0, %v7332
      %v7334 = vrot.slane %v7329, %v7333
      %v7352 = vunpack.c.l.b16 %v7312
      %v7353 = vunpack.c.l.b16 %v7313
      %v7354 = vunpack.c.l.b16 %v7314
      %v7355 = vunpack.c.l.b16 %v7315
      %v7356 = vunpack.c.l.b16 %v7316
      %v7357 = vunpack.c.l.b16 %v7317
      %v7358 = vunpack.c.l.b16 %v7318
      %v7359 = vunpack.c.l.b16 %v7319
      %v7360 = vunpack.c.l.b16 %v7320
      %v7361 = vunpack.c.l.b16 %v7321
      %v7362 = vunpack.c.l.b16 %v7322
      %v7363 = vunpack.c.l.b16 %v7323
      %v7364 = vunpack.c.l.b16 %v7324
      %v7365 = vunpack.c.l.b16 %v7325
      %v7366 = vunpack.c.l.b16 %v7326
      %v7367 = vunpack.c.l.b16 %v7327
      %v7368 = vpack.c.b16 %v7353, %v7352
      %v7369 = vpack.c.b16 %v7355, %v7354
      %v7370 = vpack.c.b16 %v7357, %v7356
      %v7371 = vpack.c.b16 %v7359, %v7358
      %v7372 = vpack.c.b16 %v7361, %v7360
      %v7373 = vpack.c.b16 %v7363, %v7362
      %v7374 = vpack.c.b16 %v7365, %v7364
      %v7375 = vpack.c.b16 %v7367, %v7366
      %7384 = vmatprep.subr.bf16.mxu0 0
      %7385 = vmatpush1.bf16.msra.mxu0 %v7368
      %7386 = vmatprep.subr.bf16.mxu0 0
      %7387 = vmatpush1.bf16.msra.mxu0 %v7369
      %7388 = vmatprep.subr.bf16.mxu0 0
      %7389 = vmatpush1.bf16.msra.mxu0 %v7370
      %7390 = vmatprep.subr.bf16.mxu0 0
      %7391 = vmatpush1.bf16.msra.mxu0 %v7371
      %7392 = vmatprep.subr.bf16.mxu0 0
      %7393 = vmatpush1.bf16.msra.mxu0 %v7372
      %7394 = vmatprep.subr.bf16.mxu0 0
      %7395 = vmatpush1.bf16.msra.mxu0 %v7373
      %7396 = vmatprep.subr.bf16.mxu0 0
      %7397 = vmatpush1.bf16.msra.mxu0 %v7374
      %7398 = vmatprep.subr.bf16.mxu0 0
      %7399 = vmatpush1.bf16.msra.mxu0 %v7375
      %7400 = vmatprep.subr.bf16.mxu0 0
      %7401 = vmatpush1.bf16.msra.mxu0 0
      %7402 = vmatprep.subr.bf16.mxu0 0
      %7403 = vmatpush1.bf16.msra.mxu0 0
      %7404 = vmatprep.subr.bf16.mxu0 0
      %7405 = vmatpush1.bf16.msra.mxu0 0
      %7406 = vmatprep.subr.bf16.mxu0 0
      %7407 = vmatpush1.bf16.msra.mxu0 0
      %7408 = vmatprep.subr.bf16.mxu0 0
      %7409 = vmatpush1.bf16.msra.mxu0 0
      %7410 = vmatprep.subr.bf16.mxu0 0
      %7411 = vmatpush1.bf16.msra.mxu0 0
      %7412 = vmatprep.subr.bf16.mxu0 0
      %7413 = vmatpush1.bf16.msra.mxu0 0
      %7414 = vmatprep.subr.bf16.mxu0 0
      %7415 = vmatpush1.bf16.msra.mxu0 0
      %7416 = vmatprep.mubr.bf16.mxu0 0
      %7417 = vmatmul.mubr.bf16.gmra.mrb[0].mxu0 %v6028
      %v7418 = vpop.f32.mrb[0].mxu0
      %v7419 = vadd.f32 %v7334, %v7418
      %v7420 = vpop.f32.mrb[0].mxu0
      %v7421 = vpop.f32.mrb[0].mxu0
      %v7422 = vadd.f32 %v7334, %v7421
      %v7423 = vpop.f32.mrb[0].mxu0
      %7424 = vdwg.mxu0
      %v7425 = vpack.c.bf16 %v7194, %v7191
      %v7426 = vpack.c.bf16 %v7308, %v7305
      %v7428 = vsel %vm1143, %v7425, 0
      %v7431 = vsel %vm1143, %v7426, 0
      %7433 = vmatprep.subr.bf16.mxu0 0
      %7434 = vmatpush1.bf16.xpose.msra.mxu0 %v7431
      %7435 = vmatprep.subr.bf16.mxu0 0
      %7436 = vmatpush1.bf16.xpose.msra.mxu0 0
      %7437 = vmatprep.subr.bf16.mxu0 0
      %7438 = vmatpush1.bf16.xpose.msra.mxu0 0
      %7439 = vmatprep.subr.bf16.mxu0 0
      %7440 = vmatpush1.bf16.xpose.msra.mxu0 0
      %7441 = vmatprep.subr.bf16.mxu0 0
      %7442 = vmatpush1.bf16.xpose.msra.mxu0 0
      %7443 = vmatprep.subr.bf16.mxu0 0
      %7444 = vmatpush1.bf16.xpose.msra.mxu0 0
      %7445 = vmatprep.subr.bf16.mxu0 0
      %7446 = vmatpush1.bf16.xpose.msra.mxu0 0
      %7447 = vmatprep.subr.bf16.mxu0 0
      %7448 = vmatpush1.bf16.xpose.msra.mxu0 0
      %7449 = vmatprep.subr.bf16.mxu0 0
      %7450 = vmatpush1.bf16.xpose.msra.mxu0 0
      %7451 = vmatprep.subr.bf16.mxu0 0
      %7452 = vmatpush1.bf16.xpose.msra.mxu0 0
      %7453 = vmatprep.subr.bf16.mxu0 0
      %7454 = vmatpush1.bf16.xpose.msra.mxu0 0
      %7455 = vmatprep.subr.bf16.mxu0 0
      %7456 = vmatpush1.bf16.xpose.msra.mxu0 0
      %7457 = vmatprep.subr.bf16.mxu0 0
      %7458 = vmatpush1.bf16.xpose.msra.mxu0 0
      %7459 = vmatprep.subr.bf16.mxu0 0
      %7460 = vmatpush1.bf16.xpose.msra.mxu0 0
      %7461 = vmatprep.subr.bf16.mxu0 0
      %7462 = vmatpush1.bf16.xpose.msra.mxu0 0
      %7463 = vmatprep.subr.bf16.mxu0 0
      %7464 = vmatpush1.bf16.xpose.msra.mxu0 0
      %7465 = vmatprep.mubr.bf16.mxu0 0
      %7466 = vmatmul.mubr.bf16.gmra.mrb[0].mxu0 %v7428
      %v7467 = vpop.f32.mrb[0].mxu0
      %v7468 = vadd.f32 %v1141, %v7467
      %v7469 = vpop.f32.mrb[0].mxu0
      %v7470 = vpop.f32.mrb[0].mxu0
      %v7471 = vadd.f32 %v1141, %v7470
      %v7472 = vpop.f32.mrb[0].mxu0
      %7473 = vdwg.mxu0
      %v7474 = vsel %vm1191, %v7468, -inf
      %7475 = vmax.xlane.f32.xlu0 %v7474
      %v7476 = vpop.xlane.xlu0 %7475
      %v7477 = vsel %vm1191, %v7471, -inf
      %7478 = vmax.xlane.f32.xlu0 %v7477
      %v7479 = vpop.xlane.xlu0 %7478
      %v7480 = vsub.f32 %v7468, %v7476
      %v7481 = vsub.f32 %v7471, %v7479
      %v7482 = vmul.f32 %v7480, 1.442695
      %v7483 = vpow.pop %v7482
      %v7484 = vmul.f32 %v7481, 1.442695
      %v7485 = vpow.pop %v7484
      %v7486 = vsel %vm1191, %v7483, 0.0
      %7487 = vadd.xlane.f32.xlu0 %v7486
      %v7488 = vpop.xlane.xlu0 %7487
      %v7489 = vsel %vm1191, %v7485, 0.0
      %7490 = vadd.xlane.f32.xlu0 %v7489
      %v7491 = vpop.xlane.xlu0 %7490
      %v7492 = vrcp.pop %v7488
      %v7493 = vrcp.pop %v7491
      %v7494 = vmul.f32 %v7483, %v7492
      %v7495 = vmul.f32 %v7485, %v7493
      %v7496 = vpack.c.bf16 %v7495, %v7494
      %v7497 = vpack.c.bf16 %v7422, %v7419
      %v7499 = vsel %vm1191, %v7496, 0
      %7501 = vmatprep.subr.bf16.mxu0 0
      %7502 = vmatpush1.bf16.msra.mxu0 %v7497
      %7503 = vmatprep.subr.bf16.mxu0 0
      %7504 = vmatpush1.bf16.msra.mxu0 0
      %7505 = vmatprep.subr.bf16.mxu0 0
      %7506 = vmatpush1.bf16.msra.mxu0 0
      %7507 = vmatprep.subr.bf16.mxu0 0
      %7508 = vmatpush1.bf16.msra.mxu0 0
      %7509 = vmatprep.subr.bf16.mxu0 0
      %7510 = vmatpush1.bf16.msra.mxu0 0
      %7511 = vmatprep.subr.bf16.mxu0 0
      %7512 = vmatpush1.bf16.msra.mxu0 0
      %7513 = vmatprep.subr.bf16.mxu0 0
      %7514 = vmatpush1.bf16.msra.mxu0 0
      %7515 = vmatprep.subr.bf16.mxu0 0
      %7516 = vmatpush1.bf16.msra.mxu0 0
      %7517 = vmatprep.subr.bf16.mxu0 0
      %7518 = vmatpush1.bf16.msra.mxu0 0
      %7519 = vmatprep.subr.bf16.mxu0 0
      %7520 = vmatpush1.bf16.msra.mxu0 0
      %7521 = vmatprep.subr.bf16.mxu0 0
      %7522 = vmatpush1.bf16.msra.mxu0 0
      %7523 = vmatprep.subr.bf16.mxu0 0
      %7524 = vmatpush1.bf16.msra.mxu0 0
      %7525 = vmatprep.subr.bf16.mxu0 0
      %7526 = vmatpush1.bf16.msra.mxu0 0
      %7527 = vmatprep.subr.bf16.mxu0 0
      %7528 = vmatpush1.bf16.msra.mxu0 0
      %7529 = vmatprep.subr.bf16.mxu0 0
      %7530 = vmatpush1.bf16.msra.mxu0 0
      %7531 = vmatprep.subr.bf16.mxu0 0
      %7532 = vmatpush1.bf16.msra.mxu0 0
      %7533 = vmatprep.mubr.bf16.mxu0 0
      %7534 = vmatmul.mubr.bf16.gmra.mrb[0].mxu0 %v7499
      %v7535 = vpop.f32.mrb[0].mxu0
      %v7536 = vadd.f32 0.0, %v7535
      %v7537 = vpop.f32.mrb[0].mxu0
      %v7538 = vpop.f32.mrb[0].mxu0
      %v7539 = vadd.f32 0.0, %v7538
      %v7540 = vpop.f32.mrb[0].mxu0
      %7541 = vdwg.mxu0
      %v7542 = vpack.c.bf16 %v7539, %v7536
      %s7543 = scalar_lea.vmem %s10, 160
      %v7544 = vld [vmem:[%s7543] sm:$0xf]
      %v7545 = vld [vmem:[%s7543 + $0x4] sm:$0xf]
      %v7546 = vld [vmem:[%s7543 + $0x8] sm:$0xf]
      %v7547 = vld [vmem:[%s7543 + $0xc] sm:$0xf]
      %v7552 = vunpack.c.l.b16 %v7544
      %v7553 = vunpack.c.l.b16 %v7545
      %v7554 = vunpack.c.l.b16 %v7546
      %v7555 = vunpack.c.l.b16 %v7547
      %v7556 = vpack.c.b16 %v7553, %v7552
      %v7557 = vpack.c.b16 %v7555, %v7554
      %v7561 = vsel %vm1143, %v7542, 0
      %7563 = vmatprep.subr.bf16.mxu0 0
      %7564 = vmatpush1.bf16.msra.mxu0 %v7556
      %7565 = vmatprep.subr.bf16.mxu0 0
      %7566 = vmatpush1.bf16.msra.mxu0 %v7557
      %7567 = vmatprep.subr.bf16.mxu0 0
      %7568 = vmatpush1.bf16.msra.mxu0 0
      %7569 = vmatprep.subr.bf16.mxu0 0
      %7570 = vmatpush1.bf16.msra.mxu0 0
      %7571 = vmatprep.subr.bf16.mxu0 0
      %7572 = vmatpush1.bf16.msra.mxu0 0
      %7573 = vmatprep.subr.bf16.mxu0 0
      %7574 = vmatpush1.bf16.msra.mxu0 0
      %7575 = vmatprep.subr.bf16.mxu0 0
      %7576 = vmatpush1.bf16.msra.mxu0 0
      %7577 = vmatprep.subr.bf16.mxu0 0
      %7578 = vmatpush1.bf16.msra.mxu0 0
      %7579 = vmatprep.subr.bf16.mxu0 0
      %7580 = vmatpush1.bf16.msra.mxu0 0
      %7581 = vmatprep.subr.bf16.mxu0 0
      %7582 = vmatpush1.bf16.msra.mxu0 0
      %7583 = vmatprep.subr.bf16.mxu0 0
      %7584 = vmatpush1.bf16.msra.mxu0 0
      %7585 = vmatprep.subr.bf16.mxu0 0
      %7586 = vmatpush1.bf16.msra.mxu0 0
      %7587 = vmatprep.subr.bf16.mxu0 0
      %7588 = vmatpush1.bf16.msra.mxu0 0
      %7589 = vmatprep.subr.bf16.mxu0 0
      %7590 = vmatpush1.bf16.msra.mxu0 0
      %7591 = vmatprep.subr.bf16.mxu0 0
      %7592 = vmatpush1.bf16.msra.mxu0 0
      %7593 = vmatprep.subr.bf16.mxu0 0
      %7594 = vmatpush1.bf16.msra.mxu0 0
      %7595 = vmatprep.mubr.bf16.mxu0 0
      %7596 = vmatmul.mubr.bf16.gmra.mrb[0].mxu0 %v7561
      %v7597 = vpop.f32.mrb[0].mxu0
      %v7598 = vadd.f32 0.0, %v7597
      %v7599 = vpop.f32.mrb[0].mxu0
      %v7600 = vpop.f32.mrb[0].mxu0
      %v7601 = vadd.f32 0.0, %v7600
      %v7602 = vpop.f32.mrb[0].mxu0
      %7603 = vdwg.mxu0
      %v7604 = vadd.f32 %v7081, %v7598
      %v7605 = vadd.f32 %v7082, %v7601
      %s7606 = scalar_lea.vmem %s4, 704
      %v7607 = vld [vmem:[%s7606] sm:$0xf]
      %v7608 = vld [vmem:[%s7606 + $0x4] sm:$0xf]
      %v7609 = vld [vmem:[%s7606 + $0x8] sm:$0xf]
      %v7610 = vld [vmem:[%s7606 + $0xc] sm:$0xf]
      %v7611 = vld [vmem:[%s7606 + $0x10] sm:$0xf]
      %v7612 = vld [vmem:[%s7606 + $0x14] sm:$0xf]
      %v7613 = vld [vmem:[%s7606 + $0x18] sm:$0xf]
      %v7614 = vld [vmem:[%s7606 + $0x1c] sm:$0xf]
      %v7615 = vld [vmem:[%s7606 + $0x20] sm:$0xf]
      %v7616 = vld [vmem:[%s7606 + $0x24] sm:$0xf]
      %v7617 = vld [vmem:[%s7606 + $0x28] sm:$0xf]
      %v7618 = vld [vmem:[%s7606 + $0x2c] sm:$0xf]
      %v7619 = vld [vmem:[%s7606 + $0x30] sm:$0xf]
      %v7620 = vld [vmem:[%s7606 + $0x34] sm:$0xf]
      %v7621 = vld [vmem:[%s7606 + $0x38] sm:$0xf]
      %v7622 = vld [vmem:[%s7606 + $0x3c] sm:$0xf]
      %s7623 = scalar_lea.vmem %s5, 11
      %v7624 = vld [vmem:[%s7623] sm:$0x1]
      %v7626 = vlaneseq
      %v7627 = vshrl.u32 %v7626, 7
      %v7628 = vsub.s32 0, %v7627
      %v7629 = vrot.slane %v7624, %v7628
      %v7647 = vunpack.c.l.b16 %v7607
      %v7648 = vunpack.c.l.b16 %v7608
      %v7649 = vunpack.c.l.b16 %v7609
      %v7650 = vunpack.c.l.b16 %v7610
      %v7651 = vunpack.c.l.b16 %v7611
      %v7652 = vunpack.c.l.b16 %v7612
      %v7653 = vunpack.c.l.b16 %v7613
      %v7654 = vunpack.c.l.b16 %v7614
      %v7655 = vunpack.c.l.b16 %v7615
      %v7656 = vunpack.c.l.b16 %v7616
      %v7657 = vunpack.c.l.b16 %v7617
      %v7658 = vunpack.c.l.b16 %v7618
      %v7659 = vunpack.c.l.b16 %v7619
      %v7660 = vunpack.c.l.b16 %v7620
      %v7661 = vunpack.c.l.b16 %v7621
      %v7662 = vunpack.c.l.b16 %v7622
      %v7663 = vpack.c.b16 %v7648, %v7647
      %v7664 = vpack.c.b16 %v7650, %v7649
      %v7665 = vpack.c.b16 %v7652, %v7651
      %v7666 = vpack.c.b16 %v7654, %v7653
      %v7667 = vpack.c.b16 %v7656, %v7655
      %v7668 = vpack.c.b16 %v7658, %v7657
      %v7669 = vpack.c.b16 %v7660, %v7659
      %v7670 = vpack.c.b16 %v7662, %v7661
      %7679 = vmatprep.subr.bf16.mxu0 0
      %7680 = vmatpush1.bf16.msra.mxu0 %v7663
      %7681 = vmatprep.subr.bf16.mxu0 0
      %7682 = vmatpush1.bf16.msra.mxu0 %v7664
      %7683 = vmatprep.subr.bf16.mxu0 0
      %7684 = vmatpush1.bf16.msra.mxu0 %v7665
      %7685 = vmatprep.subr.bf16.mxu0 0
      %7686 = vmatpush1.bf16.msra.mxu0 %v7666
      %7687 = vmatprep.subr.bf16.mxu0 0
      %7688 = vmatpush1.bf16.msra.mxu0 %v7667
      %7689 = vmatprep.subr.bf16.mxu0 0
      %7690 = vmatpush1.bf16.msra.mxu0 %v7668
      %7691 = vmatprep.subr.bf16.mxu0 0
      %7692 = vmatpush1.bf16.msra.mxu0 %v7669
      %7693 = vmatprep.subr.bf16.mxu0 0
      %7694 = vmatpush1.bf16.msra.mxu0 %v7670
      %7695 = vmatprep.subr.bf16.mxu0 0
      %7696 = vmatpush1.bf16.msra.mxu0 0
      %7697 = vmatprep.subr.bf16.mxu0 0
      %7698 = vmatpush1.bf16.msra.mxu0 0
      %7699 = vmatprep.subr.bf16.mxu0 0
      %7700 = vmatpush1.bf16.msra.mxu0 0
      %7701 = vmatprep.subr.bf16.mxu0 0
      %7702 = vmatpush1.bf16.msra.mxu0 0
      %7703 = vmatprep.subr.bf16.mxu0 0
      %7704 = vmatpush1.bf16.msra.mxu0 0
      %7705 = vmatprep.subr.bf16.mxu0 0
      %7706 = vmatpush1.bf16.msra.mxu0 0
      %7707 = vmatprep.subr.bf16.mxu0 0
      %7708 = vmatpush1.bf16.msra.mxu0 0
      %7709 = vmatprep.subr.bf16.mxu0 0
      %7710 = vmatpush1.bf16.msra.mxu0 0
      %7711 = vmatprep.mubr.bf16.mxu0 0
      %7712 = vmatmul.mubr.bf16.gmra.mrb[0].mxu0 %v6028
      %v7713 = vpop.f32.mrb[0].mxu0
      %v7714 = vadd.f32 %v7629, %v7713
      %v7715 = vpop.f32.mrb[0].mxu0
      %v7716 = vpop.f32.mrb[0].mxu0
      %v7717 = vadd.f32 %v7629, %v7716
      %v7718 = vpop.f32.mrb[0].mxu0
      %7719 = vdwg.mxu0
      %s7720 = scalar_lea.vmem %s6, 704
      %v7721 = vld [vmem:[%s7720] sm:$0xf]
      %v7722 = vld [vmem:[%s7720 + $0x4] sm:$0xf]
      %v7723 = vld [vmem:[%s7720 + $0x8] sm:$0xf]
      %v7724 = vld [vmem:[%s7720 + $0xc] sm:$0xf]
      %v7725 = vld [vmem:[%s7720 + $0x10] sm:$0xf]
      %v7726 = vld [vmem:[%s7720 + $0x14] sm:$0xf]
      %v7727 = vld [vmem:[%s7720 + $0x18] sm:$0xf]
      %v7728 = vld [vmem:[%s7720 + $0x1c] sm:$0xf]
      %v7729 = vld [vmem:[%s7720 + $0x20] sm:$0xf]
      %v7730 = vld [vmem:[%s7720 + $0x24] sm:$0xf]
      %v7731 = vld [vmem:[%s7720 + $0x28] sm:$0xf]
      %v7732 = vld [vmem:[%s7720 + $0x2c] sm:$0xf]
      %v7733 = vld [vmem:[%s7720 + $0x30] sm:$0xf]
      %v7734 = vld [vmem:[%s7720 + $0x34] sm:$0xf]
      %v7735 = vld [vmem:[%s7720 + $0x38] sm:$0xf]
      %v7736 = vld [vmem:[%s7720 + $0x3c] sm:$0xf]
      %s7737 = scalar_lea.vmem %s7, 11
      %v7738 = vld [vmem:[%s7737] sm:$0x1]
      %v7740 = vlaneseq
      %v7741 = vshrl.u32 %v7740, 7
      %v7742 = vsub.s32 0, %v7741
      %v7743 = vrot.slane %v7738, %v7742
      %v7761 = vunpack.c.l.b16 %v7721
      %v7762 = vunpack.c.l.b16 %v7722
      %v7763 = vunpack.c.l.b16 %v7723
      %v7764 = vunpack.c.l.b16 %v7724
      %v7765 = vunpack.c.l.b16 %v7725
      %v7766 = vunpack.c.l.b16 %v7726
      %v7767 = vunpack.c.l.b16 %v7727
      %v7768 = vunpack.c.l.b16 %v7728
      %v7769 = vunpack.c.l.b16 %v7729
      %v7770 = vunpack.c.l.b16 %v7730
      %v7771 = vunpack.c.l.b16 %v7731
      %v7772 = vunpack.c.l.b16 %v7732
      %v7773 = vunpack.c.l.b16 %v7733
      %v7774 = vunpack.c.l.b16 %v7734
      %v7775 = vunpack.c.l.b16 %v7735
      %v7776 = vunpack.c.l.b16 %v7736
      %v7777 = vpack.c.b16 %v7762, %v7761
      %v7778 = vpack.c.b16 %v7764, %v7763
      %v7779 = vpack.c.b16 %v7766, %v7765
      %v7780 = vpack.c.b16 %v7768, %v7767
      %v7781 = vpack.c.b16 %v7770, %v7769
      %v7782 = vpack.c.b16 %v7772, %v7771
      %v7783 = vpack.c.b16 %v7774, %v7773
      %v7784 = vpack.c.b16 %v7776, %v7775
      %7793 = vmatprep.subr.bf16.mxu0 0
      %7794 = vmatpush1.bf16.msra.mxu0 %v7777
      %7795 = vmatprep.subr.bf16.mxu0 0
      %7796 = vmatpush1.bf16.msra.mxu0 %v7778
      %7797 = vmatprep.subr.bf16.mxu0 0
      %7798 = vmatpush1.bf16.msra.mxu0 %v7779
      %7799 = vmatprep.subr.bf16.mxu0 0
      %7800 = vmatpush1.bf16.msra.mxu0 %v7780
      %7801 = vmatprep.subr.bf16.mxu0 0
      %7802 = vmatpush1.bf16.msra.mxu0 %v7781
      %7803 = vmatprep.subr.bf16.mxu0 0
      %7804 = vmatpush1.bf16.msra.mxu0 %v7782
      %7805 = vmatprep.subr.bf16.mxu0 0
      %7806 = vmatpush1.bf16.msra.mxu0 %v7783
      %7807 = vmatprep.subr.bf16.mxu0 0
      %7808 = vmatpush1.bf16.msra.mxu0 %v7784
      %7809 = vmatprep.subr.bf16.mxu0 0
      %7810 = vmatpush1.bf16.msra.mxu0 0
      %7811 = vmatprep.subr.bf16.mxu0 0
      %7812 = vmatpush1.bf16.msra.mxu0 0
      %7813 = vmatprep.subr.bf16.mxu0 0
      %7814 = vmatpush1.bf16.msra.mxu0 0
      %7815 = vmatprep.subr.bf16.mxu0 0
      %7816 = vmatpush1.bf16.msra.mxu0 0
      %7817 = vmatprep.subr.bf16.mxu0 0
      %7818 = vmatpush1.bf16.msra.mxu0 0
      %7819 = vmatprep.subr.bf16.mxu0 0
      %7820 = vmatpush1.bf16.msra.mxu0 0
      %7821 = vmatprep.subr.bf16.mxu0 0
      %7822 = vmatpush1.bf16.msra.mxu0 0
      %7823 = vmatprep.subr.bf16.mxu0 0
      %7824 = vmatpush1.bf16.msra.mxu0 0
      %7825 = vmatprep.mubr.bf16.mxu0 0
      %7826 = vmatmul.mubr.bf16.gmra.mrb[0].mxu0 %v6028
      %v7827 = vpop.f32.mrb[0].mxu0
      %v7828 = vadd.f32 %v7743, %v7827
      %v7829 = vpop.f32.mrb[0].mxu0
      %v7830 = vpop.f32.mrb[0].mxu0
      %v7831 = vadd.f32 %v7743, %v7830
      %v7832 = vpop.f32.mrb[0].mxu0
      %7833 = vdwg.mxu0
      %s7834 = scalar_lea.vmem %s8, 704
      %v7835 = vld [vmem:[%s7834] sm:$0xf]
      %v7836 = vld [vmem:[%s7834 + $0x4] sm:$0xf]
      %v7837 = vld [vmem:[%s7834 + $0x8] sm:$0xf]
      %v7838 = vld [vmem:[%s7834 + $0xc] sm:$0xf]
      %v7839 = vld [vmem:[%s7834 + $0x10] sm:$0xf]
      %v7840 = vld [vmem:[%s7834 + $0x14] sm:$0xf]
      %v7841 = vld [vmem:[%s7834 + $0x18] sm:$0xf]
      %v7842 = vld [vmem:[%s7834 + $0x1c] sm:$0xf]
      %v7843 = vld [vmem:[%s7834 + $0x20] sm:$0xf]
      %v7844 = vld [vmem:[%s7834 + $0x24] sm:$0xf]
      %v7845 = vld [vmem:[%s7834 + $0x28] sm:$0xf]
      %v7846 = vld [vmem:[%s7834 + $0x2c] sm:$0xf]
      %v7847 = vld [vmem:[%s7834 + $0x30] sm:$0xf]
      %v7848 = vld [vmem:[%s7834 + $0x34] sm:$0xf]
      %v7849 = vld [vmem:[%s7834 + $0x38] sm:$0xf]
      %v7850 = vld [vmem:[%s7834 + $0x3c] sm:$0xf]
      %s7851 = scalar_lea.vmem %s9, 11
      %v7852 = vld [vmem:[%s7851] sm:$0x1]
      %v7854 = vlaneseq
      %v7855 = vshrl.u32 %v7854, 7
      %v7856 = vsub.s32 0, %v7855
      %v7857 = vrot.slane %v7852, %v7856
      %v7875 = vunpack.c.l.b16 %v7835
      %v7876 = vunpack.c.l.b16 %v7836
      %v7877 = vunpack.c.l.b16 %v7837
      %v7878 = vunpack.c.l.b16 %v7838
      %v7879 = vunpack.c.l.b16 %v7839
      %v7880 = vunpack.c.l.b16 %v7840
      %v7881 = vunpack.c.l.b16 %v7841
      %v7882 = vunpack.c.l.b16 %v7842
      %v7883 = vunpack.c.l.b16 %v7843
      %v7884 = vunpack.c.l.b16 %v7844
      %v7885 = vunpack.c.l.b16 %v7845
      %v7886 = vunpack.c.l.b16 %v7846
      %v7887 = vunpack.c.l.b16 %v7847
      %v7888 = vunpack.c.l.b16 %v7848
      %v7889 = vunpack.c.l.b16 %v7849
      %v7890 = vunpack.c.l.b16 %v7850
      %v7891 = vpack.c.b16 %v7876, %v7875
      %v7892 = vpack.c.b16 %v7878, %v7877
      %v7893 = vpack.c.b16 %v7880, %v7879
      %v7894 = vpack.c.b16 %v7882, %v7881
      %v7895 = vpack.c.b16 %v7884, %v7883
      %v7896 = vpack.c.b16 %v7886, %v7885
      %v7897 = vpack.c.b16 %v7888, %v7887
      %v7898 = vpack.c.b16 %v7890, %v7889
      %7907 = vmatprep.subr.bf16.mxu0 0
      %7908 = vmatpush1.bf16.msra.mxu0 %v7891
      %7909 = vmatprep.subr.bf16.mxu0 0
      %7910 = vmatpush1.bf16.msra.mxu0 %v7892
      %7911 = vmatprep.subr.bf16.mxu0 0
      %7912 = vmatpush1.bf16.msra.mxu0 %v7893
      %7913 = vmatprep.subr.bf16.mxu0 0
      %7914 = vmatpush1.bf16.msra.mxu0 %v7894
      %7915 = vmatprep.subr.bf16.mxu0 0
      %7916 = vmatpush1.bf16.msra.mxu0 %v7895
      %7917 = vmatprep.subr.bf16.mxu0 0
      %7918 = vmatpush1.bf16.msra.mxu0 %v7896
      %7919 = vmatprep.subr.bf16.mxu0 0
      %7920 = vmatpush1.bf16.msra.mxu0 %v7897
      %7921 = vmatprep.subr.bf16.mxu0 0
      %7922 = vmatpush1.bf16.msra.mxu0 %v7898
      %7923 = vmatprep.subr.bf16.mxu0 0
      %7924 = vmatpush1.bf16.msra.mxu0 0
      %7925 = vmatprep.subr.bf16.mxu0 0
      %7926 = vmatpush1.bf16.msra.mxu0 0
      %7927 = vmatprep.subr.bf16.mxu0 0
      %7928 = vmatpush1.bf16.msra.mxu0 0
      %7929 = vmatprep.subr.bf16.mxu0 0
      %7930 = vmatpush1.bf16.msra.mxu0 0
      %7931 = vmatprep.subr.bf16.mxu0 0
      %7932 = vmatpush1.bf16.msra.mxu0 0
      %7933 = vmatprep.subr.bf16.mxu0 0
      %7934 = vmatpush1.bf16.msra.mxu0 0
      %7935 = vmatprep.subr.bf16.mxu0 0
      %7936 = vmatpush1.bf16.msra.mxu0 0
      %7937 = vmatprep.subr.bf16.mxu0 0
      %7938 = vmatpush1.bf16.msra.mxu0 0
      %7939 = vmatprep.mubr.bf16.mxu0 0
      %7940 = vmatmul.mubr.bf16.gmra.mrb[0].mxu0 %v6028
      %v7941 = vpop.f32.mrb[0].mxu0
      %v7942 = vadd.f32 %v7857, %v7941
      %v7943 = vpop.f32.mrb[0].mxu0
      %v7944 = vpop.f32.mrb[0].mxu0
      %v7945 = vadd.f32 %v7857, %v7944
      %v7946 = vpop.f32.mrb[0].mxu0
      %7947 = vdwg.mxu0
      %v7948 = vpack.c.bf16 %v7717, %v7714
      %v7949 = vpack.c.bf16 %v7831, %v7828
      %v7951 = vsel %vm1143, %v7948, 0
      %v7954 = vsel %vm1143, %v7949, 0
      %7956 = vmatprep.subr.bf16.mxu0 0
      %7957 = vmatpush1.bf16.xpose.msra.mxu0 %v7954
      %7958 = vmatprep.subr.bf16.mxu0 0
      %7959 = vmatpush1.bf16.xpose.msra.mxu0 0
      %7960 = vmatprep.subr.bf16.mxu0 0
      %7961 = vmatpush1.bf16.xpose.msra.mxu0 0
      %7962 = vmatprep.subr.bf16.mxu0 0
      %7963 = vmatpush1.bf16.xpose.msra.mxu0 0
      %7964 = vmatprep.subr.bf16.mxu0 0
      %7965 = vmatpush1.bf16.xpose.msra.mxu0 0
      %7966 = vmatprep.subr.bf16.mxu0 0
      %7967 = vmatpush1.bf16.xpose.msra.mxu0 0
      %7968 = vmatprep.subr.bf16.mxu0 0
      %7969 = vmatpush1.bf16.xpose.msra.mxu0 0
      %7970 = vmatprep.subr.bf16.mxu0 0
      %7971 = vmatpush1.bf16.xpose.msra.mxu0 0
      %7972 = vmatprep.subr.bf16.mxu0 0
      %7973 = vmatpush1.bf16.xpose.msra.mxu0 0
      %7974 = vmatprep.subr.bf16.mxu0 0
      %7975 = vmatpush1.bf16.xpose.msra.mxu0 0
      %7976 = vmatprep.subr.bf16.mxu0 0
      %7977 = vmatpush1.bf16.xpose.msra.mxu0 0
      %7978 = vmatprep.subr.bf16.mxu0 0
      %7979 = vmatpush1.bf16.xpose.msra.mxu0 0
      %7980 = vmatprep.subr.bf16.mxu0 0
      %7981 = vmatpush1.bf16.xpose.msra.mxu0 0
      %7982 = vmatprep.subr.bf16.mxu0 0
      %7983 = vmatpush1.bf16.xpose.msra.mxu0 0
      %7984 = vmatprep.subr.bf16.mxu0 0
      %7985 = vmatpush1.bf16.xpose.msra.mxu0 0
      %7986 = vmatprep.subr.bf16.mxu0 0
      %7987 = vmatpush1.bf16.xpose.msra.mxu0 0
      %7988 = vmatprep.mubr.bf16.mxu0 0
      %7989 = vmatmul.mubr.bf16.gmra.mrb[0].mxu0 %v7951
      %v7990 = vpop.f32.mrb[0].mxu0
      %v7991 = vadd.f32 %v1141, %v7990
      %v7992 = vpop.f32.mrb[0].mxu0
      %v7993 = vpop.f32.mrb[0].mxu0
      %v7994 = vadd.f32 %v1141, %v7993
      %v7995 = vpop.f32.mrb[0].mxu0
      %7996 = vdwg.mxu0
      %v7997 = vsel %vm1191, %v7991, -inf
      %7998 = vmax.xlane.f32.xlu0 %v7997
      %v7999 = vpop.xlane.xlu0 %7998
      %v8000 = vsel %vm1191, %v7994, -inf
      %8001 = vmax.xlane.f32.xlu0 %v8000
      %v8002 = vpop.xlane.xlu0 %8001
      %v8003 = vsub.f32 %v7991, %v7999
      %v8004 = vsub.f32 %v7994, %v8002
      %v8005 = vmul.f32 %v8003, 1.442695
      %v8006 = vpow.pop %v8005
      %v8007 = vmul.f32 %v8004, 1.442695
      %v8008 = vpow.pop %v8007
      %v8009 = vsel %vm1191, %v8006, 0.0
      %8010 = vadd.xlane.f32.xlu0 %v8009
      %v8011 = vpop.xlane.xlu0 %8010
      %v8012 = vsel %vm1191, %v8008, 0.0
      %8013 = vadd.xlane.f32.xlu0 %v8012
      %v8014 = vpop.xlane.xlu0 %8013
      %v8015 = vrcp.pop %v8011
      %v8016 = vrcp.pop %v8014
      %v8017 = vmul.f32 %v8006, %v8015
      %v8018 = vmul.f32 %v8008, %v8016
      %v8019 = vpack.c.bf16 %v8018, %v8017
      %v8020 = vpack.c.bf16 %v7945, %v7942
      %v8022 = vsel %vm1191, %v8019, 0
      %8024 = vmatprep.subr.bf16.mxu0 0
      %8025 = vmatpush1.bf16.msra.mxu0 %v8020
      %8026 = vmatprep.subr.bf16.mxu0 0
      %8027 = vmatpush1.bf16.msra.mxu0 0
      %8028 = vmatprep.subr.bf16.mxu0 0
      %8029 = vmatpush1.bf16.msra.mxu0 0
      %8030 = vmatprep.subr.bf16.mxu0 0
      %8031 = vmatpush1.bf16.msra.mxu0 0
      %8032 = vmatprep.subr.bf16.mxu0 0
      %8033 = vmatpush1.bf16.msra.mxu0 0
      %8034 = vmatprep.subr.bf16.mxu0 0
      %8035 = vmatpush1.bf16.msra.mxu0 0
      %8036 = vmatprep.subr.bf16.mxu0 0
      %8037 = vmatpush1.bf16.msra.mxu0 0
      %8038 = vmatprep.subr.bf16.mxu0 0
      %8039 = vmatpush1.bf16.msra.mxu0 0
      %8040 = vmatprep.subr.bf16.mxu0 0
      %8041 = vmatpush1.bf16.msra.mxu0 0
      %8042 = vmatprep.subr.bf16.mxu0 0
      %8043 = vmatpush1.bf16.msra.mxu0 0
      %8044 = vmatprep.subr.bf16.mxu0 0
      %8045 = vmatpush1.bf16.msra.mxu0 0
      %8046 = vmatprep.subr.bf16.mxu0 0
      %8047 = vmatpush1.bf16.msra.mxu0 0
      %8048 = vmatprep.subr.bf16.mxu0 0
      %8049 = vmatpush1.bf16.msra.mxu0 0
      %8050 = vmatprep.subr.bf16.mxu0 0
      %8051 = vmatpush1.bf16.msra.mxu0 0
      %8052 = vmatprep.subr.bf16.mxu0 0
      %8053 = vmatpush1.bf16.msra.mxu0 0
      %8054 = vmatprep.subr.bf16.mxu0 0
      %8055 = vmatpush1.bf16.msra.mxu0 0
      %8056 = vmatprep.mubr.bf16.mxu0 0
      %8057 = vmatmul.mubr.bf16.gmra.mrb[0].mxu0 %v8022
      %v8058 = vpop.f32.mrb[0].mxu0
      %v8059 = vadd.f32 0.0, %v8058
      %v8060 = vpop.f32.mrb[0].mxu0
      %v8061 = vpop.f32.mrb[0].mxu0
      %v8062 = vadd.f32 0.0, %v8061
      %v8063 = vpop.f32.mrb[0].mxu0
      %8064 = vdwg.mxu0
      %v8065 = vpack.c.bf16 %v8062, %v8059
      %s8066 = scalar_lea.vmem %s10, 176
      %v8067 = vld [vmem:[%s8066] sm:$0xf]
      %v8068 = vld [vmem:[%s8066 + $0x4] sm:$0xf]
      %v8069 = vld [vmem:[%s8066 + $0x8] sm:$0xf]
      %v8070 = vld [vmem:[%s8066 + $0xc] sm:$0xf]
      %v8075 = vunpack.c.l.b16 %v8067
      %v8076 = vunpack.c.l.b16 %v8068
      %v8077 = vunpack.c.l.b16 %v8069
      %v8078 = vunpack.c.l.b16 %v8070
      %v8079 = vpack.c.b16 %v8076, %v8075
      %v8080 = vpack.c.b16 %v8078, %v8077
      %v8084 = vsel %vm1143, %v8065, 0
      %8086 = vmatprep.subr.bf16.mxu0 0
      %8087 = vmatpush1.bf16.msra.mxu0 %v8079
      %8088 = vmatprep.subr.bf16.mxu0 0
      %8089 = vmatpush1.bf16.msra.mxu0 %v8080
      %8090 = vmatprep.subr.bf16.mxu0 0
      %8091 = vmatpush1.bf16.msra.mxu0 0
      %8092 = vmatprep.subr.bf16.mxu0 0
      %8093 = vmatpush1.bf16.msra.mxu0 0
      %8094 = vmatprep.subr.bf16.mxu0 0
      %8095 = vmatpush1.bf16.msra.mxu0 0
      %8096 = vmatprep.subr.bf16.mxu0 0
      %8097 = vmatpush1.bf16.msra.mxu0 0
      %8098 = vmatprep.subr.bf16.mxu0 0
      %8099 = vmatpush1.bf16.msra.mxu0 0
      %8100 = vmatprep.subr.bf16.mxu0 0
      %8101 = vmatpush1.bf16.msra.mxu0 0
      %8102 = vmatprep.subr.bf16.mxu0 0
      %8103 = vmatpush1.bf16.msra.mxu0 0
      %8104 = vmatprep.subr.bf16.mxu0 0
      %8105 = vmatpush1.bf16.msra.mxu0 0
      %8106 = vmatprep.subr.bf16.mxu0 0
      %8107 = vmatpush1.bf16.msra.mxu0 0
      %8108 = vmatprep.subr.bf16.mxu0 0
      %8109 = vmatpush1.bf16.msra.mxu0 0
      %8110 = vmatprep.subr.bf16.mxu0 0
      %8111 = vmatpush1.bf16.msra.mxu0 0
      %8112 = vmatprep.subr.bf16.mxu0 0
      %8113 = vmatpush1.bf16.msra.mxu0 0
      %8114 = vmatprep.subr.bf16.mxu0 0
      %8115 = vmatpush1.bf16.msra.mxu0 0
      %8116 = vmatprep.subr.bf16.mxu0 0
      %8117 = vmatpush1.bf16.msra.mxu0 0
      %8118 = vmatprep.mubr.bf16.mxu0 0
      %8119 = vmatmul.mubr.bf16.gmra.mrb[0].mxu0 %v8084
      %v8120 = vpop.f32.mrb[0].mxu0
      %v8121 = vadd.f32 0.0, %v8120
      %v8122 = vpop.f32.mrb[0].mxu0
      %v8123 = vpop.f32.mrb[0].mxu0
      %v8124 = vadd.f32 0.0, %v8123
      %v8125 = vpop.f32.mrb[0].mxu0
      %8126 = vdwg.mxu0
      %v8127 = vadd.f32 %v7604, %v8121
      %v8128 = vadd.f32 %v7605, %v8124
      %v8129 = vunpack.c.l.bf16 %v6028
      %v8130 = vunpack.c.h.bf16 %v6028
      %v8131 = vadd.f32 %v8127, %v8129
      %v8132 = vadd.f32 %v8128, %v8130
      %s8133 = scalar_lea.vmem %s12, 2
      %v8134 = vld [vmem:[%s8133] sm:$0x1]
      %s8135 = scalar_lea.vmem %s13, 2
      %v8136 = vld [vmem:[%s8135] sm:$0x1]
      %8137 = vadd.xlane.f32.xlu0 %v8131
      %v8138 = vpop.xlane.xlu0 %8137
      %8139 = vadd.xlane.f32.xlu0 %v8132
      %v8140 = vpop.xlane.xlu0 %8139
      %v8141 = vmul.f32 %v8138, %v761
      %v8142 = vmul.f32 %v8140, %v761
      %v8143 = vsub.f32 %v8131, %v8141
      %v8144 = vsub.f32 %v8132, %v8142
      %v8145 = vmul.f32 %v8143, %v8143
      %v8146 = vmul.f32 %v8144, %v8144
      %8147 = vadd.xlane.f32.xlu0 %v8145
      %v8148 = vpop.xlane.xlu0 %8147
      %8149 = vadd.xlane.f32.xlu0 %v8146
      %v8150 = vpop.xlane.xlu0 %8149
      %v8151 = vmul.f32 %v8148, %v761
      %v8152 = vmul.f32 %v8150, %v761
      %v8153 = vadd.f32 %v8151, 1e-05
      %v8154 = vadd.f32 %v8152, 1e-05
      %v8155 = vrsqrt.pop %v8153
      %v8156 = vrsqrt.pop %v8154
      %v8157 = vmul.f32 %v8143, %v8155
      %v8158 = vmul.f32 %v8144, %v8156
      %v8160 = vlaneseq
      %v8161 = vshrl.u32 %v8160, 7
      %v8162 = vsub.s32 0, %v8161
      %v8163 = vrot.slane %v8134, %v8162
      %v8165 = vmul.f32 %v8157, %v8163
      %v8166 = vmul.f32 %v8158, %v8163
      %v8168 = vlaneseq
      %v8169 = vshrl.u32 %v8168, 7
      %v8170 = vsub.s32 0, %v8169
      %v8171 = vrot.slane %v8136, %v8170
      %v8173 = vadd.f32 %v8165, %v8171
      %v8174 = vadd.f32 %v8166, %v8171
      %v8175 = vpack.c.bf16 %v8174, %v8173
      %s8176 = scalar_lea.vmem %s14, 256
      %v8177 = vld [vmem:[%s8176] sm:$0xff]
      %v8178 = vld [vmem:[%s8176 + $0x8] sm:$0xff]
      %v8179 = vld [vmem:[%s8176 + $0x10] sm:$0xff]
      %v8180 = vld [vmem:[%s8176 + $0x18] sm:$0xff]
      %v8181 = vld [vmem:[%s8176 + $0x20] sm:$0xff]
      %v8182 = vld [vmem:[%s8176 + $0x28] sm:$0xff]
      %v8183 = vld [vmem:[%s8176 + $0x30] sm:$0xff]
      %v8184 = vld [vmem:[%s8176 + $0x38] sm:$0xff]
      %v8185 = vld [vmem:[%s8176 + $0x40] sm:$0xff]
      %v8186 = vld [vmem:[%s8176 + $0x48] sm:$0xff]
      %v8187 = vld [vmem:[%s8176 + $0x50] sm:$0xff]
      %v8188 = vld [vmem:[%s8176 + $0x58] sm:$0xff]
      %v8189 = vld [vmem:[%s8176 + $0x60] sm:$0xff]
      %v8190 = vld [vmem:[%s8176 + $0x68] sm:$0xff]
      %v8191 = vld [vmem:[%s8176 + $0x70] sm:$0xff]
      %v8192 = vld [vmem:[%s8176 + $0x78] sm:$0xff]
      %s8193 = scalar_lea.vmem %s15, 4
      %v8194 = vld [vmem:[%s8193] sm:$0x3]
      %v8196 = vlaneseq
      %v8197 = vshrl.u32 %v8196, 7
      %v8198 = vsub.s32 0, %v8197
      %v8199 = vrot.slane %v8194, %v8198
      %v8200 = vlaneseq
      %v8201 = vshrl.u32 %v8200, 7
      %v8202 = vsub.s32 1, %v8201
      %v8203 = vrot.slane %v8194, %v8202
      %v8222 = vunpack.c.l.b16 %v8177
      %v8223 = vunpack.c.h.b16 %v8177
      %v8224 = vunpack.c.l.b16 %v8178
      %v8225 = vunpack.c.h.b16 %v8178
      %v8226 = vunpack.c.l.b16 %v8179
      %v8227 = vunpack.c.h.b16 %v8179
      %v8228 = vunpack.c.l.b16 %v8180
      %v8229 = vunpack.c.h.b16 %v8180
      %v8230 = vunpack.c.l.b16 %v8181
      %v8231 = vunpack.c.h.b16 %v8181
      %v8232 = vunpack.c.l.b16 %v8182
      %v8233 = vunpack.c.h.b16 %v8182
      %v8234 = vunpack.c.l.b16 %v8183
      %v8235 = vunpack.c.h.b16 %v8183
      %v8236 = vunpack.c.l.b16 %v8184
      %v8237 = vunpack.c.h.b16 %v8184
      %v8238 = vunpack.c.l.b16 %v8185
      %v8239 = vunpack.c.h.b16 %v8185
      %v8240 = vunpack.c.l.b16 %v8186
      %v8241 = vunpack.c.h.b16 %v8186
      %v8242 = vunpack.c.l.b16 %v8187
      %v8243 = vunpack.c.h.b16 %v8187
      %v8244 = vunpack.c.l.b16 %v8188
      %v8245 = vunpack.c.h.b16 %v8188
      %v8246 = vunpack.c.l.b16 %v8189
      %v8247 = vunpack.c.h.b16 %v8189
      %v8248 = vunpack.c.l.b16 %v8190
      %v8249 = vunpack.c.h.b16 %v8190
      %v8250 = vunpack.c.l.b16 %v8191
      %v8251 = vunpack.c.h.b16 %v8191
      %v8252 = vunpack.c.l.b16 %v8192
      %v8253 = vunpack.c.h.b16 %v8192
      %v8254 = vpack.c.b16 %v8224, %v8222
      %v8255 = vpack.c.b16 %v8225, %v8223
      %v8256 = vpack.c.b16 %v8228, %v8226
      %v8257 = vpack.c.b16 %v8229, %v8227
      %v8258 = vpack.c.b16 %v8232, %v8230
      %v8259 = vpack.c.b16 %v8233, %v8231
      %v8260 = vpack.c.b16 %v8236, %v8234
      %v8261 = vpack.c.b16 %v8237, %v8235
      %v8262 = vpack.c.b16 %v8240, %v8238
      %v8263 = vpack.c.b16 %v8241, %v8239
      %v8264 = vpack.c.b16 %v8244, %v8242
      %v8265 = vpack.c.b16 %v8245, %v8243
      %v8266 = vpack.c.b16 %v8248, %v8246
      %v8267 = vpack.c.b16 %v8249, %v8247
      %v8268 = vpack.c.b16 %v8252, %v8250
      %v8269 = vpack.c.b16 %v8253, %v8251
      %8286 = vmatprep.subr.bf16.mxu0 %v8255
      %8287 = vmatpush1.bf16.msra.mxu0 %v8254
      %8288 = vmatprep.subr.bf16.mxu0 %v8257
      %8289 = vmatpush1.bf16.msra.mxu0 %v8256
      %8290 = vmatprep.subr.bf16.mxu0 %v8259
      %8291 = vmatpush1.bf16.msra.mxu0 %v8258
      %8292 = vmatprep.subr.bf16.mxu0 %v8261
      %8293 = vmatpush1.bf16.msra.mxu0 %v8260
      %8294 = vmatprep.subr.bf16.mxu0 %v8263
      %8295 = vmatpush1.bf16.msra.mxu0 %v8262
      %8296 = vmatprep.subr.bf16.mxu0 %v8265
      %8297 = vmatpush1.bf16.msra.mxu0 %v8264
      %8298 = vmatprep.subr.bf16.mxu0 %v8267
      %8299 = vmatpush1.bf16.msra.mxu0 %v8266
      %8300 = vmatprep.subr.bf16.mxu0 %v8269
      %8301 = vmatpush1.bf16.msra.mxu0 %v8268
      %8302 = vmatprep.subr.bf16.mxu0 0
      %8303 = vmatpush1.bf16.msra.mxu0 0
      %8304 = vmatprep.subr.bf16.mxu0 0
      %8305 = vmatpush1.bf16.msra.mxu0 0
      %8306 = vmatprep.subr.bf16.mxu0 0
      %8307 = vmatpush1.bf16.msra.mxu0 0
      %8308 = vmatprep.subr.bf16.mxu0 0
      %8309 = vmatpush1.bf16.msra.mxu0 0
      %8310 = vmatprep.subr.bf16.mxu0 0
      %8311 = vmatpush1.bf16.msra.mxu0 0
      %8312 = vmatprep.subr.bf16.mxu0 0
      %8313 = vmatpush1.bf16.msra.mxu0 0
      %8314 = vmatprep.subr.bf16.mxu0 0
      %8315 = vmatpush1.bf16.msra.mxu0 0
      %8316 = vmatprep.subr.bf16.mxu0 0
      %8317 = vmatpush1.bf16.msra.mxu0 0
      %8318 = vmatprep.mubr.bf16.mxu0 0
      %8319 = vmatmul.mubr.bf16.gmra.mrb[0].mxu0 %v8175
      %v8320 = vpop.f32.mrb[0].mxu0
      %v8321 = vadd.f32 %v8199, %v8320
      %v8322 = vpop.f32.mrb[0].mxu0
      %v8323 = vadd.f32 %v8203, %v8322
      %v8324 = vpop.f32.mrb[0].mxu0
      %v8325 = vadd.f32 %v8199, %v8324
      %v8326 = vpop.f32.mrb[0].mxu0
      %v8327 = vadd.f32 %v8203, %v8326
      %8328 = vdwg.mxu0
      %v8329 = vmul.f32 %v8321, %v8321
      %v8330 = vmul.f32 %v8323, %v8323
      %v8331 = vmul.f32 %v8325, %v8325
      %v8332 = vmul.f32 %v8327, %v8327
      %v8333 = vmul.f32 %v8321, %v8329
      %v8334 = vmul.f32 %v8323, %v8330
      %v8335 = vmul.f32 %v8325, %v8331
      %v8336 = vmul.f32 %v8327, %v8332
      %v8337 = vmul.f32 %v8333, 0.044715
      %v8338 = vmul.f32 %v8334, 0.044715
      %v8339 = vmul.f32 %v8335, 0.044715
      %v8340 = vmul.f32 %v8336, 0.044715
      %v8341 = vadd.f32 %v8321, %v8337
      %v8342 = vadd.f32 %v8323, %v8338
      %v8343 = vadd.f32 %v8325, %v8339
      %v8344 = vadd.f32 %v8327, %v8340
      %v8345 = vmul.f32 %v8341, 0.7978846
      %v8346 = vmul.f32 %v8342, 0.7978846
      %v8347 = vmul.f32 %v8343, 0.7978846
      %v8348 = vmul.f32 %v8344, 0.7978846
      %v8349 = vtanh.pop %v8345
      %v8350 = vtanh.pop %v8346
      %v8351 = vtanh.pop %v8347
      %v8352 = vtanh.pop %v8348
      %v8353 = vadd.f32 %v8349, 1.0
      %v8354 = vadd.f32 %v8350, 1.0
      %v8355 = vadd.f32 %v8351, 1.0
      %v8356 = vadd.f32 %v8352, 1.0
      %v8357 = vmul.f32 %v8353, 0.5
      %v8358 = vmul.f32 %v8354, 0.5
      %v8359 = vmul.f32 %v8355, 0.5
      %v8360 = vmul.f32 %v8356, 0.5
      %v8361 = vmul.f32 %v8321, %v8357
      %v8362 = vmul.f32 %v8323, %v8358
      %v8363 = vmul.f32 %v8325, %v8359
      %v8364 = vmul.f32 %v8327, %v8360
      %v8365 = vpack.c.bf16 %v8363, %v8361
      %v8366 = vpack.c.bf16 %v8364, %v8362
      %s8367 = scalar_lea.vmem %s16, 256
      %v8368 = vld [vmem:[%s8367] sm:$0xf]
      %v8369 = vld [vmem:[%s8367 + $0x4] sm:$0xf]
      %v8370 = vld [vmem:[%s8367 + $0x8] sm:$0xf]
      %v8371 = vld [vmem:[%s8367 + $0xc] sm:$0xf]
      %v8372 = vld [vmem:[%s8367 + $0x10] sm:$0xf]
      %v8373 = vld [vmem:[%s8367 + $0x14] sm:$0xf]
      %v8374 = vld [vmem:[%s8367 + $0x18] sm:$0xf]
      %v8375 = vld [vmem:[%s8367 + $0x1c] sm:$0xf]
      %v8376 = vld [vmem:[%s8367 + $0x20] sm:$0xf]
      %v8377 = vld [vmem:[%s8367 + $0x24] sm:$0xf]
      %v8378 = vld [vmem:[%s8367 + $0x28] sm:$0xf]
      %v8379 = vld [vmem:[%s8367 + $0x2c] sm:$0xf]
      %v8380 = vld [vmem:[%s8367 + $0x30] sm:$0xf]
      %v8381 = vld [vmem:[%s8367 + $0x34] sm:$0xf]
      %v8382 = vld [vmem:[%s8367 + $0x38] sm:$0xf]
      %v8383 = vld [vmem:[%s8367 + $0x3c] sm:$0xf]
      %v8384 = vld [vmem:[%s8367 + $0x40] sm:$0xf]
      %v8385 = vld [vmem:[%s8367 + $0x44] sm:$0xf]
      %v8386 = vld [vmem:[%s8367 + $0x48] sm:$0xf]
      %v8387 = vld [vmem:[%s8367 + $0x4c] sm:$0xf]
      %v8388 = vld [vmem:[%s8367 + $0x50] sm:$0xf]
      %v8389 = vld [vmem:[%s8367 + $0x54] sm:$0xf]
      %v8390 = vld [vmem:[%s8367 + $0x58] sm:$0xf]
      %v8391 = vld [vmem:[%s8367 + $0x5c] sm:$0xf]
      %v8392 = vld [vmem:[%s8367 + $0x60] sm:$0xf]
      %v8393 = vld [vmem:[%s8367 + $0x64] sm:$0xf]
      %v8394 = vld [vmem:[%s8367 + $0x68] sm:$0xf]
      %v8395 = vld [vmem:[%s8367 + $0x6c] sm:$0xf]
      %v8396 = vld [vmem:[%s8367 + $0x70] sm:$0xf]
      %v8397 = vld [vmem:[%s8367 + $0x74] sm:$0xf]
      %v8398 = vld [vmem:[%s8367 + $0x78] sm:$0xf]
      %v8399 = vld [vmem:[%s8367 + $0x7c] sm:$0xf]
      %s8400 = scalar_lea.vmem %s17, 2
      %v8401 = vld [vmem:[%s8400] sm:$0x1]
      %v8403 = vlaneseq
      %v8404 = vshrl.u32 %v8403, 7
      %v8405 = vsub.s32 0, %v8404
      %v8406 = vrot.slane %v8401, %v8405
      %v8440 = vunpack.c.l.b16 %v8368
      %v8441 = vunpack.c.l.b16 %v8369
      %v8442 = vunpack.c.l.b16 %v8370
      %v8443 = vunpack.c.l.b16 %v8371
      %v8444 = vunpack.c.l.b16 %v8372
      %v8445 = vunpack.c.l.b16 %v8373
      %v8446 = vunpack.c.l.b16 %v8374
      %v8447 = vunpack.c.l.b16 %v8375
      %v8448 = vunpack.c.l.b16 %v8376
      %v8449 = vunpack.c.l.b16 %v8377
      %v8450 = vunpack.c.l.b16 %v8378
      %v8451 = vunpack.c.l.b16 %v8379
      %v8452 = vunpack.c.l.b16 %v8380
      %v8453 = vunpack.c.l.b16 %v8381
      %v8454 = vunpack.c.l.b16 %v8382
      %v8455 = vunpack.c.l.b16 %v8383
      %v8456 = vunpack.c.l.b16 %v8384
      %v8457 = vunpack.c.l.b16 %v8385
      %v8458 = vunpack.c.l.b16 %v8386
      %v8459 = vunpack.c.l.b16 %v8387
      %v8460 = vunpack.c.l.b16 %v8388
      %v8461 = vunpack.c.l.b16 %v8389
      %v8462 = vunpack.c.l.b16 %v8390
      %v8463 = vunpack.c.l.b16 %v8391
      %v8464 = vunpack.c.l.b16 %v8392
      %v8465 = vunpack.c.l.b16 %v8393
      %v8466 = vunpack.c.l.b16 %v8394
      %v8467 = vunpack.c.l.b16 %v8395
      %v8468 = vunpack.c.l.b16 %v8396
      %v8469 = vunpack.c.l.b16 %v8397
      %v8470 = vunpack.c.l.b16 %v8398
      %v8471 = vunpack.c.l.b16 %v8399
      %v8472 = vpack.c.b16 %v8441, %v8440
      %v8473 = vpack.c.b16 %v8443, %v8442
      %v8474 = vpack.c.b16 %v8445, %v8444
      %v8475 = vpack.c.b16 %v8447, %v8446
      %v8476 = vpack.c.b16 %v8449, %v8448
      %v8477 = vpack.c.b16 %v8451, %v8450
      %v8478 = vpack.c.b16 %v8453, %v8452
      %v8479 = vpack.c.b16 %v8455, %v8454
      %v8480 = vpack.c.b16 %v8457, %v8456
      %v8481 = vpack.c.b16 %v8459, %v8458
      %v8482 = vpack.c.b16 %v8461, %v8460
      %v8483 = vpack.c.b16 %v8463, %v8462
      %v8484 = vpack.c.b16 %v8465, %v8464
      %v8485 = vpack.c.b16 %v8467, %v8466
      %v8486 = vpack.c.b16 %v8469, %v8468
      %v8487 = vpack.c.b16 %v8471, %v8470
      %8504 = vmatprep.subr.bf16.mxu0 0
      %8505 = vmatpush1.bf16.msra.mxu0 %v8472
      %8506 = vmatprep.subr.bf16.mxu0 0
      %8507 = vmatpush1.bf16.msra.mxu0 %v8473
      %8508 = vmatprep.subr.bf16.mxu0 0
      %8509 = vmatpush1.bf16.msra.mxu0 %v8474
      %8510 = vmatprep.subr.bf16.mxu0 0
      %8511 = vmatpush1.bf16.msra.mxu0 %v8475
      %8512 = vmatprep.subr.bf16.mxu0 0
      %8513 = vmatpush1.bf16.msra.mxu0 %v8476
      %8514 = vmatprep.subr.bf16.mxu0 0
      %8515 = vmatpush1.bf16.msra.mxu0 %v8477
      %8516 = vmatprep.subr.bf16.mxu0 0
      %8517 = vmatpush1.bf16.msra.mxu0 %v8478
      %8518 = vmatprep.subr.bf16.mxu0 0
      %8519 = vmatpush1.bf16.msra.mxu0 %v8479
      %8520 = vmatprep.subr.bf16.mxu0 0
      %8521 = vmatpush1.bf16.msra.mxu0 %v8480
      %8522 = vmatprep.subr.bf16.mxu0 0
      %8523 = vmatpush1.bf16.msra.mxu0 %v8481
      %8524 = vmatprep.subr.bf16.mxu0 0
      %8525 = vmatpush1.bf16.msra.mxu0 %v8482
      %8526 = vmatprep.subr.bf16.mxu0 0
      %8527 = vmatpush1.bf16.msra.mxu0 %v8483
      %8528 = vmatprep.subr.bf16.mxu0 0
      %8529 = vmatpush1.bf16.msra.mxu0 %v8484
      %8530 = vmatprep.subr.bf16.mxu0 0
      %8531 = vmatpush1.bf16.msra.mxu0 %v8485
      %8532 = vmatprep.subr.bf16.mxu0 0
      %8533 = vmatpush1.bf16.msra.mxu0 %v8486
      %8534 = vmatprep.subr.bf16.mxu0 0
      %8535 = vmatpush1.bf16.msra.mxu0 %v8487
      %8536 = vmatprep.mubr.bf16.mxu0 %v8366
      %8537 = vmatmul.mubr.bf16.gmra.mrb[0].mxu0 %v8365
      %v8538 = vpop.f32.mrb[0].mxu0
      %v8539 = vadd.f32 %v8406, %v8538
      %v8540 = vpop.f32.mrb[0].mxu0
      %v8541 = vpop.f32.mrb[0].mxu0
      %v8542 = vadd.f32 %v8406, %v8541
      %v8543 = vpop.f32.mrb[0].mxu0
      %8544 = vdwg.mxu0
      %v8545 = vunpack.c.l.bf16 %v8175
      %v8546 = vunpack.c.h.bf16 %v8175
      %v8547 = vadd.f32 %v8539, %v8545
      %v8548 = vadd.f32 %v8542, %v8546
      %s8549 = scalar_lea.vmem %s18, 2
      %v8550 = vld [vmem:[%s8549] sm:$0x1]
      %s8551 = scalar_lea.vmem %s19, 2
      %v8552 = vld [vmem:[%s8551] sm:$0x1]
      %8553 = vadd.xlane.f32.xlu0 %v8547
      %v8554 = vpop.xlane.xlu0 %8553
      %8555 = vadd.xlane.f32.xlu0 %v8548
      %v8556 = vpop.xlane.xlu0 %8555
      %v8557 = vmul.f32 %v8554, %v761
      %v8558 = vmul.f32 %v8556, %v761
      %v8559 = vsub.f32 %v8547, %v8557
      %v8560 = vsub.f32 %v8548, %v8558
      %v8561 = vmul.f32 %v8559, %v8559
      %v8562 = vmul.f32 %v8560, %v8560
      %8563 = vadd.xlane.f32.xlu0 %v8561
      %v8564 = vpop.xlane.xlu0 %8563
      %8565 = vadd.xlane.f32.xlu0 %v8562
      %v8566 = vpop.xlane.xlu0 %8565
      %v8567 = vmul.f32 %v8564, %v761
      %v8568 = vmul.f32 %v8566, %v761
      %v8569 = vadd.f32 %v8567, 1e-05
      %v8570 = vadd.f32 %v8568, 1e-05
      %v8571 = vrsqrt.pop %v8569
      %v8572 = vrsqrt.pop %v8570
      %v8573 = vmul.f32 %v8559, %v8571
      %v8574 = vmul.f32 %v8560, %v8572
      %v8576 = vlaneseq
      %v8577 = vshrl.u32 %v8576, 7
      %v8578 = vsub.s32 0, %v8577
      %v8579 = vrot.slane %v8550, %v8578
      %v8581 = vmul.f32 %v8573, %v8579
      %v8582 = vmul.f32 %v8574, %v8579
      %v8584 = vlaneseq
      %v8585 = vshrl.u32 %v8584, 7
      %v8586 = vsub.s32 0, %v8585
      %v8587 = vrot.slane %v8552, %v8586
      %v8589 = vadd.f32 %v8581, %v8587
      %v8590 = vadd.f32 %v8582, %v8587
      %v8591 = vpack.c.bf16 %v8590, %v8589
      %v8592 = vld [vmem:[%s22] sm:$0xf]
      %v8593 = vld [vmem:[%s22 + $0x4] sm:$0xf]
      %v8594 = vld [vmem:[%s22 + $0x8] sm:$0xf]
      %v8595 = vld [vmem:[%s22 + $0xc] sm:$0xf]
      %v8596 = vld [vmem:[%s22 + $0x10] sm:$0xf]
      %v8597 = vld [vmem:[%s22 + $0x14] sm:$0xf]
      %v8598 = vld [vmem:[%s22 + $0x18] sm:$0xf]
      %v8599 = vld [vmem:[%s22 + $0x1c] sm:$0xf]
      %v8600 = vld [vmem:[%s22 + $0x20] sm:$0xf]
      %v8601 = vld [vmem:[%s22 + $0x24] sm:$0xf]
      %v8602 = vld [vmem:[%s22 + $0x28] sm:$0xf]
      %v8603 = vld [vmem:[%s22 + $0x2c] sm:$0xf]
      %v8604 = vld [vmem:[%s22 + $0x30] sm:$0xf]
      %v8605 = vld [vmem:[%s22 + $0x34] sm:$0xf]
      %v8606 = vld [vmem:[%s22 + $0x38] sm:$0xf]
      %v8607 = vld [vmem:[%s22 + $0x3c] sm:$0xf]
      %v8608 = vld [vmem:[%s23] sm:$0x1]
      %v8610 = vlaneseq
      %v8611 = vshrl.u32 %v8610, 7
      %v8612 = vsub.s32 0, %v8611
      %v8613 = vrot.slane %v8608, %v8612
      %v8631 = vunpack.c.l.b16 %v8592
      %v8632 = vunpack.c.l.b16 %v8593
      %v8633 = vunpack.c.l.b16 %v8594
      %v8634 = vunpack.c.l.b16 %v8595
      %v8635 = vunpack.c.l.b16 %v8596
      %v8636 = vunpack.c.l.b16 %v8597
      %v8637 = vunpack.c.l.b16 %v8598
      %v8638 = vunpack.c.l.b16 %v8599
      %v8639 = vunpack.c.l.b16 %v8600
      %v8640 = vunpack.c.l.b16 %v8601
      %v8641 = vunpack.c.l.b16 %v8602
      %v8642 = vunpack.c.l.b16 %v8603
      %v8643 = vunpack.c.l.b16 %v8604
      %v8644 = vunpack.c.l.b16 %v8605
      %v8645 = vunpack.c.l.b16 %v8606
      %v8646 = vunpack.c.l.b16 %v8607
      %v8647 = vpack.c.b16 %v8632, %v8631
      %v8648 = vpack.c.b16 %v8634, %v8633
      %v8649 = vpack.c.b16 %v8636, %v8635
      %v8650 = vpack.c.b16 %v8638, %v8637
      %v8651 = vpack.c.b16 %v8640, %v8639
      %v8652 = vpack.c.b16 %v8642, %v8641
      %v8653 = vpack.c.b16 %v8644, %v8643
      %v8654 = vpack.c.b16 %v8646, %v8645
      %8663 = vmatprep.subr.bf16.mxu0 0
      %8664 = vmatpush1.bf16.msra.mxu0 %v8647
      %8665 = vmatprep.subr.bf16.mxu0 0
      %8666 = vmatpush1.bf16.msra.mxu0 %v8648
      %8667 = vmatprep.subr.bf16.mxu0 0
      %8668 = vmatpush1.bf16.msra.mxu0 %v8649
      %8669 = vmatprep.subr.bf16.mxu0 0
      %8670 = vmatpush1.bf16.msra.mxu0 %v8650
      %8671 = vmatprep.subr.bf16.mxu0 0
      %8672 = vmatpush1.bf16.msra.mxu0 %v8651
      %8673 = vmatprep.subr.bf16.mxu0 0
      %8674 = vmatpush1.bf16.msra.mxu0 %v8652
      %8675 = vmatprep.subr.bf16.mxu0 0
      %8676 = vmatpush1.bf16.msra.mxu0 %v8653
      %8677 = vmatprep.subr.bf16.mxu0 0
      %8678 = vmatpush1.bf16.msra.mxu0 %v8654
      %8679 = vmatprep.subr.bf16.mxu0 0
      %8680 = vmatpush1.bf16.msra.mxu0 0
      %8681 = vmatprep.subr.bf16.mxu0 0
      %8682 = vmatpush1.bf16.msra.mxu0 0
      %8683 = vmatprep.subr.bf16.mxu0 0
      %8684 = vmatpush1.bf16.msra.mxu0 0
      %8685 = vmatprep.subr.bf16.mxu0 0
      %8686 = vmatpush1.bf16.msra.mxu0 0
      %8687 = vmatprep.subr.bf16.mxu0 0
      %8688 = vmatpush1.bf16.msra.mxu0 0
      %8689 = vmatprep.subr.bf16.mxu0 0
      %8690 = vmatpush1.bf16.msra.mxu0 0
      %8691 = vmatprep.subr.bf16.mxu0 0
      %8692 = vmatpush1.bf16.msra.mxu0 0
      %8693 = vmatprep.subr.bf16.mxu0 0
      %8694 = vmatpush1.bf16.msra.mxu0 0
      %8695 = vmatprep.mubr.bf16.mxu0 0
      %8696 = vmatmul.mubr.bf16.gmra.mrb[0].mxu0 %v8591
      %v8697 = vpop.f32.mrb[0].mxu0
      %v8698 = vadd.f32 %v8613, %v8697
      %v8699 = vpop.f32.mrb[0].mxu0
      %v8700 = vpop.f32.mrb[0].mxu0
      %v8701 = vadd.f32 %v8613, %v8700
      %v8702 = vpop.f32.mrb[0].mxu0
      %8703 = vdwg.mxu0
      %v8704 = vpack.c.bf16 %v8701, %v8698
      %v8706 = vunpack.c.l.b16 %v8704
      %v8707 = vunpack.c.h.b16 %v8704
      %v8708 = vpack.c.b16 %v8706, %v8706
      %v8709 = vpack.c.b16 %v8707, %v8707
      %8712 = vst [vmem:[%s751] sm:$0xf] %v8708
      %8713 = vst [vmem:[%s751 + $0x4] sm:$0xf] %v8709
      %p8714 = scmp.lt.s32.totalorder %s35, 1
      %s8715 = scalar_select %p8714, %s35, 1
      %s8716 = smul.addr %s8715, 2
      %s8717 = smul.addr %s8716, 4
      %s8718 = scalar_lea.vmem %s24, %s8717
      // Predicated region
      $region117: #{forward.1} parent=115 // pred_check
        %p8719 = pneg %p567
      $region118: #{forward.1} parent=115 // pred_check_branch
        %8721 = sbr.rel (%p8719) target = $region120
      $region119: #{forward.1} parent=115 // pred_region
        _
      $region120: #{forward.1} parent=115 // pred_fallthru
        _
    $region116: #{forward.1} parent=5 // pred_fallthru
      _
    %p8722 = scmp.le.s32.totalorder 2, %s30
    // Predicated region
    $region121: #{forward.1} parent=5 // pred_check
      %p8723 = pneg %p8722
    $region122: #{forward.1} parent=5 // pred_check_branch
      %8725 = sbr.rel (%p8723) target = $region124
    $region123: #{forward.1} parent=5 // pred_region
      %s8726 = ssub.s32 %s30, 2
      // Predicated region
      $region125: #{forward.1} parent=123 // pred_check
        %p8727 = pneg %p573
      $region126: #{forward.1} parent=123 // pred_check_branch
        %8729 = sbr.rel (%p8727) target = $region128
      $region127: #{forward.1} parent=123 // pred_region
        %p8730 = scmp.lt.s32.totalorder %s36, 1
        %s8731 = scalar_select %p8730, %s36, 1
        %s8732 = smul.addr %s8731, 2
        %s8733 = smul.addr %s8732, 4
        %s8734 = scalar_lea.vmem %s24, %s8733
      $region128: #{forward.1} parent=123 // pred_fallthru
        _
    $region124: #{forward.1} parent=5 // pred_fallthru
      _
  $region6: #{forward.1} parent=0 // loop_footer
    %s34 = sadd.s32 1, %s30
  $region7: #{forward.1} parent=0 // loop_footer_branch
    %29 = sbr.rel target = $region3
  $region8: #{forward.1} parent=0 // loop_exit
    _

</llo_original>
